<compile_context>
chip_gen: v6e
topology: v6e:2x2x1
jax: 0.10.0
libtpu: 0.0.40
codegen_flags: <defaults>
</compile_context>

<pallas_src>
import math
from functools import partial

import jax
import jax.numpy as jnp
from jax.experimental import pallas as pl
from jax.experimental.pallas import tpu as pltpu

_TWO_PI = 2.0 * math.pi      # plain Python floats -> kernel immediates
_HALF_PI = 0.5 * math.pi
_LANES = 128


def _split3_bf16(v):
    """Split an f32 array into three bf16 terms, v ~= hi + mid + lo (to ~2^-25 rel)."""
    hi = v.astype(jnp.bfloat16)
    r = v - hi.astype(jnp.float32)
    mid = r.astype(jnp.bfloat16)
    r = r - mid.astype(jnp.float32)
    lo = r.astype(jnp.bfloat16)
    return hi, mid, lo


def _ffpe_kernel(x_ref, w_hi_ref, w_mid_ref, w_lo_ref, a_ref, ph_ref, o_ref):
    # x_ref   : (bm, P*dims)        f32  packed coordinates (P coords per row)
    # w_*_ref : (P*dims, P*emb)     bf16 block-diag 2*pi*[bvals.T|bvals.T], 3-way split
    # a_ref   : (1, P*emb)          f32  tiled [avals | avals]
    # ph_ref  : (1, P*emb)          f32  tiled [0..0 | pi/2..pi/2]
    # o_ref   : (bm, P*emb)              packed [sin | cos] features
    x = x_ref[...].astype(jnp.float32)
    x_hi, x_mid, x_lo = _split3_bf16(x)          # cheap: only P*dims lanes wide

    dot = partial(jnp.dot, preferred_element_type=jnp.float32)
    # bf16x6 emulated f32 matmul on the MXU (keep cross terms down to eps^2).
    proj = dot(x_hi, w_hi_ref[...])
    proj = proj + dot(x_hi, w_mid_ref[...])
    proj = proj + dot(x_mid, w_hi_ref[...])
    proj = proj + dot(x_hi, w_lo_ref[...])
    proj = proj + dot(x_mid, w_mid_ref[...])
    proj = proj + dot(x_lo, w_hi_ref[...])

    # cos(t) = sin(t + pi/2): one lane-dense sin over the whole [sin|cos] slab.
    o_ref[...] = (a_ref[...] * jnp.sin(proj + ph_ref[...])).astype(o_ref.dtype)


def _choose_pack(dims: int, emb: int, w_budget_bytes: int = 8 << 20) -> int:
    """Coordinates folded per packed row.

    Guarantees P*emb % 128 == 0 (lane-dense output / unmasked stores); prefers
    P*dims % 128 == 0 as well (lane-dense input block + 128-aligned MXU K) while
    keeping the three bf16 weight splits under w_budget_bytes."""
    pe = _LANES // math.gcd(emb, _LANES)      # min P for lane-dense output
    px = _LANES // math.gcd(dims, _LANES)     # min P for lane-dense input
    p = max(pe, px)                           # both are powers of two
    while p > pe and 3 * 2 * (p * dims) * (p * emb) > w_budget_bytes:
        p //= 2                               # shrink (rare: very wide embeddings)
    return p


def _pick_block_rows(m_packed: int, in_lanes: int, out_lanes: int,
                     in_itemsize: int, out_itemsize: int, w_bytes: int,
                     vmem_budget_bytes: int = 16 << 20) -> int:
    """Packed-row block size from the *padded* VMEM footprint:
       double-buffered input block + double-buffered output block
       + ~3 full-block f32 elementwise temporaries + resident weight splits."""
    def pad_lane(n):
        return -(-n // _LANES) * _LANES
    fixed = 2 * w_bytes + 2 * 2 * 8 * pad_lane(out_lanes) * 4   # W + avals/phase rows
    per_row = (2 * pad_lane(in_lanes) * in_itemsize             # x block  (dbl-buf)
               + 2 * pad_lane(out_lanes) * out_itemsize         # out block (dbl-buf)
               + 3 * pad_lane(out_lanes) * 4)                   # f32 temporaries
    bm = (vmem_budget_bytes - fixed) // per_row
    bm = max(16, (bm // 16) * 16)             # bf16 MXU LHS likes 16-row granules
    return m_packed if m_packed <= bm else bm


def ff_positional_encoding(x: jax.Array, bvals: jax.Array, avals: jax.Array) -> jax.Array:
    """concat([avals*sin(2*pi*x@bvals.T), avals*cos(2*pi*x@bvals.T)], -1)."""
    *lead, dims = x.shape
    half, bd = bvals.shape
    assert bd == dims, "bvals last dim must match coordinate dims"
    emb = 2 * half

    m = 1
    for s in lead:
        m *= int(s)

    p = _choose_pack(dims, emb)
    m_pad = -(-m // p) * p
    m_packed = m_pad // p
    in_lanes, out_lanes = p * dims, p * emb

    x2 = x.reshape(m, dims)                   # free reshape
    if m_pad != m:                            # only copies when m % P != 0
        x2 = jnp.pad(x2, ((0, m_pad - m), (0, 0)))
    xp = x2.reshape(m_packed, in_lanes)       # free row-major packing

    # Block-diagonal weights: 2*pi and the [sin|cos] feature duplication folded in.
    w_dup = _TWO_PI * jnp.concatenate(
        [bvals.T.astype(jnp.float32), bvals.T.astype(jnp.float32)], axis=1)  # (dims, emb)
    eye = jnp.eye(p, dtype=jnp.float32)
    w_blk = (eye[:, None, :, None] * w_dup[None, :, None, :]).reshape(in_lanes, out_lanes)
    w_hi, w_mid, w_lo = _split3_bf16(w_blk)

    a_pack = jnp.tile(
        jnp.concatenate([avals, avals]).astype(jnp.float32), p).reshape(1, out_lanes)
    phase = jnp.concatenate([jnp.zeros((half,), jnp.float32),
                             jnp.full((half,), _HALF_PI, jnp.float32)])
    ph_pack = jnp.tile(phase, p).reshape(1, out_lanes)

    w_bytes = 3 * in_lanes * out_lanes * 2    # three bf16 splits
    itemsize = jnp.dtype(x.dtype).itemsize
    bm = _pick_block_rows(m_packed, in_lanes, out_lanes, itemsize, itemsize, w_bytes)
    grid = (pl.cdiv(m_packed, bm),)           # ragged last block masked by Pallas

    out_p = pl.pallas_call(
        _ffpe_kernel,
        out_shape=jax.ShapeDtypeStruct((m_packed, out_lanes), x.dtype),
        grid=grid,
        in_specs=[
            pl.BlockSpec((bm, in_lanes), lambda i: (i, 0)),
            pl.BlockSpec((in_lanes, out_lanes), lambda i: (0, 0)),
            pl.BlockSpec((in_lanes, out_lanes), lambda i: (0, 0)),
            pl.BlockSpec((in_lanes, out_lanes), lambda i: (0, 0)),
            pl.BlockSpec((1, out_lanes), lambda i: (0, 0)),
            pl.BlockSpec((1, out_lanes), lambda i: (0, 0)),
        ],
        out_specs=pl.BlockSpec((bm, out_lanes), lambda i: (i, 0)),
        compiler_params=pltpu.CompilerParams(
            dimension_semantics=("parallel",),
            vmem_limit_bytes=32 * 1024 * 1024,
        ),
    )(xp, w_hi, w_mid, w_lo, a_pack, ph_pack)

    out2 = out_p.reshape(m_pad, emb)          # free reshape back to (rows, features)
    if m_pad != m:
        out2 = out2[:m]
    return out2.reshape(*lead, emb)


if __name__ == "__main__":
    key = jax.random.PRNGKey(0)
    kb, kx = jax.random.split(key)

    # Module config (gaussian=True path): embedding_size=32, scale=1.0, dims=2.
    embedding_size = 32
    scale = 1.0
    dims = 2
    half = embedding_size // 2

    bvals = jax.random.normal(kb, (half, dims), dtype=jnp.float32) * scale
    avals = jnp.ones((half,), dtype=jnp.float32)

    # Coordinates: batch=2, 32x32 grid, 2-D coords in [-1, 1] (typical INR input).
    x = jax.random.uniform(kx, (2, 32, 32, dims), dtype=jnp.float32,
                           minval=-1.0, maxval=1.0)

    out = ff_positional_encoding(x, bvals, avals)
    out = jax.block_until_ready(out)

    # Pure-JAX f32 reference.
    proj = _TWO_PI * jnp.sum(x[..., None, :] * bvals, axis=-1)
    ref = jnp.concatenate([avals * jnp.sin(proj), avals * jnp.cos(proj)], axis=-1)

    assert out.shape == x.shape[:-1] + (embedding_size,)
    assert out.dtype == x.dtype
    max_err = float(jnp.max(jnp.abs(out - ref)))
    assert jnp.allclose(out, ref, atol=1e-4, rtol=1e-4), f"mismatch vs reference: {max_err}"

    print("KERNEL_OK")
</pallas_src>

<mosaic_0001>
module attributes {stable_mosaic.version = 11 : i64} {
  func.func @_ffpe_kernel(%arg0: i32, %arg1: memref<32x128xf32, #tpu.memory_space<vmem>>, %arg2: memref<128x2048xbf16, #tpu.memory_space<vmem>>, %arg3: memref<128x2048xbf16, #tpu.memory_space<vmem>>, %arg4: memref<128x2048xbf16, #tpu.memory_space<vmem>>, %arg5: memref<1x2048xf32, #tpu.memory_space<vmem>>, %arg6: memref<1x2048xf32, #tpu.memory_space<vmem>>, %arg7: memref<32x2048xf32, #tpu.memory_space<vmem>>) attributes {dimension_semantics = [#tpu.dimension_semantics<parallel>], iteration_bounds = array<i64: 1>, scalar_prefetch = 0 : i64, scratch_operands = 0 : i64, tpu.core_type = #tpu.core_type<tc>, window_params = [{transform_indices = @transform_0, window_bounds = array<i64: 32, 128>}, {pipeline_mode = #tpu.pipeline_mode<synchronous>, transform_indices = @transform_1, window_bounds = array<i64: 128, 2048>}, {pipeline_mode = #tpu.pipeline_mode<synchronous>, transform_indices = @transform_2, window_bounds = array<i64: 128, 2048>}, {pipeline_mode = #tpu.pipeline_mode<synchronous>, transform_indices = @transform_3, window_bounds = array<i64: 128, 2048>}, {pipeline_mode = #tpu.pipeline_mode<synchronous>, transform_indices = @transform_4, window_bounds = array<i64: 1, 2048>}, {pipeline_mode = #tpu.pipeline_mode<synchronous>, transform_indices = @transform_5, window_bounds = array<i64: 1, 2048>}, {transform_indices = @transform_6, window_bounds = array<i64: 32, 2048>}]} {
    %c0 = arith.constant 0 : index
    %c0_0 = arith.constant 0 : index
    %0 = vector.load %arg1[%c0, %c0_0] : memref<32x128xf32, #tpu.memory_space<vmem>>, vector<32x128xf32>
    %1 = arith.truncf %0 : vector<32x128xf32> to vector<32x128xbf16>
    %2 = arith.extf %1 : vector<32x128xbf16> to vector<32x128xf32>
    %3 = arith.subf %0, %2 : vector<32x128xf32>
    %4 = arith.truncf %3 : vector<32x128xf32> to vector<32x128xbf16>
    %5 = arith.extf %4 : vector<32x128xbf16> to vector<32x128xf32>
    %6 = arith.subf %3, %5 : vector<32x128xf32>
    %7 = arith.truncf %6 : vector<32x128xf32> to vector<32x128xbf16>
    %c0_1 = arith.constant 0 : index
    %c0_2 = arith.constant 0 : index
    %8 = vector.load %arg2[%c0_1, %c0_2] : memref<128x2048xbf16, #tpu.memory_space<vmem>>, vector<128x2048xbf16>
    %cst = arith.constant dense<0.000000e+00> : vector<32x2048xf32>
    %9 = tpu.matmul %1, %8, %cst {dimension_numbers = #tpu.dot_dimension_numbers<[1], [0], [0], [1], [0, 0, 1, 1], [], []>} : vector<32x128xbf16>, vector<128x2048xbf16>, vector<32x2048xf32> -> vector<32x2048xf32>
    %c0_3 = arith.constant 0 : index
    %c0_4 = arith.constant 0 : index
    %10 = vector.load %arg3[%c0_3, %c0_4] : memref<128x2048xbf16, #tpu.memory_space<vmem>>, vector<128x2048xbf16>
    %cst_5 = arith.constant dense<0.000000e+00> : vector<32x2048xf32>
    %11 = tpu.matmul %1, %10, %cst_5 {dimension_numbers = #tpu.dot_dimension_numbers<[1], [0], [0], [1], [0, 0, 1, 1], [], []>} : vector<32x128xbf16>, vector<128x2048xbf16>, vector<32x2048xf32> -> vector<32x2048xf32>
    %12 = arith.addf %9, %11 : vector<32x2048xf32>
    %c0_6 = arith.constant 0 : index
    %c0_7 = arith.constant 0 : index
    %13 = vector.load %arg2[%c0_6, %c0_7] : memref<128x2048xbf16, #tpu.memory_space<vmem>>, vector<128x2048xbf16>
    %cst_8 = arith.constant dense<0.000000e+00> : vector<32x2048xf32>
    %14 = tpu.matmul %4, %13, %cst_8 {dimension_numbers = #tpu.dot_dimension_numbers<[1], [0], [0], [1], [0, 0, 1, 1], [], []>} : vector<32x128xbf16>, vector<128x2048xbf16>, vector<32x2048xf32> -> vector<32x2048xf32>
    %15 = arith.addf %12, %14 : vector<32x2048xf32>
    %c0_9 = arith.constant 0 : index
    %c0_10 = arith.constant 0 : index
    %16 = vector.load %arg4[%c0_9, %c0_10] : memref<128x2048xbf16, #tpu.memory_space<vmem>>, vector<128x2048xbf16>
    %cst_11 = arith.constant dense<0.000000e+00> : vector<32x2048xf32>
    %17 = tpu.matmul %1, %16, %cst_11 {dimension_numbers = #tpu.dot_dimension_numbers<[1], [0], [0], [1], [0, 0, 1, 1], [], []>} : vector<32x128xbf16>, vector<128x2048xbf16>, vector<32x2048xf32> -> vector<32x2048xf32>
    %18 = arith.addf %15, %17 : vector<32x2048xf32>
    %c0_12 = arith.constant 0 : index
    %c0_13 = arith.constant 0 : index
    %19 = vector.load %arg3[%c0_12, %c0_13] : memref<128x2048xbf16, #tpu.memory_space<vmem>>, vector<128x2048xbf16>
    %cst_14 = arith.constant dense<0.000000e+00> : vector<32x2048xf32>
    %20 = tpu.matmul %4, %19, %cst_14 {dimension_numbers = #tpu.dot_dimension_numbers<[1], [0], [0], [1], [0, 0, 1, 1], [], []>} : vector<32x128xbf16>, vector<128x2048xbf16>, vector<32x2048xf32> -> vector<32x2048xf32>
    %21 = arith.addf %18, %20 : vector<32x2048xf32>
    %c0_15 = arith.constant 0 : index
    %c0_16 = arith.constant 0 : index
    %22 = vector.load %arg2[%c0_15, %c0_16] : memref<128x2048xbf16, #tpu.memory_space<vmem>>, vector<128x2048xbf16>
    %cst_17 = arith.constant dense<0.000000e+00> : vector<32x2048xf32>
    %23 = tpu.matmul %7, %22, %cst_17 {dimension_numbers = #tpu.dot_dimension_numbers<[1], [0], [0], [1], [0, 0, 1, 1], [], []>} : vector<32x128xbf16>, vector<128x2048xbf16>, vector<32x2048xf32> -> vector<32x2048xf32>
    %24 = arith.addf %21, %23 : vector<32x2048xf32>
    %c0_18 = arith.constant 0 : index
    %c0_19 = arith.constant 0 : index
    %25 = vector.load %arg5[%c0_18, %c0_19] : memref<1x2048xf32, #tpu.memory_space<vmem>>, vector<1x2048xf32>
    %c0_20 = arith.constant 0 : index
    %c0_21 = arith.constant 0 : index
    %26 = vector.load %arg6[%c0_20, %c0_21] : memref<1x2048xf32, #tpu.memory_space<vmem>>, vector<1x2048xf32>
    %27 = vector.broadcast %26 : vector<1x2048xf32> to vector<32x2048xf32>
    %28 = arith.addf %24, %27 : vector<32x2048xf32>
    %29 = math.sin %28 : vector<32x2048xf32>
    %30 = vector.broadcast %25 : vector<1x2048xf32> to vector<32x2048xf32>
    %31 = arith.mulf %30, %29 : vector<32x2048xf32>
    %c0_22 = arith.constant 0 : index
    %c0_23 = arith.constant 0 : index
    %32 = vector.load %arg7[%c0_22, %c0_23] : memref<32x2048xf32, #tpu.memory_space<vmem>>, vector<32x2048xf32>
    tpu.vector_store %arg7[%c0_22, %c0_23], %31 {strides = array<i32>} : memref<32x2048xf32, #tpu.memory_space<vmem>>, vector<32x2048xf32>,
    return
  }
  func.func @transform_0(%arg0: i32) -> (i32, i32) {
    %c0_i32 = arith.constant 0 : i32
    %c0_i32_0 = arith.constant 0 : i32
    return %arg0, %c0_i32 : i32, i32
  }
  func.func @transform_1(%arg0: i32) -> (i32, i32) {
    %c0_i32 = arith.constant 0 : i32
    %c0_i32_0 = arith.constant 0 : i32
    %c0_i32_1 = arith.constant 0 : i32
    return %c0_i32, %c0_i32_0 : i32, i32
  }
  func.func @transform_2(%arg0: i32) -> (i32, i32) {
    %c0_i32 = arith.constant 0 : i32
    %c0_i32_0 = arith.constant 0 : i32
    %c0_i32_1 = arith.constant 0 : i32
    return %c0_i32, %c0_i32_0 : i32, i32
  }
  func.func @transform_3(%arg0: i32) -> (i32, i32) {
    %c0_i32 = arith.constant 0 : i32
    %c0_i32_0 = arith.constant 0 : i32
    %c0_i32_1 = arith.constant 0 : i32
    return %c0_i32, %c0_i32_0 : i32, i32
  }
  func.func @transform_4(%arg0: i32) -> (i32, i32) {
    %c0_i32 = arith.constant 0 : i32
    %c0_i32_0 = arith.constant 0 : i32
    %c0_i32_1 = arith.constant 0 : i32
    return %c0_i32, %c0_i32_0 : i32, i32
  }
  func.func @transform_5(%arg0: i32) -> (i32, i32) {
    %c0_i32 = arith.constant 0 : i32
    %c0_i32_0 = arith.constant 0 : i32
    %c0_i32_1 = arith.constant 0 : i32
    return %c0_i32, %c0_i32_0 : i32, i32
  }
  func.func @transform_6(%arg0: i32) -> (i32, i32) {
    %c0_i32 = arith.constant 0 : i32
    %c0_i32_0 = arith.constant 0 : i32
    return %arg0, %c0_i32 : i32, i32
  }
}

</mosaic_0001>

<llo_original>
// kernel: tpu_custom_call.1
$region0: #{tpu_custom_call.1}
  #allocation0 [shape = 'u32[]', space=smem, size = 0x4, offset = 0x4, fixed_abs, tag = 'smem constant byte address 0x4 - core index']
  #allocation1 [shape = 'u32[144,128]{1,0:T(1,128)}', space=vmem, size = 0x12000, scoped, tag = 'internal scratch']
  %s0 = inlined_call_operand.hbm [shape: f32[32,128], index: 0, kind: input, shape index: {}]
  %s1 = inlined_call_operand.hbm [shape: bf16[128,2048], index: 1, kind: input, shape index: {}]
  %s2 = inlined_call_operand.hbm [shape: bf16[128,2048], index: 2, kind: input, shape index: {}]
  %s3 = inlined_call_operand.hbm [shape: bf16[128,2048], index: 3, kind: input, shape index: {}]
  %s4 = inlined_call_operand.hbm [shape: f32[1,2048], index: 4, kind: input, shape index: {}]
  %s5 = inlined_call_operand.hbm [shape: f32[1,2048], index: 5, kind: input, shape index: {}]
  %s6 = inlined_call_operand.hbm [shape: f32[32,2048], index: 6, kind: output, shape index: {}]
  %s7 = sld [smem:[#allocation0]]
  $region58: #{tpu_custom_call.1} parent=0
    _
  %s9 = ssub.s32 1, %s7
  %s10 = scalar_select 0, %s9, %s7
  $region1: #{tpu_custom_call.1} parent=0
    #allocation2 [shape = 'u8[16384]{0}', space=vmem, size = 0x4000, scoped, tag = 'input window, operand 0, single buffered']
    #allocation3 [shape = 's32[1]{0}', space=sflag, size = 0x4, scoped, tag = 'scoped memory for tpu_custom_call.1']
    #allocation4 [shape = 's32[1]{0}', space=sflag, size = 0x4, scoped, tag = 'scoped memory for tpu_custom_call.1']
    #allocation5 [shape = 'u8[524288]{0}', space=vmem, size = 0x80000, scoped, tag = 'input window, operand 1, single buffered']
    #allocation6 [shape = 's32[1]{0}', space=sflag, size = 0x4, scoped, tag = 'scoped memory for tpu_custom_call.1']
    #allocation7 [shape = 'u8[524288]{0}', space=vmem, size = 0x80000, scoped, tag = 'input window, operand 2, single buffered']
    #allocation8 [shape = 'u8[524288]{0}', space=vmem, size = 0x80000, scoped, tag = 'input window, operand 3, single buffered']
    #allocation9 [shape = 's32[1]{0}', space=sflag, size = 0x4, scoped, tag = 'scoped memory for tpu_custom_call.1']
    #allocation10 [shape = 'u8[8192]{0}', space=vmem, size = 0x2000, scoped, tag = 'input window, operand 4, single buffered']
    #allocation11 [shape = 'u8[8192]{0}', space=vmem, size = 0x2000, scoped, tag = 'input window, operand 5, single buffered']
    #allocation12 [shape = 's32[1]{0}', space=sflag, size = 0x4, scoped, tag = 'scoped memory for tpu_custom_call.1']
    #allocation13 [shape = 'u8[262144]{0}', space=vmem, size = 0x40000, scoped, tag = 'output window, operand 0, single buffered']
    %11 = vsyncpa [#allocation3], 0
    %12 = vsyncpa [#allocation6], 0
    %13 = vsyncpa [#allocation9], 0
    %14 = vsyncpa [#allocation12], 0
    %15 = vsyncpa [#allocation4], 0
    // Predicated region
    $region2: #{tpu_custom_call.1} parent=1 // pred_check
      _
    $region3: #{tpu_custom_call.1} parent=1 // pred_check_branch
      %17 = sbr.rel (0) target = $region5
    $region4: #{tpu_custom_call.1} parent=1 // pred_region
      %s19 = ssub.s32 512, 512
      %20 = vsyncadd [#allocation3], %s19
      %s21 = sshll.u32 [#allocation2], 4
      %s22 = int_to_ptr.vmem [resolvable:$true] %s21
      %27 = dma.hbm_to_vmem [thread:$0]  %s0, 512, %s22, [#allocation3], 128, 128, 8
    $region5: #{tpu_custom_call.1} parent=1 // pred_fallthru
      _
    // Predicated region
    $region6: #{tpu_custom_call.1} parent=1 // pred_check
      _
    $region7: #{tpu_custom_call.1} parent=1 // pred_check_branch
      %29 = sbr.rel (0) target = $region9
    $region8: #{tpu_custom_call.1} parent=1 // pred_region
      %s31 = ssub.s32 16384, 16384
      %32 = vsyncadd [#allocation6], %s31
      %s33 = sshll.u32 [#allocation5], 4
      %s34 = int_to_ptr.vmem [resolvable:$true] %s33
      %39 = dma.hbm_to_vmem [thread:$0]  %s1, 16384, %s34, [#allocation6], 1024, 1024, 64
    $region9: #{tpu_custom_call.1} parent=1 // pred_fallthru
      _
    // Predicated region
    $region10: #{tpu_custom_call.1} parent=1 // pred_check
      _
    $region11: #{tpu_custom_call.1} parent=1 // pred_check_branch
      %41 = sbr.rel (0) target = $region13
    $region12: #{tpu_custom_call.1} parent=1 // pred_region
      %s43 = ssub.s32 16384, 16384
      %44 = vsyncadd [#allocation6], %s43
      %s45 = sshll.u32 [#allocation7], 4
      %s46 = int_to_ptr.vmem [resolvable:$true] %s45
      %51 = dma.hbm_to_vmem [thread:$0]  %s2, 16384, %s46, [#allocation6], 1024, 1024, 64
    $region13: #{tpu_custom_call.1} parent=1 // pred_fallthru
      _
    // Predicated region
    $region14: #{tpu_custom_call.1} parent=1 // pred_check
      _
    $region15: #{tpu_custom_call.1} parent=1 // pred_check_branch
      %53 = sbr.rel (0) target = $region17
    $region16: #{tpu_custom_call.1} parent=1 // pred_region
      %s55 = ssub.s32 16384, 16384
      %56 = vsyncadd [#allocation9], %s55
      %s57 = sshll.u32 [#allocation8], 4
      %s58 = int_to_ptr.vmem [resolvable:$true] %s57
      %63 = dma.hbm_to_vmem [thread:$0]  %s3, 16384, %s58, [#allocation9], 1024, 1024, 64
    $region17: #{tpu_custom_call.1} parent=1 // pred_fallthru
      _
    // Predicated region
    $region18: #{tpu_custom_call.1} parent=1 // pred_check
      _
    $region19: #{tpu_custom_call.1} parent=1 // pred_check_branch
      %65 = sbr.rel (0) target = $region21
    $region20: #{tpu_custom_call.1} parent=1 // pred_region
      %s67 = ssub.s32 256, 256
      %68 = vsyncadd [#allocation9], %s67
      %s70 = sshll.u32 [#allocation10], 4
      %s71 = int_to_ptr.vmem [resolvable:$true] %s70
      %73 = dma.hbm_to_vmem [thread:$0]  %s4, 256, %s71, [#allocation9]
    $region21: #{tpu_custom_call.1} parent=1 // pred_fallthru
      _
    // Predicated region
    $region22: #{tpu_custom_call.1} parent=1 // pred_check
      _
    $region23: #{tpu_custom_call.1} parent=1 // pred_check_branch
      %75 = sbr.rel (0) target = $region25
    $region24: #{tpu_custom_call.1} parent=1 // pred_region
      %s77 = ssub.s32 256, 256
      %78 = vsyncadd [#allocation12], %s77
      %s80 = sshll.u32 [#allocation11], 4
      %s81 = int_to_ptr.vmem [resolvable:$true] %s80
      %83 = dma.hbm_to_vmem [thread:$0]  %s5, 256, %s81, [#allocation12]
    $region25: #{tpu_custom_call.1} parent=1 // pred_fallthru
      _
    // Predicated region
    $region26: #{tpu_custom_call.1} parent=1 // pred_check
      _
    $region27: #{tpu_custom_call.1} parent=1 // pred_check_branch
      %85 = sbr.rel (0) target = $region29
    $region28: #{tpu_custom_call.1} parent=1 // pred_region
      %86 = dma.done [#allocation3], 512
    $region29: #{tpu_custom_call.1} parent=1 // pred_fallthru
      _
    // Predicated region
    $region30: #{tpu_custom_call.1} parent=1 // pred_check
      _
    $region31: #{tpu_custom_call.1} parent=1 // pred_check_branch
      %88 = sbr.rel (0) target = $region33
    $region32: #{tpu_custom_call.1} parent=1 // pred_region
      %89 = dma.done [#allocation6], 16384
    $region33: #{tpu_custom_call.1} parent=1 // pred_fallthru
      _
    // Predicated region
    $region34: #{tpu_custom_call.1} parent=1 // pred_check
      _
    $region35: #{tpu_custom_call.1} parent=1 // pred_check_branch
      %91 = sbr.rel (0) target = $region37
    $region36: #{tpu_custom_call.1} parent=1 // pred_region
      %92 = dma.done [#allocation6], 16384
    $region37: #{tpu_custom_call.1} parent=1 // pred_fallthru
      _
    // Predicated region
    $region38: #{tpu_custom_call.1} parent=1 // pred_check
      _
    $region39: #{tpu_custom_call.1} parent=1 // pred_check_branch
      %94 = sbr.rel (0) target = $region41
    $region40: #{tpu_custom_call.1} parent=1 // pred_region
      %95 = dma.done [#allocation9], 16384
    $region41: #{tpu_custom_call.1} parent=1 // pred_fallthru
      _
    // Predicated region
    $region42: #{tpu_custom_call.1} parent=1 // pred_check
      _
    $region43: #{tpu_custom_call.1} parent=1 // pred_check_branch
      %97 = sbr.rel (0) target = $region45
    $region44: #{tpu_custom_call.1} parent=1 // pred_region
      %98 = dma.done [#allocation9], 256
    $region45: #{tpu_custom_call.1} parent=1 // pred_fallthru
      _
    // Predicated region
    $region46: #{tpu_custom_call.1} parent=1 // pred_check
      _
    $region47: #{tpu_custom_call.1} parent=1 // pred_check_branch
      %100 = sbr.rel (0) target = $region49
    $region48: #{tpu_custom_call.1} parent=1 // pred_region
      %101 = dma.done [#allocation12], 256
    $region49: #{tpu_custom_call.1} parent=1 // pred_fallthru
      _
    %v103 = vld [vmem:[#allocation2] sm:$0xff]
    %v104 = vld [vmem:[#allocation2 + $0x8] sm:$0xff]
    %v105 = vld [vmem:[#allocation2 + $0x10] sm:$0xff]
    %v106 = vld [vmem:[#allocation2 + $0x18] sm:$0xff]
    %v107 = vpack.c.bf16 %v104, %v103
    %v108 = vpack.c.bf16 %v106, %v105
    %v109 = vunpack.c.l.bf16 %v107
    %v110 = vunpack.c.h.bf16 %v107
    %v111 = vunpack.c.l.bf16 %v108
    %v112 = vunpack.c.h.bf16 %v108
    %v113 = vsub.f32 %v103, %v109
    %v114 = vsub.f32 %v104, %v110
    %v115 = vsub.f32 %v105, %v111
    %v116 = vsub.f32 %v106, %v112
    %v117 = vpack.c.bf16 %v114, %v113
    %v118 = vpack.c.bf16 %v116, %v115
    %v119 = vunpack.c.l.bf16 %v117
    %v120 = vunpack.c.h.bf16 %v117
    %v121 = vunpack.c.l.bf16 %v118
    %v122 = vunpack.c.h.bf16 %v118
    %v123 = vsub.f32 %v113, %v119
    %v124 = vsub.f32 %v114, %v120
    %v125 = vsub.f32 %v115, %v121
    %v126 = vsub.f32 %v116, %v122
    %v127 = vpack.c.bf16 %v124, %v123
    %v128 = vpack.c.bf16 %v126, %v125
    %v129 = vld [vmem:[#allocation5] sm:$0xff]
    %v130 = vld [vmem:[#allocation5 + $0x8] sm:$0xff]
    %v131 = vld [vmem:[#allocation5 + $0x10] sm:$0xff]
    %v132 = vld [vmem:[#allocation5 + $0x18] sm:$0xff]
    %v133 = vld [vmem:[#allocation5 + $0x20] sm:$0xff]
    %v134 = vld [vmem:[#allocation5 + $0x28] sm:$0xff]
    %v135 = vld [vmem:[#allocation5 + $0x30] sm:$0xff]
    %v136 = vld [vmem:[#allocation5 + $0x38] sm:$0xff]
    %v137 = vld [vmem:[#allocation5 + $0x40] sm:$0xff]
    %v138 = vld [vmem:[#allocation5 + $0x48] sm:$0xff]
    %v139 = vld [vmem:[#allocation5 + $0x50] sm:$0xff]
    %v140 = vld [vmem:[#allocation5 + $0x58] sm:$0xff]
    %v141 = vld [vmem:[#allocation5 + $0x60] sm:$0xff]
    %v142 = vld [vmem:[#allocation5 + $0x68] sm:$0xff]
    %v143 = vld [vmem:[#allocation5 + $0x70] sm:$0xff]
    %v144 = vld [vmem:[#allocation5 + $0x78] sm:$0xff]
    %v145 = vld [vmem:[#allocation5 + $0x80] sm:$0xff]
    %v146 = vld [vmem:[#allocation5 + $0x88] sm:$0xff]
    %v147 = vld [vmem:[#allocation5 + $0x90] sm:$0xff]
    %v148 = vld [vmem:[#allocation5 + $0x98] sm:$0xff]
    %v149 = vld [vmem:[#allocation5 + $0xa0] sm:$0xff]
    %v150 = vld [vmem:[#allocation5 + $0xa8] sm:$0xff]
    %v151 = vld [vmem:[#allocation5 + $0xb0] sm:$0xff]
    %v152 = vld [vmem:[#allocation5 + $0xb8] sm:$0xff]
    %v153 = vld [vmem:[#allocation5 + $0xc0] sm:$0xff]
    %v154 = vld [vmem:[#allocation5 + $0xc8] sm:$0xff]
    %v155 = vld [vmem:[#allocation5 + $0xd0] sm:$0xff]
    %v156 = vld [vmem:[#allocation5 + $0xd8] sm:$0xff]
    %v157 = vld [vmem:[#allocation5 + $0xe0] sm:$0xff]
    %v158 = vld [vmem:[#allocation5 + $0xe8] sm:$0xff]
    %v159 = vld [vmem:[#allocation5 + $0xf0] sm:$0xff]
    %v160 = vld [vmem:[#allocation5 + $0xf8] sm:$0xff]
    %v161 = vld [vmem:[#allocation5 + $0x100] sm:$0xff]
    %v162 = vld [vmem:[#allocation5 + $0x108] sm:$0xff]
    %v163 = vld [vmem:[#allocation5 + $0x110] sm:$0xff]
    %v164 = vld [vmem:[#allocation5 + $0x118] sm:$0xff]
    %v165 = vld [vmem:[#allocation5 + $0x120] sm:$0xff]
    %v166 = vld [vmem:[#allocation5 + $0x128] sm:$0xff]
    %v167 = vld [vmem:[#allocation5 + $0x130] sm:$0xff]
    %v168 = vld [vmem:[#allocation5 + $0x138] sm:$0xff]
    %v169 = vld [vmem:[#allocation5 + $0x140] sm:$0xff]
    %v170 = vld [vmem:[#allocation5 + $0x148] sm:$0xff]
    %v171 = vld [vmem:[#allocation5 + $0x150] sm:$0xff]
    %v172 = vld [vmem:[#allocation5 + $0x158] sm:$0xff]
    %v173 = vld [vmem:[#allocation5 + $0x160] sm:$0xff]
    %v174 = vld [vmem:[#allocation5 + $0x168] sm:$0xff]
    %v175 = vld [vmem:[#allocation5 + $0x170] sm:$0xff]
    %v176 = vld [vmem:[#allocation5 + $0x178] sm:$0xff]
    %v177 = vld [vmem:[#allocation5 + $0x180] sm:$0xff]
    %v178 = vld [vmem:[#allocation5 + $0x188] sm:$0xff]
    %v179 = vld [vmem:[#allocation5 + $0x190] sm:$0xff]
    %v180 = vld [vmem:[#allocation5 + $0x198] sm:$0xff]
    %v181 = vld [vmem:[#allocation5 + $0x1a0] sm:$0xff]
    %v182 = vld [vmem:[#allocation5 + $0x1a8] sm:$0xff]
    %v183 = vld [vmem:[#allocation5 + $0x1b0] sm:$0xff]
    %v184 = vld [vmem:[#allocation5 + $0x1b8] sm:$0xff]
    %v185 = vld [vmem:[#allocation5 + $0x1c0] sm:$0xff]
    %v186 = vld [vmem:[#allocation5 + $0x1c8] sm:$0xff]
    %v187 = vld [vmem:[#allocation5 + $0x1d0] sm:$0xff]
    %v188 = vld [vmem:[#allocation5 + $0x1d8] sm:$0xff]
    %v189 = vld [vmem:[#allocation5 + $0x1e0] sm:$0xff]
    %v190 = vld [vmem:[#allocation5 + $0x1e8] sm:$0xff]
    %v191 = vld [vmem:[#allocation5 + $0x1f0] sm:$0xff]
    %v192 = vld [vmem:[#allocation5 + $0x1f8] sm:$0xff]
    %v193 = vld [vmem:[#allocation5 + $0x200] sm:$0xff]
    %v194 = vld [vmem:[#allocation5 + $0x208] sm:$0xff]
    %v195 = vld [vmem:[#allocation5 + $0x210] sm:$0xff]
    %v196 = vld [vmem:[#allocation5 + $0x218] sm:$0xff]
    %v197 = vld [vmem:[#allocation5 + $0x220] sm:$0xff]
    %v198 = vld [vmem:[#allocation5 + $0x228] sm:$0xff]
    %v199 = vld [vmem:[#allocation5 + $0x230] sm:$0xff]
    %v200 = vld [vmem:[#allocation5 + $0x238] sm:$0xff]
    %v201 = vld [vmem:[#allocation5 + $0x240] sm:$0xff]
    %v202 = vld [vmem:[#allocation5 + $0x248] sm:$0xff]
    %v203 = vld [vmem:[#allocation5 + $0x250] sm:$0xff]
    %v204 = vld [vmem:[#allocation5 + $0x258] sm:$0xff]
    %v205 = vld [vmem:[#allocation5 + $0x260] sm:$0xff]
    %v206 = vld [vmem:[#allocation5 + $0x268] sm:$0xff]
    %v207 = vld [vmem:[#allocation5 + $0x270] sm:$0xff]
    %v208 = vld [vmem:[#allocation5 + $0x278] sm:$0xff]
    %v209 = vld [vmem:[#allocation5 + $0x280] sm:$0xff]
    %v210 = vld [vmem:[#allocation5 + $0x288] sm:$0xff]
    %v211 = vld [vmem:[#allocation5 + $0x290] sm:$0xff]
    %v212 = vld [vmem:[#allocation5 + $0x298] sm:$0xff]
    %v213 = vld [vmem:[#allocation5 + $0x2a0] sm:$0xff]
    %v214 = vld [vmem:[#allocation5 + $0x2a8] sm:$0xff]
    %v215 = vld [vmem:[#allocation5 + $0x2b0] sm:$0xff]
    %v216 = vld [vmem:[#allocation5 + $0x2b8] sm:$0xff]
    %v217 = vld [vmem:[#allocation5 + $0x2c0] sm:$0xff]
    %v218 = vld [vmem:[#allocation5 + $0x2c8] sm:$0xff]
    %v219 = vld [vmem:[#allocation5 + $0x2d0] sm:$0xff]
    %v220 = vld [vmem:[#allocation5 + $0x2d8] sm:$0xff]
    %v221 = vld [vmem:[#allocation5 + $0x2e0] sm:$0xff]
    %v222 = vld [vmem:[#allocation5 + $0x2e8] sm:$0xff]
    %v223 = vld [vmem:[#allocation5 + $0x2f0] sm:$0xff]
    %v224 = vld [vmem:[#allocation5 + $0x2f8] sm:$0xff]
    %v225 = vld [vmem:[#allocation5 + $0x300] sm:$0xff]
    %v226 = vld [vmem:[#allocation5 + $0x308] sm:$0xff]
    %v227 = vld [vmem:[#allocation5 + $0x310] sm:$0xff]
    %v228 = vld [vmem:[#allocation5 + $0x318] sm:$0xff]
    %v229 = vld [vmem:[#allocation5 + $0x320] sm:$0xff]
    %v230 = vld [vmem:[#allocation5 + $0x328] sm:$0xff]
    %v231 = vld [vmem:[#allocation5 + $0x330] sm:$0xff]
    %v232 = vld [vmem:[#allocation5 + $0x338] sm:$0xff]
    %v233 = vld [vmem:[#allocation5 + $0x340] sm:$0xff]
    %v234 = vld [vmem:[#allocation5 + $0x348] sm:$0xff]
    %v235 = vld [vmem:[#allocation5 + $0x350] sm:$0xff]
    %v236 = vld [vmem:[#allocation5 + $0x358] sm:$0xff]
    %v237 = vld [vmem:[#allocation5 + $0x360] sm:$0xff]
    %v238 = vld [vmem:[#allocation5 + $0x368] sm:$0xff]
    %v239 = vld [vmem:[#allocation5 + $0x370] sm:$0xff]
    %v240 = vld [vmem:[#allocation5 + $0x378] sm:$0xff]
    %v241 = vld [vmem:[#allocation5 + $0x380] sm:$0xff]
    %v242 = vld [vmem:[#allocation5 + $0x388] sm:$0xff]
    %v243 = vld [vmem:[#allocation5 + $0x390] sm:$0xff]
    %v244 = vld [vmem:[#allocation5 + $0x398] sm:$0xff]
    %v245 = vld [vmem:[#allocation5 + $0x3a0] sm:$0xff]
    %v246 = vld [vmem:[#allocation5 + $0x3a8] sm:$0xff]
    %v247 = vld [vmem:[#allocation5 + $0x3b0] sm:$0xff]
    %v248 = vld [vmem:[#allocation5 + $0x3b8] sm:$0xff]
    %v249 = vld [vmem:[#allocation5 + $0x3c0] sm:$0xff]
    %v250 = vld [vmem:[#allocation5 + $0x3c8] sm:$0xff]
    %v251 = vld [vmem:[#allocation5 + $0x3d0] sm:$0xff]
    %v252 = vld [vmem:[#allocation5 + $0x3d8] sm:$0xff]
    %v253 = vld [vmem:[#allocation5 + $0x3e0] sm:$0xff]
    %v254 = vld [vmem:[#allocation5 + $0x3e8] sm:$0xff]
    %v255 = vld [vmem:[#allocation5 + $0x3f0] sm:$0xff]
    %v256 = vld [vmem:[#allocation5 + $0x3f8] sm:$0xff]
    %v257 = vld [vmem:[#allocation7] sm:$0xff]
    %v258 = vld [vmem:[#allocation7 + $0x8] sm:$0xff]
    %v259 = vld [vmem:[#allocation7 + $0x10] sm:$0xff]
    %v260 = vld [vmem:[#allocation7 + $0x18] sm:$0xff]
    %v261 = vld [vmem:[#allocation7 + $0x20] sm:$0xff]
    %v262 = vld [vmem:[#allocation7 + $0x28] sm:$0xff]
    %v263 = vld [vmem:[#allocation7 + $0x30] sm:$0xff]
    %v264 = vld [vmem:[#allocation7 + $0x38] sm:$0xff]
    %v265 = vld [vmem:[#allocation7 + $0x40] sm:$0xff]
    %v266 = vld [vmem:[#allocation7 + $0x48] sm:$0xff]
    %v267 = vld [vmem:[#allocation7 + $0x50] sm:$0xff]
    %v268 = vld [vmem:[#allocation7 + $0x58] sm:$0xff]
    %v269 = vld [vmem:[#allocation7 + $0x60] sm:$0xff]
    %v270 = vld [vmem:[#allocation7 + $0x68] sm:$0xff]
    %v271 = vld [vmem:[#allocation7 + $0x70] sm:$0xff]
    %v272 = vld [vmem:[#allocation7 + $0x78] sm:$0xff]
    %v273 = vld [vmem:[#allocation7 + $0x80] sm:$0xff]
    %v274 = vld [vmem:[#allocation7 + $0x88] sm:$0xff]
    %v275 = vld [vmem:[#allocation7 + $0x90] sm:$0xff]
    %v276 = vld [vmem:[#allocation7 + $0x98] sm:$0xff]
    %v277 = vld [vmem:[#allocation7 + $0xa0] sm:$0xff]
    %v278 = vld [vmem:[#allocation7 + $0xa8] sm:$0xff]
    %v279 = vld [vmem:[#allocation7 + $0xb0] sm:$0xff]
    %v280 = vld [vmem:[#allocation7 + $0xb8] sm:$0xff]
    %v281 = vld [vmem:[#allocation7 + $0xc0] sm:$0xff]
    %v282 = vld [vmem:[#allocation7 + $0xc8] sm:$0xff]
    %v283 = vld [vmem:[#allocation7 + $0xd0] sm:$0xff]
    %v284 = vld [vmem:[#allocation7 + $0xd8] sm:$0xff]
    %v285 = vld [vmem:[#allocation7 + $0xe0] sm:$0xff]
    %v286 = vld [vmem:[#allocation7 + $0xe8] sm:$0xff]
    %v287 = vld [vmem:[#allocation7 + $0xf0] sm:$0xff]
    %v288 = vld [vmem:[#allocation7 + $0xf8] sm:$0xff]
    %v289 = vld [vmem:[#allocation7 + $0x100] sm:$0xff]
    %v290 = vld [vmem:[#allocation7 + $0x108] sm:$0xff]
    %v291 = vld [vmem:[#allocation7 + $0x110] sm:$0xff]
    %v292 = vld [vmem:[#allocation7 + $0x118] sm:$0xff]
    %v293 = vld [vmem:[#allocation7 + $0x120] sm:$0xff]
    %v294 = vld [vmem:[#allocation7 + $0x128] sm:$0xff]
    %v295 = vld [vmem:[#allocation7 + $0x130] sm:$0xff]
    %v296 = vld [vmem:[#allocation7 + $0x138] sm:$0xff]
    %v297 = vld [vmem:[#allocation7 + $0x140] sm:$0xff]
    %v298 = vld [vmem:[#allocation7 + $0x148] sm:$0xff]
    %v299 = vld [vmem:[#allocation7 + $0x150] sm:$0xff]
    %v300 = vld [vmem:[#allocation7 + $0x158] sm:$0xff]
    %v301 = vld [vmem:[#allocation7 + $0x160] sm:$0xff]
    %v302 = vld [vmem:[#allocation7 + $0x168] sm:$0xff]
    %v303 = vld [vmem:[#allocation7 + $0x170] sm:$0xff]
    %v304 = vld [vmem:[#allocation7 + $0x178] sm:$0xff]
    %v305 = vld [vmem:[#allocation7 + $0x180] sm:$0xff]
    %v306 = vld [vmem:[#allocation7 + $0x188] sm:$0xff]
    %v307 = vld [vmem:[#allocation7 + $0x190] sm:$0xff]
    %v308 = vld [vmem:[#allocation7 + $0x198] sm:$0xff]
    %v309 = vld [vmem:[#allocation7 + $0x1a0] sm:$0xff]
    %v310 = vld [vmem:[#allocation7 + $0x1a8] sm:$0xff]
    %v311 = vld [vmem:[#allocation7 + $0x1b0] sm:$0xff]
    %v312 = vld [vmem:[#allocation7 + $0x1b8] sm:$0xff]
    %v313 = vld [vmem:[#allocation7 + $0x1c0] sm:$0xff]
    %v314 = vld [vmem:[#allocation7 + $0x1c8] sm:$0xff]
    %v315 = vld [vmem:[#allocation7 + $0x1d0] sm:$0xff]
    %v316 = vld [vmem:[#allocation7 + $0x1d8] sm:$0xff]
    %v317 = vld [vmem:[#allocation7 + $0x1e0] sm:$0xff]
    %v318 = vld [vmem:[#allocation7 + $0x1e8] sm:$0xff]
    %v319 = vld [vmem:[#allocation7 + $0x1f0] sm:$0xff]
    %v320 = vld [vmem:[#allocation7 + $0x1f8] sm:$0xff]
    %v321 = vld [vmem:[#allocation7 + $0x200] sm:$0xff]
    %v322 = vld [vmem:[#allocation7 + $0x208] sm:$0xff]
    %v323 = vld [vmem:[#allocation7 + $0x210] sm:$0xff]
    %v324 = vld [vmem:[#allocation7 + $0x218] sm:$0xff]
    %v325 = vld [vmem:[#allocation7 + $0x220] sm:$0xff]
    %v326 = vld [vmem:[#allocation7 + $0x228] sm:$0xff]
    %v327 = vld [vmem:[#allocation7 + $0x230] sm:$0xff]
    %v328 = vld [vmem:[#allocation7 + $0x238] sm:$0xff]
    %v329 = vld [vmem:[#allocation7 + $0x240] sm:$0xff]
    %v330 = vld [vmem:[#allocation7 + $0x248] sm:$0xff]
    %v331 = vld [vmem:[#allocation7 + $0x250] sm:$0xff]
    %v332 = vld [vmem:[#allocation7 + $0x258] sm:$0xff]
    %v333 = vld [vmem:[#allocation7 + $0x260] sm:$0xff]
    %v334 = vld [vmem:[#allocation7 + $0x268] sm:$0xff]
    %v335 = vld [vmem:[#allocation7 + $0x270] sm:$0xff]
    %v336 = vld [vmem:[#allocation7 + $0x278] sm:$0xff]
    %v337 = vld [vmem:[#allocation7 + $0x280] sm:$0xff]
    %v338 = vld [vmem:[#allocation7 + $0x288] sm:$0xff]
    %v339 = vld [vmem:[#allocation7 + $0x290] sm:$0xff]
    %v340 = vld [vmem:[#allocation7 + $0x298] sm:$0xff]
    %v341 = vld [vmem:[#allocation7 + $0x2a0] sm:$0xff]
    %v342 = vld [vmem:[#allocation7 + $0x2a8] sm:$0xff]
    %v343 = vld [vmem:[#allocation7 + $0x2b0] sm:$0xff]
    %v344 = vld [vmem:[#allocation7 + $0x2b8] sm:$0xff]
    %v345 = vld [vmem:[#allocation7 + $0x2c0] sm:$0xff]
    %v346 = vld [vmem:[#allocation7 + $0x2c8] sm:$0xff]
    %v347 = vld [vmem:[#allocation7 + $0x2d0] sm:$0xff]
    %v348 = vld [vmem:[#allocation7 + $0x2d8] sm:$0xff]
    %v349 = vld [vmem:[#allocation7 + $0x2e0] sm:$0xff]
    %v350 = vld [vmem:[#allocation7 + $0x2e8] sm:$0xff]
    %v351 = vld [vmem:[#allocation7 + $0x2f0] sm:$0xff]
    %v352 = vld [vmem:[#allocation7 + $0x2f8] sm:$0xff]
    %v353 = vld [vmem:[#allocation7 + $0x300] sm:$0xff]
    %v354 = vld [vmem:[#allocation7 + $0x308] sm:$0xff]
    %v355 = vld [vmem:[#allocation7 + $0x310] sm:$0xff]
    %v356 = vld [vmem:[#allocation7 + $0x318] sm:$0xff]
    %v357 = vld [vmem:[#allocation7 + $0x320] sm:$0xff]
    %v358 = vld [vmem:[#allocation7 + $0x328] sm:$0xff]
    %v359 = vld [vmem:[#allocation7 + $0x330] sm:$0xff]
    %v360 = vld [vmem:[#allocation7 + $0x338] sm:$0xff]
    %v361 = vld [vmem:[#allocation7 + $0x340] sm:$0xff]
    %v362 = vld [vmem:[#allocation7 + $0x348] sm:$0xff]
    %v363 = vld [vmem:[#allocation7 + $0x350] sm:$0xff]
    %v364 = vld [vmem:[#allocation7 + $0x358] sm:$0xff]
    %v365 = vld [vmem:[#allocation7 + $0x360] sm:$0xff]
    %v366 = vld [vmem:[#allocation7 + $0x368] sm:$0xff]
    %v367 = vld [vmem:[#allocation7 + $0x370] sm:$0xff]
    %v368 = vld [vmem:[#allocation7 + $0x378] sm:$0xff]
    %v369 = vld [vmem:[#allocation7 + $0x380] sm:$0xff]
    %v370 = vld [vmem:[#allocation7 + $0x388] sm:$0xff]
    %v371 = vld [vmem:[#allocation7 + $0x390] sm:$0xff]
    %v372 = vld [vmem:[#allocation7 + $0x398] sm:$0xff]
    %v373 = vld [vmem:[#allocation7 + $0x3a0] sm:$0xff]
    %v374 = vld [vmem:[#allocation7 + $0x3a8] sm:$0xff]
    %v375 = vld [vmem:[#allocation7 + $0x3b0] sm:$0xff]
    %v376 = vld [vmem:[#allocation7 + $0x3b8] sm:$0xff]
    %v377 = vld [vmem:[#allocation7 + $0x3c0] sm:$0xff]
    %v378 = vld [vmem:[#allocation7 + $0x3c8] sm:$0xff]
    %v379 = vld [vmem:[#allocation7 + $0x3d0] sm:$0xff]
    %v380 = vld [vmem:[#allocation7 + $0x3d8] sm:$0xff]
    %v381 = vld [vmem:[#allocation7 + $0x3e0] sm:$0xff]
    %v382 = vld [vmem:[#allocation7 + $0x3e8] sm:$0xff]
    %v383 = vld [vmem:[#allocation7 + $0x3f0] sm:$0xff]
    %v384 = vld [vmem:[#allocation7 + $0x3f8] sm:$0xff]
    %v513 = vunpack.c.l.b16 %v257
    %v514 = vunpack.c.h.b16 %v257
    %v515 = vunpack.c.l.b16 %v258
    %v516 = vunpack.c.h.b16 %v258
    %v517 = vunpack.c.l.b16 %v259
    %v518 = vunpack.c.h.b16 %v259
    %v519 = vunpack.c.l.b16 %v260
    %v520 = vunpack.c.h.b16 %v260
    %v521 = vunpack.c.l.b16 %v261
    %v522 = vunpack.c.h.b16 %v261
    %v523 = vunpack.c.l.b16 %v262
    %v524 = vunpack.c.h.b16 %v262
    %v525 = vunpack.c.l.b16 %v263
    %v526 = vunpack.c.h.b16 %v263
    %v527 = vunpack.c.l.b16 %v264
    %v528 = vunpack.c.h.b16 %v264
    %v529 = vunpack.c.l.b16 %v265
    %v530 = vunpack.c.h.b16 %v265
    %v531 = vunpack.c.l.b16 %v266
    %v532 = vunpack.c.h.b16 %v266
    %v533 = vunpack.c.l.b16 %v267
    %v534 = vunpack.c.h.b16 %v267
    %v535 = vunpack.c.l.b16 %v268
    %v536 = vunpack.c.h.b16 %v268
    %v537 = vunpack.c.l.b16 %v269
    %v538 = vunpack.c.h.b16 %v269
    %v539 = vunpack.c.l.b16 %v270
    %v540 = vunpack.c.h.b16 %v270
    %v541 = vunpack.c.l.b16 %v271
    %v542 = vunpack.c.h.b16 %v271
    %v543 = vunpack.c.l.b16 %v272
    %v544 = vunpack.c.h.b16 %v272
    %v545 = vunpack.c.l.b16 %v273
    %v546 = vunpack.c.h.b16 %v273
    %v547 = vunpack.c.l.b16 %v274
    %v548 = vunpack.c.h.b16 %v274
    %v549 = vunpack.c.l.b16 %v275
    %v550 = vunpack.c.h.b16 %v275
    %v551 = vunpack.c.l.b16 %v276
    %v552 = vunpack.c.h.b16 %v276
    %v553 = vunpack.c.l.b16 %v277
    %v554 = vunpack.c.h.b16 %v277
    %v555 = vunpack.c.l.b16 %v278
    %v556 = vunpack.c.h.b16 %v278
    %v557 = vunpack.c.l.b16 %v279
    %v558 = vunpack.c.h.b16 %v279
    %v559 = vunpack.c.l.b16 %v280
    %v560 = vunpack.c.h.b16 %v280
    %v561 = vunpack.c.l.b16 %v281
    %v562 = vunpack.c.h.b16 %v281
    %v563 = vunpack.c.l.b16 %v282
    %v564 = vunpack.c.h.b16 %v282
    %v565 = vunpack.c.l.b16 %v283
    %v566 = vunpack.c.h.b16 %v283
    %v567 = vunpack.c.l.b16 %v284
    %v568 = vunpack.c.h.b16 %v284
    %v569 = vunpack.c.l.b16 %v285
    %v570 = vunpack.c.h.b16 %v285
    %v571 = vunpack.c.l.b16 %v286
    %v572 = vunpack.c.h.b16 %v286
    %v573 = vunpack.c.l.b16 %v287
    %v574 = vunpack.c.h.b16 %v287
    %v575 = vunpack.c.l.b16 %v288
    %v576 = vunpack.c.h.b16 %v288
    %v577 = vunpack.c.l.b16 %v289
    %v578 = vunpack.c.h.b16 %v289
    %v579 = vunpack.c.l.b16 %v290
    %v580 = vunpack.c.h.b16 %v290
    %v581 = vunpack.c.l.b16 %v291
    %v582 = vunpack.c.h.b16 %v291
    %v583 = vunpack.c.l.b16 %v292
    %v584 = vunpack.c.h.b16 %v292
    %v585 = vunpack.c.l.b16 %v293
    %v586 = vunpack.c.h.b16 %v293
    %v587 = vunpack.c.l.b16 %v294
    %v588 = vunpack.c.h.b16 %v294
    %v589 = vunpack.c.l.b16 %v295
    %v590 = vunpack.c.h.b16 %v295
    %v591 = vunpack.c.l.b16 %v296
    %v592 = vunpack.c.h.b16 %v296
    %v593 = vunpack.c.l.b16 %v297
    %v594 = vunpack.c.h.b16 %v297
    %v595 = vunpack.c.l.b16 %v298
    %v596 = vunpack.c.h.b16 %v298
    %v597 = vunpack.c.l.b16 %v299
    %v598 = vunpack.c.h.b16 %v299
    %v599 = vunpack.c.l.b16 %v300
    %v600 = vunpack.c.h.b16 %v300
    %v601 = vunpack.c.l.b16 %v301
    %v602 = vunpack.c.h.b16 %v301
    %v603 = vunpack.c.l.b16 %v302
    %v604 = vunpack.c.h.b16 %v302
    %v605 = vunpack.c.l.b16 %v303
    %v606 = vunpack.c.h.b16 %v303
    %v607 = vunpack.c.l.b16 %v304
    %v608 = vunpack.c.h.b16 %v304
    %v609 = vunpack.c.l.b16 %v305
    %v610 = vunpack.c.h.b16 %v305
    %v611 = vunpack.c.l.b16 %v306
    %v612 = vunpack.c.h.b16 %v306
    %v613 = vunpack.c.l.b16 %v307
    %v614 = vunpack.c.h.b16 %v307
    %v615 = vunpack.c.l.b16 %v308
    %v616 = vunpack.c.h.b16 %v308
    %v617 = vunpack.c.l.b16 %v309
    %v618 = vunpack.c.h.b16 %v309
    %v619 = vunpack.c.l.b16 %v310
    %v620 = vunpack.c.h.b16 %v310
    %v621 = vunpack.c.l.b16 %v311
    %v622 = vunpack.c.h.b16 %v311
    %v623 = vunpack.c.l.b16 %v312
    %v624 = vunpack.c.h.b16 %v312
    %v625 = vunpack.c.l.b16 %v313
    %v626 = vunpack.c.h.b16 %v313
    %v627 = vunpack.c.l.b16 %v314
    %v628 = vunpack.c.h.b16 %v314
    %v629 = vunpack.c.l.b16 %v315
    %v630 = vunpack.c.h.b16 %v315
    %v631 = vunpack.c.l.b16 %v316
    %v632 = vunpack.c.h.b16 %v316
    %v633 = vunpack.c.l.b16 %v317
    %v634 = vunpack.c.h.b16 %v317
    %v635 = vunpack.c.l.b16 %v318
    %v636 = vunpack.c.h.b16 %v318
    %v637 = vunpack.c.l.b16 %v319
    %v638 = vunpack.c.h.b16 %v319
    %v639 = vunpack.c.l.b16 %v320
    %v640 = vunpack.c.h.b16 %v320
    %v641 = vunpack.c.l.b16 %v321
    %v642 = vunpack.c.h.b16 %v321
    %v643 = vunpack.c.l.b16 %v322
    %v644 = vunpack.c.h.b16 %v322
    %v645 = vunpack.c.l.b16 %v323
    %v646 = vunpack.c.h.b16 %v323
    %v647 = vunpack.c.l.b16 %v324
    %v648 = vunpack.c.h.b16 %v324
    %v649 = vunpack.c.l.b16 %v325
    %v650 = vunpack.c.h.b16 %v325
    %v651 = vunpack.c.l.b16 %v326
    %v652 = vunpack.c.h.b16 %v326
    %v653 = vunpack.c.l.b16 %v327
    %v654 = vunpack.c.h.b16 %v327
    %v655 = vunpack.c.l.b16 %v328
    %v656 = vunpack.c.h.b16 %v328
    %v657 = vunpack.c.l.b16 %v329
    %v658 = vunpack.c.h.b16 %v329
    %v659 = vunpack.c.l.b16 %v330
    %v660 = vunpack.c.h.b16 %v330
    %v661 = vunpack.c.l.b16 %v331
    %v662 = vunpack.c.h.b16 %v331
    %v663 = vunpack.c.l.b16 %v332
    %v664 = vunpack.c.h.b16 %v332
    %v665 = vunpack.c.l.b16 %v333
    %v666 = vunpack.c.h.b16 %v333
    %v667 = vunpack.c.l.b16 %v334
    %v668 = vunpack.c.h.b16 %v334
    %v669 = vunpack.c.l.b16 %v335
    %v670 = vunpack.c.h.b16 %v335
    %v671 = vunpack.c.l.b16 %v336
    %v672 = vunpack.c.h.b16 %v336
    %v673 = vunpack.c.l.b16 %v337
    %v674 = vunpack.c.h.b16 %v337
    %v675 = vunpack.c.l.b16 %v338
    %v676 = vunpack.c.h.b16 %v338
    %v677 = vunpack.c.l.b16 %v339
    %v678 = vunpack.c.h.b16 %v339
    %v679 = vunpack.c.l.b16 %v340
    %v680 = vunpack.c.h.b16 %v340
    %v681 = vunpack.c.l.b16 %v341
    %v682 = vunpack.c.h.b16 %v341
    %v683 = vunpack.c.l.b16 %v342
    %v684 = vunpack.c.h.b16 %v342
    %v685 = vunpack.c.l.b16 %v343
    %v686 = vunpack.c.h.b16 %v343
    %v687 = vunpack.c.l.b16 %v344
    %v688 = vunpack.c.h.b16 %v344
    %v689 = vunpack.c.l.b16 %v345
    %v690 = vunpack.c.h.b16 %v345
    %v691 = vunpack.c.l.b16 %v346
    %v692 = vunpack.c.h.b16 %v346
    %v693 = vunpack.c.l.b16 %v347
    %v694 = vunpack.c.h.b16 %v347
    %v695 = vunpack.c.l.b16 %v348
    %v696 = vunpack.c.h.b16 %v348
    %v697 = vunpack.c.l.b16 %v349
    %v698 = vunpack.c.h.b16 %v349
    %v699 = vunpack.c.l.b16 %v350
    %v700 = vunpack.c.h.b16 %v350
    %v701 = vunpack.c.l.b16 %v351
    %v702 = vunpack.c.h.b16 %v351
    %v703 = vunpack.c.l.b16 %v352
    %v704 = vunpack.c.h.b16 %v352
    %v705 = vunpack.c.l.b16 %v353
    %v706 = vunpack.c.h.b16 %v353
    %v707 = vunpack.c.l.b16 %v354
    %v708 = vunpack.c.h.b16 %v354
    %v709 = vunpack.c.l.b16 %v355
    %v710 = vunpack.c.h.b16 %v355
    %v711 = vunpack.c.l.b16 %v356
    %v712 = vunpack.c.h.b16 %v356
    %v713 = vunpack.c.l.b16 %v357
    %v714 = vunpack.c.h.b16 %v357
    %v715 = vunpack.c.l.b16 %v358
    %v716 = vunpack.c.h.b16 %v358
    %v717 = vunpack.c.l.b16 %v359
    %v718 = vunpack.c.h.b16 %v359
    %v719 = vunpack.c.l.b16 %v360
    %v720 = vunpack.c.h.b16 %v360
    %v721 = vunpack.c.l.b16 %v361
    %v722 = vunpack.c.h.b16 %v361
    %v723 = vunpack.c.l.b16 %v362
    %v724 = vunpack.c.h.b16 %v362
    %v725 = vunpack.c.l.b16 %v363
    %v726 = vunpack.c.h.b16 %v363
    %v727 = vunpack.c.l.b16 %v364
    %v728 = vunpack.c.h.b16 %v364
    %v729 = vunpack.c.l.b16 %v365
    %v730 = vunpack.c.h.b16 %v365
    %v731 = vunpack.c.l.b16 %v366
    %v732 = vunpack.c.h.b16 %v366
    %v733 = vunpack.c.l.b16 %v367
    %v734 = vunpack.c.h.b16 %v367
    %v735 = vunpack.c.l.b16 %v368
    %v736 = vunpack.c.h.b16 %v368
    %v737 = vunpack.c.l.b16 %v369
    %v738 = vunpack.c.h.b16 %v369
    %v739 = vunpack.c.l.b16 %v370
    %v740 = vunpack.c.h.b16 %v370
    %v741 = vunpack.c.l.b16 %v371
    %v742 = vunpack.c.h.b16 %v371
    %v743 = vunpack.c.l.b16 %v372
    %v744 = vunpack.c.h.b16 %v372
    %v745 = vunpack.c.l.b16 %v373
    %v746 = vunpack.c.h.b16 %v373
    %v747 = vunpack.c.l.b16 %v374
    %v748 = vunpack.c.h.b16 %v374
    %v749 = vunpack.c.l.b16 %v375
    %v750 = vunpack.c.h.b16 %v375
    %v751 = vunpack.c.l.b16 %v376
    %v752 = vunpack.c.h.b16 %v376
    %v753 = vunpack.c.l.b16 %v377
    %v754 = vunpack.c.h.b16 %v377
    %v755 = vunpack.c.l.b16 %v378
    %v756 = vunpack.c.h.b16 %v378
    %v757 = vunpack.c.l.b16 %v379
    %v758 = vunpack.c.h.b16 %v379
    %v759 = vunpack.c.l.b16 %v380
    %v760 = vunpack.c.h.b16 %v380
    %v761 = vunpack.c.l.b16 %v381
    %v762 = vunpack.c.h.b16 %v381
    %v763 = vunpack.c.l.b16 %v382
    %v764 = vunpack.c.h.b16 %v382
    %v765 = vunpack.c.l.b16 %v383
    %v766 = vunpack.c.h.b16 %v383
    %v767 = vunpack.c.l.b16 %v384
    %v768 = vunpack.c.h.b16 %v384
    %v769 = vpack.c.b16 %v529, %v513
    %v770 = vpack.c.b16 %v530, %v514
    %v771 = vpack.c.b16 %v531, %v515
    %v772 = vpack.c.b16 %v532, %v516
    %v773 = vpack.c.b16 %v533, %v517
    %v774 = vpack.c.b16 %v534, %v518
    %v775 = vpack.c.b16 %v535, %v519
    %v776 = vpack.c.b16 %v536, %v520
    %v777 = vpack.c.b16 %v537, %v521
    %v778 = vpack.c.b16 %v538, %v522
    %v779 = vpack.c.b16 %v539, %v523
    %v780 = vpack.c.b16 %v540, %v524
    %v781 = vpack.c.b16 %v541, %v525
    %v782 = vpack.c.b16 %v542, %v526
    %v783 = vpack.c.b16 %v543, %v527
    %v784 = vpack.c.b16 %v544, %v528
    %v785 = vpack.c.b16 %v561, %v545
    %v786 = vpack.c.b16 %v562, %v546
    %v787 = vpack.c.b16 %v563, %v547
    %v788 = vpack.c.b16 %v564, %v548
    %v789 = vpack.c.b16 %v565, %v549
    %v790 = vpack.c.b16 %v566, %v550
    %v791 = vpack.c.b16 %v567, %v551
    %v792 = vpack.c.b16 %v568, %v552
    %v793 = vpack.c.b16 %v569, %v553
    %v794 = vpack.c.b16 %v570, %v554
    %v795 = vpack.c.b16 %v571, %v555
    %v796 = vpack.c.b16 %v572, %v556
    %v797 = vpack.c.b16 %v573, %v557
    %v798 = vpack.c.b16 %v574, %v558
    %v799 = vpack.c.b16 %v575, %v559
    %v800 = vpack.c.b16 %v576, %v560
    %v801 = vpack.c.b16 %v593, %v577
    %v802 = vpack.c.b16 %v594, %v578
    %v803 = vpack.c.b16 %v595, %v579
    %v804 = vpack.c.b16 %v596, %v580
    %v805 = vpack.c.b16 %v597, %v581
    %v806 = vpack.c.b16 %v598, %v582
    %v807 = vpack.c.b16 %v599, %v583
    %v808 = vpack.c.b16 %v600, %v584
    %v809 = vpack.c.b16 %v601, %v585
    %v810 = vpack.c.b16 %v602, %v586
    %v811 = vpack.c.b16 %v603, %v587
    %v812 = vpack.c.b16 %v604, %v588
    %v813 = vpack.c.b16 %v605, %v589
    %v814 = vpack.c.b16 %v606, %v590
    %v815 = vpack.c.b16 %v607, %v591
    %v816 = vpack.c.b16 %v608, %v592
    %v817 = vpack.c.b16 %v625, %v609
    %v818 = vpack.c.b16 %v626, %v610
    %v819 = vpack.c.b16 %v627, %v611
    %v820 = vpack.c.b16 %v628, %v612
    %v821 = vpack.c.b16 %v629, %v613
    %v822 = vpack.c.b16 %v630, %v614
    %v823 = vpack.c.b16 %v631, %v615
    %v824 = vpack.c.b16 %v632, %v616
    %v825 = vpack.c.b16 %v633, %v617
    %v826 = vpack.c.b16 %v634, %v618
    %v827 = vpack.c.b16 %v635, %v619
    %v828 = vpack.c.b16 %v636, %v620
    %v829 = vpack.c.b16 %v637, %v621
    %v830 = vpack.c.b16 %v638, %v622
    %v831 = vpack.c.b16 %v639, %v623
    %v832 = vpack.c.b16 %v640, %v624
    %v833 = vpack.c.b16 %v657, %v641
    %v834 = vpack.c.b16 %v658, %v642
    %v835 = vpack.c.b16 %v659, %v643
    %v836 = vpack.c.b16 %v660, %v644
    %v837 = vpack.c.b16 %v661, %v645
    %v838 = vpack.c.b16 %v662, %v646
    %v839 = vpack.c.b16 %v663, %v647
    %v840 = vpack.c.b16 %v664, %v648
    %v841 = vpack.c.b16 %v665, %v649
    %v842 = vpack.c.b16 %v666, %v650
    %v843 = vpack.c.b16 %v667, %v651
    %v844 = vpack.c.b16 %v668, %v652
    %v845 = vpack.c.b16 %v669, %v653
    %v846 = vpack.c.b16 %v670, %v654
    %v847 = vpack.c.b16 %v671, %v655
    %v848 = vpack.c.b16 %v672, %v656
    %v849 = vpack.c.b16 %v689, %v673
    %v850 = vpack.c.b16 %v690, %v674
    %v851 = vpack.c.b16 %v691, %v675
    %v852 = vpack.c.b16 %v692, %v676
    %v853 = vpack.c.b16 %v693, %v677
    %v854 = vpack.c.b16 %v694, %v678
    %v855 = vpack.c.b16 %v695, %v679
    %v856 = vpack.c.b16 %v696, %v680
    %v857 = vpack.c.b16 %v697, %v681
    %v858 = vpack.c.b16 %v698, %v682
    %v859 = vpack.c.b16 %v699, %v683
    %v860 = vpack.c.b16 %v700, %v684
    %v861 = vpack.c.b16 %v701, %v685
    %v862 = vpack.c.b16 %v702, %v686
    %v863 = vpack.c.b16 %v703, %v687
    %v864 = vpack.c.b16 %v704, %v688
    %v865 = vpack.c.b16 %v721, %v705
    %v866 = vpack.c.b16 %v722, %v706
    %v867 = vpack.c.b16 %v723, %v707
    %v868 = vpack.c.b16 %v724, %v708
    %v869 = vpack.c.b16 %v725, %v709
    %v870 = vpack.c.b16 %v726, %v710
    %v871 = vpack.c.b16 %v727, %v711
    %v872 = vpack.c.b16 %v728, %v712
    %v873 = vpack.c.b16 %v729, %v713
    %v874 = vpack.c.b16 %v730, %v714
    %v875 = vpack.c.b16 %v731, %v715
    %v876 = vpack.c.b16 %v732, %v716
    %v877 = vpack.c.b16 %v733, %v717
    %v878 = vpack.c.b16 %v734, %v718
    %v879 = vpack.c.b16 %v735, %v719
    %v880 = vpack.c.b16 %v736, %v720
    %v881 = vpack.c.b16 %v753, %v737
    %v882 = vpack.c.b16 %v754, %v738
    %v883 = vpack.c.b16 %v755, %v739
    %v884 = vpack.c.b16 %v756, %v740
    %v885 = vpack.c.b16 %v757, %v741
    %v886 = vpack.c.b16 %v758, %v742
    %v887 = vpack.c.b16 %v759, %v743
    %v888 = vpack.c.b16 %v760, %v744
    %v889 = vpack.c.b16 %v761, %v745
    %v890 = vpack.c.b16 %v762, %v746
    %v891 = vpack.c.b16 %v763, %v747
    %v892 = vpack.c.b16 %v764, %v748
    %v893 = vpack.c.b16 %v765, %v749
    %v894 = vpack.c.b16 %v766, %v750
    %v895 = vpack.c.b16 %v767, %v751
    %v896 = vpack.c.b16 %v768, %v752
    %1025 = vmatprep.subr.bf16.mxu0 %v882
    %1026 = vmatpush1.bf16.msra.mxu0 %v881
    %1027 = vmatprep.subr.bf16.mxu0 %v866
    %1028 = vmatpush1.bf16.msra.mxu0 %v865
    %1029 = vmatprep.subr.bf16.mxu0 %v850
    %1030 = vmatpush1.bf16.msra.mxu0 %v849
    %1031 = vmatprep.subr.bf16.mxu0 %v834
    %1032 = vmatpush1.bf16.msra.mxu0 %v833
    %1033 = vmatprep.subr.bf16.mxu0 %v818
    %1034 = vmatpush1.bf16.msra.mxu0 %v817
    %1035 = vmatprep.subr.bf16.mxu0 %v802
    %1036 = vmatpush1.bf16.msra.mxu0 %v801
    %1037 = vmatprep.subr.bf16.mxu0 %v786
    %1038 = vmatpush1.bf16.msra.mxu0 %v785
    %1039 = vmatprep.subr.bf16.mxu0 %v770
    %1040 = vmatpush1.bf16.msra.mxu0 %v769
    %1041 = vmatprep.subr.bf16.mxu0 0
    %1042 = vmatpush2.bf16.msra.mxu0 0
    %1043 = vmatprep.subr.bf16.mxu0 0
    %1044 = vmatpush2.bf16.msra.mxu0 0
    %1045 = vmatprep.subr.bf16.mxu0 0
    %1046 = vmatpush2.bf16.msra.mxu0 0
    %1047 = vmatprep.subr.bf16.mxu0 0
    %1048 = vmatpush2.bf16.msra.mxu0 0
    %1049 = vmatprep.subr.bf16.mxu0 0
    %1050 = vmatpush2.bf16.msra.mxu0 0
    %1051 = vmatprep.subr.bf16.mxu0 0
    %1052 = vmatpush2.bf16.msra.mxu0 0
    %1053 = vmatprep.subr.bf16.mxu0 0
    %1054 = vmatpush2.bf16.msra.mxu0 0
    %1055 = vmatprep.subr.bf16.mxu0 0
    %1056 = vmatpush2.bf16.msra.mxu0 0
    %1057 = vmatprep.mubr.bf16.mxu0 0
    %1058 = vmatmul.mubr.bf16.gmra.mxu0 %v107
    %v1059 = vpop.f32.mrf.mxu0
    %v1060 = vadd.f32 0.0, %v1059
    %v1061 = vpop.f32.mrf.mxu0
    %v1062 = vadd.f32 0.0, %v1061
    %v1063 = vpop.f32.mrf.mxu0
    %v1064 = vadd.f32 0.0, %v1063
    %v1065 = vpop.f32.mrf.mxu0
    %v1066 = vadd.f32 0.0, %v1065
    %1067 = vmatprep.mubr.bf16.mxu0 0
    %1068 = vmatmul.mubr.bf16.gmra.mxu0 %v108
    %v1069 = vpop.f32.mrf.mxu0
    %v1070 = vadd.f32 0.0, %v1069
    %v1071 = vpop.f32.mrf.mxu0
    %v1072 = vadd.f32 0.0, %v1071
    %v1073 = vpop.f32.mrf.mxu0
    %v1074 = vadd.f32 0.0, %v1073
    %v1075 = vpop.f32.mrf.mxu0
    %v1076 = vadd.f32 0.0, %v1075
    %1077 = vdwg.mxu0
    %1078 = vmatprep.subr.bf16.mxu0 %v884
    %1079 = vmatpush1.bf16.msra.mxu0 %v883
    %1080 = vmatprep.subr.bf16.mxu0 %v868
    %1081 = vmatpush1.bf16.msra.mxu0 %v867
    %1082 = vmatprep.subr.bf16.mxu0 %v852
    %1083 = vmatpush1.bf16.msra.mxu0 %v851
    %1084 = vmatprep.subr.bf16.mxu0 %v836
    %1085 = vmatpush1.bf16.msra.mxu0 %v835
    %1086 = vmatprep.subr.bf16.mxu0 %v820
    %1087 = vmatpush1.bf16.msra.mxu0 %v819
    %1088 = vmatprep.subr.bf16.mxu0 %v804
    %1089 = vmatpush1.bf16.msra.mxu0 %v803
    %1090 = vmatprep.subr.bf16.mxu0 %v788
    %1091 = vmatpush1.bf16.msra.mxu0 %v787
    %1092 = vmatprep.subr.bf16.mxu0 %v772
    %1093 = vmatpush1.bf16.msra.mxu0 %v771
    %1094 = vmatprep.subr.bf16.mxu0 0
    %1095 = vmatpush2.bf16.msra.mxu0 0
    %1096 = vmatprep.subr.bf16.mxu0 0
    %1097 = vmatpush2.bf16.msra.mxu0 0
    %1098 = vmatprep.subr.bf16.mxu0 0
    %1099 = vmatpush2.bf16.msra.mxu0 0
    %1100 = vmatprep.subr.bf16.mxu0 0
    %1101 = vmatpush2.bf16.msra.mxu0 0
    %1102 = vmatprep.subr.bf16.mxu0 0
    %1103 = vmatpush2.bf16.msra.mxu0 0
    %1104 = vmatprep.subr.bf16.mxu0 0
    %1105 = vmatpush2.bf16.msra.mxu0 0
    %1106 = vmatprep.subr.bf16.mxu0 0
    %1107 = vmatpush2.bf16.msra.mxu0 0
    %1108 = vmatprep.subr.bf16.mxu0 0
    %1109 = vmatpush2.bf16.msra.mxu0 0
    %1110 = vmatprep.mubr.bf16.mxu0 0
    %1111 = vmatmul.mubr.bf16.gmra.mxu0 %v107
    %v1112 = vpop.f32.mrf.mxu0
    %v1113 = vadd.f32 0.0, %v1112
    %v1114 = vpop.f32.mrf.mxu0
    %v1115 = vadd.f32 0.0, %v1114
    %v1116 = vpop.f32.mrf.mxu0
    %v1117 = vadd.f32 0.0, %v1116
    %v1118 = vpop.f32.mrf.mxu0
    %v1119 = vadd.f32 0.0, %v1118
    %1120 = vmatprep.mubr.bf16.mxu0 0
    %1121 = vmatmul.mubr.bf16.gmra.mxu0 %v108
    %v1122 = vpop.f32.mrf.mxu0
    %v1123 = vadd.f32 0.0, %v1122
    %v1124 = vpop.f32.mrf.mxu0
    %v1125 = vadd.f32 0.0, %v1124
    %v1126 = vpop.f32.mrf.mxu0
    %v1127 = vadd.f32 0.0, %v1126
    %v1128 = vpop.f32.mrf.mxu0
    %v1129 = vadd.f32 0.0, %v1128
    %1130 = vdwg.mxu0
    %1131 = vmatprep.subr.bf16.mxu0 %v886
    %1132 = vmatpush1.bf16.msra.mxu0 %v885
    %1133 = vmatprep.subr.bf16.mxu0 %v870
    %1134 = vmatpush1.bf16.msra.mxu0 %v869
    %1135 = vmatprep.subr.bf16.mxu0 %v854
    %1136 = vmatpush1.bf16.msra.mxu0 %v853
    %1137 = vmatprep.subr.bf16.mxu0 %v838
    %1138 = vmatpush1.bf16.msra.mxu0 %v837
    %1139 = vmatprep.subr.bf16.mxu0 %v822
    %1140 = vmatpush1.bf16.msra.mxu0 %v821
    %1141 = vmatprep.subr.bf16.mxu0 %v806
    %1142 = vmatpush1.bf16.msra.mxu0 %v805
    %1143 = vmatprep.subr.bf16.mxu0 %v790
    %1144 = vmatpush1.bf16.msra.mxu0 %v789
    %1145 = vmatprep.subr.bf16.mxu0 %v774
    %1146 = vmatpush1.bf16.msra.mxu0 %v773
    %1147 = vmatprep.subr.bf16.mxu0 0
    %1148 = vmatpush2.bf16.msra.mxu0 0
    %1149 = vmatprep.subr.bf16.mxu0 0
    %1150 = vmatpush2.bf16.msra.mxu0 0
    %1151 = vmatprep.subr.bf16.mxu0 0
    %1152 = vmatpush2.bf16.msra.mxu0 0
    %1153 = vmatprep.subr.bf16.mxu0 0
    %1154 = vmatpush2.bf16.msra.mxu0 0
    %1155 = vmatprep.subr.bf16.mxu0 0
    %1156 = vmatpush2.bf16.msra.mxu0 0
    %1157 = vmatprep.subr.bf16.mxu0 0
    %1158 = vmatpush2.bf16.msra.mxu0 0
    %1159 = vmatprep.subr.bf16.mxu0 0
    %1160 = vmatpush2.bf16.msra.mxu0 0
    %1161 = vmatprep.subr.bf16.mxu0 0
    %1162 = vmatpush2.bf16.msra.mxu0 0
    %1163 = vmatprep.mubr.bf16.mxu0 0
    %1164 = vmatmul.mubr.bf16.gmra.mxu0 %v107
    %v1165 = vpop.f32.mrf.mxu0
    %v1166 = vadd.f32 0.0, %v1165
    %v1167 = vpop.f32.mrf.mxu0
    %v1168 = vadd.f32 0.0, %v1167
    %v1169 = vpop.f32.mrf.mxu0
    %v1170 = vadd.f32 0.0, %v1169
    %v1171 = vpop.f32.mrf.mxu0
    %v1172 = vadd.f32 0.0, %v1171
    %1173 = vmatprep.mubr.bf16.mxu0 0
    %1174 = vmatmul.mubr.bf16.gmra.mxu0 %v108
    %v1175 = vpop.f32.mrf.mxu0
    %v1176 = vadd.f32 0.0, %v1175
    %v1177 = vpop.f32.mrf.mxu0
    %v1178 = vadd.f32 0.0, %v1177
    %v1179 = vpop.f32.mrf.mxu0
    %v1180 = vadd.f32 0.0, %v1179
    %v1181 = vpop.f32.mrf.mxu0
    %v1182 = vadd.f32 0.0, %v1181
    %1183 = vdwg.mxu0
    %1184 = vmatprep.subr.bf16.mxu0 %v888
    %1185 = vmatpush1.bf16.msra.mxu0 %v887
    %1186 = vmatprep.subr.bf16.mxu0 %v872
    %1187 = vmatpush1.bf16.msra.mxu0 %v871
    %1188 = vmatprep.subr.bf16.mxu0 %v856
    %1189 = vmatpush1.bf16.msra.mxu0 %v855
    %1190 = vmatprep.subr.bf16.mxu0 %v840
    %1191 = vmatpush1.bf16.msra.mxu0 %v839
    %1192 = vmatprep.subr.bf16.mxu0 %v824
    %1193 = vmatpush1.bf16.msra.mxu0 %v823
    %1194 = vmatprep.subr.bf16.mxu0 %v808
    %1195 = vmatpush1.bf16.msra.mxu0 %v807
    %1196 = vmatprep.subr.bf16.mxu0 %v792
    %1197 = vmatpush1.bf16.msra.mxu0 %v791
    %1198 = vmatprep.subr.bf16.mxu0 %v776
    %1199 = vmatpush1.bf16.msra.mxu0 %v775
    %1200 = vmatprep.subr.bf16.mxu0 0
    %1201 = vmatpush2.bf16.msra.mxu0 0
    %1202 = vmatprep.subr.bf16.mxu0 0
    %1203 = vmatpush2.bf16.msra.mxu0 0
    %1204 = vmatprep.subr.bf16.mxu0 0
    %1205 = vmatpush2.bf16.msra.mxu0 0
    %1206 = vmatprep.subr.bf16.mxu0 0
    %1207 = vmatpush2.bf16.msra.mxu0 0
    %1208 = vmatprep.subr.bf16.mxu0 0
    %1209 = vmatpush2.bf16.msra.mxu0 0
    %1210 = vmatprep.subr.bf16.mxu0 0
    %1211 = vmatpush2.bf16.msra.mxu0 0
    %1212 = vmatprep.subr.bf16.mxu0 0
    %1213 = vmatpush2.bf16.msra.mxu0 0
    %1214 = vmatprep.subr.bf16.mxu0 0
    %1215 = vmatpush2.bf16.msra.mxu0 0
    %1216 = vmatprep.mubr.bf16.mxu0 0
    %1217 = vmatmul.mubr.bf16.gmra.mxu0 %v107
    %v1218 = vpop.f32.mrf.mxu0
    %v1219 = vadd.f32 0.0, %v1218
    %v1220 = vpop.f32.mrf.mxu0
    %v1221 = vadd.f32 0.0, %v1220
    %v1222 = vpop.f32.mrf.mxu0
    %v1223 = vadd.f32 0.0, %v1222
    %v1224 = vpop.f32.mrf.mxu0
    %v1225 = vadd.f32 0.0, %v1224
    %1226 = vmatprep.mubr.bf16.mxu0 0
    %1227 = vmatmul.mubr.bf16.gmra.mxu0 %v108
    %v1228 = vpop.f32.mrf.mxu0
    %v1229 = vadd.f32 0.0, %v1228
    %v1230 = vpop.f32.mrf.mxu0
    %v1231 = vadd.f32 0.0, %v1230
    %v1232 = vpop.f32.mrf.mxu0
    %v1233 = vadd.f32 0.0, %v1232
    %v1234 = vpop.f32.mrf.mxu0
    %v1235 = vadd.f32 0.0, %v1234
    %1236 = vdwg.mxu0
    %1237 = vmatprep.subr.bf16.mxu0 %v890
    %1238 = vmatpush1.bf16.msra.mxu0 %v889
    %1239 = vmatprep.subr.bf16.mxu0 %v874
    %1240 = vmatpush1.bf16.msra.mxu0 %v873
    %1241 = vmatprep.subr.bf16.mxu0 %v858
    %1242 = vmatpush1.bf16.msra.mxu0 %v857
    %1243 = vmatprep.subr.bf16.mxu0 %v842
    %1244 = vmatpush1.bf16.msra.mxu0 %v841
    %1245 = vmatprep.subr.bf16.mxu0 %v826
    %1246 = vmatpush1.bf16.msra.mxu0 %v825
    %1247 = vmatprep.subr.bf16.mxu0 %v810
    %1248 = vmatpush1.bf16.msra.mxu0 %v809
    %1249 = vmatprep.subr.bf16.mxu0 %v794
    %1250 = vmatpush1.bf16.msra.mxu0 %v793
    %1251 = vmatprep.subr.bf16.mxu0 %v778
    %1252 = vmatpush1.bf16.msra.mxu0 %v777
    %1253 = vmatprep.subr.bf16.mxu0 0
    %1254 = vmatpush2.bf16.msra.mxu0 0
    %1255 = vmatprep.subr.bf16.mxu0 0
    %1256 = vmatpush2.bf16.msra.mxu0 0
    %1257 = vmatprep.subr.bf16.mxu0 0
    %1258 = vmatpush2.bf16.msra.mxu0 0
    %1259 = vmatprep.subr.bf16.mxu0 0
    %1260 = vmatpush2.bf16.msra.mxu0 0
    %1261 = vmatprep.subr.bf16.mxu0 0
    %1262 = vmatpush2.bf16.msra.mxu0 0
    %1263 = vmatprep.subr.bf16.mxu0 0
    %1264 = vmatpush2.bf16.msra.mxu0 0
    %1265 = vmatprep.subr.bf16.mxu0 0
    %1266 = vmatpush2.bf16.msra.mxu0 0
    %1267 = vmatprep.subr.bf16.mxu0 0
    %1268 = vmatpush2.bf16.msra.mxu0 0
    %1269 = vmatprep.mubr.bf16.mxu0 0
    %1270 = vmatmul.mubr.bf16.gmra.mxu0 %v107
    %v1271 = vpop.f32.mrf.mxu0
    %v1272 = vadd.f32 0.0, %v1271
    %v1273 = vpop.f32.mrf.mxu0
    %v1274 = vadd.f32 0.0, %v1273
    %v1275 = vpop.f32.mrf.mxu0
    %v1276 = vadd.f32 0.0, %v1275
    %v1277 = vpop.f32.mrf.mxu0
    %v1278 = vadd.f32 0.0, %v1277
    %1279 = vmatprep.mubr.bf16.mxu0 0
    %1280 = vmatmul.mubr.bf16.gmra.mxu0 %v108
    %v1281 = vpop.f32.mrf.mxu0
    %v1282 = vadd.f32 0.0, %v1281
    %v1283 = vpop.f32.mrf.mxu0
    %v1284 = vadd.f32 0.0, %v1283
    %v1285 = vpop.f32.mrf.mxu0
    %v1286 = vadd.f32 0.0, %v1285
    %v1287 = vpop.f32.mrf.mxu0
    %v1288 = vadd.f32 0.0, %v1287
    %1289 = vdwg.mxu0
    %1290 = vmatprep.subr.bf16.mxu0 %v892
    %1291 = vmatpush1.bf16.msra.mxu0 %v891
    %1292 = vmatprep.subr.bf16.mxu0 %v876
    %1293 = vmatpush1.bf16.msra.mxu0 %v875
    %1294 = vmatprep.subr.bf16.mxu0 %v860
    %1295 = vmatpush1.bf16.msra.mxu0 %v859
    %1296 = vmatprep.subr.bf16.mxu0 %v844
    %1297 = vmatpush1.bf16.msra.mxu0 %v843
    %1298 = vmatprep.subr.bf16.mxu0 %v828
    %1299 = vmatpush1.bf16.msra.mxu0 %v827
    %1300 = vmatprep.subr.bf16.mxu0 %v812
    %1301 = vmatpush1.bf16.msra.mxu0 %v811
    %1302 = vmatprep.subr.bf16.mxu0 %v796
    %1303 = vmatpush1.bf16.msra.mxu0 %v795
    %1304 = vmatprep.subr.bf16.mxu0 %v780
    %1305 = vmatpush1.bf16.msra.mxu0 %v779
    %1306 = vmatprep.subr.bf16.mxu0 0
    %1307 = vmatpush2.bf16.msra.mxu0 0
    %1308 = vmatprep.subr.bf16.mxu0 0
    %1309 = vmatpush2.bf16.msra.mxu0 0
    %1310 = vmatprep.subr.bf16.mxu0 0
    %1311 = vmatpush2.bf16.msra.mxu0 0
    %1312 = vmatprep.subr.bf16.mxu0 0
    %1313 = vmatpush2.bf16.msra.mxu0 0
    %1314 = vmatprep.subr.bf16.mxu0 0
    %1315 = vmatpush2.bf16.msra.mxu0 0
    %1316 = vmatprep.subr.bf16.mxu0 0
    %1317 = vmatpush2.bf16.msra.mxu0 0
    %1318 = vmatprep.subr.bf16.mxu0 0
    %1319 = vmatpush2.bf16.msra.mxu0 0
    %1320 = vmatprep.subr.bf16.mxu0 0
    %1321 = vmatpush2.bf16.msra.mxu0 0
    %1322 = vmatprep.mubr.bf16.mxu0 0
    %1323 = vmatmul.mubr.bf16.gmra.mxu0 %v107
    %v1324 = vpop.f32.mrf.mxu0
    %v1325 = vadd.f32 0.0, %v1324
    %v1326 = vpop.f32.mrf.mxu0
    %v1327 = vadd.f32 0.0, %v1326
    %v1328 = vpop.f32.mrf.mxu0
    %v1329 = vadd.f32 0.0, %v1328
    %v1330 = vpop.f32.mrf.mxu0
    %v1331 = vadd.f32 0.0, %v1330
    %1332 = vmatprep.mubr.bf16.mxu0 0
    %1333 = vmatmul.mubr.bf16.gmra.mxu0 %v108
    %v1334 = vpop.f32.mrf.mxu0
    %v1335 = vadd.f32 0.0, %v1334
    %v1336 = vpop.f32.mrf.mxu0
    %v1337 = vadd.f32 0.0, %v1336
    %v1338 = vpop.f32.mrf.mxu0
    %v1339 = vadd.f32 0.0, %v1338
    %v1340 = vpop.f32.mrf.mxu0
    %v1341 = vadd.f32 0.0, %v1340
    %1342 = vdwg.mxu0
    %1343 = vmatprep.subr.bf16.mxu0 %v894
    %1344 = vmatpush1.bf16.msra.mxu0 %v893
    %1345 = vmatprep.subr.bf16.mxu0 %v878
    %1346 = vmatpush1.bf16.msra.mxu0 %v877
    %1347 = vmatprep.subr.bf16.mxu0 %v862
    %1348 = vmatpush1.bf16.msra.mxu0 %v861
    %1349 = vmatprep.subr.bf16.mxu0 %v846
    %1350 = vmatpush1.bf16.msra.mxu0 %v845
    %1351 = vmatprep.subr.bf16.mxu0 %v830
    %1352 = vmatpush1.bf16.msra.mxu0 %v829
    %1353 = vmatprep.subr.bf16.mxu0 %v814
    %1354 = vmatpush1.bf16.msra.mxu0 %v813
    %1355 = vmatprep.subr.bf16.mxu0 %v798
    %1356 = vmatpush1.bf16.msra.mxu0 %v797
    %1357 = vmatprep.subr.bf16.mxu0 %v782
    %1358 = vmatpush1.bf16.msra.mxu0 %v781
    %1359 = vmatprep.subr.bf16.mxu0 0
    %1360 = vmatpush2.bf16.msra.mxu0 0
    %1361 = vmatprep.subr.bf16.mxu0 0
    %1362 = vmatpush2.bf16.msra.mxu0 0
    %1363 = vmatprep.subr.bf16.mxu0 0
    %1364 = vmatpush2.bf16.msra.mxu0 0
    %1365 = vmatprep.subr.bf16.mxu0 0
    %1366 = vmatpush2.bf16.msra.mxu0 0
    %1367 = vmatprep.subr.bf16.mxu0 0
    %1368 = vmatpush2.bf16.msra.mxu0 0
    %1369 = vmatprep.subr.bf16.mxu0 0
    %1370 = vmatpush2.bf16.msra.mxu0 0
    %1371 = vmatprep.subr.bf16.mxu0 0
    %1372 = vmatpush2.bf16.msra.mxu0 0
    %1373 = vmatprep.subr.bf16.mxu0 0
    %1374 = vmatpush2.bf16.msra.mxu0 0
    %1375 = vmatprep.mubr.bf16.mxu0 0
    %1376 = vmatmul.mubr.bf16.gmra.mxu0 %v107
    %v1377 = vpop.f32.mrf.mxu0
    %v1378 = vadd.f32 0.0, %v1377
    %v1379 = vpop.f32.mrf.mxu0
    %v1380 = vadd.f32 0.0, %v1379
    %v1381 = vpop.f32.mrf.mxu0
    %v1382 = vadd.f32 0.0, %v1381
    %v1383 = vpop.f32.mrf.mxu0
    %v1384 = vadd.f32 0.0, %v1383
    %1385 = vmatprep.mubr.bf16.mxu0 0
    %1386 = vmatmul.mubr.bf16.gmra.mxu0 %v108
    %v1387 = vpop.f32.mrf.mxu0
    %v1388 = vadd.f32 0.0, %v1387
    %v1389 = vpop.f32.mrf.mxu0
    %v1390 = vadd.f32 0.0, %v1389
    %v1391 = vpop.f32.mrf.mxu0
    %v1392 = vadd.f32 0.0, %v1391
    %v1393 = vpop.f32.mrf.mxu0
    %v1394 = vadd.f32 0.0, %v1393
    %1395 = vdwg.mxu0
    %1396 = vmatprep.subr.bf16.mxu0 %v896
    %1397 = vmatpush1.bf16.msra.mxu0 %v895
    %1398 = vmatprep.subr.bf16.mxu0 %v880
    %1399 = vmatpush1.bf16.msra.mxu0 %v879
    %1400 = vmatprep.subr.bf16.mxu0 %v864
    %1401 = vmatpush1.bf16.msra.mxu0 %v863
    %1402 = vmatprep.subr.bf16.mxu0 %v848
    %1403 = vmatpush1.bf16.msra.mxu0 %v847
    %1404 = vmatprep.subr.bf16.mxu0 %v832
    %1405 = vmatpush1.bf16.msra.mxu0 %v831
    %1406 = vmatprep.subr.bf16.mxu0 %v816
    %1407 = vmatpush1.bf16.msra.mxu0 %v815
    %1408 = vmatprep.subr.bf16.mxu0 %v800
    %1409 = vmatpush1.bf16.msra.mxu0 %v799
    %1410 = vmatprep.subr.bf16.mxu0 %v784
    %1411 = vmatpush1.bf16.msra.mxu0 %v783
    %1412 = vmatprep.subr.bf16.mxu0 0
    %1413 = vmatpush2.bf16.msra.mxu0 0
    %1414 = vmatprep.subr.bf16.mxu0 0
    %1415 = vmatpush2.bf16.msra.mxu0 0
    %1416 = vmatprep.subr.bf16.mxu0 0
    %1417 = vmatpush2.bf16.msra.mxu0 0
    %1418 = vmatprep.subr.bf16.mxu0 0
    %1419 = vmatpush2.bf16.msra.mxu0 0
    %1420 = vmatprep.subr.bf16.mxu0 0
    %1421 = vmatpush2.bf16.msra.mxu0 0
    %1422 = vmatprep.subr.bf16.mxu0 0
    %1423 = vmatpush2.bf16.msra.mxu0 0
    %1424 = vmatprep.subr.bf16.mxu0 0
    %1425 = vmatpush2.bf16.msra.mxu0 0
    %1426 = vmatprep.subr.bf16.mxu0 0
    %1427 = vmatpush2.bf16.msra.mxu0 0
    %1428 = vmatprep.mubr.bf16.mxu0 0
    %1429 = vmatmul.mubr.bf16.gmra.mxu0 %v107
    %v1430 = vpop.f32.mrf.mxu0
    %v1431 = vadd.f32 0.0, %v1430
    %v1432 = vpop.f32.mrf.mxu0
    %v1433 = vadd.f32 0.0, %v1432
    %v1434 = vpop.f32.mrf.mxu0
    %v1435 = vadd.f32 0.0, %v1434
    %v1436 = vpop.f32.mrf.mxu0
    %v1437 = vadd.f32 0.0, %v1436
    %1438 = vmatprep.mubr.bf16.mxu0 0
    %1439 = vmatmul.mubr.bf16.gmra.mxu0 %v108
    %v1440 = vpop.f32.mrf.mxu0
    %v1441 = vadd.f32 0.0, %v1440
    %v1442 = vpop.f32.mrf.mxu0
    %v1443 = vadd.f32 0.0, %v1442
    %v1444 = vpop.f32.mrf.mxu0
    %v1445 = vadd.f32 0.0, %v1444
    %v1446 = vpop.f32.mrf.mxu0
    %v1447 = vadd.f32 0.0, %v1446
    %1448 = vdwg.mxu0
    %v1577 = vunpack.c.l.b16 %v129
    %v1578 = vunpack.c.h.b16 %v129
    %v1579 = vunpack.c.l.b16 %v130
    %v1580 = vunpack.c.h.b16 %v130
    %v1581 = vunpack.c.l.b16 %v131
    %v1582 = vunpack.c.h.b16 %v131
    %v1583 = vunpack.c.l.b16 %v132
    %v1584 = vunpack.c.h.b16 %v132
    %v1585 = vunpack.c.l.b16 %v133
    %v1586 = vunpack.c.h.b16 %v133
    %v1587 = vunpack.c.l.b16 %v134
    %v1588 = vunpack.c.h.b16 %v134
    %v1589 = vunpack.c.l.b16 %v135
    %v1590 = vunpack.c.h.b16 %v135
    %v1591 = vunpack.c.l.b16 %v136
    %v1592 = vunpack.c.h.b16 %v136
    %v1593 = vunpack.c.l.b16 %v137
    %v1594 = vunpack.c.h.b16 %v137
    %v1595 = vunpack.c.l.b16 %v138
    %v1596 = vunpack.c.h.b16 %v138
    %v1597 = vunpack.c.l.b16 %v139
    %v1598 = vunpack.c.h.b16 %v139
    %v1599 = vunpack.c.l.b16 %v140
    %v1600 = vunpack.c.h.b16 %v140
    %v1601 = vunpack.c.l.b16 %v141
    %v1602 = vunpack.c.h.b16 %v141
    %v1603 = vunpack.c.l.b16 %v142
    %v1604 = vunpack.c.h.b16 %v142
    %v1605 = vunpack.c.l.b16 %v143
    %v1606 = vunpack.c.h.b16 %v143
    %v1607 = vunpack.c.l.b16 %v144
    %v1608 = vunpack.c.h.b16 %v144
    %v1609 = vunpack.c.l.b16 %v145
    %v1610 = vunpack.c.h.b16 %v145
    %v1611 = vunpack.c.l.b16 %v146
    %v1612 = vunpack.c.h.b16 %v146
    %v1613 = vunpack.c.l.b16 %v147
    %v1614 = vunpack.c.h.b16 %v147
    %v1615 = vunpack.c.l.b16 %v148
    %v1616 = vunpack.c.h.b16 %v148
    %v1617 = vunpack.c.l.b16 %v149
    %v1618 = vunpack.c.h.b16 %v149
    %v1619 = vunpack.c.l.b16 %v150
    %v1620 = vunpack.c.h.b16 %v150
    %v1621 = vunpack.c.l.b16 %v151
    %v1622 = vunpack.c.h.b16 %v151
    %v1623 = vunpack.c.l.b16 %v152
    %v1624 = vunpack.c.h.b16 %v152
    %v1625 = vunpack.c.l.b16 %v153
    %v1626 = vunpack.c.h.b16 %v153
    %v1627 = vunpack.c.l.b16 %v154
    %v1628 = vunpack.c.h.b16 %v154
    %v1629 = vunpack.c.l.b16 %v155
    %v1630 = vunpack.c.h.b16 %v155
    %v1631 = vunpack.c.l.b16 %v156
    %v1632 = vunpack.c.h.b16 %v156
    %v1633 = vunpack.c.l.b16 %v157
    %v1634 = vunpack.c.h.b16 %v157
    %v1635 = vunpack.c.l.b16 %v158
    %v1636 = vunpack.c.h.b16 %v158
    %v1637 = vunpack.c.l.b16 %v159
    %v1638 = vunpack.c.h.b16 %v159
    %v1639 = vunpack.c.l.b16 %v160
    %v1640 = vunpack.c.h.b16 %v160
    %v1641 = vunpack.c.l.b16 %v161
    %v1642 = vunpack.c.h.b16 %v161
    %v1643 = vunpack.c.l.b16 %v162
    %v1644 = vunpack.c.h.b16 %v162
    %v1645 = vunpack.c.l.b16 %v163
    %v1646 = vunpack.c.h.b16 %v163
    %v1647 = vunpack.c.l.b16 %v164
    %v1648 = vunpack.c.h.b16 %v164
    %v1649 = vunpack.c.l.b16 %v165
    %v1650 = vunpack.c.h.b16 %v165
    %v1651 = vunpack.c.l.b16 %v166
    %v1652 = vunpack.c.h.b16 %v166
    %v1653 = vunpack.c.l.b16 %v167
    %v1654 = vunpack.c.h.b16 %v167
    %v1655 = vunpack.c.l.b16 %v168
    %v1656 = vunpack.c.h.b16 %v168
    %v1657 = vunpack.c.l.b16 %v169
    %v1658 = vunpack.c.h.b16 %v169
    %v1659 = vunpack.c.l.b16 %v170
    %v1660 = vunpack.c.h.b16 %v170
    %v1661 = vunpack.c.l.b16 %v171
    %v1662 = vunpack.c.h.b16 %v171
    %v1663 = vunpack.c.l.b16 %v172
    %v1664 = vunpack.c.h.b16 %v172
    %v1665 = vunpack.c.l.b16 %v173
    %v1666 = vunpack.c.h.b16 %v173
    %v1667 = vunpack.c.l.b16 %v174
    %v1668 = vunpack.c.h.b16 %v174
    %v1669 = vunpack.c.l.b16 %v175
    %v1670 = vunpack.c.h.b16 %v175
    %v1671 = vunpack.c.l.b16 %v176
    %v1672 = vunpack.c.h.b16 %v176
    %v1673 = vunpack.c.l.b16 %v177
    %v1674 = vunpack.c.h.b16 %v177
    %v1675 = vunpack.c.l.b16 %v178
    %v1676 = vunpack.c.h.b16 %v178
    %v1677 = vunpack.c.l.b16 %v179
    %v1678 = vunpack.c.h.b16 %v179
    %v1679 = vunpack.c.l.b16 %v180
    %v1680 = vunpack.c.h.b16 %v180
    %v1681 = vunpack.c.l.b16 %v181
    %v1682 = vunpack.c.h.b16 %v181
    %v1683 = vunpack.c.l.b16 %v182
    %v1684 = vunpack.c.h.b16 %v182
    %v1685 = vunpack.c.l.b16 %v183
    %v1686 = vunpack.c.h.b16 %v183
    %v1687 = vunpack.c.l.b16 %v184
    %v1688 = vunpack.c.h.b16 %v184
    %v1689 = vunpack.c.l.b16 %v185
    %v1690 = vunpack.c.h.b16 %v185
    %v1691 = vunpack.c.l.b16 %v186
    %v1692 = vunpack.c.h.b16 %v186
    %v1693 = vunpack.c.l.b16 %v187
    %v1694 = vunpack.c.h.b16 %v187
    %v1695 = vunpack.c.l.b16 %v188
    %v1696 = vunpack.c.h.b16 %v188
    %v1697 = vunpack.c.l.b16 %v189
    %v1698 = vunpack.c.h.b16 %v189
    %v1699 = vunpack.c.l.b16 %v190
    %v1700 = vunpack.c.h.b16 %v190
    %v1701 = vunpack.c.l.b16 %v191
    %v1702 = vunpack.c.h.b16 %v191
    %v1703 = vunpack.c.l.b16 %v192
    %v1704 = vunpack.c.h.b16 %v192
    %v1705 = vunpack.c.l.b16 %v193
    %v1706 = vunpack.c.h.b16 %v193
    %v1707 = vunpack.c.l.b16 %v194
    %v1708 = vunpack.c.h.b16 %v194
    %v1709 = vunpack.c.l.b16 %v195
    %v1710 = vunpack.c.h.b16 %v195
    %v1711 = vunpack.c.l.b16 %v196
    %v1712 = vunpack.c.h.b16 %v196
    %v1713 = vunpack.c.l.b16 %v197
    %v1714 = vunpack.c.h.b16 %v197
    %v1715 = vunpack.c.l.b16 %v198
    %v1716 = vunpack.c.h.b16 %v198
    %v1717 = vunpack.c.l.b16 %v199
    %v1718 = vunpack.c.h.b16 %v199
    %v1719 = vunpack.c.l.b16 %v200
    %v1720 = vunpack.c.h.b16 %v200
    %v1721 = vunpack.c.l.b16 %v201
    %v1722 = vunpack.c.h.b16 %v201
    %v1723 = vunpack.c.l.b16 %v202
    %v1724 = vunpack.c.h.b16 %v202
    %v1725 = vunpack.c.l.b16 %v203
    %v1726 = vunpack.c.h.b16 %v203
    %v1727 = vunpack.c.l.b16 %v204
    %v1728 = vunpack.c.h.b16 %v204
    %v1729 = vunpack.c.l.b16 %v205
    %v1730 = vunpack.c.h.b16 %v205
    %v1731 = vunpack.c.l.b16 %v206
    %v1732 = vunpack.c.h.b16 %v206
    %v1733 = vunpack.c.l.b16 %v207
    %v1734 = vunpack.c.h.b16 %v207
    %v1735 = vunpack.c.l.b16 %v208
    %v1736 = vunpack.c.h.b16 %v208
    %v1737 = vunpack.c.l.b16 %v209
    %v1738 = vunpack.c.h.b16 %v209
    %v1739 = vunpack.c.l.b16 %v210
    %v1740 = vunpack.c.h.b16 %v210
    %v1741 = vunpack.c.l.b16 %v211
    %v1742 = vunpack.c.h.b16 %v211
    %v1743 = vunpack.c.l.b16 %v212
    %v1744 = vunpack.c.h.b16 %v212
    %v1745 = vunpack.c.l.b16 %v213
    %v1746 = vunpack.c.h.b16 %v213
    %v1747 = vunpack.c.l.b16 %v214
    %v1748 = vunpack.c.h.b16 %v214
    %v1749 = vunpack.c.l.b16 %v215
    %v1750 = vunpack.c.h.b16 %v215
    %v1751 = vunpack.c.l.b16 %v216
    %v1752 = vunpack.c.h.b16 %v216
    %v1753 = vunpack.c.l.b16 %v217
    %v1754 = vunpack.c.h.b16 %v217
    %v1755 = vunpack.c.l.b16 %v218
    %v1756 = vunpack.c.h.b16 %v218
    %v1757 = vunpack.c.l.b16 %v219
    %v1758 = vunpack.c.h.b16 %v219
    %v1759 = vunpack.c.l.b16 %v220
    %v1760 = vunpack.c.h.b16 %v220
    %v1761 = vunpack.c.l.b16 %v221
    %v1762 = vunpack.c.h.b16 %v221
    %v1763 = vunpack.c.l.b16 %v222
    %v1764 = vunpack.c.h.b16 %v222
    %v1765 = vunpack.c.l.b16 %v223
    %v1766 = vunpack.c.h.b16 %v223
    %v1767 = vunpack.c.l.b16 %v224
    %v1768 = vunpack.c.h.b16 %v224
    %v1769 = vunpack.c.l.b16 %v225
    %v1770 = vunpack.c.h.b16 %v225
    %v1771 = vunpack.c.l.b16 %v226
    %v1772 = vunpack.c.h.b16 %v226
    %v1773 = vunpack.c.l.b16 %v227
    %v1774 = vunpack.c.h.b16 %v227
    %v1775 = vunpack.c.l.b16 %v228
    %v1776 = vunpack.c.h.b16 %v228
    %v1777 = vunpack.c.l.b16 %v229
    %v1778 = vunpack.c.h.b16 %v229
    %v1779 = vunpack.c.l.b16 %v230
    %v1780 = vunpack.c.h.b16 %v230
    %v1781 = vunpack.c.l.b16 %v231
    %v1782 = vunpack.c.h.b16 %v231
    %v1783 = vunpack.c.l.b16 %v232
    %v1784 = vunpack.c.h.b16 %v232
    %v1785 = vunpack.c.l.b16 %v233
    %v1786 = vunpack.c.h.b16 %v233
    %v1787 = vunpack.c.l.b16 %v234
    %v1788 = vunpack.c.h.b16 %v234
    %v1789 = vunpack.c.l.b16 %v235
    %v1790 = vunpack.c.h.b16 %v235
    %v1791 = vunpack.c.l.b16 %v236
    %v1792 = vunpack.c.h.b16 %v236
    %v1793 = vunpack.c.l.b16 %v237
    %v1794 = vunpack.c.h.b16 %v237
    %v1795 = vunpack.c.l.b16 %v238
    %v1796 = vunpack.c.h.b16 %v238
    %v1797 = vunpack.c.l.b16 %v239
    %v1798 = vunpack.c.h.b16 %v239
    %v1799 = vunpack.c.l.b16 %v240
    %v1800 = vunpack.c.h.b16 %v240
    %v1801 = vunpack.c.l.b16 %v241
    %v1802 = vunpack.c.h.b16 %v241
    %v1803 = vunpack.c.l.b16 %v242
    %v1804 = vunpack.c.h.b16 %v242
    %v1805 = vunpack.c.l.b16 %v243
    %v1806 = vunpack.c.h.b16 %v243
    %v1807 = vunpack.c.l.b16 %v244
    %v1808 = vunpack.c.h.b16 %v244
    %v1809 = vunpack.c.l.b16 %v245
    %v1810 = vunpack.c.h.b16 %v245
    %v1811 = vunpack.c.l.b16 %v246
    %v1812 = vunpack.c.h.b16 %v246
    %v1813 = vunpack.c.l.b16 %v247
    %v1814 = vunpack.c.h.b16 %v247
    %v1815 = vunpack.c.l.b16 %v248
    %v1816 = vunpack.c.h.b16 %v248
    %v1817 = vunpack.c.l.b16 %v249
    %v1818 = vunpack.c.h.b16 %v249
    %v1819 = vunpack.c.l.b16 %v250
    %v1820 = vunpack.c.h.b16 %v250
    %v1821 = vunpack.c.l.b16 %v251
    %v1822 = vunpack.c.h.b16 %v251
    %v1823 = vunpack.c.l.b16 %v252
    %v1824 = vunpack.c.h.b16 %v252
    %v1825 = vunpack.c.l.b16 %v253
    %v1826 = vunpack.c.h.b16 %v253
    %v1827 = vunpack.c.l.b16 %v254
    %v1828 = vunpack.c.h.b16 %v254
    %v1829 = vunpack.c.l.b16 %v255
    %v1830 = vunpack.c.h.b16 %v255
    %v1831 = vunpack.c.l.b16 %v256
    %v1832 = vunpack.c.h.b16 %v256
    %v1833 = vpack.c.b16 %v1593, %v1577
    %v1834 = vpack.c.b16 %v1594, %v1578
    %v1835 = vpack.c.b16 %v1595, %v1579
    %v1836 = vpack.c.b16 %v1596, %v1580
    %v1837 = vpack.c.b16 %v1597, %v1581
    %v1838 = vpack.c.b16 %v1598, %v1582
    %v1839 = vpack.c.b16 %v1599, %v1583
    %v1840 = vpack.c.b16 %v1600, %v1584
    %v1841 = vpack.c.b16 %v1601, %v1585
    %v1842 = vpack.c.b16 %v1602, %v1586
    %v1843 = vpack.c.b16 %v1603, %v1587
    %v1844 = vpack.c.b16 %v1604, %v1588
    %v1845 = vpack.c.b16 %v1605, %v1589
    %v1846 = vpack.c.b16 %v1606, %v1590
    %v1847 = vpack.c.b16 %v1607, %v1591
    %v1848 = vpack.c.b16 %v1608, %v1592
    %v1849 = vpack.c.b16 %v1625, %v1609
    %v1850 = vpack.c.b16 %v1626, %v1610
    %v1851 = vpack.c.b16 %v1627, %v1611
    %v1852 = vpack.c.b16 %v1628, %v1612
    %v1853 = vpack.c.b16 %v1629, %v1613
    %v1854 = vpack.c.b16 %v1630, %v1614
    %v1855 = vpack.c.b16 %v1631, %v1615
    %v1856 = vpack.c.b16 %v1632, %v1616
    %v1857 = vpack.c.b16 %v1633, %v1617
    %v1858 = vpack.c.b16 %v1634, %v1618
    %v1859 = vpack.c.b16 %v1635, %v1619
    %v1860 = vpack.c.b16 %v1636, %v1620
    %v1861 = vpack.c.b16 %v1637, %v1621
    %v1862 = vpack.c.b16 %v1638, %v1622
    %v1863 = vpack.c.b16 %v1639, %v1623
    %v1864 = vpack.c.b16 %v1640, %v1624
    %v1865 = vpack.c.b16 %v1657, %v1641
    %v1866 = vpack.c.b16 %v1658, %v1642
    %v1867 = vpack.c.b16 %v1659, %v1643
    %v1868 = vpack.c.b16 %v1660, %v1644
    %v1869 = vpack.c.b16 %v1661, %v1645
    %v1870 = vpack.c.b16 %v1662, %v1646
    %v1871 = vpack.c.b16 %v1663, %v1647
    %v1872 = vpack.c.b16 %v1664, %v1648
    %v1873 = vpack.c.b16 %v1665, %v1649
    %v1874 = vpack.c.b16 %v1666, %v1650
    %v1875 = vpack.c.b16 %v1667, %v1651
    %v1876 = vpack.c.b16 %v1668, %v1652
    %v1877 = vpack.c.b16 %v1669, %v1653
    %v1878 = vpack.c.b16 %v1670, %v1654
    %v1879 = vpack.c.b16 %v1671, %v1655
    %v1880 = vpack.c.b16 %v1672, %v1656
    %v1881 = vpack.c.b16 %v1689, %v1673
    %v1882 = vpack.c.b16 %v1690, %v1674
    %v1883 = vpack.c.b16 %v1691, %v1675
    %v1884 = vpack.c.b16 %v1692, %v1676
    %v1885 = vpack.c.b16 %v1693, %v1677
    %v1886 = vpack.c.b16 %v1694, %v1678
    %v1887 = vpack.c.b16 %v1695, %v1679
    %v1888 = vpack.c.b16 %v1696, %v1680
    %v1889 = vpack.c.b16 %v1697, %v1681
    %v1890 = vpack.c.b16 %v1698, %v1682
    %v1891 = vpack.c.b16 %v1699, %v1683
    %v1892 = vpack.c.b16 %v1700, %v1684
    %v1893 = vpack.c.b16 %v1701, %v1685
    %v1894 = vpack.c.b16 %v1702, %v1686
    %v1895 = vpack.c.b16 %v1703, %v1687
    %v1896 = vpack.c.b16 %v1704, %v1688
    %v1897 = vpack.c.b16 %v1721, %v1705
    %v1898 = vpack.c.b16 %v1722, %v1706
    %v1899 = vpack.c.b16 %v1723, %v1707
    %v1900 = vpack.c.b16 %v1724, %v1708
    %v1901 = vpack.c.b16 %v1725, %v1709
    %v1902 = vpack.c.b16 %v1726, %v1710
    %v1903 = vpack.c.b16 %v1727, %v1711
    %v1904 = vpack.c.b16 %v1728, %v1712
    %v1905 = vpack.c.b16 %v1729, %v1713
    %v1906 = vpack.c.b16 %v1730, %v1714
    %v1907 = vpack.c.b16 %v1731, %v1715
    %v1908 = vpack.c.b16 %v1732, %v1716
    %v1909 = vpack.c.b16 %v1733, %v1717
    %v1910 = vpack.c.b16 %v1734, %v1718
    %v1911 = vpack.c.b16 %v1735, %v1719
    %v1912 = vpack.c.b16 %v1736, %v1720
    %v1913 = vpack.c.b16 %v1753, %v1737
    %v1914 = vpack.c.b16 %v1754, %v1738
    %v1915 = vpack.c.b16 %v1755, %v1739
    %v1916 = vpack.c.b16 %v1756, %v1740
    %v1917 = vpack.c.b16 %v1757, %v1741
    %v1918 = vpack.c.b16 %v1758, %v1742
    %v1919 = vpack.c.b16 %v1759, %v1743
    %v1920 = vpack.c.b16 %v1760, %v1744
    %v1921 = vpack.c.b16 %v1761, %v1745
    %v1922 = vpack.c.b16 %v1762, %v1746
    %v1923 = vpack.c.b16 %v1763, %v1747
    %v1924 = vpack.c.b16 %v1764, %v1748
    %v1925 = vpack.c.b16 %v1765, %v1749
    %v1926 = vpack.c.b16 %v1766, %v1750
    %v1927 = vpack.c.b16 %v1767, %v1751
    %v1928 = vpack.c.b16 %v1768, %v1752
    %v1929 = vpack.c.b16 %v1785, %v1769
    %v1930 = vpack.c.b16 %v1786, %v1770
    %v1931 = vpack.c.b16 %v1787, %v1771
    %v1932 = vpack.c.b16 %v1788, %v1772
    %v1933 = vpack.c.b16 %v1789, %v1773
    %v1934 = vpack.c.b16 %v1790, %v1774
    %v1935 = vpack.c.b16 %v1791, %v1775
    %v1936 = vpack.c.b16 %v1792, %v1776
    %v1937 = vpack.c.b16 %v1793, %v1777
    %v1938 = vpack.c.b16 %v1794, %v1778
    %v1939 = vpack.c.b16 %v1795, %v1779
    %v1940 = vpack.c.b16 %v1796, %v1780
    %v1941 = vpack.c.b16 %v1797, %v1781
    %v1942 = vpack.c.b16 %v1798, %v1782
    %v1943 = vpack.c.b16 %v1799, %v1783
    %v1944 = vpack.c.b16 %v1800, %v1784
    %v1945 = vpack.c.b16 %v1817, %v1801
    %v1946 = vpack.c.b16 %v1818, %v1802
    %v1947 = vpack.c.b16 %v1819, %v1803
    %v1948 = vpack.c.b16 %v1820, %v1804
    %v1949 = vpack.c.b16 %v1821, %v1805
    %v1950 = vpack.c.b16 %v1822, %v1806
    %v1951 = vpack.c.b16 %v1823, %v1807
    %v1952 = vpack.c.b16 %v1824, %v1808
    %v1953 = vpack.c.b16 %v1825, %v1809
    %v1954 = vpack.c.b16 %v1826, %v1810
    %v1955 = vpack.c.b16 %v1827, %v1811
    %v1956 = vpack.c.b16 %v1828, %v1812
    %v1957 = vpack.c.b16 %v1829, %v1813
    %v1958 = vpack.c.b16 %v1830, %v1814
    %v1959 = vpack.c.b16 %v1831, %v1815
    %v1960 = vpack.c.b16 %v1832, %v1816
    %2089 = vmatprep.subr.bf16.mxu0 %v1946
    %2090 = vmatpush1.bf16.msra.mxu0 %v1945
    %2091 = vmatprep.subr.bf16.mxu0 %v1930
    %2092 = vmatpush1.bf16.msra.mxu0 %v1929
    %2093 = vmatprep.subr.bf16.mxu0 %v1914
    %2094 = vmatpush1.bf16.msra.mxu0 %v1913
    %2095 = vmatprep.subr.bf16.mxu0 %v1898
    %2096 = vmatpush1.bf16.msra.mxu0 %v1897
    %2097 = vmatprep.subr.bf16.mxu0 %v1882
    %2098 = vmatpush1.bf16.msra.mxu0 %v1881
    %2099 = vmatprep.subr.bf16.mxu0 %v1866
    %2100 = vmatpush1.bf16.msra.mxu0 %v1865
    %2101 = vmatprep.subr.bf16.mxu0 %v1850
    %2102 = vmatpush1.bf16.msra.mxu0 %v1849
    %2103 = vmatprep.subr.bf16.mxu0 %v1834
    %2104 = vmatpush1.bf16.msra.mxu0 %v1833
    %2105 = vmatprep.subr.bf16.mxu0 0
    %2106 = vmatpush2.bf16.msra.mxu0 0
    %2107 = vmatprep.subr.bf16.mxu0 0
    %2108 = vmatpush2.bf16.msra.mxu0 0
    %2109 = vmatprep.subr.bf16.mxu0 0
    %2110 = vmatpush2.bf16.msra.mxu0 0
    %2111 = vmatprep.subr.bf16.mxu0 0
    %2112 = vmatpush2.bf16.msra.mxu0 0
    %2113 = vmatprep.subr.bf16.mxu0 0
    %2114 = vmatpush2.bf16.msra.mxu0 0
    %2115 = vmatprep.subr.bf16.mxu0 0
    %2116 = vmatpush2.bf16.msra.mxu0 0
    %2117 = vmatprep.subr.bf16.mxu0 0
    %2118 = vmatpush2.bf16.msra.mxu0 0
    %2119 = vmatprep.subr.bf16.mxu0 0
    %2120 = vmatpush2.bf16.msra.mxu0 0
    %2121 = vmatprep.mubr.bf16.mxu0 0
    %2122 = vmatmul.mubr.bf16.gmra.mxu0 %v107
    %v2123 = vpop.f32.mrf.mxu0
    %v2124 = vadd.f32 %v1060, %v2123
    %v2125 = vpop.f32.mrf.mxu0
    %v2126 = vadd.f32 %v1062, %v2125
    %v2127 = vpop.f32.mrf.mxu0
    %v2128 = vadd.f32 %v1064, %v2127
    %v2129 = vpop.f32.mrf.mxu0
    %v2130 = vadd.f32 %v1066, %v2129
    %2131 = vmatprep.mubr.bf16.mxu0 0
    %2132 = vmatmul.mubr.bf16.gmra.mxu0 %v108
    %v2133 = vpop.f32.mrf.mxu0
    %v2134 = vadd.f32 %v1070, %v2133
    %v2135 = vpop.f32.mrf.mxu0
    %v2136 = vadd.f32 %v1072, %v2135
    %v2137 = vpop.f32.mrf.mxu0
    %v2138 = vadd.f32 %v1074, %v2137
    %v2139 = vpop.f32.mrf.mxu0
    %v2140 = vadd.f32 %v1076, %v2139
    %2141 = vdwg.mxu0
    %2142 = vmatprep.subr.bf16.mxu0 %v1948
    %2143 = vmatpush1.bf16.msra.mxu0 %v1947
    %2144 = vmatprep.subr.bf16.mxu0 %v1932
    %2145 = vmatpush1.bf16.msra.mxu0 %v1931
    %2146 = vmatprep.subr.bf16.mxu0 %v1916
    %2147 = vmatpush1.bf16.msra.mxu0 %v1915
    %2148 = vmatprep.subr.bf16.mxu0 %v1900
    %2149 = vmatpush1.bf16.msra.mxu0 %v1899
    %2150 = vmatprep.subr.bf16.mxu0 %v1884
    %2151 = vmatpush1.bf16.msra.mxu0 %v1883
    %2152 = vmatprep.subr.bf16.mxu0 %v1868
    %2153 = vmatpush1.bf16.msra.mxu0 %v1867
    %2154 = vmatprep.subr.bf16.mxu0 %v1852
    %2155 = vmatpush1.bf16.msra.mxu0 %v1851
    %2156 = vmatprep.subr.bf16.mxu0 %v1836
    %2157 = vmatpush1.bf16.msra.mxu0 %v1835
    %2158 = vmatprep.subr.bf16.mxu0 0
    %2159 = vmatpush2.bf16.msra.mxu0 0
    %2160 = vmatprep.subr.bf16.mxu0 0
    %2161 = vmatpush2.bf16.msra.mxu0 0
    %2162 = vmatprep.subr.bf16.mxu0 0
    %2163 = vmatpush2.bf16.msra.mxu0 0
    %2164 = vmatprep.subr.bf16.mxu0 0
    %2165 = vmatpush2.bf16.msra.mxu0 0
    %2166 = vmatprep.subr.bf16.mxu0 0
    %2167 = vmatpush2.bf16.msra.mxu0 0
    %2168 = vmatprep.subr.bf16.mxu0 0
    %2169 = vmatpush2.bf16.msra.mxu0 0
    %2170 = vmatprep.subr.bf16.mxu0 0
    %2171 = vmatpush2.bf16.msra.mxu0 0
    %2172 = vmatprep.subr.bf16.mxu0 0
    %2173 = vmatpush2.bf16.msra.mxu0 0
    %2174 = vmatprep.mubr.bf16.mxu0 0
    %2175 = vmatmul.mubr.bf16.gmra.mxu0 %v107
    %v2176 = vpop.f32.mrf.mxu0
    %v2177 = vadd.f32 %v1113, %v2176
    %v2178 = vpop.f32.mrf.mxu0
    %v2179 = vadd.f32 %v1115, %v2178
    %v2180 = vpop.f32.mrf.mxu0
    %v2181 = vadd.f32 %v1117, %v2180
    %v2182 = vpop.f32.mrf.mxu0
    %v2183 = vadd.f32 %v1119, %v2182
    %2184 = vmatprep.mubr.bf16.mxu0 0
    %2185 = vmatmul.mubr.bf16.gmra.mxu0 %v108
    %v2186 = vpop.f32.mrf.mxu0
    %v2187 = vadd.f32 %v1123, %v2186
    %v2188 = vpop.f32.mrf.mxu0
    %v2189 = vadd.f32 %v1125, %v2188
    %v2190 = vpop.f32.mrf.mxu0
    %v2191 = vadd.f32 %v1127, %v2190
    %v2192 = vpop.f32.mrf.mxu0
    %v2193 = vadd.f32 %v1129, %v2192
    %2194 = vdwg.mxu0
    %2195 = vmatprep.subr.bf16.mxu0 %v1950
    %2196 = vmatpush1.bf16.msra.mxu0 %v1949
    %2197 = vmatprep.subr.bf16.mxu0 %v1934
    %2198 = vmatpush1.bf16.msra.mxu0 %v1933
    %2199 = vmatprep.subr.bf16.mxu0 %v1918
    %2200 = vmatpush1.bf16.msra.mxu0 %v1917
    %2201 = vmatprep.subr.bf16.mxu0 %v1902
    %2202 = vmatpush1.bf16.msra.mxu0 %v1901
    %2203 = vmatprep.subr.bf16.mxu0 %v1886
    %2204 = vmatpush1.bf16.msra.mxu0 %v1885
    %2205 = vmatprep.subr.bf16.mxu0 %v1870
    %2206 = vmatpush1.bf16.msra.mxu0 %v1869
    %2207 = vmatprep.subr.bf16.mxu0 %v1854
    %2208 = vmatpush1.bf16.msra.mxu0 %v1853
    %2209 = vmatprep.subr.bf16.mxu0 %v1838
    %2210 = vmatpush1.bf16.msra.mxu0 %v1837
    %2211 = vmatprep.subr.bf16.mxu0 0
    %2212 = vmatpush2.bf16.msra.mxu0 0
    %2213 = vmatprep.subr.bf16.mxu0 0
    %2214 = vmatpush2.bf16.msra.mxu0 0
    %2215 = vmatprep.subr.bf16.mxu0 0
    %2216 = vmatpush2.bf16.msra.mxu0 0
    %2217 = vmatprep.subr.bf16.mxu0 0
    %2218 = vmatpush2.bf16.msra.mxu0 0
    %2219 = vmatprep.subr.bf16.mxu0 0
    %2220 = vmatpush2.bf16.msra.mxu0 0
    %2221 = vmatprep.subr.bf16.mxu0 0
    %2222 = vmatpush2.bf16.msra.mxu0 0
    %2223 = vmatprep.subr.bf16.mxu0 0
    %2224 = vmatpush2.bf16.msra.mxu0 0
    %2225 = vmatprep.subr.bf16.mxu0 0
    %2226 = vmatpush2.bf16.msra.mxu0 0
    %2227 = vmatprep.mubr.bf16.mxu0 0
    %2228 = vmatmul.mubr.bf16.gmra.mxu0 %v107
    %v2229 = vpop.f32.mrf.mxu0
    %v2230 = vadd.f32 %v1166, %v2229
    %v2231 = vpop.f32.mrf.mxu0
    %v2232 = vadd.f32 %v1168, %v2231
    %v2233 = vpop.f32.mrf.mxu0
    %v2234 = vadd.f32 %v1170, %v2233
    %v2235 = vpop.f32.mrf.mxu0
    %v2236 = vadd.f32 %v1172, %v2235
    %2237 = vmatprep.mubr.bf16.mxu0 0
    %2238 = vmatmul.mubr.bf16.gmra.mxu0 %v108
    %v2239 = vpop.f32.mrf.mxu0
    %v2240 = vadd.f32 %v1176, %v2239
    %v2241 = vpop.f32.mrf.mxu0
    %v2242 = vadd.f32 %v1178, %v2241
    %v2243 = vpop.f32.mrf.mxu0
    %v2244 = vadd.f32 %v1180, %v2243
    %v2245 = vpop.f32.mrf.mxu0
    %v2246 = vadd.f32 %v1182, %v2245
    %2247 = vdwg.mxu0
    %2248 = vmatprep.subr.bf16.mxu0 %v1952
    %2249 = vmatpush1.bf16.msra.mxu0 %v1951
    %2250 = vmatprep.subr.bf16.mxu0 %v1936
    %2251 = vmatpush1.bf16.msra.mxu0 %v1935
    %2252 = vmatprep.subr.bf16.mxu0 %v1920
    %2253 = vmatpush1.bf16.msra.mxu0 %v1919
    %2254 = vmatprep.subr.bf16.mxu0 %v1904
    %2255 = vmatpush1.bf16.msra.mxu0 %v1903
    %2256 = vmatprep.subr.bf16.mxu0 %v1888
    %2257 = vmatpush1.bf16.msra.mxu0 %v1887
    %2258 = vmatprep.subr.bf16.mxu0 %v1872
    %2259 = vmatpush1.bf16.msra.mxu0 %v1871
    %2260 = vmatprep.subr.bf16.mxu0 %v1856
    %2261 = vmatpush1.bf16.msra.mxu0 %v1855
    %2262 = vmatprep.subr.bf16.mxu0 %v1840
    %2263 = vmatpush1.bf16.msra.mxu0 %v1839
    %2264 = vmatprep.subr.bf16.mxu0 0
    %2265 = vmatpush2.bf16.msra.mxu0 0
    %2266 = vmatprep.subr.bf16.mxu0 0
    %2267 = vmatpush2.bf16.msra.mxu0 0
    %2268 = vmatprep.subr.bf16.mxu0 0
    %2269 = vmatpush2.bf16.msra.mxu0 0
    %2270 = vmatprep.subr.bf16.mxu0 0
    %2271 = vmatpush2.bf16.msra.mxu0 0
    %2272 = vmatprep.subr.bf16.mxu0 0
    %2273 = vmatpush2.bf16.msra.mxu0 0
    %2274 = vmatprep.subr.bf16.mxu0 0
    %2275 = vmatpush2.bf16.msra.mxu0 0
    %2276 = vmatprep.subr.bf16.mxu0 0
    %2277 = vmatpush2.bf16.msra.mxu0 0
    %2278 = vmatprep.subr.bf16.mxu0 0
    %2279 = vmatpush2.bf16.msra.mxu0 0
    %2280 = vmatprep.mubr.bf16.mxu0 0
    %2281 = vmatmul.mubr.bf16.gmra.mxu0 %v107
    %v2282 = vpop.f32.mrf.mxu0
    %v2283 = vadd.f32 %v1219, %v2282
    %v2284 = vpop.f32.mrf.mxu0
    %v2285 = vadd.f32 %v1221, %v2284
    %v2286 = vpop.f32.mrf.mxu0
    %v2287 = vadd.f32 %v1223, %v2286
    %v2288 = vpop.f32.mrf.mxu0
    %v2289 = vadd.f32 %v1225, %v2288
    %2290 = vmatprep.mubr.bf16.mxu0 0
    %2291 = vmatmul.mubr.bf16.gmra.mxu0 %v108
    %v2292 = vpop.f32.mrf.mxu0
    %v2293 = vadd.f32 %v1229, %v2292
    %v2294 = vpop.f32.mrf.mxu0
    %v2295 = vadd.f32 %v1231, %v2294
    %v2296 = vpop.f32.mrf.mxu0
    %v2297 = vadd.f32 %v1233, %v2296
    %v2298 = vpop.f32.mrf.mxu0
    %v2299 = vadd.f32 %v1235, %v2298
    %2300 = vdwg.mxu0
    %2301 = vmatprep.subr.bf16.mxu0 %v1954
    %2302 = vmatpush1.bf16.msra.mxu0 %v1953
    %2303 = vmatprep.subr.bf16.mxu0 %v1938
    %2304 = vmatpush1.bf16.msra.mxu0 %v1937
    %2305 = vmatprep.subr.bf16.mxu0 %v1922
    %2306 = vmatpush1.bf16.msra.mxu0 %v1921
    %2307 = vmatprep.subr.bf16.mxu0 %v1906
    %2308 = vmatpush1.bf16.msra.mxu0 %v1905
    %2309 = vmatprep.subr.bf16.mxu0 %v1890
    %2310 = vmatpush1.bf16.msra.mxu0 %v1889
    %2311 = vmatprep.subr.bf16.mxu0 %v1874
    %2312 = vmatpush1.bf16.msra.mxu0 %v1873
    %2313 = vmatprep.subr.bf16.mxu0 %v1858
    %2314 = vmatpush1.bf16.msra.mxu0 %v1857
    %2315 = vmatprep.subr.bf16.mxu0 %v1842
    %2316 = vmatpush1.bf16.msra.mxu0 %v1841
    %2317 = vmatprep.subr.bf16.mxu0 0
    %2318 = vmatpush2.bf16.msra.mxu0 0
    %2319 = vmatprep.subr.bf16.mxu0 0
    %2320 = vmatpush2.bf16.msra.mxu0 0
    %2321 = vmatprep.subr.bf16.mxu0 0
    %2322 = vmatpush2.bf16.msra.mxu0 0
    %2323 = vmatprep.subr.bf16.mxu0 0
    %2324 = vmatpush2.bf16.msra.mxu0 0
    %2325 = vmatprep.subr.bf16.mxu0 0
    %2326 = vmatpush2.bf16.msra.mxu0 0
    %2327 = vmatprep.subr.bf16.mxu0 0
    %2328 = vmatpush2.bf16.msra.mxu0 0
    %2329 = vmatprep.subr.bf16.mxu0 0
    %2330 = vmatpush2.bf16.msra.mxu0 0
    %2331 = vmatprep.subr.bf16.mxu0 0
    %2332 = vmatpush2.bf16.msra.mxu0 0
    %2333 = vmatprep.mubr.bf16.mxu0 0
    %2334 = vmatmul.mubr.bf16.gmra.mxu0 %v107
    %v2335 = vpop.f32.mrf.mxu0
    %v2336 = vadd.f32 %v1272, %v2335
    %v2337 = vpop.f32.mrf.mxu0
    %v2338 = vadd.f32 %v1274, %v2337
    %v2339 = vpop.f32.mrf.mxu0
    %v2340 = vadd.f32 %v1276, %v2339
    %v2341 = vpop.f32.mrf.mxu0
    %v2342 = vadd.f32 %v1278, %v2341
    %2343 = vmatprep.mubr.bf16.mxu0 0
    %2344 = vmatmul.mubr.bf16.gmra.mxu0 %v108
    %v2345 = vpop.f32.mrf.mxu0
    %v2346 = vadd.f32 %v1282, %v2345
    %v2347 = vpop.f32.mrf.mxu0
    %v2348 = vadd.f32 %v1284, %v2347
    %v2349 = vpop.f32.mrf.mxu0
    %v2350 = vadd.f32 %v1286, %v2349
    %v2351 = vpop.f32.mrf.mxu0
    %v2352 = vadd.f32 %v1288, %v2351
    %2353 = vdwg.mxu0
    %2354 = vmatprep.subr.bf16.mxu0 %v1956
    %2355 = vmatpush1.bf16.msra.mxu0 %v1955
    %2356 = vmatprep.subr.bf16.mxu0 %v1940
    %2357 = vmatpush1.bf16.msra.mxu0 %v1939
    %2358 = vmatprep.subr.bf16.mxu0 %v1924
    %2359 = vmatpush1.bf16.msra.mxu0 %v1923
    %2360 = vmatprep.subr.bf16.mxu0 %v1908
    %2361 = vmatpush1.bf16.msra.mxu0 %v1907
    %2362 = vmatprep.subr.bf16.mxu0 %v1892
    %2363 = vmatpush1.bf16.msra.mxu0 %v1891
    %2364 = vmatprep.subr.bf16.mxu0 %v1876
    %2365 = vmatpush1.bf16.msra.mxu0 %v1875
    %2366 = vmatprep.subr.bf16.mxu0 %v1860
    %2367 = vmatpush1.bf16.msra.mxu0 %v1859
    %2368 = vmatprep.subr.bf16.mxu0 %v1844
    %2369 = vmatpush1.bf16.msra.mxu0 %v1843
    %2370 = vmatprep.subr.bf16.mxu0 0
    %2371 = vmatpush2.bf16.msra.mxu0 0
    %2372 = vmatprep.subr.bf16.mxu0 0
    %2373 = vmatpush2.bf16.msra.mxu0 0
    %2374 = vmatprep.subr.bf16.mxu0 0
    %2375 = vmatpush2.bf16.msra.mxu0 0
    %2376 = vmatprep.subr.bf16.mxu0 0
    %2377 = vmatpush2.bf16.msra.mxu0 0
    %2378 = vmatprep.subr.bf16.mxu0 0
    %2379 = vmatpush2.bf16.msra.mxu0 0
    %2380 = vmatprep.subr.bf16.mxu0 0
    %2381 = vmatpush2.bf16.msra.mxu0 0
    %2382 = vmatprep.subr.bf16.mxu0 0
    %2383 = vmatpush2.bf16.msra.mxu0 0
    %2384 = vmatprep.subr.bf16.mxu0 0
    %2385 = vmatpush2.bf16.msra.mxu0 0
    %2386 = vmatprep.mubr.bf16.mxu0 0
    %2387 = vmatmul.mubr.bf16.gmra.mxu0 %v107
    %v2388 = vpop.f32.mrf.mxu0
    %v2389 = vadd.f32 %v1325, %v2388
    %v2390 = vpop.f32.mrf.mxu0
    %v2391 = vadd.f32 %v1327, %v2390
    %v2392 = vpop.f32.mrf.mxu0
    %v2393 = vadd.f32 %v1329, %v2392
    %v2394 = vpop.f32.mrf.mxu0
    %v2395 = vadd.f32 %v1331, %v2394
    %2396 = vmatprep.mubr.bf16.mxu0 0
    %2397 = vmatmul.mubr.bf16.gmra.mxu0 %v108
    %v2398 = vpop.f32.mrf.mxu0
    %v2399 = vadd.f32 %v1335, %v2398
    %v2400 = vpop.f32.mrf.mxu0
    %v2401 = vadd.f32 %v1337, %v2400
    %v2402 = vpop.f32.mrf.mxu0
    %v2403 = vadd.f32 %v1339, %v2402
    %v2404 = vpop.f32.mrf.mxu0
    %v2405 = vadd.f32 %v1341, %v2404
    %2406 = vdwg.mxu0
    %2407 = vmatprep.subr.bf16.mxu0 %v1958
    %2408 = vmatpush1.bf16.msra.mxu0 %v1957
    %2409 = vmatprep.subr.bf16.mxu0 %v1942
    %2410 = vmatpush1.bf16.msra.mxu0 %v1941
    %2411 = vmatprep.subr.bf16.mxu0 %v1926
    %2412 = vmatpush1.bf16.msra.mxu0 %v1925
    %2413 = vmatprep.subr.bf16.mxu0 %v1910
    %2414 = vmatpush1.bf16.msra.mxu0 %v1909
    %2415 = vmatprep.subr.bf16.mxu0 %v1894
    %2416 = vmatpush1.bf16.msra.mxu0 %v1893
    %2417 = vmatprep.subr.bf16.mxu0 %v1878
    %2418 = vmatpush1.bf16.msra.mxu0 %v1877
    %2419 = vmatprep.subr.bf16.mxu0 %v1862
    %2420 = vmatpush1.bf16.msra.mxu0 %v1861
    %2421 = vmatprep.subr.bf16.mxu0 %v1846
    %2422 = vmatpush1.bf16.msra.mxu0 %v1845
    %2423 = vmatprep.subr.bf16.mxu0 0
    %2424 = vmatpush2.bf16.msra.mxu0 0
    %2425 = vmatprep.subr.bf16.mxu0 0
    %2426 = vmatpush2.bf16.msra.mxu0 0
    %2427 = vmatprep.subr.bf16.mxu0 0
    %2428 = vmatpush2.bf16.msra.mxu0 0
    %2429 = vmatprep.subr.bf16.mxu0 0
    %2430 = vmatpush2.bf16.msra.mxu0 0
    %2431 = vmatprep.subr.bf16.mxu0 0
    %2432 = vmatpush2.bf16.msra.mxu0 0
    %2433 = vmatprep.subr.bf16.mxu0 0
    %2434 = vmatpush2.bf16.msra.mxu0 0
    %2435 = vmatprep.subr.bf16.mxu0 0
    %2436 = vmatpush2.bf16.msra.mxu0 0
    %2437 = vmatprep.subr.bf16.mxu0 0
    %2438 = vmatpush2.bf16.msra.mxu0 0
    %2439 = vmatprep.mubr.bf16.mxu0 0
    %2440 = vmatmul.mubr.bf16.gmra.mxu0 %v107
    %v2441 = vpop.f32.mrf.mxu0
    %v2442 = vadd.f32 %v1378, %v2441
    %v2443 = vpop.f32.mrf.mxu0
    %v2444 = vadd.f32 %v1380, %v2443
    %v2445 = vpop.f32.mrf.mxu0
    %v2446 = vadd.f32 %v1382, %v2445
    %v2447 = vpop.f32.mrf.mxu0
    %v2448 = vadd.f32 %v1384, %v2447
    %2449 = vmatprep.mubr.bf16.mxu0 0
    %2450 = vmatmul.mubr.bf16.gmra.mxu0 %v108
    %v2451 = vpop.f32.mrf.mxu0
    %v2452 = vadd.f32 %v1388, %v2451
    %v2453 = vpop.f32.mrf.mxu0
    %v2454 = vadd.f32 %v1390, %v2453
    %v2455 = vpop.f32.mrf.mxu0
    %v2456 = vadd.f32 %v1392, %v2455
    %v2457 = vpop.f32.mrf.mxu0
    %v2458 = vadd.f32 %v1394, %v2457
    %2459 = vdwg.mxu0
    %2460 = vmatprep.subr.bf16.mxu0 %v1960
    %2461 = vmatpush1.bf16.msra.mxu0 %v1959
    %2462 = vmatprep.subr.bf16.mxu0 %v1944
    %2463 = vmatpush1.bf16.msra.mxu0 %v1943
    %2464 = vmatprep.subr.bf16.mxu0 %v1928
    %2465 = vmatpush1.bf16.msra.mxu0 %v1927
    %2466 = vmatprep.subr.bf16.mxu0 %v1912
    %2467 = vmatpush1.bf16.msra.mxu0 %v1911
    %2468 = vmatprep.subr.bf16.mxu0 %v1896
    %2469 = vmatpush1.bf16.msra.mxu0 %v1895
    %2470 = vmatprep.subr.bf16.mxu0 %v1880
    %2471 = vmatpush1.bf16.msra.mxu0 %v1879
    %2472 = vmatprep.subr.bf16.mxu0 %v1864
    %2473 = vmatpush1.bf16.msra.mxu0 %v1863
    %2474 = vmatprep.subr.bf16.mxu0 %v1848
    %2475 = vmatpush1.bf16.msra.mxu0 %v1847
    %2476 = vmatprep.subr.bf16.mxu0 0
    %2477 = vmatpush2.bf16.msra.mxu0 0
    %2478 = vmatprep.subr.bf16.mxu0 0
    %2479 = vmatpush2.bf16.msra.mxu0 0
    %2480 = vmatprep.subr.bf16.mxu0 0
    %2481 = vmatpush2.bf16.msra.mxu0 0
    %2482 = vmatprep.subr.bf16.mxu0 0
    %2483 = vmatpush2.bf16.msra.mxu0 0
    %2484 = vmatprep.subr.bf16.mxu0 0
    %2485 = vmatpush2.bf16.msra.mxu0 0
    %2486 = vmatprep.subr.bf16.mxu0 0
    %2487 = vmatpush2.bf16.msra.mxu0 0
    %2488 = vmatprep.subr.bf16.mxu0 0
    %2489 = vmatpush2.bf16.msra.mxu0 0
    %2490 = vmatprep.subr.bf16.mxu0 0
    %2491 = vmatpush2.bf16.msra.mxu0 0
    %2492 = vmatprep.mubr.bf16.mxu0 0
    %2493 = vmatmul.mubr.bf16.gmra.mxu0 %v107
    %v2494 = vpop.f32.mrf.mxu0
    %v2495 = vadd.f32 %v1431, %v2494
    %v2496 = vpop.f32.mrf.mxu0
    %v2497 = vadd.f32 %v1433, %v2496
    %v2498 = vpop.f32.mrf.mxu0
    %v2499 = vadd.f32 %v1435, %v2498
    %v2500 = vpop.f32.mrf.mxu0
    %v2501 = vadd.f32 %v1437, %v2500
    %2502 = vmatprep.mubr.bf16.mxu0 0
    %2503 = vmatmul.mubr.bf16.gmra.mxu0 %v108
    %v2504 = vpop.f32.mrf.mxu0
    %v2505 = vadd.f32 %v1441, %v2504
    %v2506 = vpop.f32.mrf.mxu0
    %v2507 = vadd.f32 %v1443, %v2506
    %v2508 = vpop.f32.mrf.mxu0
    %v2509 = vadd.f32 %v1445, %v2508
    %v2510 = vpop.f32.mrf.mxu0
    %v2511 = vadd.f32 %v1447, %v2510
    %2512 = vdwg.mxu0
    %2513 = vmatprep.subr.bf16.mxu0 %v1946
    %2514 = vmatpush1.bf16.msra.mxu0 %v1945
    %2515 = vmatprep.subr.bf16.mxu0 %v1930
    %2516 = vmatpush1.bf16.msra.mxu0 %v1929
    %2517 = vmatprep.subr.bf16.mxu0 %v1914
    %2518 = vmatpush1.bf16.msra.mxu0 %v1913
    %2519 = vmatprep.subr.bf16.mxu0 %v1898
    %2520 = vmatpush1.bf16.msra.mxu0 %v1897
    %2521 = vmatprep.subr.bf16.mxu0 %v1882
    %2522 = vmatpush1.bf16.msra.mxu0 %v1881
    %2523 = vmatprep.subr.bf16.mxu0 %v1866
    %2524 = vmatpush1.bf16.msra.mxu0 %v1865
    %2525 = vmatprep.subr.bf16.mxu0 %v1850
    %2526 = vmatpush1.bf16.msra.mxu0 %v1849
    %2527 = vmatprep.subr.bf16.mxu0 %v1834
    %2528 = vmatpush1.bf16.msra.mxu0 %v1833
    %2529 = vmatprep.subr.bf16.mxu0 0
    %2530 = vmatpush2.bf16.msra.mxu0 0
    %2531 = vmatprep.subr.bf16.mxu0 0
    %2532 = vmatpush2.bf16.msra.mxu0 0
    %2533 = vmatprep.subr.bf16.mxu0 0
    %2534 = vmatpush2.bf16.msra.mxu0 0
    %2535 = vmatprep.subr.bf16.mxu0 0
    %2536 = vmatpush2.bf16.msra.mxu0 0
    %2537 = vmatprep.subr.bf16.mxu0 0
    %2538 = vmatpush2.bf16.msra.mxu0 0
    %2539 = vmatprep.subr.bf16.mxu0 0
    %2540 = vmatpush2.bf16.msra.mxu0 0
    %2541 = vmatprep.subr.bf16.mxu0 0
    %2542 = vmatpush2.bf16.msra.mxu0 0
    %2543 = vmatprep.subr.bf16.mxu0 0
    %2544 = vmatpush2.bf16.msra.mxu0 0
    %2545 = vmatprep.mubr.bf16.mxu0 0
    %2546 = vmatmul.mubr.bf16.gmra.mxu0 %v117
    %v2547 = vpop.f32.mrf.mxu0
    %v2548 = vadd.f32 0.0, %v2547
    %v2549 = vpop.f32.mrf.mxu0
    %v2550 = vadd.f32 0.0, %v2549
    %v2551 = vpop.f32.mrf.mxu0
    %v2552 = vadd.f32 0.0, %v2551
    %v2553 = vpop.f32.mrf.mxu0
    %v2554 = vadd.f32 0.0, %v2553
    %2555 = vmatprep.mubr.bf16.mxu0 0
    %2556 = vmatmul.mubr.bf16.gmra.mxu0 %v118
    %v2557 = vpop.f32.mrf.mxu0
    %v2558 = vadd.f32 0.0, %v2557
    %v2559 = vpop.f32.mrf.mxu0
    %v2560 = vadd.f32 0.0, %v2559
    %v2561 = vpop.f32.mrf.mxu0
    %v2562 = vadd.f32 0.0, %v2561
    %v2563 = vpop.f32.mrf.mxu0
    %v2564 = vadd.f32 0.0, %v2563
    %2565 = vdwg.mxu0
    %2566 = vmatprep.subr.bf16.mxu0 %v1948
    %2567 = vmatpush1.bf16.msra.mxu0 %v1947
    %2568 = vmatprep.subr.bf16.mxu0 %v1932
    %2569 = vmatpush1.bf16.msra.mxu0 %v1931
    %2570 = vmatprep.subr.bf16.mxu0 %v1916
    %2571 = vmatpush1.bf16.msra.mxu0 %v1915
    %2572 = vmatprep.subr.bf16.mxu0 %v1900
    %2573 = vmatpush1.bf16.msra.mxu0 %v1899
    %2574 = vmatprep.subr.bf16.mxu0 %v1884
    %2575 = vmatpush1.bf16.msra.mxu0 %v1883
    %2576 = vmatprep.subr.bf16.mxu0 %v1868
    %2577 = vmatpush1.bf16.msra.mxu0 %v1867
    %2578 = vmatprep.subr.bf16.mxu0 %v1852
    %2579 = vmatpush1.bf16.msra.mxu0 %v1851
    %2580 = vmatprep.subr.bf16.mxu0 %v1836
    %2581 = vmatpush1.bf16.msra.mxu0 %v1835
    %2582 = vmatprep.subr.bf16.mxu0 0
    %2583 = vmatpush2.bf16.msra.mxu0 0
    %2584 = vmatprep.subr.bf16.mxu0 0
    %2585 = vmatpush2.bf16.msra.mxu0 0
    %2586 = vmatprep.subr.bf16.mxu0 0
    %2587 = vmatpush2.bf16.msra.mxu0 0
    %2588 = vmatprep.subr.bf16.mxu0 0
    %2589 = vmatpush2.bf16.msra.mxu0 0
    %2590 = vmatprep.subr.bf16.mxu0 0
    %2591 = vmatpush2.bf16.msra.mxu0 0
    %2592 = vmatprep.subr.bf16.mxu0 0
    %2593 = vmatpush2.bf16.msra.mxu0 0
    %2594 = vmatprep.subr.bf16.mxu0 0
    %2595 = vmatpush2.bf16.msra.mxu0 0
    %2596 = vmatprep.subr.bf16.mxu0 0
    %2597 = vmatpush2.bf16.msra.mxu0 0
    %2598 = vmatprep.mubr.bf16.mxu0 0
    %2599 = vmatmul.mubr.bf16.gmra.mxu0 %v117
    %v2600 = vpop.f32.mrf.mxu0
    %v2601 = vadd.f32 0.0, %v2600
    %v2602 = vpop.f32.mrf.mxu0
    %v2603 = vadd.f32 0.0, %v2602
    %v2604 = vpop.f32.mrf.mxu0
    %v2605 = vadd.f32 0.0, %v2604
    %v2606 = vpop.f32.mrf.mxu0
    %v2607 = vadd.f32 0.0, %v2606
    %2608 = vmatprep.mubr.bf16.mxu0 0
    %2609 = vmatmul.mubr.bf16.gmra.mxu0 %v118
    %v2610 = vpop.f32.mrf.mxu0
    %v2611 = vadd.f32 0.0, %v2610
    %v2612 = vpop.f32.mrf.mxu0
    %v2613 = vadd.f32 0.0, %v2612
    %v2614 = vpop.f32.mrf.mxu0
    %v2615 = vadd.f32 0.0, %v2614
    %v2616 = vpop.f32.mrf.mxu0
    %v2617 = vadd.f32 0.0, %v2616
    %2618 = vdwg.mxu0
    %2619 = vmatprep.subr.bf16.mxu0 %v1950
    %2620 = vmatpush1.bf16.msra.mxu0 %v1949
    %2621 = vmatprep.subr.bf16.mxu0 %v1934
    %2622 = vmatpush1.bf16.msra.mxu0 %v1933
    %2623 = vmatprep.subr.bf16.mxu0 %v1918
    %2624 = vmatpush1.bf16.msra.mxu0 %v1917
    %2625 = vmatprep.subr.bf16.mxu0 %v1902
    %2626 = vmatpush1.bf16.msra.mxu0 %v1901
    %2627 = vmatprep.subr.bf16.mxu0 %v1886
    %2628 = vmatpush1.bf16.msra.mxu0 %v1885
    %2629 = vmatprep.subr.bf16.mxu0 %v1870
    %2630 = vmatpush1.bf16.msra.mxu0 %v1869
    %2631 = vmatprep.subr.bf16.mxu0 %v1854
    %2632 = vmatpush1.bf16.msra.mxu0 %v1853
    %2633 = vmatprep.subr.bf16.mxu0 %v1838
    %2634 = vmatpush1.bf16.msra.mxu0 %v1837
    %2635 = vmatprep.subr.bf16.mxu0 0
    %2636 = vmatpush2.bf16.msra.mxu0 0
    %2637 = vmatprep.subr.bf16.mxu0 0
    %2638 = vmatpush2.bf16.msra.mxu0 0
    %2639 = vmatprep.subr.bf16.mxu0 0
    %2640 = vmatpush2.bf16.msra.mxu0 0
    %2641 = vmatprep.subr.bf16.mxu0 0
    %2642 = vmatpush2.bf16.msra.mxu0 0
    %2643 = vmatprep.subr.bf16.mxu0 0
    %2644 = vmatpush2.bf16.msra.mxu0 0
    %2645 = vmatprep.subr.bf16.mxu0 0
    %2646 = vmatpush2.bf16.msra.mxu0 0
    %2647 = vmatprep.subr.bf16.mxu0 0
    %2648 = vmatpush2.bf16.msra.mxu0 0
    %2649 = vmatprep.subr.bf16.mxu0 0
    %2650 = vmatpush2.bf16.msra.mxu0 0
    %2651 = vmatprep.mubr.bf16.mxu0 0
    %2652 = vmatmul.mubr.bf16.gmra.mxu0 %v117
    %v2653 = vpop.f32.mrf.mxu0
    %v2654 = vadd.f32 0.0, %v2653
    %v2655 = vpop.f32.mrf.mxu0
    %v2656 = vadd.f32 0.0, %v2655
    %v2657 = vpop.f32.mrf.mxu0
    %v2658 = vadd.f32 0.0, %v2657
    %v2659 = vpop.f32.mrf.mxu0
    %v2660 = vadd.f32 0.0, %v2659
    %2661 = vmatprep.mubr.bf16.mxu0 0
    %2662 = vmatmul.mubr.bf16.gmra.mxu0 %v118
    %v2663 = vpop.f32.mrf.mxu0
    %v2664 = vadd.f32 0.0, %v2663
    %v2665 = vpop.f32.mrf.mxu0
    %v2666 = vadd.f32 0.0, %v2665
    %v2667 = vpop.f32.mrf.mxu0
    %v2668 = vadd.f32 0.0, %v2667
    %v2669 = vpop.f32.mrf.mxu0
    %v2670 = vadd.f32 0.0, %v2669
    %2671 = vdwg.mxu0
    %2672 = vmatprep.subr.bf16.mxu0 %v1952
    %2673 = vmatpush1.bf16.msra.mxu0 %v1951
    %2674 = vmatprep.subr.bf16.mxu0 %v1936
    %2675 = vmatpush1.bf16.msra.mxu0 %v1935
    %2676 = vmatprep.subr.bf16.mxu0 %v1920
    %2677 = vmatpush1.bf16.msra.mxu0 %v1919
    %2678 = vmatprep.subr.bf16.mxu0 %v1904
    %2679 = vmatpush1.bf16.msra.mxu0 %v1903
    %2680 = vmatprep.subr.bf16.mxu0 %v1888
    %2681 = vmatpush1.bf16.msra.mxu0 %v1887
    %2682 = vmatprep.subr.bf16.mxu0 %v1872
    %2683 = vmatpush1.bf16.msra.mxu0 %v1871
    %2684 = vmatprep.subr.bf16.mxu0 %v1856
    %2685 = vmatpush1.bf16.msra.mxu0 %v1855
    %2686 = vmatprep.subr.bf16.mxu0 %v1840
    %2687 = vmatpush1.bf16.msra.mxu0 %v1839
    %2688 = vmatprep.subr.bf16.mxu0 0
    %2689 = vmatpush2.bf16.msra.mxu0 0
    %2690 = vmatprep.subr.bf16.mxu0 0
    %2691 = vmatpush2.bf16.msra.mxu0 0
    %2692 = vmatprep.subr.bf16.mxu0 0
    %2693 = vmatpush2.bf16.msra.mxu0 0
    %2694 = vmatprep.subr.bf16.mxu0 0
    %2695 = vmatpush2.bf16.msra.mxu0 0
    %2696 = vmatprep.subr.bf16.mxu0 0
    %2697 = vmatpush2.bf16.msra.mxu0 0
    %2698 = vmatprep.subr.bf16.mxu0 0
    %2699 = vmatpush2.bf16.msra.mxu0 0
    %2700 = vmatprep.subr.bf16.mxu0 0
    %2701 = vmatpush2.bf16.msra.mxu0 0
    %2702 = vmatprep.subr.bf16.mxu0 0
    %2703 = vmatpush2.bf16.msra.mxu0 0
    %2704 = vmatprep.mubr.bf16.mxu0 0
    %2705 = vmatmul.mubr.bf16.gmra.mxu0 %v117
    %v2706 = vpop.f32.mrf.mxu0
    %v2707 = vadd.f32 0.0, %v2706
    %v2708 = vpop.f32.mrf.mxu0
    %v2709 = vadd.f32 0.0, %v2708
    %v2710 = vpop.f32.mrf.mxu0
    %v2711 = vadd.f32 0.0, %v2710
    %v2712 = vpop.f32.mrf.mxu0
    %v2713 = vadd.f32 0.0, %v2712
    %2714 = vmatprep.mubr.bf16.mxu0 0
    %2715 = vmatmul.mubr.bf16.gmra.mxu0 %v118
    %v2716 = vpop.f32.mrf.mxu0
    %v2717 = vadd.f32 0.0, %v2716
    %v2718 = vpop.f32.mrf.mxu0
    %v2719 = vadd.f32 0.0, %v2718
    %v2720 = vpop.f32.mrf.mxu0
    %v2721 = vadd.f32 0.0, %v2720
    %v2722 = vpop.f32.mrf.mxu0
    %v2723 = vadd.f32 0.0, %v2722
    %2724 = vdwg.mxu0
    %2725 = vmatprep.subr.bf16.mxu0 %v1954
    %2726 = vmatpush1.bf16.msra.mxu0 %v1953
    %2727 = vmatprep.subr.bf16.mxu0 %v1938
    %2728 = vmatpush1.bf16.msra.mxu0 %v1937
    %2729 = vmatprep.subr.bf16.mxu0 %v1922
    %2730 = vmatpush1.bf16.msra.mxu0 %v1921
    %2731 = vmatprep.subr.bf16.mxu0 %v1906
    %2732 = vmatpush1.bf16.msra.mxu0 %v1905
    %2733 = vmatprep.subr.bf16.mxu0 %v1890
    %2734 = vmatpush1.bf16.msra.mxu0 %v1889
    %2735 = vmatprep.subr.bf16.mxu0 %v1874
    %2736 = vmatpush1.bf16.msra.mxu0 %v1873
    %2737 = vmatprep.subr.bf16.mxu0 %v1858
    %2738 = vmatpush1.bf16.msra.mxu0 %v1857
    %2739 = vmatprep.subr.bf16.mxu0 %v1842
    %2740 = vmatpush1.bf16.msra.mxu0 %v1841
    %2741 = vmatprep.subr.bf16.mxu0 0
    %2742 = vmatpush2.bf16.msra.mxu0 0
    %2743 = vmatprep.subr.bf16.mxu0 0
    %2744 = vmatpush2.bf16.msra.mxu0 0
    %2745 = vmatprep.subr.bf16.mxu0 0
    %2746 = vmatpush2.bf16.msra.mxu0 0
    %2747 = vmatprep.subr.bf16.mxu0 0
    %2748 = vmatpush2.bf16.msra.mxu0 0
    %2749 = vmatprep.subr.bf16.mxu0 0
    %2750 = vmatpush2.bf16.msra.mxu0 0
    %2751 = vmatprep.subr.bf16.mxu0 0
    %2752 = vmatpush2.bf16.msra.mxu0 0
    %2753 = vmatprep.subr.bf16.mxu0 0
    %2754 = vmatpush2.bf16.msra.mxu0 0
    %2755 = vmatprep.subr.bf16.mxu0 0
    %2756 = vmatpush2.bf16.msra.mxu0 0
    %2757 = vmatprep.mubr.bf16.mxu0 0
    %2758 = vmatmul.mubr.bf16.gmra.mxu0 %v117
    %v2759 = vpop.f32.mrf.mxu0
    %v2760 = vadd.f32 0.0, %v2759
    %v2761 = vpop.f32.mrf.mxu0
    %v2762 = vadd.f32 0.0, %v2761
    %v2763 = vpop.f32.mrf.mxu0
    %v2764 = vadd.f32 0.0, %v2763
    %v2765 = vpop.f32.mrf.mxu0
    %v2766 = vadd.f32 0.0, %v2765
    %2767 = vmatprep.mubr.bf16.mxu0 0
    %2768 = vmatmul.mubr.bf16.gmra.mxu0 %v118
    %v2769 = vpop.f32.mrf.mxu0
    %v2770 = vadd.f32 0.0, %v2769
    %v2771 = vpop.f32.mrf.mxu0
    %v2772 = vadd.f32 0.0, %v2771
    %v2773 = vpop.f32.mrf.mxu0
    %v2774 = vadd.f32 0.0, %v2773
    %v2775 = vpop.f32.mrf.mxu0
    %v2776 = vadd.f32 0.0, %v2775
    %2777 = vdwg.mxu0
    %2778 = vmatprep.subr.bf16.mxu0 %v1956
    %2779 = vmatpush1.bf16.msra.mxu0 %v1955
    %2780 = vmatprep.subr.bf16.mxu0 %v1940
    %2781 = vmatpush1.bf16.msra.mxu0 %v1939
    %2782 = vmatprep.subr.bf16.mxu0 %v1924
    %2783 = vmatpush1.bf16.msra.mxu0 %v1923
    %2784 = vmatprep.subr.bf16.mxu0 %v1908
    %2785 = vmatpush1.bf16.msra.mxu0 %v1907
    %2786 = vmatprep.subr.bf16.mxu0 %v1892
    %2787 = vmatpush1.bf16.msra.mxu0 %v1891
    %2788 = vmatprep.subr.bf16.mxu0 %v1876
    %2789 = vmatpush1.bf16.msra.mxu0 %v1875
    %2790 = vmatprep.subr.bf16.mxu0 %v1860
    %2791 = vmatpush1.bf16.msra.mxu0 %v1859
    %2792 = vmatprep.subr.bf16.mxu0 %v1844
    %2793 = vmatpush1.bf16.msra.mxu0 %v1843
    %2794 = vmatprep.subr.bf16.mxu0 0
    %2795 = vmatpush2.bf16.msra.mxu0 0
    %2796 = vmatprep.subr.bf16.mxu0 0
    %2797 = vmatpush2.bf16.msra.mxu0 0
    %2798 = vmatprep.subr.bf16.mxu0 0
    %2799 = vmatpush2.bf16.msra.mxu0 0
    %2800 = vmatprep.subr.bf16.mxu0 0
    %2801 = vmatpush2.bf16.msra.mxu0 0
    %2802 = vmatprep.subr.bf16.mxu0 0
    %2803 = vmatpush2.bf16.msra.mxu0 0
    %2804 = vmatprep.subr.bf16.mxu0 0
    %2805 = vmatpush2.bf16.msra.mxu0 0
    %2806 = vmatprep.subr.bf16.mxu0 0
    %2807 = vmatpush2.bf16.msra.mxu0 0
    %2808 = vmatprep.subr.bf16.mxu0 0
    %2809 = vmatpush2.bf16.msra.mxu0 0
    %2810 = vmatprep.mubr.bf16.mxu0 0
    %2811 = vmatmul.mubr.bf16.gmra.mxu0 %v117
    %v2812 = vpop.f32.mrf.mxu0
    %v2813 = vadd.f32 0.0, %v2812
    %v2814 = vpop.f32.mrf.mxu0
    %v2815 = vadd.f32 0.0, %v2814
    %v2816 = vpop.f32.mrf.mxu0
    %v2817 = vadd.f32 0.0, %v2816
    %v2818 = vpop.f32.mrf.mxu0
    %v2819 = vadd.f32 0.0, %v2818
    %2820 = vmatprep.mubr.bf16.mxu0 0
    %2821 = vmatmul.mubr.bf16.gmra.mxu0 %v118
    %v2822 = vpop.f32.mrf.mxu0
    %v2823 = vadd.f32 0.0, %v2822
    %v2824 = vpop.f32.mrf.mxu0
    %v2825 = vadd.f32 0.0, %v2824
    %v2826 = vpop.f32.mrf.mxu0
    %v2827 = vadd.f32 0.0, %v2826
    %v2828 = vpop.f32.mrf.mxu0
    %v2829 = vadd.f32 0.0, %v2828
    %2830 = vdwg.mxu0
    %2831 = vmatprep.subr.bf16.mxu0 %v1958
    %2832 = vmatpush1.bf16.msra.mxu0 %v1957
    %2833 = vmatprep.subr.bf16.mxu0 %v1942
    %2834 = vmatpush1.bf16.msra.mxu0 %v1941
    %2835 = vmatprep.subr.bf16.mxu0 %v1926
    %2836 = vmatpush1.bf16.msra.mxu0 %v1925
    %2837 = vmatprep.subr.bf16.mxu0 %v1910
    %2838 = vmatpush1.bf16.msra.mxu0 %v1909
    %2839 = vmatprep.subr.bf16.mxu0 %v1894
    %2840 = vmatpush1.bf16.msra.mxu0 %v1893
    %2841 = vmatprep.subr.bf16.mxu0 %v1878
    %2842 = vmatpush1.bf16.msra.mxu0 %v1877
    %2843 = vmatprep.subr.bf16.mxu0 %v1862
    %2844 = vmatpush1.bf16.msra.mxu0 %v1861
    %2845 = vmatprep.subr.bf16.mxu0 %v1846
    %2846 = vmatpush1.bf16.msra.mxu0 %v1845
    %2847 = vmatprep.subr.bf16.mxu0 0
    %2848 = vmatpush2.bf16.msra.mxu0 0
    %2849 = vmatprep.subr.bf16.mxu0 0
    %2850 = vmatpush2.bf16.msra.mxu0 0
    %2851 = vmatprep.subr.bf16.mxu0 0
    %2852 = vmatpush2.bf16.msra.mxu0 0
    %2853 = vmatprep.subr.bf16.mxu0 0
    %2854 = vmatpush2.bf16.msra.mxu0 0
    %2855 = vmatprep.subr.bf16.mxu0 0
    %2856 = vmatpush2.bf16.msra.mxu0 0
    %2857 = vmatprep.subr.bf16.mxu0 0
    %2858 = vmatpush2.bf16.msra.mxu0 0
    %2859 = vmatprep.subr.bf16.mxu0 0
    %2860 = vmatpush2.bf16.msra.mxu0 0
    %2861 = vmatprep.subr.bf16.mxu0 0
    %2862 = vmatpush2.bf16.msra.mxu0 0
    %2863 = vmatprep.mubr.bf16.mxu0 0
    %2864 = vmatmul.mubr.bf16.gmra.mxu0 %v117
    %v2865 = vpop.f32.mrf.mxu0
    %v2866 = vadd.f32 0.0, %v2865
    %v2867 = vpop.f32.mrf.mxu0
    %v2868 = vadd.f32 0.0, %v2867
    %v2869 = vpop.f32.mrf.mxu0
    %v2870 = vadd.f32 0.0, %v2869
    %v2871 = vpop.f32.mrf.mxu0
    %v2872 = vadd.f32 0.0, %v2871
    %2873 = vmatprep.mubr.bf16.mxu0 0
    %2874 = vmatmul.mubr.bf16.gmra.mxu0 %v118
    %v2875 = vpop.f32.mrf.mxu0
    %v2876 = vadd.f32 0.0, %v2875
    %v2877 = vpop.f32.mrf.mxu0
    %v2878 = vadd.f32 0.0, %v2877
    %v2879 = vpop.f32.mrf.mxu0
    %v2880 = vadd.f32 0.0, %v2879
    %v2881 = vpop.f32.mrf.mxu0
    %v2882 = vadd.f32 0.0, %v2881
    %2883 = vdwg.mxu0
    %2884 = vmatprep.subr.bf16.mxu0 %v1960
    %2885 = vmatpush1.bf16.msra.mxu0 %v1959
    %2886 = vmatprep.subr.bf16.mxu0 %v1944
    %2887 = vmatpush1.bf16.msra.mxu0 %v1943
    %2888 = vmatprep.subr.bf16.mxu0 %v1928
    %2889 = vmatpush1.bf16.msra.mxu0 %v1927
    %2890 = vmatprep.subr.bf16.mxu0 %v1912
    %2891 = vmatpush1.bf16.msra.mxu0 %v1911
    %2892 = vmatprep.subr.bf16.mxu0 %v1896
    %2893 = vmatpush1.bf16.msra.mxu0 %v1895
    %2894 = vmatprep.subr.bf16.mxu0 %v1880
    %2895 = vmatpush1.bf16.msra.mxu0 %v1879
    %2896 = vmatprep.subr.bf16.mxu0 %v1864
    %2897 = vmatpush1.bf16.msra.mxu0 %v1863
    %2898 = vmatprep.subr.bf16.mxu0 %v1848
    %2899 = vmatpush1.bf16.msra.mxu0 %v1847
    %2900 = vmatprep.subr.bf16.mxu0 0
    %2901 = vmatpush2.bf16.msra.mxu0 0
    %2902 = vmatprep.subr.bf16.mxu0 0
    %2903 = vmatpush2.bf16.msra.mxu0 0
    %2904 = vmatprep.subr.bf16.mxu0 0
    %2905 = vmatpush2.bf16.msra.mxu0 0
    %2906 = vmatprep.subr.bf16.mxu0 0
    %2907 = vmatpush2.bf16.msra.mxu0 0
    %2908 = vmatprep.subr.bf16.mxu0 0
    %2909 = vmatpush2.bf16.msra.mxu0 0
    %2910 = vmatprep.subr.bf16.mxu0 0
    %2911 = vmatpush2.bf16.msra.mxu0 0
    %2912 = vmatprep.subr.bf16.mxu0 0
    %2913 = vmatpush2.bf16.msra.mxu0 0
    %2914 = vmatprep.subr.bf16.mxu0 0
    %2915 = vmatpush2.bf16.msra.mxu0 0
    %2916 = vmatprep.mubr.bf16.mxu0 0
    %2917 = vmatmul.mubr.bf16.gmra.mxu0 %v117
    %v2918 = vpop.f32.mrf.mxu0
    %v2919 = vadd.f32 0.0, %v2918
    %v2920 = vpop.f32.mrf.mxu0
    %v2921 = vadd.f32 0.0, %v2920
    %v2922 = vpop.f32.mrf.mxu0
    %v2923 = vadd.f32 0.0, %v2922
    %v2924 = vpop.f32.mrf.mxu0
    %v2925 = vadd.f32 0.0, %v2924
    %2926 = vmatprep.mubr.bf16.mxu0 0
    %2927 = vmatmul.mubr.bf16.gmra.mxu0 %v118
    %v2928 = vpop.f32.mrf.mxu0
    %v2929 = vadd.f32 0.0, %v2928
    %v2930 = vpop.f32.mrf.mxu0
    %v2931 = vadd.f32 0.0, %v2930
    %v2932 = vpop.f32.mrf.mxu0
    %v2933 = vadd.f32 0.0, %v2932
    %v2934 = vpop.f32.mrf.mxu0
    %v2935 = vadd.f32 0.0, %v2934
    %2936 = vdwg.mxu0
    %v2937 = vadd.f32 %v2124, %v2548
    %v2938 = vadd.f32 %v2126, %v2550
    %v2939 = vadd.f32 %v2177, %v2601
    %v2940 = vadd.f32 %v2179, %v2603
    %v2941 = vadd.f32 %v2230, %v2654
    %v2942 = vadd.f32 %v2232, %v2656
    %v2943 = vadd.f32 %v2283, %v2707
    %v2944 = vadd.f32 %v2285, %v2709
    %v2945 = vadd.f32 %v2336, %v2760
    %v2946 = vadd.f32 %v2338, %v2762
    %v2947 = vadd.f32 %v2389, %v2813
    %v2948 = vadd.f32 %v2391, %v2815
    %v2949 = vadd.f32 %v2442, %v2866
    %v2950 = vadd.f32 %v2444, %v2868
    %v2951 = vadd.f32 %v2495, %v2919
    %v2952 = vadd.f32 %v2497, %v2921
    %v2953 = vadd.f32 %v2128, %v2552
    %v2954 = vadd.f32 %v2130, %v2554
    %v2955 = vadd.f32 %v2181, %v2605
    %v2956 = vadd.f32 %v2183, %v2607
    %v2957 = vadd.f32 %v2234, %v2658
    %v2958 = vadd.f32 %v2236, %v2660
    %v2959 = vadd.f32 %v2287, %v2711
    %v2960 = vadd.f32 %v2289, %v2713
    %v2961 = vadd.f32 %v2340, %v2764
    %v2962 = vadd.f32 %v2342, %v2766
    %v2963 = vadd.f32 %v2393, %v2817
    %v2964 = vadd.f32 %v2395, %v2819
    %v2965 = vadd.f32 %v2446, %v2870
    %v2966 = vadd.f32 %v2448, %v2872
    %v2967 = vadd.f32 %v2499, %v2923
    %v2968 = vadd.f32 %v2501, %v2925
    %v2969 = vadd.f32 %v2134, %v2558
    %v2970 = vadd.f32 %v2136, %v2560
    %v2971 = vadd.f32 %v2187, %v2611
    %v2972 = vadd.f32 %v2189, %v2613
    %v2973 = vadd.f32 %v2240, %v2664
    %v2974 = vadd.f32 %v2242, %v2666
    %v2975 = vadd.f32 %v2293, %v2717
    %v2976 = vadd.f32 %v2295, %v2719
    %v2977 = vadd.f32 %v2346, %v2770
    %v2978 = vadd.f32 %v2348, %v2772
    %v2979 = vadd.f32 %v2399, %v2823
    %v2980 = vadd.f32 %v2401, %v2825
    %v2981 = vadd.f32 %v2452, %v2876
    %v2982 = vadd.f32 %v2454, %v2878
    %v2983 = vadd.f32 %v2505, %v2929
    %v2984 = vadd.f32 %v2507, %v2931
    %v2985 = vadd.f32 %v2138, %v2562
    %v2986 = vadd.f32 %v2140, %v2564
    %v2987 = vadd.f32 %v2191, %v2615
    %v2988 = vadd.f32 %v2193, %v2617
    %v2989 = vadd.f32 %v2244, %v2668
    %v2990 = vadd.f32 %v2246, %v2670
    %v2991 = vadd.f32 %v2297, %v2721
    %v2992 = vadd.f32 %v2299, %v2723
    %v2993 = vadd.f32 %v2350, %v2774
    %v2994 = vadd.f32 %v2352, %v2776
    %v2995 = vadd.f32 %v2403, %v2827
    %v2996 = vadd.f32 %v2405, %v2829
    %v2997 = vadd.f32 %v2456, %v2880
    %v2998 = vadd.f32 %v2458, %v2882
    %v2999 = vadd.f32 %v2509, %v2933
    %v3000 = vadd.f32 %v2511, %v2935
    %v3001 = vld [vmem:[#allocation8] sm:$0xff]
    %v3002 = vld [vmem:[#allocation8 + $0x8] sm:$0xff]
    %v3003 = vld [vmem:[#allocation8 + $0x10] sm:$0xff]
    %v3004 = vld [vmem:[#allocation8 + $0x18] sm:$0xff]
    %v3005 = vld [vmem:[#allocation8 + $0x20] sm:$0xff]
    %v3006 = vld [vmem:[#allocation8 + $0x28] sm:$0xff]
    %v3007 = vld [vmem:[#allocation8 + $0x30] sm:$0xff]
    %v3008 = vld [vmem:[#allocation8 + $0x38] sm:$0xff]
    %v3009 = vld [vmem:[#allocation8 + $0x40] sm:$0xff]
    %v3010 = vld [vmem:[#allocation8 + $0x48] sm:$0xff]
    %v3011 = vld [vmem:[#allocation8 + $0x50] sm:$0xff]
    %v3012 = vld [vmem:[#allocation8 + $0x58] sm:$0xff]
    %v3013 = vld [vmem:[#allocation8 + $0x60] sm:$0xff]
    %v3014 = vld [vmem:[#allocation8 + $0x68] sm:$0xff]
    %v3015 = vld [vmem:[#allocation8 + $0x70] sm:$0xff]
    %v3016 = vld [vmem:[#allocation8 + $0x78] sm:$0xff]
    %v3017 = vld [vmem:[#allocation8 + $0x80] sm:$0xff]
    %v3018 = vld [vmem:[#allocation8 + $0x88] sm:$0xff]
    %v3019 = vld [vmem:[#allocation8 + $0x90] sm:$0xff]
    %v3020 = vld [vmem:[#allocation8 + $0x98] sm:$0xff]
    %v3021 = vld [vmem:[#allocation8 + $0xa0] sm:$0xff]
    %v3022 = vld [vmem:[#allocation8 + $0xa8] sm:$0xff]
    %v3023 = vld [vmem:[#allocation8 + $0xb0] sm:$0xff]
    %v3024 = vld [vmem:[#allocation8 + $0xb8] sm:$0xff]
    %v3025 = vld [vmem:[#allocation8 + $0xc0] sm:$0xff]
    %v3026 = vld [vmem:[#allocation8 + $0xc8] sm:$0xff]
    %v3027 = vld [vmem:[#allocation8 + $0xd0] sm:$0xff]
    %v3028 = vld [vmem:[#allocation8 + $0xd8] sm:$0xff]
    %v3029 = vld [vmem:[#allocation8 + $0xe0] sm:$0xff]
    %v3030 = vld [vmem:[#allocation8 + $0xe8] sm:$0xff]
    %v3031 = vld [vmem:[#allocation8 + $0xf0] sm:$0xff]
    %v3032 = vld [vmem:[#allocation8 + $0xf8] sm:$0xff]
    %v3033 = vld [vmem:[#allocation8 + $0x100] sm:$0xff]
    %v3034 = vld [vmem:[#allocation8 + $0x108] sm:$0xff]
    %v3035 = vld [vmem:[#allocation8 + $0x110] sm:$0xff]
    %v3036 = vld [vmem:[#allocation8 + $0x118] sm:$0xff]
    %v3037 = vld [vmem:[#allocation8 + $0x120] sm:$0xff]
    %v3038 = vld [vmem:[#allocation8 + $0x128] sm:$0xff]
    %v3039 = vld [vmem:[#allocation8 + $0x130] sm:$0xff]
    %v3040 = vld [vmem:[#allocation8 + $0x138] sm:$0xff]
    %v3041 = vld [vmem:[#allocation8 + $0x140] sm:$0xff]
    %v3042 = vld [vmem:[#allocation8 + $0x148] sm:$0xff]
    %v3043 = vld [vmem:[#allocation8 + $0x150] sm:$0xff]
    %v3044 = vld [vmem:[#allocation8 + $0x158] sm:$0xff]
    %v3045 = vld [vmem:[#allocation8 + $0x160] sm:$0xff]
    %v3046 = vld [vmem:[#allocation8 + $0x168] sm:$0xff]
    %v3047 = vld [vmem:[#allocation8 + $0x170] sm:$0xff]
    %v3048 = vld [vmem:[#allocation8 + $0x178] sm:$0xff]
    %v3049 = vld [vmem:[#allocation8 + $0x180] sm:$0xff]
    %v3050 = vld [vmem:[#allocation8 + $0x188] sm:$0xff]
    %v3051 = vld [vmem:[#allocation8 + $0x190] sm:$0xff]
    %v3052 = vld [vmem:[#allocation8 + $0x198] sm:$0xff]
    %v3053 = vld [vmem:[#allocation8 + $0x1a0] sm:$0xff]
    %v3054 = vld [vmem:[#allocation8 + $0x1a8] sm:$0xff]
    %v3055 = vld [vmem:[#allocation8 + $0x1b0] sm:$0xff]
    %v3056 = vld [vmem:[#allocation8 + $0x1b8] sm:$0xff]
    %v3057 = vld [vmem:[#allocation8 + $0x1c0] sm:$0xff]
    %v3058 = vld [vmem:[#allocation8 + $0x1c8] sm:$0xff]
    %v3059 = vld [vmem:[#allocation8 + $0x1d0] sm:$0xff]
    %v3060 = vld [vmem:[#allocation8 + $0x1d8] sm:$0xff]
    %v3061 = vld [vmem:[#allocation8 + $0x1e0] sm:$0xff]
    %v3062 = vld [vmem:[#allocation8 + $0x1e8] sm:$0xff]
    %v3063 = vld [vmem:[#allocation8 + $0x1f0] sm:$0xff]
    %v3064 = vld [vmem:[#allocation8 + $0x1f8] sm:$0xff]
    %v3065 = vld [vmem:[#allocation8 + $0x200] sm:$0xff]
    %v3066 = vld [vmem:[#allocation8 + $0x208] sm:$0xff]
    %v3067 = vld [vmem:[#allocation8 + $0x210] sm:$0xff]
    %v3068 = vld [vmem:[#allocation8 + $0x218] sm:$0xff]
    %v3069 = vld [vmem:[#allocation8 + $0x220] sm:$0xff]
    %v3070 = vld [vmem:[#allocation8 + $0x228] sm:$0xff]
    %v3071 = vld [vmem:[#allocation8 + $0x230] sm:$0xff]
    %v3072 = vld [vmem:[#allocation8 + $0x238] sm:$0xff]
    %v3073 = vld [vmem:[#allocation8 + $0x240] sm:$0xff]
    %v3074 = vld [vmem:[#allocation8 + $0x248] sm:$0xff]
    %v3075 = vld [vmem:[#allocation8 + $0x250] sm:$0xff]
    %v3076 = vld [vmem:[#allocation8 + $0x258] sm:$0xff]
    %v3077 = vld [vmem:[#allocation8 + $0x260] sm:$0xff]
    %v3078 = vld [vmem:[#allocation8 + $0x268] sm:$0xff]
    %v3079 = vld [vmem:[#allocation8 + $0x270] sm:$0xff]
    %v3080 = vld [vmem:[#allocation8 + $0x278] sm:$0xff]
    %v3081 = vld [vmem:[#allocation8 + $0x280] sm:$0xff]
    %v3082 = vld [vmem:[#allocation8 + $0x288] sm:$0xff]
    %v3083 = vld [vmem:[#allocation8 + $0x290] sm:$0xff]
    %v3084 = vld [vmem:[#allocation8 + $0x298] sm:$0xff]
    %v3085 = vld [vmem:[#allocation8 + $0x2a0] sm:$0xff]
    %v3086 = vld [vmem:[#allocation8 + $0x2a8] sm:$0xff]
    %v3087 = vld [vmem:[#allocation8 + $0x2b0] sm:$0xff]
    %v3088 = vld [vmem:[#allocation8 + $0x2b8] sm:$0xff]
    %v3089 = vld [vmem:[#allocation8 + $0x2c0] sm:$0xff]
    %v3090 = vld [vmem:[#allocation8 + $0x2c8] sm:$0xff]
    %v3091 = vld [vmem:[#allocation8 + $0x2d0] sm:$0xff]
    %v3092 = vld [vmem:[#allocation8 + $0x2d8] sm:$0xff]
    %v3093 = vld [vmem:[#allocation8 + $0x2e0] sm:$0xff]
    %v3094 = vld [vmem:[#allocation8 + $0x2e8] sm:$0xff]
    %v3095 = vld [vmem:[#allocation8 + $0x2f0] sm:$0xff]
    %v3096 = vld [vmem:[#allocation8 + $0x2f8] sm:$0xff]
    %v3097 = vld [vmem:[#allocation8 + $0x300] sm:$0xff]
    %v3098 = vld [vmem:[#allocation8 + $0x308] sm:$0xff]
    %v3099 = vld [vmem:[#allocation8 + $0x310] sm:$0xff]
    %v3100 = vld [vmem:[#allocation8 + $0x318] sm:$0xff]
    %v3101 = vld [vmem:[#allocation8 + $0x320] sm:$0xff]
    %v3102 = vld [vmem:[#allocation8 + $0x328] sm:$0xff]
    %v3103 = vld [vmem:[#allocation8 + $0x330] sm:$0xff]
    %v3104 = vld [vmem:[#allocation8 + $0x338] sm:$0xff]
    %v3105 = vld [vmem:[#allocation8 + $0x340] sm:$0xff]
    %v3106 = vld [vmem:[#allocation8 + $0x348] sm:$0xff]
    %v3107 = vld [vmem:[#allocation8 + $0x350] sm:$0xff]
    %v3108 = vld [vmem:[#allocation8 + $0x358] sm:$0xff]
    %v3109 = vld [vmem:[#allocation8 + $0x360] sm:$0xff]
    %v3110 = vld [vmem:[#allocation8 + $0x368] sm:$0xff]
    %v3111 = vld [vmem:[#allocation8 + $0x370] sm:$0xff]
    %v3112 = vld [vmem:[#allocation8 + $0x378] sm:$0xff]
    %v3113 = vld [vmem:[#allocation8 + $0x380] sm:$0xff]
    %v3114 = vld [vmem:[#allocation8 + $0x388] sm:$0xff]
    %v3115 = vld [vmem:[#allocation8 + $0x390] sm:$0xff]
    %v3116 = vld [vmem:[#allocation8 + $0x398] sm:$0xff]
    %v3117 = vld [vmem:[#allocation8 + $0x3a0] sm:$0xff]
    %v3118 = vld [vmem:[#allocation8 + $0x3a8] sm:$0xff]
    %v3119 = vld [vmem:[#allocation8 + $0x3b0] sm:$0xff]
    %v3120 = vld [vmem:[#allocation8 + $0x3b8] sm:$0xff]
    %v3121 = vld [vmem:[#allocation8 + $0x3c0] sm:$0xff]
    %v3122 = vld [vmem:[#allocation8 + $0x3c8] sm:$0xff]
    %v3123 = vld [vmem:[#allocation8 + $0x3d0] sm:$0xff]
    %v3124 = vld [vmem:[#allocation8 + $0x3d8] sm:$0xff]
    %v3125 = vld [vmem:[#allocation8 + $0x3e0] sm:$0xff]
    %v3126 = vld [vmem:[#allocation8 + $0x3e8] sm:$0xff]
    %v3127 = vld [vmem:[#allocation8 + $0x3f0] sm:$0xff]
    %v3128 = vld [vmem:[#allocation8 + $0x3f8] sm:$0xff]
    %v3257 = vunpack.c.l.b16 %v3001
    %v3258 = vunpack.c.h.b16 %v3001
    %v3259 = vunpack.c.l.b16 %v3002
    %v3260 = vunpack.c.h.b16 %v3002
    %v3261 = vunpack.c.l.b16 %v3003
    %v3262 = vunpack.c.h.b16 %v3003
    %v3263 = vunpack.c.l.b16 %v3004
    %v3264 = vunpack.c.h.b16 %v3004
    %v3265 = vunpack.c.l.b16 %v3005
    %v3266 = vunpack.c.h.b16 %v3005
    %v3267 = vunpack.c.l.b16 %v3006
    %v3268 = vunpack.c.h.b16 %v3006
    %v3269 = vunpack.c.l.b16 %v3007
    %v3270 = vunpack.c.h.b16 %v3007
    %v3271 = vunpack.c.l.b16 %v3008
    %v3272 = vunpack.c.h.b16 %v3008
    %v3273 = vunpack.c.l.b16 %v3009
    %v3274 = vunpack.c.h.b16 %v3009
    %v3275 = vunpack.c.l.b16 %v3010
    %v3276 = vunpack.c.h.b16 %v3010
    %v3277 = vunpack.c.l.b16 %v3011
    %v3278 = vunpack.c.h.b16 %v3011
    %v3279 = vunpack.c.l.b16 %v3012
    %v3280 = vunpack.c.h.b16 %v3012
    %v3281 = vunpack.c.l.b16 %v3013
    %v3282 = vunpack.c.h.b16 %v3013
    %v3283 = vunpack.c.l.b16 %v3014
    %v3284 = vunpack.c.h.b16 %v3014
    %v3285 = vunpack.c.l.b16 %v3015
    %v3286 = vunpack.c.h.b16 %v3015
    %v3287 = vunpack.c.l.b16 %v3016
    %v3288 = vunpack.c.h.b16 %v3016
    %v3289 = vunpack.c.l.b16 %v3017
    %v3290 = vunpack.c.h.b16 %v3017
    %v3291 = vunpack.c.l.b16 %v3018
    %v3292 = vunpack.c.h.b16 %v3018
    %v3293 = vunpack.c.l.b16 %v3019
    %v3294 = vunpack.c.h.b16 %v3019
    %v3295 = vunpack.c.l.b16 %v3020
    %v3296 = vunpack.c.h.b16 %v3020
    %v3297 = vunpack.c.l.b16 %v3021
    %v3298 = vunpack.c.h.b16 %v3021
    %v3299 = vunpack.c.l.b16 %v3022
    %v3300 = vunpack.c.h.b16 %v3022
    %v3301 = vunpack.c.l.b16 %v3023
    %v3302 = vunpack.c.h.b16 %v3023
    %v3303 = vunpack.c.l.b16 %v3024
    %v3304 = vunpack.c.h.b16 %v3024
    %v3305 = vunpack.c.l.b16 %v3025
    %v3306 = vunpack.c.h.b16 %v3025
    %v3307 = vunpack.c.l.b16 %v3026
    %v3308 = vunpack.c.h.b16 %v3026
    %v3309 = vunpack.c.l.b16 %v3027
    %v3310 = vunpack.c.h.b16 %v3027
    %v3311 = vunpack.c.l.b16 %v3028
    %v3312 = vunpack.c.h.b16 %v3028
    %v3313 = vunpack.c.l.b16 %v3029
    %v3314 = vunpack.c.h.b16 %v3029
    %v3315 = vunpack.c.l.b16 %v3030
    %v3316 = vunpack.c.h.b16 %v3030
    %v3317 = vunpack.c.l.b16 %v3031
    %v3318 = vunpack.c.h.b16 %v3031
    %v3319 = vunpack.c.l.b16 %v3032
    %v3320 = vunpack.c.h.b16 %v3032
    %v3321 = vunpack.c.l.b16 %v3033
    %v3322 = vunpack.c.h.b16 %v3033
    %v3323 = vunpack.c.l.b16 %v3034
    %v3324 = vunpack.c.h.b16 %v3034
    %v3325 = vunpack.c.l.b16 %v3035
    %v3326 = vunpack.c.h.b16 %v3035
    %v3327 = vunpack.c.l.b16 %v3036
    %v3328 = vunpack.c.h.b16 %v3036
    %v3329 = vunpack.c.l.b16 %v3037
    %v3330 = vunpack.c.h.b16 %v3037
    %v3331 = vunpack.c.l.b16 %v3038
    %v3332 = vunpack.c.h.b16 %v3038
    %v3333 = vunpack.c.l.b16 %v3039
    %v3334 = vunpack.c.h.b16 %v3039
    %v3335 = vunpack.c.l.b16 %v3040
    %v3336 = vunpack.c.h.b16 %v3040
    %v3337 = vunpack.c.l.b16 %v3041
    %v3338 = vunpack.c.h.b16 %v3041
    %v3339 = vunpack.c.l.b16 %v3042
    %v3340 = vunpack.c.h.b16 %v3042
    %v3341 = vunpack.c.l.b16 %v3043
    %v3342 = vunpack.c.h.b16 %v3043
    %v3343 = vunpack.c.l.b16 %v3044
    %v3344 = vunpack.c.h.b16 %v3044
    %v3345 = vunpack.c.l.b16 %v3045
    %v3346 = vunpack.c.h.b16 %v3045
    %v3347 = vunpack.c.l.b16 %v3046
    %v3348 = vunpack.c.h.b16 %v3046
    %v3349 = vunpack.c.l.b16 %v3047
    %v3350 = vunpack.c.h.b16 %v3047
    %v3351 = vunpack.c.l.b16 %v3048
    %v3352 = vunpack.c.h.b16 %v3048
    %v3353 = vunpack.c.l.b16 %v3049
    %v3354 = vunpack.c.h.b16 %v3049
    %v3355 = vunpack.c.l.b16 %v3050
    %v3356 = vunpack.c.h.b16 %v3050
    %v3357 = vunpack.c.l.b16 %v3051
    %v3358 = vunpack.c.h.b16 %v3051
    %v3359 = vunpack.c.l.b16 %v3052
    %v3360 = vunpack.c.h.b16 %v3052
    %v3361 = vunpack.c.l.b16 %v3053
    %v3362 = vunpack.c.h.b16 %v3053
    %v3363 = vunpack.c.l.b16 %v3054
    %v3364 = vunpack.c.h.b16 %v3054
    %v3365 = vunpack.c.l.b16 %v3055
    %v3366 = vunpack.c.h.b16 %v3055
    %v3367 = vunpack.c.l.b16 %v3056
    %v3368 = vunpack.c.h.b16 %v3056
    %v3369 = vunpack.c.l.b16 %v3057
    %v3370 = vunpack.c.h.b16 %v3057
    %v3371 = vunpack.c.l.b16 %v3058
    %v3372 = vunpack.c.h.b16 %v3058
    %v3373 = vunpack.c.l.b16 %v3059
    %v3374 = vunpack.c.h.b16 %v3059
    %v3375 = vunpack.c.l.b16 %v3060
    %v3376 = vunpack.c.h.b16 %v3060
    %v3377 = vunpack.c.l.b16 %v3061
    %v3378 = vunpack.c.h.b16 %v3061
    %v3379 = vunpack.c.l.b16 %v3062
    %v3380 = vunpack.c.h.b16 %v3062
    %v3381 = vunpack.c.l.b16 %v3063
    %v3382 = vunpack.c.h.b16 %v3063
    %v3383 = vunpack.c.l.b16 %v3064
    %v3384 = vunpack.c.h.b16 %v3064
    %v3385 = vunpack.c.l.b16 %v3065
    %v3386 = vunpack.c.h.b16 %v3065
    %v3387 = vunpack.c.l.b16 %v3066
    %v3388 = vunpack.c.h.b16 %v3066
    %v3389 = vunpack.c.l.b16 %v3067
    %v3390 = vunpack.c.h.b16 %v3067
    %v3391 = vunpack.c.l.b16 %v3068
    %v3392 = vunpack.c.h.b16 %v3068
    %v3393 = vunpack.c.l.b16 %v3069
    %v3394 = vunpack.c.h.b16 %v3069
    %v3395 = vunpack.c.l.b16 %v3070
    %v3396 = vunpack.c.h.b16 %v3070
    %v3397 = vunpack.c.l.b16 %v3071
    %v3398 = vunpack.c.h.b16 %v3071
    %v3399 = vunpack.c.l.b16 %v3072
    %v3400 = vunpack.c.h.b16 %v3072
    %v3401 = vunpack.c.l.b16 %v3073
    %v3402 = vunpack.c.h.b16 %v3073
    %v3403 = vunpack.c.l.b16 %v3074
    %v3404 = vunpack.c.h.b16 %v3074
    %v3405 = vunpack.c.l.b16 %v3075
    %v3406 = vunpack.c.h.b16 %v3075
    %v3407 = vunpack.c.l.b16 %v3076
    %v3408 = vunpack.c.h.b16 %v3076
    %v3409 = vunpack.c.l.b16 %v3077
    %v3410 = vunpack.c.h.b16 %v3077
    %v3411 = vunpack.c.l.b16 %v3078
    %v3412 = vunpack.c.h.b16 %v3078
    %v3413 = vunpack.c.l.b16 %v3079
    %v3414 = vunpack.c.h.b16 %v3079
    %v3415 = vunpack.c.l.b16 %v3080
    %v3416 = vunpack.c.h.b16 %v3080
    %v3417 = vunpack.c.l.b16 %v3081
    %v3418 = vunpack.c.h.b16 %v3081
    %v3419 = vunpack.c.l.b16 %v3082
    %v3420 = vunpack.c.h.b16 %v3082
    %v3421 = vunpack.c.l.b16 %v3083
    %v3422 = vunpack.c.h.b16 %v3083
    %v3423 = vunpack.c.l.b16 %v3084
    %v3424 = vunpack.c.h.b16 %v3084
    %v3425 = vunpack.c.l.b16 %v3085
    %v3426 = vunpack.c.h.b16 %v3085
    %v3427 = vunpack.c.l.b16 %v3086
    %v3428 = vunpack.c.h.b16 %v3086
    %v3429 = vunpack.c.l.b16 %v3087
    %v3430 = vunpack.c.h.b16 %v3087
    %v3431 = vunpack.c.l.b16 %v3088
    %v3432 = vunpack.c.h.b16 %v3088
    %v3433 = vunpack.c.l.b16 %v3089
    %v3434 = vunpack.c.h.b16 %v3089
    %v3435 = vunpack.c.l.b16 %v3090
    %v3436 = vunpack.c.h.b16 %v3090
    %v3437 = vunpack.c.l.b16 %v3091
    %v3438 = vunpack.c.h.b16 %v3091
    %v3439 = vunpack.c.l.b16 %v3092
    %v3440 = vunpack.c.h.b16 %v3092
    %v3441 = vunpack.c.l.b16 %v3093
    %v3442 = vunpack.c.h.b16 %v3093
    %v3443 = vunpack.c.l.b16 %v3094
    %v3444 = vunpack.c.h.b16 %v3094
    %v3445 = vunpack.c.l.b16 %v3095
    %v3446 = vunpack.c.h.b16 %v3095
    %v3447 = vunpack.c.l.b16 %v3096
    %v3448 = vunpack.c.h.b16 %v3096
    %v3449 = vunpack.c.l.b16 %v3097
    %v3450 = vunpack.c.h.b16 %v3097
    %v3451 = vunpack.c.l.b16 %v3098
    %v3452 = vunpack.c.h.b16 %v3098
    %v3453 = vunpack.c.l.b16 %v3099
    %v3454 = vunpack.c.h.b16 %v3099
    %v3455 = vunpack.c.l.b16 %v3100
    %v3456 = vunpack.c.h.b16 %v3100
    %v3457 = vunpack.c.l.b16 %v3101
    %v3458 = vunpack.c.h.b16 %v3101
    %v3459 = vunpack.c.l.b16 %v3102
    %v3460 = vunpack.c.h.b16 %v3102
    %v3461 = vunpack.c.l.b16 %v3103
    %v3462 = vunpack.c.h.b16 %v3103
    %v3463 = vunpack.c.l.b16 %v3104
    %v3464 = vunpack.c.h.b16 %v3104
    %v3465 = vunpack.c.l.b16 %v3105
    %v3466 = vunpack.c.h.b16 %v3105
    %v3467 = vunpack.c.l.b16 %v3106
    %v3468 = vunpack.c.h.b16 %v3106
    %v3469 = vunpack.c.l.b16 %v3107
    %v3470 = vunpack.c.h.b16 %v3107
    %v3471 = vunpack.c.l.b16 %v3108
    %v3472 = vunpack.c.h.b16 %v3108
    %v3473 = vunpack.c.l.b16 %v3109
    %v3474 = vunpack.c.h.b16 %v3109
    %v3475 = vunpack.c.l.b16 %v3110
    %v3476 = vunpack.c.h.b16 %v3110
    %v3477 = vunpack.c.l.b16 %v3111
    %v3478 = vunpack.c.h.b16 %v3111
    %v3479 = vunpack.c.l.b16 %v3112
    %v3480 = vunpack.c.h.b16 %v3112
    %v3481 = vunpack.c.l.b16 %v3113
    %v3482 = vunpack.c.h.b16 %v3113
    %v3483 = vunpack.c.l.b16 %v3114
    %v3484 = vunpack.c.h.b16 %v3114
    %v3485 = vunpack.c.l.b16 %v3115
    %v3486 = vunpack.c.h.b16 %v3115
    %v3487 = vunpack.c.l.b16 %v3116
    %v3488 = vunpack.c.h.b16 %v3116
    %v3489 = vunpack.c.l.b16 %v3117
    %v3490 = vunpack.c.h.b16 %v3117
    %v3491 = vunpack.c.l.b16 %v3118
    %v3492 = vunpack.c.h.b16 %v3118
    %v3493 = vunpack.c.l.b16 %v3119
    %v3494 = vunpack.c.h.b16 %v3119
    %v3495 = vunpack.c.l.b16 %v3120
    %v3496 = vunpack.c.h.b16 %v3120
    %v3497 = vunpack.c.l.b16 %v3121
    %v3498 = vunpack.c.h.b16 %v3121
    %v3499 = vunpack.c.l.b16 %v3122
    %v3500 = vunpack.c.h.b16 %v3122
    %v3501 = vunpack.c.l.b16 %v3123
    %v3502 = vunpack.c.h.b16 %v3123
    %v3503 = vunpack.c.l.b16 %v3124
    %v3504 = vunpack.c.h.b16 %v3124
    %v3505 = vunpack.c.l.b16 %v3125
    %v3506 = vunpack.c.h.b16 %v3125
    %v3507 = vunpack.c.l.b16 %v3126
    %v3508 = vunpack.c.h.b16 %v3126
    %v3509 = vunpack.c.l.b16 %v3127
    %v3510 = vunpack.c.h.b16 %v3127
    %v3511 = vunpack.c.l.b16 %v3128
    %v3512 = vunpack.c.h.b16 %v3128
    %v3513 = vpack.c.b16 %v3273, %v3257
    %v3514 = vpack.c.b16 %v3274, %v3258
    %v3515 = vpack.c.b16 %v3275, %v3259
    %v3516 = vpack.c.b16 %v3276, %v3260
    %v3517 = vpack.c.b16 %v3277, %v3261
    %v3518 = vpack.c.b16 %v3278, %v3262
    %v3519 = vpack.c.b16 %v3279, %v3263
    %v3520 = vpack.c.b16 %v3280, %v3264
    %v3521 = vpack.c.b16 %v3281, %v3265
    %v3522 = vpack.c.b16 %v3282, %v3266
    %v3523 = vpack.c.b16 %v3283, %v3267
    %v3524 = vpack.c.b16 %v3284, %v3268
    %v3525 = vpack.c.b16 %v3285, %v3269
    %v3526 = vpack.c.b16 %v3286, %v3270
    %v3527 = vpack.c.b16 %v3287, %v3271
    %v3528 = vpack.c.b16 %v3288, %v3272
    %v3529 = vpack.c.b16 %v3305, %v3289
    %v3530 = vpack.c.b16 %v3306, %v3290
    %v3531 = vpack.c.b16 %v3307, %v3291
    %v3532 = vpack.c.b16 %v3308, %v3292
    %v3533 = vpack.c.b16 %v3309, %v3293
    %v3534 = vpack.c.b16 %v3310, %v3294
    %v3535 = vpack.c.b16 %v3311, %v3295
    %v3536 = vpack.c.b16 %v3312, %v3296
    %v3537 = vpack.c.b16 %v3313, %v3297
    %v3538 = vpack.c.b16 %v3314, %v3298
    %v3539 = vpack.c.b16 %v3315, %v3299
    %v3540 = vpack.c.b16 %v3316, %v3300
    %v3541 = vpack.c.b16 %v3317, %v3301
    %v3542 = vpack.c.b16 %v3318, %v3302
    %v3543 = vpack.c.b16 %v3319, %v3303
    %v3544 = vpack.c.b16 %v3320, %v3304
    %v3545 = vpack.c.b16 %v3337, %v3321
    %v3546 = vpack.c.b16 %v3338, %v3322
    %v3547 = vpack.c.b16 %v3339, %v3323
    %v3548 = vpack.c.b16 %v3340, %v3324
    %v3549 = vpack.c.b16 %v3341, %v3325
    %v3550 = vpack.c.b16 %v3342, %v3326
    %v3551 = vpack.c.b16 %v3343, %v3327
    %v3552 = vpack.c.b16 %v3344, %v3328
    %v3553 = vpack.c.b16 %v3345, %v3329
    %v3554 = vpack.c.b16 %v3346, %v3330
    %v3555 = vpack.c.b16 %v3347, %v3331
    %v3556 = vpack.c.b16 %v3348, %v3332
    %v3557 = vpack.c.b16 %v3349, %v3333
    %v3558 = vpack.c.b16 %v3350, %v3334
    %v3559 = vpack.c.b16 %v3351, %v3335
    %v3560 = vpack.c.b16 %v3352, %v3336
    %v3561 = vpack.c.b16 %v3369, %v3353
    %v3562 = vpack.c.b16 %v3370, %v3354
    %v3563 = vpack.c.b16 %v3371, %v3355
    %v3564 = vpack.c.b16 %v3372, %v3356
    %v3565 = vpack.c.b16 %v3373, %v3357
    %v3566 = vpack.c.b16 %v3374, %v3358
    %v3567 = vpack.c.b16 %v3375, %v3359
    %v3568 = vpack.c.b16 %v3376, %v3360
    %v3569 = vpack.c.b16 %v3377, %v3361
    %v3570 = vpack.c.b16 %v3378, %v3362
    %v3571 = vpack.c.b16 %v3379, %v3363
    %v3572 = vpack.c.b16 %v3380, %v3364
    %v3573 = vpack.c.b16 %v3381, %v3365
    %v3574 = vpack.c.b16 %v3382, %v3366
    %v3575 = vpack.c.b16 %v3383, %v3367
    %v3576 = vpack.c.b16 %v3384, %v3368
    %v3577 = vpack.c.b16 %v3401, %v3385
    %v3578 = vpack.c.b16 %v3402, %v3386
    %v3579 = vpack.c.b16 %v3403, %v3387
    %v3580 = vpack.c.b16 %v3404, %v3388
    %v3581 = vpack.c.b16 %v3405, %v3389
    %v3582 = vpack.c.b16 %v3406, %v3390
    %v3583 = vpack.c.b16 %v3407, %v3391
    %v3584 = vpack.c.b16 %v3408, %v3392
    %v3585 = vpack.c.b16 %v3409, %v3393
    %v3586 = vpack.c.b16 %v3410, %v3394
    %v3587 = vpack.c.b16 %v3411, %v3395
    %v3588 = vpack.c.b16 %v3412, %v3396
    %v3589 = vpack.c.b16 %v3413, %v3397
    %v3590 = vpack.c.b16 %v3414, %v3398
    %v3591 = vpack.c.b16 %v3415, %v3399
    %v3592 = vpack.c.b16 %v3416, %v3400
    %v3593 = vpack.c.b16 %v3433, %v3417
    %v3594 = vpack.c.b16 %v3434, %v3418
    %v3595 = vpack.c.b16 %v3435, %v3419
    %v3596 = vpack.c.b16 %v3436, %v3420
    %v3597 = vpack.c.b16 %v3437, %v3421
    %v3598 = vpack.c.b16 %v3438, %v3422
    %v3599 = vpack.c.b16 %v3439, %v3423
    %v3600 = vpack.c.b16 %v3440, %v3424
    %v3601 = vpack.c.b16 %v3441, %v3425
    %v3602 = vpack.c.b16 %v3442, %v3426
    %v3603 = vpack.c.b16 %v3443, %v3427
    %v3604 = vpack.c.b16 %v3444, %v3428
    %v3605 = vpack.c.b16 %v3445, %v3429
    %v3606 = vpack.c.b16 %v3446, %v3430
    %v3607 = vpack.c.b16 %v3447, %v3431
    %v3608 = vpack.c.b16 %v3448, %v3432
    %v3609 = vpack.c.b16 %v3465, %v3449
    %v3610 = vpack.c.b16 %v3466, %v3450
    %v3611 = vpack.c.b16 %v3467, %v3451
    %v3612 = vpack.c.b16 %v3468, %v3452
    %v3613 = vpack.c.b16 %v3469, %v3453
    %v3614 = vpack.c.b16 %v3470, %v3454
    %v3615 = vpack.c.b16 %v3471, %v3455
    %v3616 = vpack.c.b16 %v3472, %v3456
    %v3617 = vpack.c.b16 %v3473, %v3457
    %v3618 = vpack.c.b16 %v3474, %v3458
    %v3619 = vpack.c.b16 %v3475, %v3459
    %v3620 = vpack.c.b16 %v3476, %v3460
    %v3621 = vpack.c.b16 %v3477, %v3461
    %v3622 = vpack.c.b16 %v3478, %v3462
    %v3623 = vpack.c.b16 %v3479, %v3463
    %v3624 = vpack.c.b16 %v3480, %v3464
    %v3625 = vpack.c.b16 %v3497, %v3481
    %v3626 = vpack.c.b16 %v3498, %v3482
    %v3627 = vpack.c.b16 %v3499, %v3483
    %v3628 = vpack.c.b16 %v3500, %v3484
    %v3629 = vpack.c.b16 %v3501, %v3485
    %v3630 = vpack.c.b16 %v3502, %v3486
    %v3631 = vpack.c.b16 %v3503, %v3487
    %v3632 = vpack.c.b16 %v3504, %v3488
    %v3633 = vpack.c.b16 %v3505, %v3489
    %v3634 = vpack.c.b16 %v3506, %v3490
    %v3635 = vpack.c.b16 %v3507, %v3491
    %v3636 = vpack.c.b16 %v3508, %v3492
    %v3637 = vpack.c.b16 %v3509, %v3493
    %v3638 = vpack.c.b16 %v3510, %v3494
    %v3639 = vpack.c.b16 %v3511, %v3495
    %v3640 = vpack.c.b16 %v3512, %v3496
    %3769 = vmatprep.subr.bf16.mxu0 %v3626
    %3770 = vmatpush1.bf16.msra.mxu0 %v3625
    %3771 = vmatprep.subr.bf16.mxu0 %v3610
    %3772 = vmatpush1.bf16.msra.mxu0 %v3609
    %3773 = vmatprep.subr.bf16.mxu0 %v3594
    %3774 = vmatpush1.bf16.msra.mxu0 %v3593
    %3775 = vmatprep.subr.bf16.mxu0 %v3578
    %3776 = vmatpush1.bf16.msra.mxu0 %v3577
    %3777 = vmatprep.subr.bf16.mxu0 %v3562
    %3778 = vmatpush1.bf16.msra.mxu0 %v3561
    %3779 = vmatprep.subr.bf16.mxu0 %v3546
    %3780 = vmatpush1.bf16.msra.mxu0 %v3545
    %3781 = vmatprep.subr.bf16.mxu0 %v3530
    %3782 = vmatpush1.bf16.msra.mxu0 %v3529
    %3783 = vmatprep.subr.bf16.mxu0 %v3514
    %3784 = vmatpush1.bf16.msra.mxu0 %v3513
    %3785 = vmatprep.subr.bf16.mxu0 0
    %3786 = vmatpush2.bf16.msra.mxu0 0
    %3787 = vmatprep.subr.bf16.mxu0 0
    %3788 = vmatpush2.bf16.msra.mxu0 0
    %3789 = vmatprep.subr.bf16.mxu0 0
    %3790 = vmatpush2.bf16.msra.mxu0 0
    %3791 = vmatprep.subr.bf16.mxu0 0
    %3792 = vmatpush2.bf16.msra.mxu0 0
    %3793 = vmatprep.subr.bf16.mxu0 0
    %3794 = vmatpush2.bf16.msra.mxu0 0
    %3795 = vmatprep.subr.bf16.mxu0 0
    %3796 = vmatpush2.bf16.msra.mxu0 0
    %3797 = vmatprep.subr.bf16.mxu0 0
    %3798 = vmatpush2.bf16.msra.mxu0 0
    %3799 = vmatprep.subr.bf16.mxu0 0
    %3800 = vmatpush2.bf16.msra.mxu0 0
    %3801 = vmatprep.mubr.bf16.mxu0 0
    %3802 = vmatmul.mubr.bf16.gmra.mxu0 %v107
    %v3803 = vpop.f32.mrf.mxu0
    %v3804 = vadd.f32 0.0, %v3803
    %v3805 = vpop.f32.mrf.mxu0
    %v3806 = vadd.f32 0.0, %v3805
    %v3807 = vpop.f32.mrf.mxu0
    %v3808 = vadd.f32 0.0, %v3807
    %v3809 = vpop.f32.mrf.mxu0
    %v3810 = vadd.f32 0.0, %v3809
    %3811 = vmatprep.mubr.bf16.mxu0 0
    %3812 = vmatmul.mubr.bf16.gmra.mxu0 %v108
    %v3813 = vpop.f32.mrf.mxu0
    %v3814 = vadd.f32 0.0, %v3813
    %v3815 = vpop.f32.mrf.mxu0
    %v3816 = vadd.f32 0.0, %v3815
    %v3817 = vpop.f32.mrf.mxu0
    %v3818 = vadd.f32 0.0, %v3817
    %v3819 = vpop.f32.mrf.mxu0
    %v3820 = vadd.f32 0.0, %v3819
    %3821 = vdwg.mxu0
    %3822 = vmatprep.subr.bf16.mxu0 %v3628
    %3823 = vmatpush1.bf16.msra.mxu0 %v3627
    %3824 = vmatprep.subr.bf16.mxu0 %v3612
    %3825 = vmatpush1.bf16.msra.mxu0 %v3611
    %3826 = vmatprep.subr.bf16.mxu0 %v3596
    %3827 = vmatpush1.bf16.msra.mxu0 %v3595
    %3828 = vmatprep.subr.bf16.mxu0 %v3580
    %3829 = vmatpush1.bf16.msra.mxu0 %v3579
    %3830 = vmatprep.subr.bf16.mxu0 %v3564
    %3831 = vmatpush1.bf16.msra.mxu0 %v3563
    %3832 = vmatprep.subr.bf16.mxu0 %v3548
    %3833 = vmatpush1.bf16.msra.mxu0 %v3547
    %3834 = vmatprep.subr.bf16.mxu0 %v3532
    %3835 = vmatpush1.bf16.msra.mxu0 %v3531
    %3836 = vmatprep.subr.bf16.mxu0 %v3516
    %3837 = vmatpush1.bf16.msra.mxu0 %v3515
    %3838 = vmatprep.subr.bf16.mxu0 0
    %3839 = vmatpush2.bf16.msra.mxu0 0
    %3840 = vmatprep.subr.bf16.mxu0 0
    %3841 = vmatpush2.bf16.msra.mxu0 0
    %3842 = vmatprep.subr.bf16.mxu0 0
    %3843 = vmatpush2.bf16.msra.mxu0 0
    %3844 = vmatprep.subr.bf16.mxu0 0
    %3845 = vmatpush2.bf16.msra.mxu0 0
    %3846 = vmatprep.subr.bf16.mxu0 0
    %3847 = vmatpush2.bf16.msra.mxu0 0
    %3848 = vmatprep.subr.bf16.mxu0 0
    %3849 = vmatpush2.bf16.msra.mxu0 0
    %3850 = vmatprep.subr.bf16.mxu0 0
    %3851 = vmatpush2.bf16.msra.mxu0 0
    %3852 = vmatprep.subr.bf16.mxu0 0
    %3853 = vmatpush2.bf16.msra.mxu0 0
    %3854 = vmatprep.mubr.bf16.mxu0 0
    %3855 = vmatmul.mubr.bf16.gmra.mxu0 %v107
    %v3856 = vpop.f32.mrf.mxu0
    %v3857 = vadd.f32 0.0, %v3856
    %v3858 = vpop.f32.mrf.mxu0
    %v3859 = vadd.f32 0.0, %v3858
    %v3860 = vpop.f32.mrf.mxu0
    %v3861 = vadd.f32 0.0, %v3860
    %v3862 = vpop.f32.mrf.mxu0
    %v3863 = vadd.f32 0.0, %v3862
    %3864 = vmatprep.mubr.bf16.mxu0 0
    %3865 = vmatmul.mubr.bf16.gmra.mxu0 %v108
    %v3866 = vpop.f32.mrf.mxu0
    %v3867 = vadd.f32 0.0, %v3866
    %v3868 = vpop.f32.mrf.mxu0
    %v3869 = vadd.f32 0.0, %v3868
    %v3870 = vpop.f32.mrf.mxu0
    %v3871 = vadd.f32 0.0, %v3870
    %v3872 = vpop.f32.mrf.mxu0
    %v3873 = vadd.f32 0.0, %v3872
    %3874 = vdwg.mxu0
    %3875 = vmatprep.subr.bf16.mxu0 %v3630
    %3876 = vmatpush1.bf16.msra.mxu0 %v3629
    %3877 = vmatprep.subr.bf16.mxu0 %v3614
    %3878 = vmatpush1.bf16.msra.mxu0 %v3613
    %3879 = vmatprep.subr.bf16.mxu0 %v3598
    %3880 = vmatpush1.bf16.msra.mxu0 %v3597
    %3881 = vmatprep.subr.bf16.mxu0 %v3582
    %3882 = vmatpush1.bf16.msra.mxu0 %v3581
    %3883 = vmatprep.subr.bf16.mxu0 %v3566
    %3884 = vmatpush1.bf16.msra.mxu0 %v3565
    %3885 = vmatprep.subr.bf16.mxu0 %v3550
    %3886 = vmatpush1.bf16.msra.mxu0 %v3549
    %3887 = vmatprep.subr.bf16.mxu0 %v3534
    %3888 = vmatpush1.bf16.msra.mxu0 %v3533
    %3889 = vmatprep.subr.bf16.mxu0 %v3518
    %3890 = vmatpush1.bf16.msra.mxu0 %v3517
    %3891 = vmatprep.subr.bf16.mxu0 0
    %3892 = vmatpush2.bf16.msra.mxu0 0
    %3893 = vmatprep.subr.bf16.mxu0 0
    %3894 = vmatpush2.bf16.msra.mxu0 0
    %3895 = vmatprep.subr.bf16.mxu0 0
    %3896 = vmatpush2.bf16.msra.mxu0 0
    %3897 = vmatprep.subr.bf16.mxu0 0
    %3898 = vmatpush2.bf16.msra.mxu0 0
    %3899 = vmatprep.subr.bf16.mxu0 0
    %3900 = vmatpush2.bf16.msra.mxu0 0
    %3901 = vmatprep.subr.bf16.mxu0 0
    %3902 = vmatpush2.bf16.msra.mxu0 0
    %3903 = vmatprep.subr.bf16.mxu0 0
    %3904 = vmatpush2.bf16.msra.mxu0 0
    %3905 = vmatprep.subr.bf16.mxu0 0
    %3906 = vmatpush2.bf16.msra.mxu0 0
    %3907 = vmatprep.mubr.bf16.mxu0 0
    %3908 = vmatmul.mubr.bf16.gmra.mxu0 %v107
    %v3909 = vpop.f32.mrf.mxu0
    %v3910 = vadd.f32 0.0, %v3909
    %v3911 = vpop.f32.mrf.mxu0
    %v3912 = vadd.f32 0.0, %v3911
    %v3913 = vpop.f32.mrf.mxu0
    %v3914 = vadd.f32 0.0, %v3913
    %v3915 = vpop.f32.mrf.mxu0
    %v3916 = vadd.f32 0.0, %v3915
    %3917 = vmatprep.mubr.bf16.mxu0 0
    %3918 = vmatmul.mubr.bf16.gmra.mxu0 %v108
    %v3919 = vpop.f32.mrf.mxu0
    %v3920 = vadd.f32 0.0, %v3919
    %v3921 = vpop.f32.mrf.mxu0
    %v3922 = vadd.f32 0.0, %v3921
    %v3923 = vpop.f32.mrf.mxu0
    %v3924 = vadd.f32 0.0, %v3923
    %v3925 = vpop.f32.mrf.mxu0
    %v3926 = vadd.f32 0.0, %v3925
    %3927 = vdwg.mxu0
    %3928 = vmatprep.subr.bf16.mxu0 %v3632
    %3929 = vmatpush1.bf16.msra.mxu0 %v3631
    %3930 = vmatprep.subr.bf16.mxu0 %v3616
    %3931 = vmatpush1.bf16.msra.mxu0 %v3615
    %3932 = vmatprep.subr.bf16.mxu0 %v3600
    %3933 = vmatpush1.bf16.msra.mxu0 %v3599
    %3934 = vmatprep.subr.bf16.mxu0 %v3584
    %3935 = vmatpush1.bf16.msra.mxu0 %v3583
    %3936 = vmatprep.subr.bf16.mxu0 %v3568
    %3937 = vmatpush1.bf16.msra.mxu0 %v3567
    %3938 = vmatprep.subr.bf16.mxu0 %v3552
    %3939 = vmatpush1.bf16.msra.mxu0 %v3551
    %3940 = vmatprep.subr.bf16.mxu0 %v3536
    %3941 = vmatpush1.bf16.msra.mxu0 %v3535
    %3942 = vmatprep.subr.bf16.mxu0 %v3520
    %3943 = vmatpush1.bf16.msra.mxu0 %v3519
    %3944 = vmatprep.subr.bf16.mxu0 0
    %3945 = vmatpush2.bf16.msra.mxu0 0
    %3946 = vmatprep.subr.bf16.mxu0 0
    %3947 = vmatpush2.bf16.msra.mxu0 0
    %3948 = vmatprep.subr.bf16.mxu0 0
    %3949 = vmatpush2.bf16.msra.mxu0 0
    %3950 = vmatprep.subr.bf16.mxu0 0
    %3951 = vmatpush2.bf16.msra.mxu0 0
    %3952 = vmatprep.subr.bf16.mxu0 0
    %3953 = vmatpush2.bf16.msra.mxu0 0
    %3954 = vmatprep.subr.bf16.mxu0 0
    %3955 = vmatpush2.bf16.msra.mxu0 0
    %3956 = vmatprep.subr.bf16.mxu0 0
    %3957 = vmatpush2.bf16.msra.mxu0 0
    %3958 = vmatprep.subr.bf16.mxu0 0
    %3959 = vmatpush2.bf16.msra.mxu0 0
    %3960 = vmatprep.mubr.bf16.mxu0 0
    %3961 = vmatmul.mubr.bf16.gmra.mxu0 %v107
    %v3962 = vpop.f32.mrf.mxu0
    %v3963 = vadd.f32 0.0, %v3962
    %v3964 = vpop.f32.mrf.mxu0
    %v3965 = vadd.f32 0.0, %v3964
    %v3966 = vpop.f32.mrf.mxu0
    %v3967 = vadd.f32 0.0, %v3966
    %v3968 = vpop.f32.mrf.mxu0
    %v3969 = vadd.f32 0.0, %v3968
    %3970 = vmatprep.mubr.bf16.mxu0 0
    %3971 = vmatmul.mubr.bf16.gmra.mxu0 %v108
    %v3972 = vpop.f32.mrf.mxu0
    %v3973 = vadd.f32 0.0, %v3972
    %v3974 = vpop.f32.mrf.mxu0
    %v3975 = vadd.f32 0.0, %v3974
    %v3976 = vpop.f32.mrf.mxu0
    %v3977 = vadd.f32 0.0, %v3976
    %v3978 = vpop.f32.mrf.mxu0
    %v3979 = vadd.f32 0.0, %v3978
    %3980 = vdwg.mxu0
    %3981 = vmatprep.subr.bf16.mxu0 %v3634
    %3982 = vmatpush1.bf16.msra.mxu0 %v3633
    %3983 = vmatprep.subr.bf16.mxu0 %v3618
    %3984 = vmatpush1.bf16.msra.mxu0 %v3617
    %3985 = vmatprep.subr.bf16.mxu0 %v3602
    %3986 = vmatpush1.bf16.msra.mxu0 %v3601
    %3987 = vmatprep.subr.bf16.mxu0 %v3586
    %3988 = vmatpush1.bf16.msra.mxu0 %v3585
    %3989 = vmatprep.subr.bf16.mxu0 %v3570
    %3990 = vmatpush1.bf16.msra.mxu0 %v3569
    %3991 = vmatprep.subr.bf16.mxu0 %v3554
    %3992 = vmatpush1.bf16.msra.mxu0 %v3553
    %3993 = vmatprep.subr.bf16.mxu0 %v3538
    %3994 = vmatpush1.bf16.msra.mxu0 %v3537
    %3995 = vmatprep.subr.bf16.mxu0 %v3522
    %3996 = vmatpush1.bf16.msra.mxu0 %v3521
    %3997 = vmatprep.subr.bf16.mxu0 0
    %3998 = vmatpush2.bf16.msra.mxu0 0
    %3999 = vmatprep.subr.bf16.mxu0 0
    %4000 = vmatpush2.bf16.msra.mxu0 0
    %4001 = vmatprep.subr.bf16.mxu0 0
    %4002 = vmatpush2.bf16.msra.mxu0 0
    %4003 = vmatprep.subr.bf16.mxu0 0
    %4004 = vmatpush2.bf16.msra.mxu0 0
    %4005 = vmatprep.subr.bf16.mxu0 0
    %4006 = vmatpush2.bf16.msra.mxu0 0
    %4007 = vmatprep.subr.bf16.mxu0 0
    %4008 = vmatpush2.bf16.msra.mxu0 0
    %4009 = vmatprep.subr.bf16.mxu0 0
    %4010 = vmatpush2.bf16.msra.mxu0 0
    %4011 = vmatprep.subr.bf16.mxu0 0
    %4012 = vmatpush2.bf16.msra.mxu0 0
    %4013 = vmatprep.mubr.bf16.mxu0 0
    %4014 = vmatmul.mubr.bf16.gmra.mxu0 %v107
    %v4015 = vpop.f32.mrf.mxu0
    %v4016 = vadd.f32 0.0, %v4015
    %v4017 = vpop.f32.mrf.mxu0
    %v4018 = vadd.f32 0.0, %v4017
    %v4019 = vpop.f32.mrf.mxu0
    %v4020 = vadd.f32 0.0, %v4019
    %v4021 = vpop.f32.mrf.mxu0
    %v4022 = vadd.f32 0.0, %v4021
    %4023 = vmatprep.mubr.bf16.mxu0 0
    %4024 = vmatmul.mubr.bf16.gmra.mxu0 %v108
    %v4025 = vpop.f32.mrf.mxu0
    %v4026 = vadd.f32 0.0, %v4025
    %v4027 = vpop.f32.mrf.mxu0
    %v4028 = vadd.f32 0.0, %v4027
    %v4029 = vpop.f32.mrf.mxu0
    %v4030 = vadd.f32 0.0, %v4029
    %v4031 = vpop.f32.mrf.mxu0
    %v4032 = vadd.f32 0.0, %v4031
    %4033 = vdwg.mxu0
    %4034 = vmatprep.subr.bf16.mxu0 %v3636
    %4035 = vmatpush1.bf16.msra.mxu0 %v3635
    %4036 = vmatprep.subr.bf16.mxu0 %v3620
    %4037 = vmatpush1.bf16.msra.mxu0 %v3619
    %4038 = vmatprep.subr.bf16.mxu0 %v3604
    %4039 = vmatpush1.bf16.msra.mxu0 %v3603
    %4040 = vmatprep.subr.bf16.mxu0 %v3588
    %4041 = vmatpush1.bf16.msra.mxu0 %v3587
    %4042 = vmatprep.subr.bf16.mxu0 %v3572
    %4043 = vmatpush1.bf16.msra.mxu0 %v3571
    %4044 = vmatprep.subr.bf16.mxu0 %v3556
    %4045 = vmatpush1.bf16.msra.mxu0 %v3555
    %4046 = vmatprep.subr.bf16.mxu0 %v3540
    %4047 = vmatpush1.bf16.msra.mxu0 %v3539
    %4048 = vmatprep.subr.bf16.mxu0 %v3524
    %4049 = vmatpush1.bf16.msra.mxu0 %v3523
    %4050 = vmatprep.subr.bf16.mxu0 0
    %4051 = vmatpush2.bf16.msra.mxu0 0
    %4052 = vmatprep.subr.bf16.mxu0 0
    %4053 = vmatpush2.bf16.msra.mxu0 0
    %4054 = vmatprep.subr.bf16.mxu0 0
    %4055 = vmatpush2.bf16.msra.mxu0 0
    %4056 = vmatprep.subr.bf16.mxu0 0
    %4057 = vmatpush2.bf16.msra.mxu0 0
    %4058 = vmatprep.subr.bf16.mxu0 0
    %4059 = vmatpush2.bf16.msra.mxu0 0
    %4060 = vmatprep.subr.bf16.mxu0 0
    %4061 = vmatpush2.bf16.msra.mxu0 0
    %4062 = vmatprep.subr.bf16.mxu0 0
    %4063 = vmatpush2.bf16.msra.mxu0 0
    %4064 = vmatprep.subr.bf16.mxu0 0
    %4065 = vmatpush2.bf16.msra.mxu0 0
    %4066 = vmatprep.mubr.bf16.mxu0 0
    %4067 = vmatmul.mubr.bf16.gmra.mxu0 %v107
    %v4068 = vpop.f32.mrf.mxu0
    %v4069 = vadd.f32 0.0, %v4068
    %v4070 = vpop.f32.mrf.mxu0
    %v4071 = vadd.f32 0.0, %v4070
    %v4072 = vpop.f32.mrf.mxu0
    %v4073 = vadd.f32 0.0, %v4072
    %v4074 = vpop.f32.mrf.mxu0
    %v4075 = vadd.f32 0.0, %v4074
    %4076 = vmatprep.mubr.bf16.mxu0 0
    %4077 = vmatmul.mubr.bf16.gmra.mxu0 %v108
    %v4078 = vpop.f32.mrf.mxu0
    %v4079 = vadd.f32 0.0, %v4078
    %v4080 = vpop.f32.mrf.mxu0
    %v4081 = vadd.f32 0.0, %v4080
    %v4082 = vpop.f32.mrf.mxu0
    %v4083 = vadd.f32 0.0, %v4082
    %v4084 = vpop.f32.mrf.mxu0
    %v4085 = vadd.f32 0.0, %v4084
    %4086 = vdwg.mxu0
    %4087 = vmatprep.subr.bf16.mxu0 %v3638
    %4088 = vmatpush1.bf16.msra.mxu0 %v3637
    %4089 = vmatprep.subr.bf16.mxu0 %v3622
    %4090 = vmatpush1.bf16.msra.mxu0 %v3621
    %4091 = vmatprep.subr.bf16.mxu0 %v3606
    %4092 = vmatpush1.bf16.msra.mxu0 %v3605
    %4093 = vmatprep.subr.bf16.mxu0 %v3590
    %4094 = vmatpush1.bf16.msra.mxu0 %v3589
    %4095 = vmatprep.subr.bf16.mxu0 %v3574
    %4096 = vmatpush1.bf16.msra.mxu0 %v3573
    %4097 = vmatprep.subr.bf16.mxu0 %v3558
    %4098 = vmatpush1.bf16.msra.mxu0 %v3557
    %4099 = vmatprep.subr.bf16.mxu0 %v3542
    %4100 = vmatpush1.bf16.msra.mxu0 %v3541
    %4101 = vmatprep.subr.bf16.mxu0 %v3526
    %4102 = vmatpush1.bf16.msra.mxu0 %v3525
    %4103 = vmatprep.subr.bf16.mxu0 0
    %4104 = vmatpush2.bf16.msra.mxu0 0
    %4105 = vmatprep.subr.bf16.mxu0 0
    %4106 = vmatpush2.bf16.msra.mxu0 0
    %4107 = vmatprep.subr.bf16.mxu0 0
    %4108 = vmatpush2.bf16.msra.mxu0 0
    %4109 = vmatprep.subr.bf16.mxu0 0
    %4110 = vmatpush2.bf16.msra.mxu0 0
    %4111 = vmatprep.subr.bf16.mxu0 0
    %4112 = vmatpush2.bf16.msra.mxu0 0
    %4113 = vmatprep.subr.bf16.mxu0 0
    %4114 = vmatpush2.bf16.msra.mxu0 0
    %4115 = vmatprep.subr.bf16.mxu0 0
    %4116 = vmatpush2.bf16.msra.mxu0 0
    %4117 = vmatprep.subr.bf16.mxu0 0
    %4118 = vmatpush2.bf16.msra.mxu0 0
    %4119 = vmatprep.mubr.bf16.mxu0 0
    %4120 = vmatmul.mubr.bf16.gmra.mxu0 %v107
    %v4121 = vpop.f32.mrf.mxu0
    %v4122 = vadd.f32 0.0, %v4121
    %v4123 = vpop.f32.mrf.mxu0
    %v4124 = vadd.f32 0.0, %v4123
    %v4125 = vpop.f32.mrf.mxu0
    %v4126 = vadd.f32 0.0, %v4125
    %v4127 = vpop.f32.mrf.mxu0
    %v4128 = vadd.f32 0.0, %v4127
    %4129 = vmatprep.mubr.bf16.mxu0 0
    %4130 = vmatmul.mubr.bf16.gmra.mxu0 %v108
    %v4131 = vpop.f32.mrf.mxu0
    %v4132 = vadd.f32 0.0, %v4131
    %v4133 = vpop.f32.mrf.mxu0
    %v4134 = vadd.f32 0.0, %v4133
    %v4135 = vpop.f32.mrf.mxu0
    %v4136 = vadd.f32 0.0, %v4135
    %v4137 = vpop.f32.mrf.mxu0
    %v4138 = vadd.f32 0.0, %v4137
    %4139 = vdwg.mxu0
    %4140 = vmatprep.subr.bf16.mxu0 %v3640
    %4141 = vmatpush1.bf16.msra.mxu0 %v3639
    %4142 = vmatprep.subr.bf16.mxu0 %v3624
    %4143 = vmatpush1.bf16.msra.mxu0 %v3623
    %4144 = vmatprep.subr.bf16.mxu0 %v3608
    %4145 = vmatpush1.bf16.msra.mxu0 %v3607
    %4146 = vmatprep.subr.bf16.mxu0 %v3592
    %4147 = vmatpush1.bf16.msra.mxu0 %v3591
    %4148 = vmatprep.subr.bf16.mxu0 %v3576
    %4149 = vmatpush1.bf16.msra.mxu0 %v3575
    %4150 = vmatprep.subr.bf16.mxu0 %v3560
    %4151 = vmatpush1.bf16.msra.mxu0 %v3559
    %4152 = vmatprep.subr.bf16.mxu0 %v3544
    %4153 = vmatpush1.bf16.msra.mxu0 %v3543
    %4154 = vmatprep.subr.bf16.mxu0 %v3528
    %4155 = vmatpush1.bf16.msra.mxu0 %v3527
    %4156 = vmatprep.subr.bf16.mxu0 0
    %4157 = vmatpush2.bf16.msra.mxu0 0
    %4158 = vmatprep.subr.bf16.mxu0 0
    %4159 = vmatpush2.bf16.msra.mxu0 0
    %4160 = vmatprep.subr.bf16.mxu0 0
    %4161 = vmatpush2.bf16.msra.mxu0 0
    %4162 = vmatprep.subr.bf16.mxu0 0
    %4163 = vmatpush2.bf16.msra.mxu0 0
    %4164 = vmatprep.subr.bf16.mxu0 0
    %4165 = vmatpush2.bf16.msra.mxu0 0
    %4166 = vmatprep.subr.bf16.mxu0 0
    %4167 = vmatpush2.bf16.msra.mxu0 0
    %4168 = vmatprep.subr.bf16.mxu0 0
    %4169 = vmatpush2.bf16.msra.mxu0 0
    %4170 = vmatprep.subr.bf16.mxu0 0
    %4171 = vmatpush2.bf16.msra.mxu0 0
    %4172 = vmatprep.mubr.bf16.mxu0 0
    %4173 = vmatmul.mubr.bf16.gmra.mxu0 %v107
    %v4174 = vpop.f32.mrf.mxu0
    %v4175 = vadd.f32 0.0, %v4174
    %v4176 = vpop.f32.mrf.mxu0
    %v4177 = vadd.f32 0.0, %v4176
    %v4178 = vpop.f32.mrf.mxu0
    %v4179 = vadd.f32 0.0, %v4178
    %v4180 = vpop.f32.mrf.mxu0
    %v4181 = vadd.f32 0.0, %v4180
    %4182 = vmatprep.mubr.bf16.mxu0 0
    %4183 = vmatmul.mubr.bf16.gmra.mxu0 %v108
    %v4184 = vpop.f32.mrf.mxu0
    %v4185 = vadd.f32 0.0, %v4184
    %v4186 = vpop.f32.mrf.mxu0
    %v4187 = vadd.f32 0.0, %v4186
    %v4188 = vpop.f32.mrf.mxu0
    %v4189 = vadd.f32 0.0, %v4188
    %v4190 = vpop.f32.mrf.mxu0
    %v4191 = vadd.f32 0.0, %v4190
    %4192 = vdwg.mxu0
    %v4193 = vadd.f32 %v2937, %v3804
    %v4194 = vadd.f32 %v2938, %v3806
    %v4195 = vadd.f32 %v2939, %v3857
    %v4196 = vadd.f32 %v2940, %v3859
    %v4197 = vadd.f32 %v2941, %v3910
    %v4198 = vadd.f32 %v2942, %v3912
    %v4199 = vadd.f32 %v2943, %v3963
    %v4200 = vadd.f32 %v2944, %v3965
    %v4201 = vadd.f32 %v2945, %v4016
    %v4202 = vadd.f32 %v2946, %v4018
    %v4203 = vadd.f32 %v2947, %v4069
    %v4204 = vadd.f32 %v2948, %v4071
    %v4205 = vadd.f32 %v2949, %v4122
    %v4206 = vadd.f32 %v2950, %v4124
    %v4207 = vadd.f32 %v2951, %v4175
    %v4208 = vadd.f32 %v2952, %v4177
    %v4209 = vadd.f32 %v2953, %v3808
    %v4210 = vadd.f32 %v2954, %v3810
    %v4211 = vadd.f32 %v2955, %v3861
    %v4212 = vadd.f32 %v2956, %v3863
    %v4213 = vadd.f32 %v2957, %v3914
    %v4214 = vadd.f32 %v2958, %v3916
    %v4215 = vadd.f32 %v2959, %v3967
    %v4216 = vadd.f32 %v2960, %v3969
    %v4217 = vadd.f32 %v2961, %v4020
    %v4218 = vadd.f32 %v2962, %v4022
    %v4219 = vadd.f32 %v2963, %v4073
    %v4220 = vadd.f32 %v2964, %v4075
    %v4221 = vadd.f32 %v2965, %v4126
    %v4222 = vadd.f32 %v2966, %v4128
    %v4223 = vadd.f32 %v2967, %v4179
    %v4224 = vadd.f32 %v2968, %v4181
    %v4225 = vadd.f32 %v2969, %v3814
    %v4226 = vadd.f32 %v2970, %v3816
    %v4227 = vadd.f32 %v2971, %v3867
    %v4228 = vadd.f32 %v2972, %v3869
    %v4229 = vadd.f32 %v2973, %v3920
    %v4230 = vadd.f32 %v2974, %v3922
    %v4231 = vadd.f32 %v2975, %v3973
    %v4232 = vadd.f32 %v2976, %v3975
    %v4233 = vadd.f32 %v2977, %v4026
    %v4234 = vadd.f32 %v2978, %v4028
    %v4235 = vadd.f32 %v2979, %v4079
    %v4236 = vadd.f32 %v2980, %v4081
    %v4237 = vadd.f32 %v2981, %v4132
    %v4238 = vadd.f32 %v2982, %v4134
    %v4239 = vadd.f32 %v2983, %v4185
    %v4240 = vadd.f32 %v2984, %v4187
    %v4241 = vadd.f32 %v2985, %v3818
    %v4242 = vadd.f32 %v2986, %v3820
    %v4243 = vadd.f32 %v2987, %v3871
    %v4244 = vadd.f32 %v2988, %v3873
    %v4245 = vadd.f32 %v2989, %v3924
    %v4246 = vadd.f32 %v2990, %v3926
    %v4247 = vadd.f32 %v2991, %v3977
    %v4248 = vadd.f32 %v2992, %v3979
    %v4249 = vadd.f32 %v2993, %v4030
    %v4250 = vadd.f32 %v2994, %v4032
    %v4251 = vadd.f32 %v2995, %v4083
    %v4252 = vadd.f32 %v2996, %v4085
    %v4253 = vadd.f32 %v2997, %v4136
    %v4254 = vadd.f32 %v2998, %v4138
    %v4255 = vadd.f32 %v2999, %v4189
    %v4256 = vadd.f32 %v3000, %v4191
    %4257 = vmatprep.subr.bf16.mxu0 %v882
    %4258 = vmatpush1.bf16.msra.mxu0 %v881
    %4259 = vmatprep.subr.bf16.mxu0 %v866
    %4260 = vmatpush1.bf16.msra.mxu0 %v865
    %4261 = vmatprep.subr.bf16.mxu0 %v850
    %4262 = vmatpush1.bf16.msra.mxu0 %v849
    %4263 = vmatprep.subr.bf16.mxu0 %v834
    %4264 = vmatpush1.bf16.msra.mxu0 %v833
    %4265 = vmatprep.subr.bf16.mxu0 %v818
    %4266 = vmatpush1.bf16.msra.mxu0 %v817
    %4267 = vmatprep.subr.bf16.mxu0 %v802
    %4268 = vmatpush1.bf16.msra.mxu0 %v801
    %4269 = vmatprep.subr.bf16.mxu0 %v786
    %4270 = vmatpush1.bf16.msra.mxu0 %v785
    %4271 = vmatprep.subr.bf16.mxu0 %v770
    %4272 = vmatpush1.bf16.msra.mxu0 %v769
    %4273 = vmatprep.subr.bf16.mxu0 0
    %4274 = vmatpush2.bf16.msra.mxu0 0
    %4275 = vmatprep.subr.bf16.mxu0 0
    %4276 = vmatpush2.bf16.msra.mxu0 0
    %4277 = vmatprep.subr.bf16.mxu0 0
    %4278 = vmatpush2.bf16.msra.mxu0 0
    %4279 = vmatprep.subr.bf16.mxu0 0
    %4280 = vmatpush2.bf16.msra.mxu0 0
    %4281 = vmatprep.subr.bf16.mxu0 0
    %4282 = vmatpush2.bf16.msra.mxu0 0
    %4283 = vmatprep.subr.bf16.mxu0 0
    %4284 = vmatpush2.bf16.msra.mxu0 0
    %4285 = vmatprep.subr.bf16.mxu0 0
    %4286 = vmatpush2.bf16.msra.mxu0 0
    %4287 = vmatprep.subr.bf16.mxu0 0
    %4288 = vmatpush2.bf16.msra.mxu0 0
    %4289 = vmatprep.mubr.bf16.mxu0 0
    %4290 = vmatmul.mubr.bf16.gmra.mxu0 %v117
    %v4291 = vpop.f32.mrf.mxu0
    %v4292 = vadd.f32 0.0, %v4291
    %v4293 = vpop.f32.mrf.mxu0
    %v4294 = vadd.f32 0.0, %v4293
    %v4295 = vpop.f32.mrf.mxu0
    %v4296 = vadd.f32 0.0, %v4295
    %v4297 = vpop.f32.mrf.mxu0
    %v4298 = vadd.f32 0.0, %v4297
    %4299 = vmatprep.mubr.bf16.mxu0 0
    %4300 = vmatmul.mubr.bf16.gmra.mxu0 %v118
    %v4301 = vpop.f32.mrf.mxu0
    %v4302 = vadd.f32 0.0, %v4301
    %v4303 = vpop.f32.mrf.mxu0
    %v4304 = vadd.f32 0.0, %v4303
    %v4305 = vpop.f32.mrf.mxu0
    %v4306 = vadd.f32 0.0, %v4305
    %v4307 = vpop.f32.mrf.mxu0
    %v4308 = vadd.f32 0.0, %v4307
    %4309 = vdwg.mxu0
    %4310 = vmatprep.subr.bf16.mxu0 %v884
    %4311 = vmatpush1.bf16.msra.mxu0 %v883
    %4312 = vmatprep.subr.bf16.mxu0 %v868
    %4313 = vmatpush1.bf16.msra.mxu0 %v867
    %4314 = vmatprep.subr.bf16.mxu0 %v852
    %4315 = vmatpush1.bf16.msra.mxu0 %v851
    %4316 = vmatprep.subr.bf16.mxu0 %v836
    %4317 = vmatpush1.bf16.msra.mxu0 %v835
    %4318 = vmatprep.subr.bf16.mxu0 %v820
    %4319 = vmatpush1.bf16.msra.mxu0 %v819
    %4320 = vmatprep.subr.bf16.mxu0 %v804
    %4321 = vmatpush1.bf16.msra.mxu0 %v803
    %4322 = vmatprep.subr.bf16.mxu0 %v788
    %4323 = vmatpush1.bf16.msra.mxu0 %v787
    %4324 = vmatprep.subr.bf16.mxu0 %v772
    %4325 = vmatpush1.bf16.msra.mxu0 %v771
    %4326 = vmatprep.subr.bf16.mxu0 0
    %4327 = vmatpush2.bf16.msra.mxu0 0
    %4328 = vmatprep.subr.bf16.mxu0 0
    %4329 = vmatpush2.bf16.msra.mxu0 0
    %4330 = vmatprep.subr.bf16.mxu0 0
    %4331 = vmatpush2.bf16.msra.mxu0 0
    %4332 = vmatprep.subr.bf16.mxu0 0
    %4333 = vmatpush2.bf16.msra.mxu0 0
    %4334 = vmatprep.subr.bf16.mxu0 0
    %4335 = vmatpush2.bf16.msra.mxu0 0
    %4336 = vmatprep.subr.bf16.mxu0 0
    %4337 = vmatpush2.bf16.msra.mxu0 0
    %4338 = vmatprep.subr.bf16.mxu0 0
    %4339 = vmatpush2.bf16.msra.mxu0 0
    %4340 = vmatprep.subr.bf16.mxu0 0
    %4341 = vmatpush2.bf16.msra.mxu0 0
    %4342 = vmatprep.mubr.bf16.mxu0 0
    %4343 = vmatmul.mubr.bf16.gmra.mxu0 %v117
    %v4344 = vpop.f32.mrf.mxu0
    %v4345 = vadd.f32 0.0, %v4344
    %v4346 = vpop.f32.mrf.mxu0
    %v4347 = vadd.f32 0.0, %v4346
    %v4348 = vpop.f32.mrf.mxu0
    %v4349 = vadd.f32 0.0, %v4348
    %v4350 = vpop.f32.mrf.mxu0
    %v4351 = vadd.f32 0.0, %v4350
    %4352 = vmatprep.mubr.bf16.mxu0 0
    %4353 = vmatmul.mubr.bf16.gmra.mxu0 %v118
    %v4354 = vpop.f32.mrf.mxu0
    %v4355 = vadd.f32 0.0, %v4354
    %v4356 = vpop.f32.mrf.mxu0
    %v4357 = vadd.f32 0.0, %v4356
    %v4358 = vpop.f32.mrf.mxu0
    %v4359 = vadd.f32 0.0, %v4358
    %v4360 = vpop.f32.mrf.mxu0
    %v4361 = vadd.f32 0.0, %v4360
    %4362 = vdwg.mxu0
    %4363 = vmatprep.subr.bf16.mxu0 %v886
    %4364 = vmatpush1.bf16.msra.mxu0 %v885
    %4365 = vmatprep.subr.bf16.mxu0 %v870
    %4366 = vmatpush1.bf16.msra.mxu0 %v869
    %4367 = vmatprep.subr.bf16.mxu0 %v854
    %4368 = vmatpush1.bf16.msra.mxu0 %v853
    %4369 = vmatprep.subr.bf16.mxu0 %v838
    %4370 = vmatpush1.bf16.msra.mxu0 %v837
    %4371 = vmatprep.subr.bf16.mxu0 %v822
    %4372 = vmatpush1.bf16.msra.mxu0 %v821
    %4373 = vmatprep.subr.bf16.mxu0 %v806
    %4374 = vmatpush1.bf16.msra.mxu0 %v805
    %4375 = vmatprep.subr.bf16.mxu0 %v790
    %4376 = vmatpush1.bf16.msra.mxu0 %v789
    %4377 = vmatprep.subr.bf16.mxu0 %v774
    %4378 = vmatpush1.bf16.msra.mxu0 %v773
    %4379 = vmatprep.subr.bf16.mxu0 0
    %4380 = vmatpush2.bf16.msra.mxu0 0
    %4381 = vmatprep.subr.bf16.mxu0 0
    %4382 = vmatpush2.bf16.msra.mxu0 0
    %4383 = vmatprep.subr.bf16.mxu0 0
    %4384 = vmatpush2.bf16.msra.mxu0 0
    %4385 = vmatprep.subr.bf16.mxu0 0
    %4386 = vmatpush2.bf16.msra.mxu0 0
    %4387 = vmatprep.subr.bf16.mxu0 0
    %4388 = vmatpush2.bf16.msra.mxu0 0
    %4389 = vmatprep.subr.bf16.mxu0 0
    %4390 = vmatpush2.bf16.msra.mxu0 0
    %4391 = vmatprep.subr.bf16.mxu0 0
    %4392 = vmatpush2.bf16.msra.mxu0 0
    %4393 = vmatprep.subr.bf16.mxu0 0
    %4394 = vmatpush2.bf16.msra.mxu0 0
    %4395 = vmatprep.mubr.bf16.mxu0 0
    %4396 = vmatmul.mubr.bf16.gmra.mxu0 %v117
    %v4397 = vpop.f32.mrf.mxu0
    %v4398 = vadd.f32 0.0, %v4397
    %v4399 = vpop.f32.mrf.mxu0
    %v4400 = vadd.f32 0.0, %v4399
    %v4401 = vpop.f32.mrf.mxu0
    %v4402 = vadd.f32 0.0, %v4401
    %v4403 = vpop.f32.mrf.mxu0
    %v4404 = vadd.f32 0.0, %v4403
    %4405 = vmatprep.mubr.bf16.mxu0 0
    %4406 = vmatmul.mubr.bf16.gmra.mxu0 %v118
    %v4407 = vpop.f32.mrf.mxu0
    %v4408 = vadd.f32 0.0, %v4407
    %v4409 = vpop.f32.mrf.mxu0
    %v4410 = vadd.f32 0.0, %v4409
    %v4411 = vpop.f32.mrf.mxu0
    %v4412 = vadd.f32 0.0, %v4411
    %v4413 = vpop.f32.mrf.mxu0
    %v4414 = vadd.f32 0.0, %v4413
    %4415 = vdwg.mxu0
    %4416 = vmatprep.subr.bf16.mxu0 %v888
    %4417 = vmatpush1.bf16.msra.mxu0 %v887
    %4418 = vmatprep.subr.bf16.mxu0 %v872
    %4419 = vmatpush1.bf16.msra.mxu0 %v871
    %4420 = vmatprep.subr.bf16.mxu0 %v856
    %4421 = vmatpush1.bf16.msra.mxu0 %v855
    %4422 = vmatprep.subr.bf16.mxu0 %v840
    %4423 = vmatpush1.bf16.msra.mxu0 %v839
    %4424 = vmatprep.subr.bf16.mxu0 %v824
    %4425 = vmatpush1.bf16.msra.mxu0 %v823
    %4426 = vmatprep.subr.bf16.mxu0 %v808
    %4427 = vmatpush1.bf16.msra.mxu0 %v807
    %4428 = vmatprep.subr.bf16.mxu0 %v792
    %4429 = vmatpush1.bf16.msra.mxu0 %v791
    %4430 = vmatprep.subr.bf16.mxu0 %v776
    %4431 = vmatpush1.bf16.msra.mxu0 %v775
    %4432 = vmatprep.subr.bf16.mxu0 0
    %4433 = vmatpush2.bf16.msra.mxu0 0
    %4434 = vmatprep.subr.bf16.mxu0 0
    %4435 = vmatpush2.bf16.msra.mxu0 0
    %4436 = vmatprep.subr.bf16.mxu0 0
    %4437 = vmatpush2.bf16.msra.mxu0 0
    %4438 = vmatprep.subr.bf16.mxu0 0
    %4439 = vmatpush2.bf16.msra.mxu0 0
    %4440 = vmatprep.subr.bf16.mxu0 0
    %4441 = vmatpush2.bf16.msra.mxu0 0
    %4442 = vmatprep.subr.bf16.mxu0 0
    %4443 = vmatpush2.bf16.msra.mxu0 0
    %4444 = vmatprep.subr.bf16.mxu0 0
    %4445 = vmatpush2.bf16.msra.mxu0 0
    %4446 = vmatprep.subr.bf16.mxu0 0
    %4447 = vmatpush2.bf16.msra.mxu0 0
    %4448 = vmatprep.mubr.bf16.mxu0 0
    %4449 = vmatmul.mubr.bf16.gmra.mxu0 %v117
    %v4450 = vpop.f32.mrf.mxu0
    %v4451 = vadd.f32 0.0, %v4450
    %v4452 = vpop.f32.mrf.mxu0
    %v4453 = vadd.f32 0.0, %v4452
    %v4454 = vpop.f32.mrf.mxu0
    %v4455 = vadd.f32 0.0, %v4454
    %v4456 = vpop.f32.mrf.mxu0
    %v4457 = vadd.f32 0.0, %v4456
    %4458 = vmatprep.mubr.bf16.mxu0 0
    %4459 = vmatmul.mubr.bf16.gmra.mxu0 %v118
    %v4460 = vpop.f32.mrf.mxu0
    %v4461 = vadd.f32 0.0, %v4460
    %v4462 = vpop.f32.mrf.mxu0
    %v4463 = vadd.f32 0.0, %v4462
    %v4464 = vpop.f32.mrf.mxu0
    %v4465 = vadd.f32 0.0, %v4464
    %v4466 = vpop.f32.mrf.mxu0
    %v4467 = vadd.f32 0.0, %v4466
    %4468 = vdwg.mxu0
    %4469 = vmatprep.subr.bf16.mxu0 %v890
    %4470 = vmatpush1.bf16.msra.mxu0 %v889
    %4471 = vmatprep.subr.bf16.mxu0 %v874
    %4472 = vmatpush1.bf16.msra.mxu0 %v873
    %4473 = vmatprep.subr.bf16.mxu0 %v858
    %4474 = vmatpush1.bf16.msra.mxu0 %v857
    %4475 = vmatprep.subr.bf16.mxu0 %v842
    %4476 = vmatpush1.bf16.msra.mxu0 %v841
    %4477 = vmatprep.subr.bf16.mxu0 %v826
    %4478 = vmatpush1.bf16.msra.mxu0 %v825
    %4479 = vmatprep.subr.bf16.mxu0 %v810
    %4480 = vmatpush1.bf16.msra.mxu0 %v809
    %4481 = vmatprep.subr.bf16.mxu0 %v794
    %4482 = vmatpush1.bf16.msra.mxu0 %v793
    %4483 = vmatprep.subr.bf16.mxu0 %v778
    %4484 = vmatpush1.bf16.msra.mxu0 %v777
    %4485 = vmatprep.subr.bf16.mxu0 0
    %4486 = vmatpush2.bf16.msra.mxu0 0
    %4487 = vmatprep.subr.bf16.mxu0 0
    %4488 = vmatpush2.bf16.msra.mxu0 0
    %4489 = vmatprep.subr.bf16.mxu0 0
    %4490 = vmatpush2.bf16.msra.mxu0 0
    %4491 = vmatprep.subr.bf16.mxu0 0
    %4492 = vmatpush2.bf16.msra.mxu0 0
    %4493 = vmatprep.subr.bf16.mxu0 0
    %4494 = vmatpush2.bf16.msra.mxu0 0
    %4495 = vmatprep.subr.bf16.mxu0 0
    %4496 = vmatpush2.bf16.msra.mxu0 0
    %4497 = vmatprep.subr.bf16.mxu0 0
    %4498 = vmatpush2.bf16.msra.mxu0 0
    %4499 = vmatprep.subr.bf16.mxu0 0
    %4500 = vmatpush2.bf16.msra.mxu0 0
    %4501 = vmatprep.mubr.bf16.mxu0 0
    %4502 = vmatmul.mubr.bf16.gmra.mxu0 %v117
    %v4503 = vpop.f32.mrf.mxu0
    %v4504 = vadd.f32 0.0, %v4503
    %v4505 = vpop.f32.mrf.mxu0
    %v4506 = vadd.f32 0.0, %v4505
    %v4507 = vpop.f32.mrf.mxu0
    %v4508 = vadd.f32 0.0, %v4507
    %v4509 = vpop.f32.mrf.mxu0
    %v4510 = vadd.f32 0.0, %v4509
    %4511 = vmatprep.mubr.bf16.mxu0 0
    %4512 = vmatmul.mubr.bf16.gmra.mxu0 %v118
    %v4513 = vpop.f32.mrf.mxu0
    %v4514 = vadd.f32 0.0, %v4513
    %v4515 = vpop.f32.mrf.mxu0
    %v4516 = vadd.f32 0.0, %v4515
    %v4517 = vpop.f32.mrf.mxu0
    %v4518 = vadd.f32 0.0, %v4517
    %v4519 = vpop.f32.mrf.mxu0
    %v4520 = vadd.f32 0.0, %v4519
    %4521 = vdwg.mxu0
    %4522 = vmatprep.subr.bf16.mxu0 %v892
    %4523 = vmatpush1.bf16.msra.mxu0 %v891
    %4524 = vmatprep.subr.bf16.mxu0 %v876
    %4525 = vmatpush1.bf16.msra.mxu0 %v875
    %4526 = vmatprep.subr.bf16.mxu0 %v860
    %4527 = vmatpush1.bf16.msra.mxu0 %v859
    %4528 = vmatprep.subr.bf16.mxu0 %v844
    %4529 = vmatpush1.bf16.msra.mxu0 %v843
    %4530 = vmatprep.subr.bf16.mxu0 %v828
    %4531 = vmatpush1.bf16.msra.mxu0 %v827
    %4532 = vmatprep.subr.bf16.mxu0 %v812
    %4533 = vmatpush1.bf16.msra.mxu0 %v811
    %4534 = vmatprep.subr.bf16.mxu0 %v796
    %4535 = vmatpush1.bf16.msra.mxu0 %v795
    %4536 = vmatprep.subr.bf16.mxu0 %v780
    %4537 = vmatpush1.bf16.msra.mxu0 %v779
    %4538 = vmatprep.subr.bf16.mxu0 0
    %4539 = vmatpush2.bf16.msra.mxu0 0
    %4540 = vmatprep.subr.bf16.mxu0 0
    %4541 = vmatpush2.bf16.msra.mxu0 0
    %4542 = vmatprep.subr.bf16.mxu0 0
    %4543 = vmatpush2.bf16.msra.mxu0 0
    %4544 = vmatprep.subr.bf16.mxu0 0
    %4545 = vmatpush2.bf16.msra.mxu0 0
    %4546 = vmatprep.subr.bf16.mxu0 0
    %4547 = vmatpush2.bf16.msra.mxu0 0
    %4548 = vmatprep.subr.bf16.mxu0 0
    %4549 = vmatpush2.bf16.msra.mxu0 0
    %4550 = vmatprep.subr.bf16.mxu0 0
    %4551 = vmatpush2.bf16.msra.mxu0 0
    %4552 = vmatprep.subr.bf16.mxu0 0
    %4553 = vmatpush2.bf16.msra.mxu0 0
    %4554 = vmatprep.mubr.bf16.mxu0 0
    %4555 = vmatmul.mubr.bf16.gmra.mxu0 %v117
    %v4556 = vpop.f32.mrf.mxu0
    %v4557 = vadd.f32 0.0, %v4556
    %v4558 = vpop.f32.mrf.mxu0
    %v4559 = vadd.f32 0.0, %v4558
    %v4560 = vpop.f32.mrf.mxu0
    %v4561 = vadd.f32 0.0, %v4560
    %v4562 = vpop.f32.mrf.mxu0
    %v4563 = vadd.f32 0.0, %v4562
    %4564 = vmatprep.mubr.bf16.mxu0 0
    %4565 = vmatmul.mubr.bf16.gmra.mxu0 %v118
    %v4566 = vpop.f32.mrf.mxu0
    %v4567 = vadd.f32 0.0, %v4566
    %v4568 = vpop.f32.mrf.mxu0
    %v4569 = vadd.f32 0.0, %v4568
    %v4570 = vpop.f32.mrf.mxu0
    %v4571 = vadd.f32 0.0, %v4570
    %v4572 = vpop.f32.mrf.mxu0
    %v4573 = vadd.f32 0.0, %v4572
    %4574 = vdwg.mxu0
    %4575 = vmatprep.subr.bf16.mxu0 %v894
    %4576 = vmatpush1.bf16.msra.mxu0 %v893
    %4577 = vmatprep.subr.bf16.mxu0 %v878
    %4578 = vmatpush1.bf16.msra.mxu0 %v877
    %4579 = vmatprep.subr.bf16.mxu0 %v862
    %4580 = vmatpush1.bf16.msra.mxu0 %v861
    %4581 = vmatprep.subr.bf16.mxu0 %v846
    %4582 = vmatpush1.bf16.msra.mxu0 %v845
    %4583 = vmatprep.subr.bf16.mxu0 %v830
    %4584 = vmatpush1.bf16.msra.mxu0 %v829
    %4585 = vmatprep.subr.bf16.mxu0 %v814
    %4586 = vmatpush1.bf16.msra.mxu0 %v813
    %4587 = vmatprep.subr.bf16.mxu0 %v798
    %4588 = vmatpush1.bf16.msra.mxu0 %v797
    %4589 = vmatprep.subr.bf16.mxu0 %v782
    %4590 = vmatpush1.bf16.msra.mxu0 %v781
    %4591 = vmatprep.subr.bf16.mxu0 0
    %4592 = vmatpush2.bf16.msra.mxu0 0
    %4593 = vmatprep.subr.bf16.mxu0 0
    %4594 = vmatpush2.bf16.msra.mxu0 0
    %4595 = vmatprep.subr.bf16.mxu0 0
    %4596 = vmatpush2.bf16.msra.mxu0 0
    %4597 = vmatprep.subr.bf16.mxu0 0
    %4598 = vmatpush2.bf16.msra.mxu0 0
    %4599 = vmatprep.subr.bf16.mxu0 0
    %4600 = vmatpush2.bf16.msra.mxu0 0
    %4601 = vmatprep.subr.bf16.mxu0 0
    %4602 = vmatpush2.bf16.msra.mxu0 0
    %4603 = vmatprep.subr.bf16.mxu0 0
    %4604 = vmatpush2.bf16.msra.mxu0 0
    %4605 = vmatprep.subr.bf16.mxu0 0
    %4606 = vmatpush2.bf16.msra.mxu0 0
    %4607 = vmatprep.mubr.bf16.mxu0 0
    %4608 = vmatmul.mubr.bf16.gmra.mxu0 %v117
    %v4609 = vpop.f32.mrf.mxu0
    %v4610 = vadd.f32 0.0, %v4609
    %v4611 = vpop.f32.mrf.mxu0
    %v4612 = vadd.f32 0.0, %v4611
    %v4613 = vpop.f32.mrf.mxu0
    %v4614 = vadd.f32 0.0, %v4613
    %v4615 = vpop.f32.mrf.mxu0
    %v4616 = vadd.f32 0.0, %v4615
    %4617 = vmatprep.mubr.bf16.mxu0 0
    %4618 = vmatmul.mubr.bf16.gmra.mxu0 %v118
    %v4619 = vpop.f32.mrf.mxu0
    %v4620 = vadd.f32 0.0, %v4619
    %v4621 = vpop.f32.mrf.mxu0
    %v4622 = vadd.f32 0.0, %v4621
    %v4623 = vpop.f32.mrf.mxu0
    %v4624 = vadd.f32 0.0, %v4623
    %v4625 = vpop.f32.mrf.mxu0
    %v4626 = vadd.f32 0.0, %v4625
    %4627 = vdwg.mxu0
    %4628 = vmatprep.subr.bf16.mxu0 %v896
    %4629 = vmatpush1.bf16.msra.mxu0 %v895
    %4630 = vmatprep.subr.bf16.mxu0 %v880
    %4631 = vmatpush1.bf16.msra.mxu0 %v879
    %4632 = vmatprep.subr.bf16.mxu0 %v864
    %4633 = vmatpush1.bf16.msra.mxu0 %v863
    %4634 = vmatprep.subr.bf16.mxu0 %v848
    %4635 = vmatpush1.bf16.msra.mxu0 %v847
    %4636 = vmatprep.subr.bf16.mxu0 %v832
    %4637 = vmatpush1.bf16.msra.mxu0 %v831
    %4638 = vmatprep.subr.bf16.mxu0 %v816
    %4639 = vmatpush1.bf16.msra.mxu0 %v815
    %4640 = vmatprep.subr.bf16.mxu0 %v800
    %4641 = vmatpush1.bf16.msra.mxu0 %v799
    %4642 = vmatprep.subr.bf16.mxu0 %v784
    %4643 = vmatpush1.bf16.msra.mxu0 %v783
    %4644 = vmatprep.subr.bf16.mxu0 0
    %4645 = vmatpush2.bf16.msra.mxu0 0
    %4646 = vmatprep.subr.bf16.mxu0 0
    %4647 = vmatpush2.bf16.msra.mxu0 0
    %4648 = vmatprep.subr.bf16.mxu0 0
    %4649 = vmatpush2.bf16.msra.mxu0 0
    %4650 = vmatprep.subr.bf16.mxu0 0
    %4651 = vmatpush2.bf16.msra.mxu0 0
    %4652 = vmatprep.subr.bf16.mxu0 0
    %4653 = vmatpush2.bf16.msra.mxu0 0
    %4654 = vmatprep.subr.bf16.mxu0 0
    %4655 = vmatpush2.bf16.msra.mxu0 0
    %4656 = vmatprep.subr.bf16.mxu0 0
    %4657 = vmatpush2.bf16.msra.mxu0 0
    %4658 = vmatprep.subr.bf16.mxu0 0
    %4659 = vmatpush2.bf16.msra.mxu0 0
    %4660 = vmatprep.mubr.bf16.mxu0 0
    %4661 = vmatmul.mubr.bf16.gmra.mxu0 %v117
    %v4662 = vpop.f32.mrf.mxu0
    %v4663 = vadd.f32 0.0, %v4662
    %v4664 = vpop.f32.mrf.mxu0
    %v4665 = vadd.f32 0.0, %v4664
    %v4666 = vpop.f32.mrf.mxu0
    %v4667 = vadd.f32 0.0, %v4666
    %v4668 = vpop.f32.mrf.mxu0
    %v4669 = vadd.f32 0.0, %v4668
    %4670 = vmatprep.mubr.bf16.mxu0 0
    %4671 = vmatmul.mubr.bf16.gmra.mxu0 %v118
    %v4672 = vpop.f32.mrf.mxu0
    %v4673 = vadd.f32 0.0, %v4672
    %v4674 = vpop.f32.mrf.mxu0
    %v4675 = vadd.f32 0.0, %v4674
    %v4676 = vpop.f32.mrf.mxu0
    %v4677 = vadd.f32 0.0, %v4676
    %v4678 = vpop.f32.mrf.mxu0
    %v4679 = vadd.f32 0.0, %v4678
    %4680 = vdwg.mxu0
    %v4681 = vadd.f32 %v4193, %v4292
    %v4682 = vadd.f32 %v4194, %v4294
    %v4683 = vadd.f32 %v4195, %v4345
    %v4684 = vadd.f32 %v4196, %v4347
    %v4685 = vadd.f32 %v4197, %v4398
    %v4686 = vadd.f32 %v4198, %v4400
    %v4687 = vadd.f32 %v4199, %v4451
    %v4688 = vadd.f32 %v4200, %v4453
    %v4689 = vadd.f32 %v4201, %v4504
    %v4690 = vadd.f32 %v4202, %v4506
    %v4691 = vadd.f32 %v4203, %v4557
    %v4692 = vadd.f32 %v4204, %v4559
    %v4693 = vadd.f32 %v4205, %v4610
    %v4694 = vadd.f32 %v4206, %v4612
    %v4695 = vadd.f32 %v4207, %v4663
    %v4696 = vadd.f32 %v4208, %v4665
    %v4697 = vadd.f32 %v4209, %v4296
    %v4698 = vadd.f32 %v4210, %v4298
    %v4699 = vadd.f32 %v4211, %v4349
    %v4700 = vadd.f32 %v4212, %v4351
    %v4701 = vadd.f32 %v4213, %v4402
    %v4702 = vadd.f32 %v4214, %v4404
    %v4703 = vadd.f32 %v4215, %v4455
    %v4704 = vadd.f32 %v4216, %v4457
    %v4705 = vadd.f32 %v4217, %v4508
    %v4706 = vadd.f32 %v4218, %v4510
    %v4707 = vadd.f32 %v4219, %v4561
    %v4708 = vadd.f32 %v4220, %v4563
    %v4709 = vadd.f32 %v4221, %v4614
    %v4710 = vadd.f32 %v4222, %v4616
    %v4711 = vadd.f32 %v4223, %v4667
    %v4712 = vadd.f32 %v4224, %v4669
    %v4713 = vadd.f32 %v4225, %v4302
    %v4714 = vadd.f32 %v4226, %v4304
    %v4715 = vadd.f32 %v4227, %v4355
    %v4716 = vadd.f32 %v4228, %v4357
    %v4717 = vadd.f32 %v4229, %v4408
    %v4718 = vadd.f32 %v4230, %v4410
    %v4719 = vadd.f32 %v4231, %v4461
    %v4720 = vadd.f32 %v4232, %v4463
    %v4721 = vadd.f32 %v4233, %v4514
    %v4722 = vadd.f32 %v4234, %v4516
    %v4723 = vadd.f32 %v4235, %v4567
    %v4724 = vadd.f32 %v4236, %v4569
    %v4725 = vadd.f32 %v4237, %v4620
    %v4726 = vadd.f32 %v4238, %v4622
    %v4727 = vadd.f32 %v4239, %v4673
    %v4728 = vadd.f32 %v4240, %v4675
    %v4729 = vadd.f32 %v4241, %v4306
    %v4730 = vadd.f32 %v4242, %v4308
    %v4731 = vadd.f32 %v4243, %v4359
    %v4732 = vadd.f32 %v4244, %v4361
    %v4733 = vadd.f32 %v4245, %v4412
    %v4734 = vadd.f32 %v4246, %v4414
    %v4735 = vadd.f32 %v4247, %v4465
    %v4736 = vadd.f32 %v4248, %v4467
    %v4737 = vadd.f32 %v4249, %v4518
    %v4738 = vadd.f32 %v4250, %v4520
    %v4739 = vadd.f32 %v4251, %v4571
    %v4740 = vadd.f32 %v4252, %v4573
    %v4741 = vadd.f32 %v4253, %v4624
    %v4742 = vadd.f32 %v4254, %v4626
    %v4743 = vadd.f32 %v4255, %v4677
    %v4744 = vadd.f32 %v4256, %v4679
    %4745 = vmatprep.subr.bf16.mxu0 %v1946
    %4746 = vmatpush1.bf16.msra.mxu0 %v1945
    %4747 = vmatprep.subr.bf16.mxu0 %v1930
    %4748 = vmatpush1.bf16.msra.mxu0 %v1929
    %4749 = vmatprep.subr.bf16.mxu0 %v1914
    %4750 = vmatpush1.bf16.msra.mxu0 %v1913
    %4751 = vmatprep.subr.bf16.mxu0 %v1898
    %4752 = vmatpush1.bf16.msra.mxu0 %v1897
    %4753 = vmatprep.subr.bf16.mxu0 %v1882
    %4754 = vmatpush1.bf16.msra.mxu0 %v1881
    %4755 = vmatprep.subr.bf16.mxu0 %v1866
    %4756 = vmatpush1.bf16.msra.mxu0 %v1865
    %4757 = vmatprep.subr.bf16.mxu0 %v1850
    %4758 = vmatpush1.bf16.msra.mxu0 %v1849
    %4759 = vmatprep.subr.bf16.mxu0 %v1834
    %4760 = vmatpush1.bf16.msra.mxu0 %v1833
    %4761 = vmatprep.subr.bf16.mxu0 0
    %4762 = vmatpush2.bf16.msra.mxu0 0
    %4763 = vmatprep.subr.bf16.mxu0 0
    %4764 = vmatpush2.bf16.msra.mxu0 0
    %4765 = vmatprep.subr.bf16.mxu0 0
    %4766 = vmatpush2.bf16.msra.mxu0 0
    %4767 = vmatprep.subr.bf16.mxu0 0
    %4768 = vmatpush2.bf16.msra.mxu0 0
    %4769 = vmatprep.subr.bf16.mxu0 0
    %4770 = vmatpush2.bf16.msra.mxu0 0
    %4771 = vmatprep.subr.bf16.mxu0 0
    %4772 = vmatpush2.bf16.msra.mxu0 0
    %4773 = vmatprep.subr.bf16.mxu0 0
    %4774 = vmatpush2.bf16.msra.mxu0 0
    %4775 = vmatprep.subr.bf16.mxu0 0
    %4776 = vmatpush2.bf16.msra.mxu0 0
    %4777 = vmatprep.mubr.bf16.mxu0 0
    %4778 = vmatmul.mubr.bf16.gmra.mxu0 %v127
    %v4779 = vpop.f32.mrf.mxu0
    %v4780 = vadd.f32 0.0, %v4779
    %v4781 = vpop.f32.mrf.mxu0
    %v4782 = vadd.f32 0.0, %v4781
    %v4783 = vpop.f32.mrf.mxu0
    %v4784 = vadd.f32 0.0, %v4783
    %v4785 = vpop.f32.mrf.mxu0
    %v4786 = vadd.f32 0.0, %v4785
    %4787 = vmatprep.mubr.bf16.mxu0 0
    %4788 = vmatmul.mubr.bf16.gmra.mxu0 %v128
    %v4789 = vpop.f32.mrf.mxu0
    %v4790 = vadd.f32 0.0, %v4789
    %v4791 = vpop.f32.mrf.mxu0
    %v4792 = vadd.f32 0.0, %v4791
    %v4793 = vpop.f32.mrf.mxu0
    %v4794 = vadd.f32 0.0, %v4793
    %v4795 = vpop.f32.mrf.mxu0
    %v4796 = vadd.f32 0.0, %v4795
    %4797 = vdwg.mxu0
    %4798 = vmatprep.subr.bf16.mxu0 %v1948
    %4799 = vmatpush1.bf16.msra.mxu0 %v1947
    %4800 = vmatprep.subr.bf16.mxu0 %v1932
    %4801 = vmatpush1.bf16.msra.mxu0 %v1931
    %4802 = vmatprep.subr.bf16.mxu0 %v1916
    %4803 = vmatpush1.bf16.msra.mxu0 %v1915
    %4804 = vmatprep.subr.bf16.mxu0 %v1900
    %4805 = vmatpush1.bf16.msra.mxu0 %v1899
    %4806 = vmatprep.subr.bf16.mxu0 %v1884
    %4807 = vmatpush1.bf16.msra.mxu0 %v1883
    %4808 = vmatprep.subr.bf16.mxu0 %v1868
    %4809 = vmatpush1.bf16.msra.mxu0 %v1867
    %4810 = vmatprep.subr.bf16.mxu0 %v1852
    %4811 = vmatpush1.bf16.msra.mxu0 %v1851
    %4812 = vmatprep.subr.bf16.mxu0 %v1836
    %4813 = vmatpush1.bf16.msra.mxu0 %v1835
    %4814 = vmatprep.subr.bf16.mxu0 0
    %4815 = vmatpush2.bf16.msra.mxu0 0
    %4816 = vmatprep.subr.bf16.mxu0 0
    %4817 = vmatpush2.bf16.msra.mxu0 0
    %4818 = vmatprep.subr.bf16.mxu0 0
    %4819 = vmatpush2.bf16.msra.mxu0 0
    %4820 = vmatprep.subr.bf16.mxu0 0
    %4821 = vmatpush2.bf16.msra.mxu0 0
    %4822 = vmatprep.subr.bf16.mxu0 0
    %4823 = vmatpush2.bf16.msra.mxu0 0
    %4824 = vmatprep.subr.bf16.mxu0 0
    %4825 = vmatpush2.bf16.msra.mxu0 0
    %4826 = vmatprep.subr.bf16.mxu0 0
    %4827 = vmatpush2.bf16.msra.mxu0 0
    %4828 = vmatprep.subr.bf16.mxu0 0
    %4829 = vmatpush2.bf16.msra.mxu0 0
    %4830 = vmatprep.mubr.bf16.mxu0 0
    %4831 = vmatmul.mubr.bf16.gmra.mxu0 %v127
    %v4832 = vpop.f32.mrf.mxu0
    %v4833 = vadd.f32 0.0, %v4832
    %v4834 = vpop.f32.mrf.mxu0
    %v4835 = vadd.f32 0.0, %v4834
    %v4836 = vpop.f32.mrf.mxu0
    %v4837 = vadd.f32 0.0, %v4836
    %v4838 = vpop.f32.mrf.mxu0
    %v4839 = vadd.f32 0.0, %v4838
    %4840 = vmatprep.mubr.bf16.mxu0 0
    %4841 = vmatmul.mubr.bf16.gmra.mxu0 %v128
    %v4842 = vpop.f32.mrf.mxu0
    %v4843 = vadd.f32 0.0, %v4842
    %v4844 = vpop.f32.mrf.mxu0
    %v4845 = vadd.f32 0.0, %v4844
    %v4846 = vpop.f32.mrf.mxu0
    %v4847 = vadd.f32 0.0, %v4846
    %v4848 = vpop.f32.mrf.mxu0
    %v4849 = vadd.f32 0.0, %v4848
    %4850 = vdwg.mxu0
    %4851 = vmatprep.subr.bf16.mxu0 %v1950
    %4852 = vmatpush1.bf16.msra.mxu0 %v1949
    %4853 = vmatprep.subr.bf16.mxu0 %v1934
    %4854 = vmatpush1.bf16.msra.mxu0 %v1933
    %4855 = vmatprep.subr.bf16.mxu0 %v1918
    %4856 = vmatpush1.bf16.msra.mxu0 %v1917
    %4857 = vmatprep.subr.bf16.mxu0 %v1902
    %4858 = vmatpush1.bf16.msra.mxu0 %v1901
    %4859 = vmatprep.subr.bf16.mxu0 %v1886
    %4860 = vmatpush1.bf16.msra.mxu0 %v1885
    %4861 = vmatprep.subr.bf16.mxu0 %v1870
    %4862 = vmatpush1.bf16.msra.mxu0 %v1869
    %4863 = vmatprep.subr.bf16.mxu0 %v1854
    %4864 = vmatpush1.bf16.msra.mxu0 %v1853
    %4865 = vmatprep.subr.bf16.mxu0 %v1838
    %4866 = vmatpush1.bf16.msra.mxu0 %v1837
    %4867 = vmatprep.subr.bf16.mxu0 0
    %4868 = vmatpush2.bf16.msra.mxu0 0
    %4869 = vmatprep.subr.bf16.mxu0 0
    %4870 = vmatpush2.bf16.msra.mxu0 0
    %4871 = vmatprep.subr.bf16.mxu0 0
    %4872 = vmatpush2.bf16.msra.mxu0 0
    %4873 = vmatprep.subr.bf16.mxu0 0
    %4874 = vmatpush2.bf16.msra.mxu0 0
    %4875 = vmatprep.subr.bf16.mxu0 0
    %4876 = vmatpush2.bf16.msra.mxu0 0
    %4877 = vmatprep.subr.bf16.mxu0 0
    %4878 = vmatpush2.bf16.msra.mxu0 0
    %4879 = vmatprep.subr.bf16.mxu0 0
    %4880 = vmatpush2.bf16.msra.mxu0 0
    %4881 = vmatprep.subr.bf16.mxu0 0
    %4882 = vmatpush2.bf16.msra.mxu0 0
    %4883 = vmatprep.mubr.bf16.mxu0 0
    %4884 = vmatmul.mubr.bf16.gmra.mxu0 %v127
    %v4885 = vpop.f32.mrf.mxu0
    %v4886 = vadd.f32 0.0, %v4885
    %v4887 = vpop.f32.mrf.mxu0
    %v4888 = vadd.f32 0.0, %v4887
    %v4889 = vpop.f32.mrf.mxu0
    %v4890 = vadd.f32 0.0, %v4889
    %v4891 = vpop.f32.mrf.mxu0
    %v4892 = vadd.f32 0.0, %v4891
    %4893 = vmatprep.mubr.bf16.mxu0 0
    %4894 = vmatmul.mubr.bf16.gmra.mxu0 %v128
    %v4895 = vpop.f32.mrf.mxu0
    %v4896 = vadd.f32 0.0, %v4895
    %v4897 = vpop.f32.mrf.mxu0
    %v4898 = vadd.f32 0.0, %v4897
    %v4899 = vpop.f32.mrf.mxu0
    %v4900 = vadd.f32 0.0, %v4899
    %v4901 = vpop.f32.mrf.mxu0
    %v4902 = vadd.f32 0.0, %v4901
    %4903 = vdwg.mxu0
    %4904 = vmatprep.subr.bf16.mxu0 %v1952
    %4905 = vmatpush1.bf16.msra.mxu0 %v1951
    %4906 = vmatprep.subr.bf16.mxu0 %v1936
    %4907 = vmatpush1.bf16.msra.mxu0 %v1935
    %4908 = vmatprep.subr.bf16.mxu0 %v1920
    %4909 = vmatpush1.bf16.msra.mxu0 %v1919
    %4910 = vmatprep.subr.bf16.mxu0 %v1904
    %4911 = vmatpush1.bf16.msra.mxu0 %v1903
    %4912 = vmatprep.subr.bf16.mxu0 %v1888
    %4913 = vmatpush1.bf16.msra.mxu0 %v1887
    %4914 = vmatprep.subr.bf16.mxu0 %v1872
    %4915 = vmatpush1.bf16.msra.mxu0 %v1871
    %4916 = vmatprep.subr.bf16.mxu0 %v1856
    %4917 = vmatpush1.bf16.msra.mxu0 %v1855
    %4918 = vmatprep.subr.bf16.mxu0 %v1840
    %4919 = vmatpush1.bf16.msra.mxu0 %v1839
    %4920 = vmatprep.subr.bf16.mxu0 0
    %4921 = vmatpush2.bf16.msra.mxu0 0
    %4922 = vmatprep.subr.bf16.mxu0 0
    %4923 = vmatpush2.bf16.msra.mxu0 0
    %4924 = vmatprep.subr.bf16.mxu0 0
    %4925 = vmatpush2.bf16.msra.mxu0 0
    %4926 = vmatprep.subr.bf16.mxu0 0
    %4927 = vmatpush2.bf16.msra.mxu0 0
    %4928 = vmatprep.subr.bf16.mxu0 0
    %4929 = vmatpush2.bf16.msra.mxu0 0
    %4930 = vmatprep.subr.bf16.mxu0 0
    %4931 = vmatpush2.bf16.msra.mxu0 0
    %4932 = vmatprep.subr.bf16.mxu0 0
    %4933 = vmatpush2.bf16.msra.mxu0 0
    %4934 = vmatprep.subr.bf16.mxu0 0
    %4935 = vmatpush2.bf16.msra.mxu0 0
    %4936 = vmatprep.mubr.bf16.mxu0 0
    %4937 = vmatmul.mubr.bf16.gmra.mxu0 %v127
    %v4938 = vpop.f32.mrf.mxu0
    %v4939 = vadd.f32 0.0, %v4938
    %v4940 = vpop.f32.mrf.mxu0
    %v4941 = vadd.f32 0.0, %v4940
    %v4942 = vpop.f32.mrf.mxu0
    %v4943 = vadd.f32 0.0, %v4942
    %v4944 = vpop.f32.mrf.mxu0
    %v4945 = vadd.f32 0.0, %v4944
    %4946 = vmatprep.mubr.bf16.mxu0 0
    %4947 = vmatmul.mubr.bf16.gmra.mxu0 %v128
    %v4948 = vpop.f32.mrf.mxu0
    %v4949 = vadd.f32 0.0, %v4948
    %v4950 = vpop.f32.mrf.mxu0
    %v4951 = vadd.f32 0.0, %v4950
    %v4952 = vpop.f32.mrf.mxu0
    %v4953 = vadd.f32 0.0, %v4952
    %v4954 = vpop.f32.mrf.mxu0
    %v4955 = vadd.f32 0.0, %v4954
    %4956 = vdwg.mxu0
    %4957 = vmatprep.subr.bf16.mxu0 %v1954
    %4958 = vmatpush1.bf16.msra.mxu0 %v1953
    %4959 = vmatprep.subr.bf16.mxu0 %v1938
    %4960 = vmatpush1.bf16.msra.mxu0 %v1937
    %4961 = vmatprep.subr.bf16.mxu0 %v1922
    %4962 = vmatpush1.bf16.msra.mxu0 %v1921
    %4963 = vmatprep.subr.bf16.mxu0 %v1906
    %4964 = vmatpush1.bf16.msra.mxu0 %v1905
    %4965 = vmatprep.subr.bf16.mxu0 %v1890
    %4966 = vmatpush1.bf16.msra.mxu0 %v1889
    %4967 = vmatprep.subr.bf16.mxu0 %v1874
    %4968 = vmatpush1.bf16.msra.mxu0 %v1873
    %4969 = vmatprep.subr.bf16.mxu0 %v1858
    %4970 = vmatpush1.bf16.msra.mxu0 %v1857
    %4971 = vmatprep.subr.bf16.mxu0 %v1842
    %4972 = vmatpush1.bf16.msra.mxu0 %v1841
    %4973 = vmatprep.subr.bf16.mxu0 0
    %4974 = vmatpush2.bf16.msra.mxu0 0
    %4975 = vmatprep.subr.bf16.mxu0 0
    %4976 = vmatpush2.bf16.msra.mxu0 0
    %4977 = vmatprep.subr.bf16.mxu0 0
    %4978 = vmatpush2.bf16.msra.mxu0 0
    %4979 = vmatprep.subr.bf16.mxu0 0
    %4980 = vmatpush2.bf16.msra.mxu0 0
    %4981 = vmatprep.subr.bf16.mxu0 0
    %4982 = vmatpush2.bf16.msra.mxu0 0
    %4983 = vmatprep.subr.bf16.mxu0 0
    %4984 = vmatpush2.bf16.msra.mxu0 0
    %4985 = vmatprep.subr.bf16.mxu0 0
    %4986 = vmatpush2.bf16.msra.mxu0 0
    %4987 = vmatprep.subr.bf16.mxu0 0
    %4988 = vmatpush2.bf16.msra.mxu0 0
    %4989 = vmatprep.mubr.bf16.mxu0 0
    %4990 = vmatmul.mubr.bf16.gmra.mxu0 %v127
    %v4991 = vpop.f32.mrf.mxu0
    %v4992 = vadd.f32 0.0, %v4991
    %v4993 = vpop.f32.mrf.mxu0
    %v4994 = vadd.f32 0.0, %v4993
    %v4995 = vpop.f32.mrf.mxu0
    %v4996 = vadd.f32 0.0, %v4995
    %v4997 = vpop.f32.mrf.mxu0
    %v4998 = vadd.f32 0.0, %v4997
    %4999 = vmatprep.mubr.bf16.mxu0 0
    %5000 = vmatmul.mubr.bf16.gmra.mxu0 %v128
    %v5001 = vpop.f32.mrf.mxu0
    %v5002 = vadd.f32 0.0, %v5001
    %v5003 = vpop.f32.mrf.mxu0
    %v5004 = vadd.f32 0.0, %v5003
    %v5005 = vpop.f32.mrf.mxu0
    %v5006 = vadd.f32 0.0, %v5005
    %v5007 = vpop.f32.mrf.mxu0
    %v5008 = vadd.f32 0.0, %v5007
    %5009 = vdwg.mxu0
    %5010 = vmatprep.subr.bf16.mxu0 %v1956
    %5011 = vmatpush1.bf16.msra.mxu0 %v1955
    %5012 = vmatprep.subr.bf16.mxu0 %v1940
    %5013 = vmatpush1.bf16.msra.mxu0 %v1939
    %5014 = vmatprep.subr.bf16.mxu0 %v1924
    %5015 = vmatpush1.bf16.msra.mxu0 %v1923
    %5016 = vmatprep.subr.bf16.mxu0 %v1908
    %5017 = vmatpush1.bf16.msra.mxu0 %v1907
    %5018 = vmatprep.subr.bf16.mxu0 %v1892
    %5019 = vmatpush1.bf16.msra.mxu0 %v1891
    %5020 = vmatprep.subr.bf16.mxu0 %v1876
    %5021 = vmatpush1.bf16.msra.mxu0 %v1875
    %5022 = vmatprep.subr.bf16.mxu0 %v1860
    %5023 = vmatpush1.bf16.msra.mxu0 %v1859
    %5024 = vmatprep.subr.bf16.mxu0 %v1844
    %5025 = vmatpush1.bf16.msra.mxu0 %v1843
    %5026 = vmatprep.subr.bf16.mxu0 0
    %5027 = vmatpush2.bf16.msra.mxu0 0
    %5028 = vmatprep.subr.bf16.mxu0 0
    %5029 = vmatpush2.bf16.msra.mxu0 0
    %5030 = vmatprep.subr.bf16.mxu0 0
    %5031 = vmatpush2.bf16.msra.mxu0 0
    %5032 = vmatprep.subr.bf16.mxu0 0
    %5033 = vmatpush2.bf16.msra.mxu0 0
    %5034 = vmatprep.subr.bf16.mxu0 0
    %5035 = vmatpush2.bf16.msra.mxu0 0
    %5036 = vmatprep.subr.bf16.mxu0 0
    %5037 = vmatpush2.bf16.msra.mxu0 0
    %5038 = vmatprep.subr.bf16.mxu0 0
    %5039 = vmatpush2.bf16.msra.mxu0 0
    %5040 = vmatprep.subr.bf16.mxu0 0
    %5041 = vmatpush2.bf16.msra.mxu0 0
    %5042 = vmatprep.mubr.bf16.mxu0 0
    %5043 = vmatmul.mubr.bf16.gmra.mxu0 %v127
    %v5044 = vpop.f32.mrf.mxu0
    %v5045 = vadd.f32 0.0, %v5044
    %v5046 = vpop.f32.mrf.mxu0
    %v5047 = vadd.f32 0.0, %v5046
    %v5048 = vpop.f32.mrf.mxu0
    %v5049 = vadd.f32 0.0, %v5048
    %v5050 = vpop.f32.mrf.mxu0
    %v5051 = vadd.f32 0.0, %v5050
    %5052 = vmatprep.mubr.bf16.mxu0 0
    %5053 = vmatmul.mubr.bf16.gmra.mxu0 %v128
    %v5054 = vpop.f32.mrf.mxu0
    %v5055 = vadd.f32 0.0, %v5054
    %v5056 = vpop.f32.mrf.mxu0
    %v5057 = vadd.f32 0.0, %v5056
    %v5058 = vpop.f32.mrf.mxu0
    %v5059 = vadd.f32 0.0, %v5058
    %v5060 = vpop.f32.mrf.mxu0
    %v5061 = vadd.f32 0.0, %v5060
    %5062 = vdwg.mxu0
    %5063 = vmatprep.subr.bf16.mxu0 %v1958
    %5064 = vmatpush1.bf16.msra.mxu0 %v1957
    %5065 = vmatprep.subr.bf16.mxu0 %v1942
    %5066 = vmatpush1.bf16.msra.mxu0 %v1941
    %5067 = vmatprep.subr.bf16.mxu0 %v1926
    %5068 = vmatpush1.bf16.msra.mxu0 %v1925
    %5069 = vmatprep.subr.bf16.mxu0 %v1910
    %5070 = vmatpush1.bf16.msra.mxu0 %v1909
    %5071 = vmatprep.subr.bf16.mxu0 %v1894
    %5072 = vmatpush1.bf16.msra.mxu0 %v1893
    %5073 = vmatprep.subr.bf16.mxu0 %v1878
    %5074 = vmatpush1.bf16.msra.mxu0 %v1877
    %5075 = vmatprep.subr.bf16.mxu0 %v1862
    %5076 = vmatpush1.bf16.msra.mxu0 %v1861
    %5077 = vmatprep.subr.bf16.mxu0 %v1846
    %5078 = vmatpush1.bf16.msra.mxu0 %v1845
    %5079 = vmatprep.subr.bf16.mxu0 0
    %5080 = vmatpush2.bf16.msra.mxu0 0
    %5081 = vmatprep.subr.bf16.mxu0 0
    %5082 = vmatpush2.bf16.msra.mxu0 0
    %5083 = vmatprep.subr.bf16.mxu0 0
    %5084 = vmatpush2.bf16.msra.mxu0 0
    %5085 = vmatprep.subr.bf16.mxu0 0
    %5086 = vmatpush2.bf16.msra.mxu0 0
    %5087 = vmatprep.subr.bf16.mxu0 0
    %5088 = vmatpush2.bf16.msra.mxu0 0
    %5089 = vmatprep.subr.bf16.mxu0 0
    %5090 = vmatpush2.bf16.msra.mxu0 0
    %5091 = vmatprep.subr.bf16.mxu0 0
    %5092 = vmatpush2.bf16.msra.mxu0 0
    %5093 = vmatprep.subr.bf16.mxu0 0
    %5094 = vmatpush2.bf16.msra.mxu0 0
    %5095 = vmatprep.mubr.bf16.mxu0 0
    %5096 = vmatmul.mubr.bf16.gmra.mxu0 %v127
    %v5097 = vpop.f32.mrf.mxu0
    %v5098 = vadd.f32 0.0, %v5097
    %v5099 = vpop.f32.mrf.mxu0
    %v5100 = vadd.f32 0.0, %v5099
    %v5101 = vpop.f32.mrf.mxu0
    %v5102 = vadd.f32 0.0, %v5101
    %v5103 = vpop.f32.mrf.mxu0
    %v5104 = vadd.f32 0.0, %v5103
    %5105 = vmatprep.mubr.bf16.mxu0 0
    %5106 = vmatmul.mubr.bf16.gmra.mxu0 %v128
    %v5107 = vpop.f32.mrf.mxu0
    %v5108 = vadd.f32 0.0, %v5107
    %v5109 = vpop.f32.mrf.mxu0
    %v5110 = vadd.f32 0.0, %v5109
    %v5111 = vpop.f32.mrf.mxu0
    %v5112 = vadd.f32 0.0, %v5111
    %v5113 = vpop.f32.mrf.mxu0
    %v5114 = vadd.f32 0.0, %v5113
    %5115 = vdwg.mxu0
    %5116 = vmatprep.subr.bf16.mxu0 %v1960
    %5117 = vmatpush1.bf16.msra.mxu0 %v1959
    %5118 = vmatprep.subr.bf16.mxu0 %v1944
    %5119 = vmatpush1.bf16.msra.mxu0 %v1943
    %5120 = vmatprep.subr.bf16.mxu0 %v1928
    %5121 = vmatpush1.bf16.msra.mxu0 %v1927
    %5122 = vmatprep.subr.bf16.mxu0 %v1912
    %5123 = vmatpush1.bf16.msra.mxu0 %v1911
    %5124 = vmatprep.subr.bf16.mxu0 %v1896
    %5125 = vmatpush1.bf16.msra.mxu0 %v1895
    %5126 = vmatprep.subr.bf16.mxu0 %v1880
    %5127 = vmatpush1.bf16.msra.mxu0 %v1879
    %5128 = vmatprep.subr.bf16.mxu0 %v1864
    %5129 = vmatpush1.bf16.msra.mxu0 %v1863
    %5130 = vmatprep.subr.bf16.mxu0 %v1848
    %5131 = vmatpush1.bf16.msra.mxu0 %v1847
    %5132 = vmatprep.subr.bf16.mxu0 0
    %5133 = vmatpush2.bf16.msra.mxu0 0
    %5134 = vmatprep.subr.bf16.mxu0 0
    %5135 = vmatpush2.bf16.msra.mxu0 0
    %5136 = vmatprep.subr.bf16.mxu0 0
    %5137 = vmatpush2.bf16.msra.mxu0 0
    %5138 = vmatprep.subr.bf16.mxu0 0
    %5139 = vmatpush2.bf16.msra.mxu0 0
    %5140 = vmatprep.subr.bf16.mxu0 0
    %5141 = vmatpush2.bf16.msra.mxu0 0
    %5142 = vmatprep.subr.bf16.mxu0 0
    %5143 = vmatpush2.bf16.msra.mxu0 0
    %5144 = vmatprep.subr.bf16.mxu0 0
    %5145 = vmatpush2.bf16.msra.mxu0 0
    %5146 = vmatprep.subr.bf16.mxu0 0
    %5147 = vmatpush2.bf16.msra.mxu0 0
    %5148 = vmatprep.mubr.bf16.mxu0 0
    %5149 = vmatmul.mubr.bf16.gmra.mxu0 %v127
    %v5150 = vpop.f32.mrf.mxu0
    %v5151 = vadd.f32 0.0, %v5150
    %v5152 = vpop.f32.mrf.mxu0
    %v5153 = vadd.f32 0.0, %v5152
    %v5154 = vpop.f32.mrf.mxu0
    %v5155 = vadd.f32 0.0, %v5154
    %v5156 = vpop.f32.mrf.mxu0
    %v5157 = vadd.f32 0.0, %v5156
    %5158 = vmatprep.mubr.bf16.mxu0 0
    %5159 = vmatmul.mubr.bf16.gmra.mxu0 %v128
    %v5160 = vpop.f32.mrf.mxu0
    %v5161 = vadd.f32 0.0, %v5160
    %v5162 = vpop.f32.mrf.mxu0
    %v5163 = vadd.f32 0.0, %v5162
    %v5164 = vpop.f32.mrf.mxu0
    %v5165 = vadd.f32 0.0, %v5164
    %v5166 = vpop.f32.mrf.mxu0
    %v5167 = vadd.f32 0.0, %v5166
    %5168 = vdwg.mxu0
    %v5169 = vadd.f32 %v4681, %v4780
    %v5170 = vadd.f32 %v4682, %v4782
    %v5171 = vadd.f32 %v4683, %v4833
    %v5172 = vadd.f32 %v4684, %v4835
    %v5173 = vadd.f32 %v4685, %v4886
    %v5174 = vadd.f32 %v4686, %v4888
    %v5175 = vadd.f32 %v4687, %v4939
    %v5176 = vadd.f32 %v4688, %v4941
    %v5177 = vadd.f32 %v4689, %v4992
    %v5178 = vadd.f32 %v4690, %v4994
    %v5179 = vadd.f32 %v4691, %v5045
    %v5180 = vadd.f32 %v4692, %v5047
    %v5181 = vadd.f32 %v4693, %v5098
    %v5182 = vadd.f32 %v4694, %v5100
    %v5183 = vadd.f32 %v4695, %v5151
    %v5184 = vadd.f32 %v4696, %v5153
    %v5185 = vadd.f32 %v4697, %v4784
    %v5186 = vadd.f32 %v4698, %v4786
    %v5187 = vadd.f32 %v4699, %v4837
    %v5188 = vadd.f32 %v4700, %v4839
    %v5189 = vadd.f32 %v4701, %v4890
    %v5190 = vadd.f32 %v4702, %v4892
    %v5191 = vadd.f32 %v4703, %v4943
    %v5192 = vadd.f32 %v4704, %v4945
    %v5193 = vadd.f32 %v4705, %v4996
    %v5194 = vadd.f32 %v4706, %v4998
    %v5195 = vadd.f32 %v4707, %v5049
    %v5196 = vadd.f32 %v4708, %v5051
    %v5197 = vadd.f32 %v4709, %v5102
    %v5198 = vadd.f32 %v4710, %v5104
    %v5199 = vadd.f32 %v4711, %v5155
    %v5200 = vadd.f32 %v4712, %v5157
    %v5201 = vadd.f32 %v4713, %v4790
    %v5202 = vadd.f32 %v4714, %v4792
    %v5203 = vadd.f32 %v4715, %v4843
    %v5204 = vadd.f32 %v4716, %v4845
    %v5205 = vadd.f32 %v4717, %v4896
    %v5206 = vadd.f32 %v4718, %v4898
    %v5207 = vadd.f32 %v4719, %v4949
    %v5208 = vadd.f32 %v4720, %v4951
    %v5209 = vadd.f32 %v4721, %v5002
    %v5210 = vadd.f32 %v4722, %v5004
    %v5211 = vadd.f32 %v4723, %v5055
    %v5212 = vadd.f32 %v4724, %v5057
    %v5213 = vadd.f32 %v4725, %v5108
    %v5214 = vadd.f32 %v4726, %v5110
    %v5215 = vadd.f32 %v4727, %v5161
    %v5216 = vadd.f32 %v4728, %v5163
    %v5217 = vadd.f32 %v4729, %v4794
    %v5218 = vadd.f32 %v4730, %v4796
    %v5219 = vadd.f32 %v4731, %v4847
    %v5220 = vadd.f32 %v4732, %v4849
    %v5221 = vadd.f32 %v4733, %v4900
    %v5222 = vadd.f32 %v4734, %v4902
    %v5223 = vadd.f32 %v4735, %v4953
    %v5224 = vadd.f32 %v4736, %v4955
    %v5225 = vadd.f32 %v4737, %v5006
    %v5226 = vadd.f32 %v4738, %v5008
    %v5227 = vadd.f32 %v4739, %v5059
    %v5228 = vadd.f32 %v4740, %v5061
    %v5229 = vadd.f32 %v4741, %v5112
    %v5230 = vadd.f32 %v4742, %v5114
    %v5231 = vadd.f32 %v4743, %v5165
    %v5232 = vadd.f32 %v4744, %v5167
    %v5233 = vld [vmem:[#allocation10] sm:$0xff]
    %v5234 = vld [vmem:[#allocation10 + $0x8] sm:$0xff]
    %v5235 = vld [vmem:[#allocation11] sm:$0xff]
    %v5236 = vld [vmem:[#allocation11 + $0x8] sm:$0xff]
    %v5239 = vlaneseq
    %v5240 = vshrl.u32 %v5239, 7
    %v5241 = vsub.s32 0, %v5240
    %v5242 = vrot.slane %v5235, %v5241
    %v5243 = vlaneseq
    %v5244 = vshrl.u32 %v5243, 7
    %v5245 = vsub.s32 1, %v5244
    %v5246 = vrot.slane %v5235, %v5245
    %v5247 = vlaneseq
    %v5248 = vshrl.u32 %v5247, 7
    %v5249 = vsub.s32 2, %v5248
    %v5250 = vrot.slane %v5235, %v5249
    %v5251 = vlaneseq
    %v5252 = vshrl.u32 %v5251, 7
    %v5253 = vsub.s32 3, %v5252
    %v5254 = vrot.slane %v5235, %v5253
    %v5255 = vlaneseq
    %v5256 = vshrl.u32 %v5255, 7
    %v5257 = vsub.s32 4, %v5256
    %v5258 = vrot.slane %v5235, %v5257
    %v5259 = vlaneseq
    %v5260 = vshrl.u32 %v5259, 7
    %v5261 = vsub.s32 5, %v5260
    %v5262 = vrot.slane %v5235, %v5261
    %v5263 = vlaneseq
    %v5264 = vshrl.u32 %v5263, 7
    %v5265 = vsub.s32 6, %v5264
    %v5266 = vrot.slane %v5235, %v5265
    %v5267 = vlaneseq
    %v5268 = vshrl.u32 %v5267, 7
    %v5269 = vsub.s32 7, %v5268
    %v5270 = vrot.slane %v5235, %v5269
    %v5271 = vlaneseq
    %v5272 = vshrl.u32 %v5271, 7
    %v5273 = vsub.s32 0, %v5272
    %v5274 = vrot.slane %v5236, %v5273
    %v5275 = vlaneseq
    %v5276 = vshrl.u32 %v5275, 7
    %v5277 = vsub.s32 1, %v5276
    %v5278 = vrot.slane %v5236, %v5277
    %v5279 = vlaneseq
    %v5280 = vshrl.u32 %v5279, 7
    %v5281 = vsub.s32 2, %v5280
    %v5282 = vrot.slane %v5236, %v5281
    %v5283 = vlaneseq
    %v5284 = vshrl.u32 %v5283, 7
    %v5285 = vsub.s32 3, %v5284
    %v5286 = vrot.slane %v5236, %v5285
    %v5287 = vlaneseq
    %v5288 = vshrl.u32 %v5287, 7
    %v5289 = vsub.s32 4, %v5288
    %v5290 = vrot.slane %v5236, %v5289
    %v5291 = vlaneseq
    %v5292 = vshrl.u32 %v5291, 7
    %v5293 = vsub.s32 5, %v5292
    %v5294 = vrot.slane %v5236, %v5293
    %v5295 = vlaneseq
    %v5296 = vshrl.u32 %v5295, 7
    %v5297 = vsub.s32 6, %v5296
    %v5298 = vrot.slane %v5236, %v5297
    %v5299 = vlaneseq
    %v5300 = vshrl.u32 %v5299, 7
    %v5301 = vsub.s32 7, %v5300
    %v5302 = vrot.slane %v5236, %v5301
    %v5319 = vadd.f32 %v5169, %v5242
    %v5320 = vadd.f32 %v5170, %v5246
    %v5321 = vadd.f32 %v5171, %v5250
    %v5322 = vadd.f32 %v5172, %v5254
    %v5323 = vadd.f32 %v5173, %v5258
    %v5324 = vadd.f32 %v5174, %v5262
    %v5325 = vadd.f32 %v5175, %v5266
    %v5326 = vadd.f32 %v5176, %v5270
    %v5327 = vadd.f32 %v5177, %v5274
    %v5328 = vadd.f32 %v5178, %v5278
    %v5329 = vadd.f32 %v5179, %v5282
    %v5330 = vadd.f32 %v5180, %v5286
    %v5331 = vadd.f32 %v5181, %v5290
    %v5332 = vadd.f32 %v5182, %v5294
    %v5333 = vadd.f32 %v5183, %v5298
    %v5334 = vadd.f32 %v5184, %v5302
    %v5335 = vadd.f32 %v5185, %v5242
    %v5336 = vadd.f32 %v5186, %v5246
    %v5337 = vadd.f32 %v5187, %v5250
    %v5338 = vadd.f32 %v5188, %v5254
    %v5339 = vadd.f32 %v5189, %v5258
    %v5340 = vadd.f32 %v5190, %v5262
    %v5341 = vadd.f32 %v5191, %v5266
    %v5342 = vadd.f32 %v5192, %v5270
    %v5343 = vadd.f32 %v5193, %v5274
    %v5344 = vadd.f32 %v5194, %v5278
    %v5345 = vadd.f32 %v5195, %v5282
    %v5346 = vadd.f32 %v5196, %v5286
    %v5347 = vadd.f32 %v5197, %v5290
    %v5348 = vadd.f32 %v5198, %v5294
    %v5349 = vadd.f32 %v5199, %v5298
    %v5350 = vadd.f32 %v5200, %v5302
    %v5351 = vadd.f32 %v5201, %v5242
    %v5352 = vadd.f32 %v5202, %v5246
    %v5353 = vadd.f32 %v5203, %v5250
    %v5354 = vadd.f32 %v5204, %v5254
    %v5355 = vadd.f32 %v5205, %v5258
    %v5356 = vadd.f32 %v5206, %v5262
    %v5357 = vadd.f32 %v5207, %v5266
    %v5358 = vadd.f32 %v5208, %v5270
    %v5359 = vadd.f32 %v5209, %v5274
    %v5360 = vadd.f32 %v5210, %v5278
    %v5361 = vadd.f32 %v5211, %v5282
    %v5362 = vadd.f32 %v5212, %v5286
    %v5363 = vadd.f32 %v5213, %v5290
    %v5364 = vadd.f32 %v5214, %v5294
    %v5365 = vadd.f32 %v5215, %v5298
    %v5366 = vadd.f32 %v5216, %v5302
    %v5367 = vadd.f32 %v5217, %v5242
    %v5368 = vadd.f32 %v5218, %v5246
    %v5369 = vadd.f32 %v5219, %v5250
    %v5370 = vadd.f32 %v5220, %v5254
    %v5371 = vadd.f32 %v5221, %v5258
    %v5372 = vadd.f32 %v5222, %v5262
    %v5373 = vadd.f32 %v5223, %v5266
    %v5374 = vadd.f32 %v5224, %v5270
    %v5375 = vadd.f32 %v5225, %v5274
    %v5376 = vadd.f32 %v5226, %v5278
    %v5377 = vadd.f32 %v5227, %v5282
    %v5378 = vadd.f32 %v5228, %v5286
    %v5379 = vadd.f32 %v5229, %v5290
    %v5380 = vadd.f32 %v5230, %v5294
    %v5381 = vadd.f32 %v5231, %v5298
    %v5382 = vadd.f32 %v5232, %v5302
    %v5383 = vand.u32 2147483647, %v5319
    %vm5384 = vcmp.le.f32.partialorder %v5383, 0.7853982
    %vm5385 = vcmp.lt.s32.totalorder %v5319, 0
    %v5386 = vand.u32 %v5319, 2139095040
    %v5387 = vshrl.u32 %v5386, 23
    %v5388 = vsub.s32 %v5387, 127
    %v5389 = vand.u32 2147483647, %v5319
    %v5390 = vand.u32 %v5389, 8388607
    %v5391 = vor.u32 %v5390, 8388608
    %v5392 = vsub.s32 0, %v5391
    %v5393 = vadd.s32 %v5388, 1
    %vm5394 = vcmp.gt.s32.totalorder %v5393, 0
    %v5395 = vsel %vm5394, %v5393, 0
    %v5396 = vshrl.u32 %v5395, 5
    %v5397 = vand.u32 %v5395, 31
    %v5398 = vsub.s32 32, %v5397
    %v5399 = vshrl.u32 683565275, %v5398
    %v5400 = vshll.u32 683565275, %v5397
    %v5401 = vshrl.u32 2475754826, %v5398
    %v5402 = vor.u32 %v5400, %v5401
    %v5403 = vshll.u32 2475754826, %v5397
    %v5404 = vshrl.u32 2131351028, %v5398
    %v5405 = vor.u32 %v5403, %v5404
    %v5406 = vshll.u32 2131351028, %v5397
    %v5407 = vshrl.u32 2102212464, %v5398
    %v5408 = vor.u32 %v5406, %v5407
    %v5409 = vshll.u32 2102212464, %v5397
    %v5410 = vshrl.u32 920167782, %v5398
    %v5411 = vor.u32 %v5409, %v5410
    %v5412 = vshll.u32 920167782, %v5397
    %v5413 = vshrl.u32 1326507024, %v5398
    %v5414 = vor.u32 %v5412, %v5413
    %vm5415 = vcmp.lt.s32.totalorder %v5396, 1
    %vm5416 = vcmp.lt.s32.totalorder %v5396, 2
    %vm5417 = vcmp.lt.s32.totalorder %v5396, 3
    %vm5418 = vcmp.lt.s32.totalorder %v5396, 4
    %v5419 = vsel %vm5415, %v5399, %v5402
    %v5420 = vsel %vm5418, %v5408, 2102212464
    %v5421 = vsel %vm5417, %v5405, %v5420
    %v5422 = vsel %vm5416, %v5419, %v5421
    %v5423 = vsel %vm5415, %v5402, %v5405
    %v5424 = vsel %vm5418, %v5411, 920167782
    %v5425 = vsel %vm5417, %v5408, %v5424
    %v5426 = vsel %vm5416, %v5423, %v5425
    %v5427 = vsel %vm5415, %v5405, %v5408
    %v5428 = vsel %vm5418, %v5414, 1326507024
    %v5429 = vsel %vm5417, %v5411, %v5428
    %v5430 = vsel %vm5416, %v5427, %v5429
    %v5431 = vshll.u32 %v5391, 8
    %v5432 = vmul.u32.u64.compose %v5431, %v5430
    %v5433 = vextract.low.u32 %v5432
    %v5434 = vextract.high.u32 %v5432
    %v5435 = vmul.u32.u64.compose %v5431, %v5426
    %v5436 = vextract.low.u32 %v5435
    %v5437 = vextract.high.u32 %v5435
    %v5438 = vmul.u32 %v5431, %v5422
    %v5439 = vadd.s32 %v5434, %v5436
    %vm5440 = vc.u32 %v5434, %v5436
    %v5441 = vadd.s32 %v5437, 1
    %v5442 = vsel %vm5440, %v5441, %v5437
    %v5443 = vadd.s32 %v5438, %v5442
    %v5444 = vadd.s32 %v5443, 536870912
    %v5445 = vshrl.u32 %v5444, 30
    %v5446 = vshll.u32 %v5445, 30
    %v5447 = vsub.s32 %v5443, %v5446
    %vm5448 = vcmp.lt.s32.totalorder %v5447, 0
    %v5449 = vsub.s32 0, %v5447
    %v5450 = vsel %vm5448, %v5449, %v5447
    %v5451 = vclz %v5450
    %v5452 = vsub.s32 %v5451, 2
    %vm5453 = vcmp.gt.s32.totalorder 0, %v5452
    %v5454 = vsel %vm5453, 0, %v5452
    %v5455 = vsub.s32 32, %v5454
    %v5456 = vshll.u32 %v5447, %v5454
    %v5457 = vshrl.u32 %v5439, %v5455
    %v5458 = vor.u32 %v5456, %v5457
    %v5459 = vsub.s32 4294967266, %v5454
    %v5460 = vadd.s32 %v5459, 127
    %v5461 = vshll.u32 %v5460, 23
    %v5462 = vor.u32 4788187, %v5461
    %v5463 = vand.u32 2147483647, %v5462
    %v5465 = vcvt.s32.f32 %v5458
    %v5466 = vmul.f32 %v5465, %v5463
    %v5467 = vxor.u32 %v5466, 2147483648
    %v5468 = vsel %vm5385, %v5467, %v5466
    %v5469 = vsub.s32 4, %v5445
    %v5470 = vsel %vm5385, %v5469, %v5445
    %v5471 = vsel %vm5384, %v5319, %v5468
    %v5472 = vsel %vm5384, 0, %v5470
    %v5473 = vcosq.f32.pop %v5471
    %v5474 = vsinq.f32.pop %v5471
    %vm5475 = vweird.f32 %v5319
    %v5476 = vadd.s32 %v5472, 3
    %v5477 = vand.u32 %v5476, 3
    %vm5478 = vcmp.lt.s32.totalorder %v5477, 2
    %vm5479 = vcmp.eq.s32.totalorder %v5477, 0
    %v5480 = vxor.u32 %v5474, 2147483648
    %v5481 = vsel %vm5479, %v5473, %v5480
    %vm5482 = vcmp.eq.s32.totalorder %v5477, 2
    %v5483 = vxor.u32 %v5473, 2147483648
    %v5484 = vsel %vm5482, %v5483, %v5474
    %v5485 = vsel %vm5478, %v5481, %v5484
    %v5486 = vsel %vm5475, nan, %v5485
    %v5487 = vand.u32 2147483647, %v5320
    %vm5488 = vcmp.le.f32.partialorder %v5487, 0.7853982
    %vm5489 = vcmp.lt.s32.totalorder %v5320, 0
    %v5490 = vand.u32 %v5320, 2139095040
    %v5491 = vshrl.u32 %v5490, 23
    %v5492 = vsub.s32 %v5491, 127
    %v5493 = vand.u32 2147483647, %v5320
    %v5494 = vand.u32 %v5493, 8388607
    %v5495 = vor.u32 %v5494, 8388608
    %v5496 = vsub.s32 0, %v5495
    %v5497 = vadd.s32 %v5492, 1
    %vm5498 = vcmp.gt.s32.totalorder %v5497, 0
    %v5499 = vsel %vm5498, %v5497, 0
    %v5500 = vshrl.u32 %v5499, 5
    %v5501 = vand.u32 %v5499, 31
    %v5502 = vsub.s32 32, %v5501
    %v5503 = vshrl.u32 683565275, %v5502
    %v5504 = vshll.u32 683565275, %v5501
    %v5505 = vshrl.u32 2475754826, %v5502
    %v5506 = vor.u32 %v5504, %v5505
    %v5507 = vshll.u32 2475754826, %v5501
    %v5508 = vshrl.u32 2131351028, %v5502
    %v5509 = vor.u32 %v5507, %v5508
    %v5510 = vshll.u32 2131351028, %v5501
    %v5511 = vshrl.u32 2102212464, %v5502
    %v5512 = vor.u32 %v5510, %v5511
    %v5513 = vshll.u32 2102212464, %v5501
    %v5514 = vshrl.u32 920167782, %v5502
    %v5515 = vor.u32 %v5513, %v5514
    %v5516 = vshll.u32 920167782, %v5501
    %v5517 = vshrl.u32 1326507024, %v5502
    %v5518 = vor.u32 %v5516, %v5517
    %vm5519 = vcmp.lt.s32.totalorder %v5500, 1
    %vm5520 = vcmp.lt.s32.totalorder %v5500, 2
    %vm5521 = vcmp.lt.s32.totalorder %v5500, 3
    %vm5522 = vcmp.lt.s32.totalorder %v5500, 4
    %v5523 = vsel %vm5519, %v5503, %v5506
    %v5524 = vsel %vm5522, %v5512, 2102212464
    %v5525 = vsel %vm5521, %v5509, %v5524
    %v5526 = vsel %vm5520, %v5523, %v5525
    %v5527 = vsel %vm5519, %v5506, %v5509
    %v5528 = vsel %vm5522, %v5515, 920167782
    %v5529 = vsel %vm5521, %v5512, %v5528
    %v5530 = vsel %vm5520, %v5527, %v5529
    %v5531 = vsel %vm5519, %v5509, %v5512
    %v5532 = vsel %vm5522, %v5518, 1326507024
    %v5533 = vsel %vm5521, %v5515, %v5532
    %v5534 = vsel %vm5520, %v5531, %v5533
    %v5535 = vshll.u32 %v5495, 8
    %v5536 = vmul.u32.u64.compose %v5535, %v5534
    %v5537 = vextract.low.u32 %v5536
    %v5538 = vextract.high.u32 %v5536
    %v5539 = vmul.u32.u64.compose %v5535, %v5530
    %v5540 = vextract.low.u32 %v5539
    %v5541 = vextract.high.u32 %v5539
    %v5542 = vmul.u32 %v5535, %v5526
    %v5543 = vadd.s32 %v5538, %v5540
    %vm5544 = vc.u32 %v5538, %v5540
    %v5545 = vadd.s32 %v5541, 1
    %v5546 = vsel %vm5544, %v5545, %v5541
    %v5547 = vadd.s32 %v5542, %v5546
    %v5548 = vadd.s32 %v5547, 536870912
    %v5549 = vshrl.u32 %v5548, 30
    %v5550 = vshll.u32 %v5549, 30
    %v5551 = vsub.s32 %v5547, %v5550
    %vm5552 = vcmp.lt.s32.totalorder %v5551, 0
    %v5553 = vsub.s32 0, %v5551
    %v5554 = vsel %vm5552, %v5553, %v5551
    %v5555 = vclz %v5554
    %v5556 = vsub.s32 %v5555, 2
    %vm5557 = vcmp.gt.s32.totalorder 0, %v5556
    %v5558 = vsel %vm5557, 0, %v5556
    %v5559 = vsub.s32 32, %v5558
    %v5560 = vshll.u32 %v5551, %v5558
    %v5561 = vshrl.u32 %v5543, %v5559
    %v5562 = vor.u32 %v5560, %v5561
    %v5563 = vsub.s32 4294967266, %v5558
    %v5564 = vadd.s32 %v5563, 127
    %v5565 = vshll.u32 %v5564, 23
    %v5566 = vor.u32 4788187, %v5565
    %v5567 = vand.u32 2147483647, %v5566
    %v5569 = vcvt.s32.f32 %v5562
    %v5570 = vmul.f32 %v5569, %v5567
    %v5571 = vxor.u32 %v5570, 2147483648
    %v5572 = vsel %vm5489, %v5571, %v5570
    %v5573 = vsub.s32 4, %v5549
    %v5574 = vsel %vm5489, %v5573, %v5549
    %v5575 = vsel %vm5488, %v5320, %v5572
    %v5576 = vsel %vm5488, 0, %v5574
    %v5577 = vcosq.f32.pop %v5575
    %v5578 = vsinq.f32.pop %v5575
    %vm5579 = vweird.f32 %v5320
    %v5580 = vadd.s32 %v5576, 3
    %v5581 = vand.u32 %v5580, 3
    %vm5582 = vcmp.lt.s32.totalorder %v5581, 2
    %vm5583 = vcmp.eq.s32.totalorder %v5581, 0
    %v5584 = vxor.u32 %v5578, 2147483648
    %v5585 = vsel %vm5583, %v5577, %v5584
    %vm5586 = vcmp.eq.s32.totalorder %v5581, 2
    %v5587 = vxor.u32 %v5577, 2147483648
    %v5588 = vsel %vm5586, %v5587, %v5578
    %v5589 = vsel %vm5582, %v5585, %v5588
    %v5590 = vsel %vm5579, nan, %v5589
    %v5591 = vand.u32 2147483647, %v5321
    %vm5592 = vcmp.le.f32.partialorder %v5591, 0.7853982
    %vm5593 = vcmp.lt.s32.totalorder %v5321, 0
    %v5594 = vand.u32 %v5321, 2139095040
    %v5595 = vshrl.u32 %v5594, 23
    %v5596 = vsub.s32 %v5595, 127
    %v5597 = vand.u32 2147483647, %v5321
    %v5598 = vand.u32 %v5597, 8388607
    %v5599 = vor.u32 %v5598, 8388608
    %v5600 = vsub.s32 0, %v5599
    %v5601 = vadd.s32 %v5596, 1
    %vm5602 = vcmp.gt.s32.totalorder %v5601, 0
    %v5603 = vsel %vm5602, %v5601, 0
    %v5604 = vshrl.u32 %v5603, 5
    %v5605 = vand.u32 %v5603, 31
    %v5606 = vsub.s32 32, %v5605
    %v5607 = vshrl.u32 683565275, %v5606
    %v5608 = vshll.u32 683565275, %v5605
    %v5609 = vshrl.u32 2475754826, %v5606
    %v5610 = vor.u32 %v5608, %v5609
    %v5611 = vshll.u32 2475754826, %v5605
    %v5612 = vshrl.u32 2131351028, %v5606
    %v5613 = vor.u32 %v5611, %v5612
    %v5614 = vshll.u32 2131351028, %v5605
    %v5615 = vshrl.u32 2102212464, %v5606
    %v5616 = vor.u32 %v5614, %v5615
    %v5617 = vshll.u32 2102212464, %v5605
    %v5618 = vshrl.u32 920167782, %v5606
    %v5619 = vor.u32 %v5617, %v5618
    %v5620 = vshll.u32 920167782, %v5605
    %v5621 = vshrl.u32 1326507024, %v5606
    %v5622 = vor.u32 %v5620, %v5621
    %vm5623 = vcmp.lt.s32.totalorder %v5604, 1
    %vm5624 = vcmp.lt.s32.totalorder %v5604, 2
    %vm5625 = vcmp.lt.s32.totalorder %v5604, 3
    %vm5626 = vcmp.lt.s32.totalorder %v5604, 4
    %v5627 = vsel %vm5623, %v5607, %v5610
    %v5628 = vsel %vm5626, %v5616, 2102212464
    %v5629 = vsel %vm5625, %v5613, %v5628
    %v5630 = vsel %vm5624, %v5627, %v5629
    %v5631 = vsel %vm5623, %v5610, %v5613
    %v5632 = vsel %vm5626, %v5619, 920167782
    %v5633 = vsel %vm5625, %v5616, %v5632
    %v5634 = vsel %vm5624, %v5631, %v5633
    %v5635 = vsel %vm5623, %v5613, %v5616
    %v5636 = vsel %vm5626, %v5622, 1326507024
    %v5637 = vsel %vm5625, %v5619, %v5636
    %v5638 = vsel %vm5624, %v5635, %v5637
    %v5639 = vshll.u32 %v5599, 8
    %v5640 = vmul.u32.u64.compose %v5639, %v5638
    %v5641 = vextract.low.u32 %v5640
    %v5642 = vextract.high.u32 %v5640
    %v5643 = vmul.u32.u64.compose %v5639, %v5634
    %v5644 = vextract.low.u32 %v5643
    %v5645 = vextract.high.u32 %v5643
    %v5646 = vmul.u32 %v5639, %v5630
    %v5647 = vadd.s32 %v5642, %v5644
    %vm5648 = vc.u32 %v5642, %v5644
    %v5649 = vadd.s32 %v5645, 1
    %v5650 = vsel %vm5648, %v5649, %v5645
    %v5651 = vadd.s32 %v5646, %v5650
    %v5652 = vadd.s32 %v5651, 536870912
    %v5653 = vshrl.u32 %v5652, 30
    %v5654 = vshll.u32 %v5653, 30
    %v5655 = vsub.s32 %v5651, %v5654
    %vm5656 = vcmp.lt.s32.totalorder %v5655, 0
    %v5657 = vsub.s32 0, %v5655
    %v5658 = vsel %vm5656, %v5657, %v5655
    %v5659 = vclz %v5658
    %v5660 = vsub.s32 %v5659, 2
    %vm5661 = vcmp.gt.s32.totalorder 0, %v5660
    %v5662 = vsel %vm5661, 0, %v5660
    %v5663 = vsub.s32 32, %v5662
    %v5664 = vshll.u32 %v5655, %v5662
    %v5665 = vshrl.u32 %v5647, %v5663
    %v5666 = vor.u32 %v5664, %v5665
    %v5667 = vsub.s32 4294967266, %v5662
    %v5668 = vadd.s32 %v5667, 127
    %v5669 = vshll.u32 %v5668, 23
    %v5670 = vor.u32 4788187, %v5669
    %v5671 = vand.u32 2147483647, %v5670
    %v5673 = vcvt.s32.f32 %v5666
    %v5674 = vmul.f32 %v5673, %v5671
    %v5675 = vxor.u32 %v5674, 2147483648
    %v5676 = vsel %vm5593, %v5675, %v5674
    %v5677 = vsub.s32 4, %v5653
    %v5678 = vsel %vm5593, %v5677, %v5653
    %v5679 = vsel %vm5592, %v5321, %v5676
    %v5680 = vsel %vm5592, 0, %v5678
    %v5681 = vcosq.f32.pop %v5679
    %v5682 = vsinq.f32.pop %v5679
    %vm5683 = vweird.f32 %v5321
    %v5684 = vadd.s32 %v5680, 3
    %v5685 = vand.u32 %v5684, 3
    %vm5686 = vcmp.lt.s32.totalorder %v5685, 2
    %vm5687 = vcmp.eq.s32.totalorder %v5685, 0
    %v5688 = vxor.u32 %v5682, 2147483648
    %v5689 = vsel %vm5687, %v5681, %v5688
    %vm5690 = vcmp.eq.s32.totalorder %v5685, 2
    %v5691 = vxor.u32 %v5681, 2147483648
    %v5692 = vsel %vm5690, %v5691, %v5682
    %v5693 = vsel %vm5686, %v5689, %v5692
    %v5694 = vsel %vm5683, nan, %v5693
    %v5695 = vand.u32 2147483647, %v5322
    %vm5696 = vcmp.le.f32.partialorder %v5695, 0.7853982
    %vm5697 = vcmp.lt.s32.totalorder %v5322, 0
    %v5698 = vand.u32 %v5322, 2139095040
    %v5699 = vshrl.u32 %v5698, 23
    %v5700 = vsub.s32 %v5699, 127
    %v5701 = vand.u32 2147483647, %v5322
    %v5702 = vand.u32 %v5701, 8388607
    %v5703 = vor.u32 %v5702, 8388608
    %v5704 = vsub.s32 0, %v5703
    %v5705 = vadd.s32 %v5700, 1
    %vm5706 = vcmp.gt.s32.totalorder %v5705, 0
    %v5707 = vsel %vm5706, %v5705, 0
    %v5708 = vshrl.u32 %v5707, 5
    %v5709 = vand.u32 %v5707, 31
    %v5710 = vsub.s32 32, %v5709
    %v5711 = vshrl.u32 683565275, %v5710
    %v5712 = vshll.u32 683565275, %v5709
    %v5713 = vshrl.u32 2475754826, %v5710
    %v5714 = vor.u32 %v5712, %v5713
    %v5715 = vshll.u32 2475754826, %v5709
    %v5716 = vshrl.u32 2131351028, %v5710
    %v5717 = vor.u32 %v5715, %v5716
    %v5718 = vshll.u32 2131351028, %v5709
    %v5719 = vshrl.u32 2102212464, %v5710
    %v5720 = vor.u32 %v5718, %v5719
    %v5721 = vshll.u32 2102212464, %v5709
    %v5722 = vshrl.u32 920167782, %v5710
    %v5723 = vor.u32 %v5721, %v5722
    %v5724 = vshll.u32 920167782, %v5709
    %v5725 = vshrl.u32 1326507024, %v5710
    %v5726 = vor.u32 %v5724, %v5725
    %vm5727 = vcmp.lt.s32.totalorder %v5708, 1
    %vm5728 = vcmp.lt.s32.totalorder %v5708, 2
    %vm5729 = vcmp.lt.s32.totalorder %v5708, 3
    %vm5730 = vcmp.lt.s32.totalorder %v5708, 4
    %v5731 = vsel %vm5727, %v5711, %v5714
    %v5732 = vsel %vm5730, %v5720, 2102212464
    %v5733 = vsel %vm5729, %v5717, %v5732
    %v5734 = vsel %vm5728, %v5731, %v5733
    %v5735 = vsel %vm5727, %v5714, %v5717
    %v5736 = vsel %vm5730, %v5723, 920167782
    %v5737 = vsel %vm5729, %v5720, %v5736
    %v5738 = vsel %vm5728, %v5735, %v5737
    %v5739 = vsel %vm5727, %v5717, %v5720
    %v5740 = vsel %vm5730, %v5726, 1326507024
    %v5741 = vsel %vm5729, %v5723, %v5740
    %v5742 = vsel %vm5728, %v5739, %v5741
    %v5743 = vshll.u32 %v5703, 8
    %v5744 = vmul.u32.u64.compose %v5743, %v5742
    %v5745 = vextract.low.u32 %v5744
    %v5746 = vextract.high.u32 %v5744
    %v5747 = vmul.u32.u64.compose %v5743, %v5738
    %v5748 = vextract.low.u32 %v5747
    %v5749 = vextract.high.u32 %v5747
    %v5750 = vmul.u32 %v5743, %v5734
    %v5751 = vadd.s32 %v5746, %v5748
    %vm5752 = vc.u32 %v5746, %v5748
    %v5753 = vadd.s32 %v5749, 1
    %v5754 = vsel %vm5752, %v5753, %v5749
    %v5755 = vadd.s32 %v5750, %v5754
    %v5756 = vadd.s32 %v5755, 536870912
    %v5757 = vshrl.u32 %v5756, 30
    %v5758 = vshll.u32 %v5757, 30
    %v5759 = vsub.s32 %v5755, %v5758
    %vm5760 = vcmp.lt.s32.totalorder %v5759, 0
    %v5761 = vsub.s32 0, %v5759
    %v5762 = vsel %vm5760, %v5761, %v5759
    %v5763 = vclz %v5762
    %v5764 = vsub.s32 %v5763, 2
    %vm5765 = vcmp.gt.s32.totalorder 0, %v5764
    %v5766 = vsel %vm5765, 0, %v5764
    %v5767 = vsub.s32 32, %v5766
    %v5768 = vshll.u32 %v5759, %v5766
    %v5769 = vshrl.u32 %v5751, %v5767
    %v5770 = vor.u32 %v5768, %v5769
    %v5771 = vsub.s32 4294967266, %v5766
    %v5772 = vadd.s32 %v5771, 127
    %v5773 = vshll.u32 %v5772, 23
    %v5774 = vor.u32 4788187, %v5773
    %v5775 = vand.u32 2147483647, %v5774
    %v5777 = vcvt.s32.f32 %v5770
    %v5778 = vmul.f32 %v5777, %v5775
    %v5779 = vxor.u32 %v5778, 2147483648
    %v5780 = vsel %vm5697, %v5779, %v5778
    %v5781 = vsub.s32 4, %v5757
    %v5782 = vsel %vm5697, %v5781, %v5757
    %v5783 = vsel %vm5696, %v5322, %v5780
    %v5784 = vsel %vm5696, 0, %v5782
    %v5785 = vcosq.f32.pop %v5783
    %v5786 = vsinq.f32.pop %v5783
    %vm5787 = vweird.f32 %v5322
    %v5788 = vadd.s32 %v5784, 3
    %v5789 = vand.u32 %v5788, 3
    %vm5790 = vcmp.lt.s32.totalorder %v5789, 2
    %vm5791 = vcmp.eq.s32.totalorder %v5789, 0
    %v5792 = vxor.u32 %v5786, 2147483648
    %v5793 = vsel %vm5791, %v5785, %v5792
    %vm5794 = vcmp.eq.s32.totalorder %v5789, 2
    %v5795 = vxor.u32 %v5785, 2147483648
    %v5796 = vsel %vm5794, %v5795, %v5786
    %v5797 = vsel %vm5790, %v5793, %v5796
    %v5798 = vsel %vm5787, nan, %v5797
    %v5799 = vand.u32 2147483647, %v5323
    %vm5800 = vcmp.le.f32.partialorder %v5799, 0.7853982
    %vm5801 = vcmp.lt.s32.totalorder %v5323, 0
    %v5802 = vand.u32 %v5323, 2139095040
    %v5803 = vshrl.u32 %v5802, 23
    %v5804 = vsub.s32 %v5803, 127
    %v5805 = vand.u32 2147483647, %v5323
    %v5806 = vand.u32 %v5805, 8388607
    %v5807 = vor.u32 %v5806, 8388608
    %v5808 = vsub.s32 0, %v5807
    %v5809 = vadd.s32 %v5804, 1
    %vm5810 = vcmp.gt.s32.totalorder %v5809, 0
    %v5811 = vsel %vm5810, %v5809, 0
    %v5812 = vshrl.u32 %v5811, 5
    %v5813 = vand.u32 %v5811, 31
    %v5814 = vsub.s32 32, %v5813
    %v5815 = vshrl.u32 683565275, %v5814
    %v5816 = vshll.u32 683565275, %v5813
    %v5817 = vshrl.u32 2475754826, %v5814
    %v5818 = vor.u32 %v5816, %v5817
    %v5819 = vshll.u32 2475754826, %v5813
    %v5820 = vshrl.u32 2131351028, %v5814
    %v5821 = vor.u32 %v5819, %v5820
    %v5822 = vshll.u32 2131351028, %v5813
    %v5823 = vshrl.u32 2102212464, %v5814
    %v5824 = vor.u32 %v5822, %v5823
    %v5825 = vshll.u32 2102212464, %v5813
    %v5826 = vshrl.u32 920167782, %v5814
    %v5827 = vor.u32 %v5825, %v5826
    %v5828 = vshll.u32 920167782, %v5813
    %v5829 = vshrl.u32 1326507024, %v5814
    %v5830 = vor.u32 %v5828, %v5829
    %vm5831 = vcmp.lt.s32.totalorder %v5812, 1
    %vm5832 = vcmp.lt.s32.totalorder %v5812, 2
    %vm5833 = vcmp.lt.s32.totalorder %v5812, 3
    %vm5834 = vcmp.lt.s32.totalorder %v5812, 4
    %v5835 = vsel %vm5831, %v5815, %v5818
    %v5836 = vsel %vm5834, %v5824, 2102212464
    %v5837 = vsel %vm5833, %v5821, %v5836
    %v5838 = vsel %vm5832, %v5835, %v5837
    %v5839 = vsel %vm5831, %v5818, %v5821
    %v5840 = vsel %vm5834, %v5827, 920167782
    %v5841 = vsel %vm5833, %v5824, %v5840
    %v5842 = vsel %vm5832, %v5839, %v5841
    %v5843 = vsel %vm5831, %v5821, %v5824
    %v5844 = vsel %vm5834, %v5830, 1326507024
    %v5845 = vsel %vm5833, %v5827, %v5844
    %v5846 = vsel %vm5832, %v5843, %v5845
    %v5847 = vshll.u32 %v5807, 8
    %v5848 = vmul.u32.u64.compose %v5847, %v5846
    %v5849 = vextract.low.u32 %v5848
    %v5850 = vextract.high.u32 %v5848
    %v5851 = vmul.u32.u64.compose %v5847, %v5842
    %v5852 = vextract.low.u32 %v5851
    %v5853 = vextract.high.u32 %v5851
    %v5854 = vmul.u32 %v5847, %v5838
    %v5855 = vadd.s32 %v5850, %v5852
    %vm5856 = vc.u32 %v5850, %v5852
    %v5857 = vadd.s32 %v5853, 1
    %v5858 = vsel %vm5856, %v5857, %v5853
    %v5859 = vadd.s32 %v5854, %v5858
    %v5860 = vadd.s32 %v5859, 536870912
    %v5861 = vshrl.u32 %v5860, 30
    %v5862 = vshll.u32 %v5861, 30
    %v5863 = vsub.s32 %v5859, %v5862
    %vm5864 = vcmp.lt.s32.totalorder %v5863, 0
    %v5865 = vsub.s32 0, %v5863
    %v5866 = vsel %vm5864, %v5865, %v5863
    %v5867 = vclz %v5866
    %v5868 = vsub.s32 %v5867, 2
    %vm5869 = vcmp.gt.s32.totalorder 0, %v5868
    %v5870 = vsel %vm5869, 0, %v5868
    %v5871 = vsub.s32 32, %v5870
    %v5872 = vshll.u32 %v5863, %v5870
    %v5873 = vshrl.u32 %v5855, %v5871
    %v5874 = vor.u32 %v5872, %v5873
    %v5875 = vsub.s32 4294967266, %v5870
    %v5876 = vadd.s32 %v5875, 127
    %v5877 = vshll.u32 %v5876, 23
    %v5878 = vor.u32 4788187, %v5877
    %v5879 = vand.u32 2147483647, %v5878
    %v5881 = vcvt.s32.f32 %v5874
    %v5882 = vmul.f32 %v5881, %v5879
    %v5883 = vxor.u32 %v5882, 2147483648
    %v5884 = vsel %vm5801, %v5883, %v5882
    %v5885 = vsub.s32 4, %v5861
    %v5886 = vsel %vm5801, %v5885, %v5861
    %v5887 = vsel %vm5800, %v5323, %v5884
    %v5888 = vsel %vm5800, 0, %v5886
    %v5889 = vcosq.f32.pop %v5887
    %v5890 = vsinq.f32.pop %v5887
    %vm5891 = vweird.f32 %v5323
    %v5892 = vadd.s32 %v5888, 3
    %v5893 = vand.u32 %v5892, 3
    %vm5894 = vcmp.lt.s32.totalorder %v5893, 2
    %vm5895 = vcmp.eq.s32.totalorder %v5893, 0
    %v5896 = vxor.u32 %v5890, 2147483648
    %v5897 = vsel %vm5895, %v5889, %v5896
    %vm5898 = vcmp.eq.s32.totalorder %v5893, 2
    %v5899 = vxor.u32 %v5889, 2147483648
    %v5900 = vsel %vm5898, %v5899, %v5890
    %v5901 = vsel %vm5894, %v5897, %v5900
    %v5902 = vsel %vm5891, nan, %v5901
    %v5903 = vand.u32 2147483647, %v5324
    %vm5904 = vcmp.le.f32.partialorder %v5903, 0.7853982
    %vm5905 = vcmp.lt.s32.totalorder %v5324, 0
    %v5906 = vand.u32 %v5324, 2139095040
    %v5907 = vshrl.u32 %v5906, 23
    %v5908 = vsub.s32 %v5907, 127
    %v5909 = vand.u32 2147483647, %v5324
    %v5910 = vand.u32 %v5909, 8388607
    %v5911 = vor.u32 %v5910, 8388608
    %v5912 = vsub.s32 0, %v5911
    %v5913 = vadd.s32 %v5908, 1
    %vm5914 = vcmp.gt.s32.totalorder %v5913, 0
    %v5915 = vsel %vm5914, %v5913, 0
    %v5916 = vshrl.u32 %v5915, 5
    %v5917 = vand.u32 %v5915, 31
    %v5918 = vsub.s32 32, %v5917
    %v5919 = vshrl.u32 683565275, %v5918
    %v5920 = vshll.u32 683565275, %v5917
    %v5921 = vshrl.u32 2475754826, %v5918
    %v5922 = vor.u32 %v5920, %v5921
    %v5923 = vshll.u32 2475754826, %v5917
    %v5924 = vshrl.u32 2131351028, %v5918
    %v5925 = vor.u32 %v5923, %v5924
    %v5926 = vshll.u32 2131351028, %v5917
    %v5927 = vshrl.u32 2102212464, %v5918
    %v5928 = vor.u32 %v5926, %v5927
    %v5929 = vshll.u32 2102212464, %v5917
    %v5930 = vshrl.u32 920167782, %v5918
    %v5931 = vor.u32 %v5929, %v5930
    %v5932 = vshll.u32 920167782, %v5917
    %v5933 = vshrl.u32 1326507024, %v5918
    %v5934 = vor.u32 %v5932, %v5933
    %vm5935 = vcmp.lt.s32.totalorder %v5916, 1
    %vm5936 = vcmp.lt.s32.totalorder %v5916, 2
    %vm5937 = vcmp.lt.s32.totalorder %v5916, 3
    %vm5938 = vcmp.lt.s32.totalorder %v5916, 4
    %v5939 = vsel %vm5935, %v5919, %v5922
    %v5940 = vsel %vm5938, %v5928, 2102212464
    %v5941 = vsel %vm5937, %v5925, %v5940
    %v5942 = vsel %vm5936, %v5939, %v5941
    %v5943 = vsel %vm5935, %v5922, %v5925
    %v5944 = vsel %vm5938, %v5931, 920167782
    %v5945 = vsel %vm5937, %v5928, %v5944
    %v5946 = vsel %vm5936, %v5943, %v5945
    %v5947 = vsel %vm5935, %v5925, %v5928
    %v5948 = vsel %vm5938, %v5934, 1326507024
    %v5949 = vsel %vm5937, %v5931, %v5948
    %v5950 = vsel %vm5936, %v5947, %v5949
    %v5951 = vshll.u32 %v5911, 8
    %v5952 = vmul.u32.u64.compose %v5951, %v5950
    %v5953 = vextract.low.u32 %v5952
    %v5954 = vextract.high.u32 %v5952
    %v5955 = vmul.u32.u64.compose %v5951, %v5946
    %v5956 = vextract.low.u32 %v5955
    %v5957 = vextract.high.u32 %v5955
    %v5958 = vmul.u32 %v5951, %v5942
    %v5959 = vadd.s32 %v5954, %v5956
    %vm5960 = vc.u32 %v5954, %v5956
    %v5961 = vadd.s32 %v5957, 1
    %v5962 = vsel %vm5960, %v5961, %v5957
    %v5963 = vadd.s32 %v5958, %v5962
    %v5964 = vadd.s32 %v5963, 536870912
    %v5965 = vshrl.u32 %v5964, 30
    %v5966 = vshll.u32 %v5965, 30
    %v5967 = vsub.s32 %v5963, %v5966
    %vm5968 = vcmp.lt.s32.totalorder %v5967, 0
    %v5969 = vsub.s32 0, %v5967
    %v5970 = vsel %vm5968, %v5969, %v5967
    %v5971 = vclz %v5970
    %v5972 = vsub.s32 %v5971, 2
    %vm5973 = vcmp.gt.s32.totalorder 0, %v5972
    %v5974 = vsel %vm5973, 0, %v5972
    %v5975 = vsub.s32 32, %v5974
    %v5976 = vshll.u32 %v5967, %v5974
    %v5977 = vshrl.u32 %v5959, %v5975
    %v5978 = vor.u32 %v5976, %v5977
    %v5979 = vsub.s32 4294967266, %v5974
    %v5980 = vadd.s32 %v5979, 127
    %v5981 = vshll.u32 %v5980, 23
    %v5982 = vor.u32 4788187, %v5981
    %v5983 = vand.u32 2147483647, %v5982
    %v5985 = vcvt.s32.f32 %v5978
    %v5986 = vmul.f32 %v5985, %v5983
    %v5987 = vxor.u32 %v5986, 2147483648
    %v5988 = vsel %vm5905, %v5987, %v5986
    %v5989 = vsub.s32 4, %v5965
    %v5990 = vsel %vm5905, %v5989, %v5965
    %v5991 = vsel %vm5904, %v5324, %v5988
    %v5992 = vsel %vm5904, 0, %v5990
    %v5993 = vcosq.f32.pop %v5991
    %v5994 = vsinq.f32.pop %v5991
    %vm5995 = vweird.f32 %v5324
    %v5996 = vadd.s32 %v5992, 3
    %v5997 = vand.u32 %v5996, 3
    %vm5998 = vcmp.lt.s32.totalorder %v5997, 2
    %vm5999 = vcmp.eq.s32.totalorder %v5997, 0
    %v6000 = vxor.u32 %v5994, 2147483648
    %v6001 = vsel %vm5999, %v5993, %v6000
    %vm6002 = vcmp.eq.s32.totalorder %v5997, 2
    %v6003 = vxor.u32 %v5993, 2147483648
    %v6004 = vsel %vm6002, %v6003, %v5994
    %v6005 = vsel %vm5998, %v6001, %v6004
    %v6006 = vsel %vm5995, nan, %v6005
    %v6007 = vand.u32 2147483647, %v5325
    %vm6008 = vcmp.le.f32.partialorder %v6007, 0.7853982
    %vm6009 = vcmp.lt.s32.totalorder %v5325, 0
    %v6010 = vand.u32 %v5325, 2139095040
    %v6011 = vshrl.u32 %v6010, 23
    %v6012 = vsub.s32 %v6011, 127
    %v6013 = vand.u32 2147483647, %v5325
    %v6014 = vand.u32 %v6013, 8388607
    %v6015 = vor.u32 %v6014, 8388608
    %v6016 = vsub.s32 0, %v6015
    %v6017 = vadd.s32 %v6012, 1
    %vm6018 = vcmp.gt.s32.totalorder %v6017, 0
    %v6019 = vsel %vm6018, %v6017, 0
    %v6020 = vshrl.u32 %v6019, 5
    %v6021 = vand.u32 %v6019, 31
    %v6022 = vsub.s32 32, %v6021
    %v6023 = vshrl.u32 683565275, %v6022
    %v6024 = vshll.u32 683565275, %v6021
    %v6025 = vshrl.u32 2475754826, %v6022
    %v6026 = vor.u32 %v6024, %v6025
    %v6027 = vshll.u32 2475754826, %v6021
    %v6028 = vshrl.u32 2131351028, %v6022
    %v6029 = vor.u32 %v6027, %v6028
    %v6030 = vshll.u32 2131351028, %v6021
    %v6031 = vshrl.u32 2102212464, %v6022
    %v6032 = vor.u32 %v6030, %v6031
    %v6033 = vshll.u32 2102212464, %v6021
    %v6034 = vshrl.u32 920167782, %v6022
    %v6035 = vor.u32 %v6033, %v6034
    %v6036 = vshll.u32 920167782, %v6021
    %v6037 = vshrl.u32 1326507024, %v6022
    %v6038 = vor.u32 %v6036, %v6037
    %vm6039 = vcmp.lt.s32.totalorder %v6020, 1
    %vm6040 = vcmp.lt.s32.totalorder %v6020, 2
    %vm6041 = vcmp.lt.s32.totalorder %v6020, 3
    %vm6042 = vcmp.lt.s32.totalorder %v6020, 4
    %v6043 = vsel %vm6039, %v6023, %v6026
    %v6044 = vsel %vm6042, %v6032, 2102212464
    %v6045 = vsel %vm6041, %v6029, %v6044
    %v6046 = vsel %vm6040, %v6043, %v6045
    %v6047 = vsel %vm6039, %v6026, %v6029
    %v6048 = vsel %vm6042, %v6035, 920167782
    %v6049 = vsel %vm6041, %v6032, %v6048
    %v6050 = vsel %vm6040, %v6047, %v6049
    %v6051 = vsel %vm6039, %v6029, %v6032
    %v6052 = vsel %vm6042, %v6038, 1326507024
    %v6053 = vsel %vm6041, %v6035, %v6052
    %v6054 = vsel %vm6040, %v6051, %v6053
    %v6055 = vshll.u32 %v6015, 8
    %v6056 = vmul.u32.u64.compose %v6055, %v6054
    %v6057 = vextract.low.u32 %v6056
    %v6058 = vextract.high.u32 %v6056
    %v6059 = vmul.u32.u64.compose %v6055, %v6050
    %v6060 = vextract.low.u32 %v6059
    %v6061 = vextract.high.u32 %v6059
    %v6062 = vmul.u32 %v6055, %v6046
    %v6063 = vadd.s32 %v6058, %v6060
    %vm6064 = vc.u32 %v6058, %v6060
    %v6065 = vadd.s32 %v6061, 1
    %v6066 = vsel %vm6064, %v6065, %v6061
    %v6067 = vadd.s32 %v6062, %v6066
    %v6068 = vadd.s32 %v6067, 536870912
    %v6069 = vshrl.u32 %v6068, 30
    %v6070 = vshll.u32 %v6069, 30
    %v6071 = vsub.s32 %v6067, %v6070
    %vm6072 = vcmp.lt.s32.totalorder %v6071, 0
    %v6073 = vsub.s32 0, %v6071
    %v6074 = vsel %vm6072, %v6073, %v6071
    %v6075 = vclz %v6074
    %v6076 = vsub.s32 %v6075, 2
    %vm6077 = vcmp.gt.s32.totalorder 0, %v6076
    %v6078 = vsel %vm6077, 0, %v6076
    %v6079 = vsub.s32 32, %v6078
    %v6080 = vshll.u32 %v6071, %v6078
    %v6081 = vshrl.u32 %v6063, %v6079
    %v6082 = vor.u32 %v6080, %v6081
    %v6083 = vsub.s32 4294967266, %v6078
    %v6084 = vadd.s32 %v6083, 127
    %v6085 = vshll.u32 %v6084, 23
    %v6086 = vor.u32 4788187, %v6085
    %v6087 = vand.u32 2147483647, %v6086
    %v6089 = vcvt.s32.f32 %v6082
    %v6090 = vmul.f32 %v6089, %v6087
    %v6091 = vxor.u32 %v6090, 2147483648
    %v6092 = vsel %vm6009, %v6091, %v6090
    %v6093 = vsub.s32 4, %v6069
    %v6094 = vsel %vm6009, %v6093, %v6069
    %v6095 = vsel %vm6008, %v5325, %v6092
    %v6096 = vsel %vm6008, 0, %v6094
    %v6097 = vcosq.f32.pop %v6095
    %v6098 = vsinq.f32.pop %v6095
    %vm6099 = vweird.f32 %v5325
    %v6100 = vadd.s32 %v6096, 3
    %v6101 = vand.u32 %v6100, 3
    %vm6102 = vcmp.lt.s32.totalorder %v6101, 2
    %vm6103 = vcmp.eq.s32.totalorder %v6101, 0
    %v6104 = vxor.u32 %v6098, 2147483648
    %v6105 = vsel %vm6103, %v6097, %v6104
    %vm6106 = vcmp.eq.s32.totalorder %v6101, 2
    %v6107 = vxor.u32 %v6097, 2147483648
    %v6108 = vsel %vm6106, %v6107, %v6098
    %v6109 = vsel %vm6102, %v6105, %v6108
    %v6110 = vsel %vm6099, nan, %v6109
    %v6111 = vand.u32 2147483647, %v5326
    %vm6112 = vcmp.le.f32.partialorder %v6111, 0.7853982
    %vm6113 = vcmp.lt.s32.totalorder %v5326, 0
    %v6114 = vand.u32 %v5326, 2139095040
    %v6115 = vshrl.u32 %v6114, 23
    %v6116 = vsub.s32 %v6115, 127
    %v6117 = vand.u32 2147483647, %v5326
    %v6118 = vand.u32 %v6117, 8388607
    %v6119 = vor.u32 %v6118, 8388608
    %v6120 = vsub.s32 0, %v6119
    %v6121 = vadd.s32 %v6116, 1
    %vm6122 = vcmp.gt.s32.totalorder %v6121, 0
    %v6123 = vsel %vm6122, %v6121, 0
    %v6124 = vshrl.u32 %v6123, 5
    %v6125 = vand.u32 %v6123, 31
    %v6126 = vsub.s32 32, %v6125
    %v6127 = vshrl.u32 683565275, %v6126
    %v6128 = vshll.u32 683565275, %v6125
    %v6129 = vshrl.u32 2475754826, %v6126
    %v6130 = vor.u32 %v6128, %v6129
    %v6131 = vshll.u32 2475754826, %v6125
    %v6132 = vshrl.u32 2131351028, %v6126
    %v6133 = vor.u32 %v6131, %v6132
    %v6134 = vshll.u32 2131351028, %v6125
    %v6135 = vshrl.u32 2102212464, %v6126
    %v6136 = vor.u32 %v6134, %v6135
    %v6137 = vshll.u32 2102212464, %v6125
    %v6138 = vshrl.u32 920167782, %v6126
    %v6139 = vor.u32 %v6137, %v6138
    %v6140 = vshll.u32 920167782, %v6125
    %v6141 = vshrl.u32 1326507024, %v6126
    %v6142 = vor.u32 %v6140, %v6141
    %vm6143 = vcmp.lt.s32.totalorder %v6124, 1
    %vm6144 = vcmp.lt.s32.totalorder %v6124, 2
    %vm6145 = vcmp.lt.s32.totalorder %v6124, 3
    %vm6146 = vcmp.lt.s32.totalorder %v6124, 4
    %v6147 = vsel %vm6143, %v6127, %v6130
    %v6148 = vsel %vm6146, %v6136, 2102212464
    %v6149 = vsel %vm6145, %v6133, %v6148
    %v6150 = vsel %vm6144, %v6147, %v6149
    %v6151 = vsel %vm6143, %v6130, %v6133
    %v6152 = vsel %vm6146, %v6139, 920167782
    %v6153 = vsel %vm6145, %v6136, %v6152
    %v6154 = vsel %vm6144, %v6151, %v6153
    %v6155 = vsel %vm6143, %v6133, %v6136
    %v6156 = vsel %vm6146, %v6142, 1326507024
    %v6157 = vsel %vm6145, %v6139, %v6156
    %v6158 = vsel %vm6144, %v6155, %v6157
    %v6159 = vshll.u32 %v6119, 8
    %v6160 = vmul.u32.u64.compose %v6159, %v6158
    %v6161 = vextract.low.u32 %v6160
    %v6162 = vextract.high.u32 %v6160
    %v6163 = vmul.u32.u64.compose %v6159, %v6154
    %v6164 = vextract.low.u32 %v6163
    %v6165 = vextract.high.u32 %v6163
    %v6166 = vmul.u32 %v6159, %v6150
    %v6167 = vadd.s32 %v6162, %v6164
    %vm6168 = vc.u32 %v6162, %v6164
    %v6169 = vadd.s32 %v6165, 1
    %v6170 = vsel %vm6168, %v6169, %v6165
    %v6171 = vadd.s32 %v6166, %v6170
    %v6172 = vadd.s32 %v6171, 536870912
    %v6173 = vshrl.u32 %v6172, 30
    %v6174 = vshll.u32 %v6173, 30
    %v6175 = vsub.s32 %v6171, %v6174
    %vm6176 = vcmp.lt.s32.totalorder %v6175, 0
    %v6177 = vsub.s32 0, %v6175
    %v6178 = vsel %vm6176, %v6177, %v6175
    %v6179 = vclz %v6178
    %v6180 = vsub.s32 %v6179, 2
    %vm6181 = vcmp.gt.s32.totalorder 0, %v6180
    %v6182 = vsel %vm6181, 0, %v6180
    %v6183 = vsub.s32 32, %v6182
    %v6184 = vshll.u32 %v6175, %v6182
    %v6185 = vshrl.u32 %v6167, %v6183
    %v6186 = vor.u32 %v6184, %v6185
    %v6187 = vsub.s32 4294967266, %v6182
    %v6188 = vadd.s32 %v6187, 127
    %v6189 = vshll.u32 %v6188, 23
    %v6190 = vor.u32 4788187, %v6189
    %v6191 = vand.u32 2147483647, %v6190
    %v6193 = vcvt.s32.f32 %v6186
    %v6194 = vmul.f32 %v6193, %v6191
    %v6195 = vxor.u32 %v6194, 2147483648
    %v6196 = vsel %vm6113, %v6195, %v6194
    %v6197 = vsub.s32 4, %v6173
    %v6198 = vsel %vm6113, %v6197, %v6173
    %v6199 = vsel %vm6112, %v5326, %v6196
    %v6200 = vsel %vm6112, 0, %v6198
    %v6201 = vcosq.f32.pop %v6199
    %v6202 = vsinq.f32.pop %v6199
    %vm6203 = vweird.f32 %v5326
    %v6204 = vadd.s32 %v6200, 3
    %v6205 = vand.u32 %v6204, 3
    %vm6206 = vcmp.lt.s32.totalorder %v6205, 2
    %vm6207 = vcmp.eq.s32.totalorder %v6205, 0
    %v6208 = vxor.u32 %v6202, 2147483648
    %v6209 = vsel %vm6207, %v6201, %v6208
    %vm6210 = vcmp.eq.s32.totalorder %v6205, 2
    %v6211 = vxor.u32 %v6201, 2147483648
    %v6212 = vsel %vm6210, %v6211, %v6202
    %v6213 = vsel %vm6206, %v6209, %v6212
    %v6214 = vsel %vm6203, nan, %v6213
    %v6215 = vand.u32 2147483647, %v5327
    %vm6216 = vcmp.le.f32.partialorder %v6215, 0.7853982
    %vm6217 = vcmp.lt.s32.totalorder %v5327, 0
    %v6218 = vand.u32 %v5327, 2139095040
    %v6219 = vshrl.u32 %v6218, 23
    %v6220 = vsub.s32 %v6219, 127
    %v6221 = vand.u32 2147483647, %v5327
    %v6222 = vand.u32 %v6221, 8388607
    %v6223 = vor.u32 %v6222, 8388608
    %v6224 = vsub.s32 0, %v6223
    %v6225 = vadd.s32 %v6220, 1
    %vm6226 = vcmp.gt.s32.totalorder %v6225, 0
    %v6227 = vsel %vm6226, %v6225, 0
    %v6228 = vshrl.u32 %v6227, 5
    %v6229 = vand.u32 %v6227, 31
    %v6230 = vsub.s32 32, %v6229
    %v6231 = vshrl.u32 683565275, %v6230
    %v6232 = vshll.u32 683565275, %v6229
    %v6233 = vshrl.u32 2475754826, %v6230
    %v6234 = vor.u32 %v6232, %v6233
    %v6235 = vshll.u32 2475754826, %v6229
    %v6236 = vshrl.u32 2131351028, %v6230
    %v6237 = vor.u32 %v6235, %v6236
    %v6238 = vshll.u32 2131351028, %v6229
    %v6239 = vshrl.u32 2102212464, %v6230
    %v6240 = vor.u32 %v6238, %v6239
    %v6241 = vshll.u32 2102212464, %v6229
    %v6242 = vshrl.u32 920167782, %v6230
    %v6243 = vor.u32 %v6241, %v6242
    %v6244 = vshll.u32 920167782, %v6229
    %v6245 = vshrl.u32 1326507024, %v6230
    %v6246 = vor.u32 %v6244, %v6245
    %vm6247 = vcmp.lt.s32.totalorder %v6228, 1
    %vm6248 = vcmp.lt.s32.totalorder %v6228, 2
    %vm6249 = vcmp.lt.s32.totalorder %v6228, 3
    %vm6250 = vcmp.lt.s32.totalorder %v6228, 4
    %v6251 = vsel %vm6247, %v6231, %v6234
    %v6252 = vsel %vm6250, %v6240, 2102212464
    %v6253 = vsel %vm6249, %v6237, %v6252
    %v6254 = vsel %vm6248, %v6251, %v6253
    %v6255 = vsel %vm6247, %v6234, %v6237
    %v6256 = vsel %vm6250, %v6243, 920167782
    %v6257 = vsel %vm6249, %v6240, %v6256
    %v6258 = vsel %vm6248, %v6255, %v6257
    %v6259 = vsel %vm6247, %v6237, %v6240
    %v6260 = vsel %vm6250, %v6246, 1326507024
    %v6261 = vsel %vm6249, %v6243, %v6260
    %v6262 = vsel %vm6248, %v6259, %v6261
    %v6263 = vshll.u32 %v6223, 8
    %v6264 = vmul.u32.u64.compose %v6263, %v6262
    %v6265 = vextract.low.u32 %v6264
    %v6266 = vextract.high.u32 %v6264
    %v6267 = vmul.u32.u64.compose %v6263, %v6258
    %v6268 = vextract.low.u32 %v6267
    %v6269 = vextract.high.u32 %v6267
    %v6270 = vmul.u32 %v6263, %v6254
    %v6271 = vadd.s32 %v6266, %v6268
    %vm6272 = vc.u32 %v6266, %v6268
    %v6273 = vadd.s32 %v6269, 1
    %v6274 = vsel %vm6272, %v6273, %v6269
    %v6275 = vadd.s32 %v6270, %v6274
    %v6276 = vadd.s32 %v6275, 536870912
    %v6277 = vshrl.u32 %v6276, 30
    %v6278 = vshll.u32 %v6277, 30
    %v6279 = vsub.s32 %v6275, %v6278
    %vm6280 = vcmp.lt.s32.totalorder %v6279, 0
    %v6281 = vsub.s32 0, %v6279
    %v6282 = vsel %vm6280, %v6281, %v6279
    %v6283 = vclz %v6282
    %v6284 = vsub.s32 %v6283, 2
    %vm6285 = vcmp.gt.s32.totalorder 0, %v6284
    %v6286 = vsel %vm6285, 0, %v6284
    %v6287 = vsub.s32 32, %v6286
    %v6288 = vshll.u32 %v6279, %v6286
    %v6289 = vshrl.u32 %v6271, %v6287
    %v6290 = vor.u32 %v6288, %v6289
    %v6291 = vsub.s32 4294967266, %v6286
    %v6292 = vadd.s32 %v6291, 127
    %v6293 = vshll.u32 %v6292, 23
    %v6294 = vor.u32 4788187, %v6293
    %v6295 = vand.u32 2147483647, %v6294
    %v6297 = vcvt.s32.f32 %v6290
    %v6298 = vmul.f32 %v6297, %v6295
    %v6299 = vxor.u32 %v6298, 2147483648
    %v6300 = vsel %vm6217, %v6299, %v6298
    %v6301 = vsub.s32 4, %v6277
    %v6302 = vsel %vm6217, %v6301, %v6277
    %v6303 = vsel %vm6216, %v5327, %v6300
    %v6304 = vsel %vm6216, 0, %v6302
    %v6305 = vcosq.f32.pop %v6303
    %v6306 = vsinq.f32.pop %v6303
    %vm6307 = vweird.f32 %v5327
    %v6308 = vadd.s32 %v6304, 3
    %v6309 = vand.u32 %v6308, 3
    %vm6310 = vcmp.lt.s32.totalorder %v6309, 2
    %vm6311 = vcmp.eq.s32.totalorder %v6309, 0
    %v6312 = vxor.u32 %v6306, 2147483648
    %v6313 = vsel %vm6311, %v6305, %v6312
    %vm6314 = vcmp.eq.s32.totalorder %v6309, 2
    %v6315 = vxor.u32 %v6305, 2147483648
    %v6316 = vsel %vm6314, %v6315, %v6306
    %v6317 = vsel %vm6310, %v6313, %v6316
    %v6318 = vsel %vm6307, nan, %v6317
    %v6319 = vand.u32 2147483647, %v5328
    %vm6320 = vcmp.le.f32.partialorder %v6319, 0.7853982
    %vm6321 = vcmp.lt.s32.totalorder %v5328, 0
    %v6322 = vand.u32 %v5328, 2139095040
    %v6323 = vshrl.u32 %v6322, 23
    %v6324 = vsub.s32 %v6323, 127
    %v6325 = vand.u32 2147483647, %v5328
    %v6326 = vand.u32 %v6325, 8388607
    %v6327 = vor.u32 %v6326, 8388608
    %v6328 = vsub.s32 0, %v6327
    %v6329 = vadd.s32 %v6324, 1
    %vm6330 = vcmp.gt.s32.totalorder %v6329, 0
    %v6331 = vsel %vm6330, %v6329, 0
    %v6332 = vshrl.u32 %v6331, 5
    %v6333 = vand.u32 %v6331, 31
    %v6334 = vsub.s32 32, %v6333
    %v6335 = vshrl.u32 683565275, %v6334
    %v6336 = vshll.u32 683565275, %v6333
    %v6337 = vshrl.u32 2475754826, %v6334
    %v6338 = vor.u32 %v6336, %v6337
    %v6339 = vshll.u32 2475754826, %v6333
    %v6340 = vshrl.u32 2131351028, %v6334
    %v6341 = vor.u32 %v6339, %v6340
    %v6342 = vshll.u32 2131351028, %v6333
    %v6343 = vshrl.u32 2102212464, %v6334
    %v6344 = vor.u32 %v6342, %v6343
    %v6345 = vshll.u32 2102212464, %v6333
    %v6346 = vshrl.u32 920167782, %v6334
    %v6347 = vor.u32 %v6345, %v6346
    %v6348 = vshll.u32 920167782, %v6333
    %v6349 = vshrl.u32 1326507024, %v6334
    %v6350 = vor.u32 %v6348, %v6349
    %vm6351 = vcmp.lt.s32.totalorder %v6332, 1
    %vm6352 = vcmp.lt.s32.totalorder %v6332, 2
    %vm6353 = vcmp.lt.s32.totalorder %v6332, 3
    %vm6354 = vcmp.lt.s32.totalorder %v6332, 4
    %v6355 = vsel %vm6351, %v6335, %v6338
    %v6356 = vsel %vm6354, %v6344, 2102212464
    %v6357 = vsel %vm6353, %v6341, %v6356
    %v6358 = vsel %vm6352, %v6355, %v6357
    %v6359 = vsel %vm6351, %v6338, %v6341
    %v6360 = vsel %vm6354, %v6347, 920167782
    %v6361 = vsel %vm6353, %v6344, %v6360
    %v6362 = vsel %vm6352, %v6359, %v6361
    %v6363 = vsel %vm6351, %v6341, %v6344
    %v6364 = vsel %vm6354, %v6350, 1326507024
    %v6365 = vsel %vm6353, %v6347, %v6364
    %v6366 = vsel %vm6352, %v6363, %v6365
    %v6367 = vshll.u32 %v6327, 8
    %v6368 = vmul.u32.u64.compose %v6367, %v6366
    %v6369 = vextract.low.u32 %v6368
    %v6370 = vextract.high.u32 %v6368
    %v6371 = vmul.u32.u64.compose %v6367, %v6362
    %v6372 = vextract.low.u32 %v6371
    %v6373 = vextract.high.u32 %v6371
    %v6374 = vmul.u32 %v6367, %v6358
    %v6375 = vadd.s32 %v6370, %v6372
    %vm6376 = vc.u32 %v6370, %v6372
    %v6377 = vadd.s32 %v6373, 1
    %v6378 = vsel %vm6376, %v6377, %v6373
    %v6379 = vadd.s32 %v6374, %v6378
    %v6380 = vadd.s32 %v6379, 536870912
    %v6381 = vshrl.u32 %v6380, 30
    %v6382 = vshll.u32 %v6381, 30
    %v6383 = vsub.s32 %v6379, %v6382
    %vm6384 = vcmp.lt.s32.totalorder %v6383, 0
    %v6385 = vsub.s32 0, %v6383
    %v6386 = vsel %vm6384, %v6385, %v6383
    %v6387 = vclz %v6386
    %v6388 = vsub.s32 %v6387, 2
    %vm6389 = vcmp.gt.s32.totalorder 0, %v6388
    %v6390 = vsel %vm6389, 0, %v6388
    %v6391 = vsub.s32 32, %v6390
    %v6392 = vshll.u32 %v6383, %v6390
    %v6393 = vshrl.u32 %v6375, %v6391
    %v6394 = vor.u32 %v6392, %v6393
    %v6395 = vsub.s32 4294967266, %v6390
    %v6396 = vadd.s32 %v6395, 127
    %v6397 = vshll.u32 %v6396, 23
    %v6398 = vor.u32 4788187, %v6397
    %v6399 = vand.u32 2147483647, %v6398
    %v6401 = vcvt.s32.f32 %v6394
    %v6402 = vmul.f32 %v6401, %v6399
    %v6403 = vxor.u32 %v6402, 2147483648
    %v6404 = vsel %vm6321, %v6403, %v6402
    %v6405 = vsub.s32 4, %v6381
    %v6406 = vsel %vm6321, %v6405, %v6381
    %v6407 = vsel %vm6320, %v5328, %v6404
    %v6408 = vsel %vm6320, 0, %v6406
    %v6409 = vcosq.f32.pop %v6407
    %v6410 = vsinq.f32.pop %v6407
    %vm6411 = vweird.f32 %v5328
    %v6412 = vadd.s32 %v6408, 3
    %v6413 = vand.u32 %v6412, 3
    %vm6414 = vcmp.lt.s32.totalorder %v6413, 2
    %vm6415 = vcmp.eq.s32.totalorder %v6413, 0
    %v6416 = vxor.u32 %v6410, 2147483648
    %v6417 = vsel %vm6415, %v6409, %v6416
    %vm6418 = vcmp.eq.s32.totalorder %v6413, 2
    %v6419 = vxor.u32 %v6409, 2147483648
    %v6420 = vsel %vm6418, %v6419, %v6410
    %v6421 = vsel %vm6414, %v6417, %v6420
    %v6422 = vsel %vm6411, nan, %v6421
    %v6423 = vand.u32 2147483647, %v5329
    %vm6424 = vcmp.le.f32.partialorder %v6423, 0.7853982
    %vm6425 = vcmp.lt.s32.totalorder %v5329, 0
    %v6426 = vand.u32 %v5329, 2139095040
    %v6427 = vshrl.u32 %v6426, 23
    %v6428 = vsub.s32 %v6427, 127
    %v6429 = vand.u32 2147483647, %v5329
    %v6430 = vand.u32 %v6429, 8388607
    %v6431 = vor.u32 %v6430, 8388608
    %v6432 = vsub.s32 0, %v6431
    %v6433 = vadd.s32 %v6428, 1
    %vm6434 = vcmp.gt.s32.totalorder %v6433, 0
    %v6435 = vsel %vm6434, %v6433, 0
    %v6436 = vshrl.u32 %v6435, 5
    %v6437 = vand.u32 %v6435, 31
    %v6438 = vsub.s32 32, %v6437
    %v6439 = vshrl.u32 683565275, %v6438
    %v6440 = vshll.u32 683565275, %v6437
    %v6441 = vshrl.u32 2475754826, %v6438
    %v6442 = vor.u32 %v6440, %v6441
    %v6443 = vshll.u32 2475754826, %v6437
    %v6444 = vshrl.u32 2131351028, %v6438
    %v6445 = vor.u32 %v6443, %v6444
    %v6446 = vshll.u32 2131351028, %v6437
    %v6447 = vshrl.u32 2102212464, %v6438
    %v6448 = vor.u32 %v6446, %v6447
    %v6449 = vshll.u32 2102212464, %v6437
    %v6450 = vshrl.u32 920167782, %v6438
    %v6451 = vor.u32 %v6449, %v6450
    %v6452 = vshll.u32 920167782, %v6437
    %v6453 = vshrl.u32 1326507024, %v6438
    %v6454 = vor.u32 %v6452, %v6453
    %vm6455 = vcmp.lt.s32.totalorder %v6436, 1
    %vm6456 = vcmp.lt.s32.totalorder %v6436, 2
    %vm6457 = vcmp.lt.s32.totalorder %v6436, 3
    %vm6458 = vcmp.lt.s32.totalorder %v6436, 4
    %v6459 = vsel %vm6455, %v6439, %v6442
    %v6460 = vsel %vm6458, %v6448, 2102212464
    %v6461 = vsel %vm6457, %v6445, %v6460
    %v6462 = vsel %vm6456, %v6459, %v6461
    %v6463 = vsel %vm6455, %v6442, %v6445
    %v6464 = vsel %vm6458, %v6451, 920167782
    %v6465 = vsel %vm6457, %v6448, %v6464
    %v6466 = vsel %vm6456, %v6463, %v6465
    %v6467 = vsel %vm6455, %v6445, %v6448
    %v6468 = vsel %vm6458, %v6454, 1326507024
    %v6469 = vsel %vm6457, %v6451, %v6468
    %v6470 = vsel %vm6456, %v6467, %v6469
    %v6471 = vshll.u32 %v6431, 8
    %v6472 = vmul.u32.u64.compose %v6471, %v6470
    %v6473 = vextract.low.u32 %v6472
    %v6474 = vextract.high.u32 %v6472
    %v6475 = vmul.u32.u64.compose %v6471, %v6466
    %v6476 = vextract.low.u32 %v6475
    %v6477 = vextract.high.u32 %v6475
    %v6478 = vmul.u32 %v6471, %v6462
    %v6479 = vadd.s32 %v6474, %v6476
    %vm6480 = vc.u32 %v6474, %v6476
    %v6481 = vadd.s32 %v6477, 1
    %v6482 = vsel %vm6480, %v6481, %v6477
    %v6483 = vadd.s32 %v6478, %v6482
    %v6484 = vadd.s32 %v6483, 536870912
    %v6485 = vshrl.u32 %v6484, 30
    %v6486 = vshll.u32 %v6485, 30
    %v6487 = vsub.s32 %v6483, %v6486
    %vm6488 = vcmp.lt.s32.totalorder %v6487, 0
    %v6489 = vsub.s32 0, %v6487
    %v6490 = vsel %vm6488, %v6489, %v6487
    %v6491 = vclz %v6490
    %v6492 = vsub.s32 %v6491, 2
    %vm6493 = vcmp.gt.s32.totalorder 0, %v6492
    %v6494 = vsel %vm6493, 0, %v6492
    %v6495 = vsub.s32 32, %v6494
    %v6496 = vshll.u32 %v6487, %v6494
    %v6497 = vshrl.u32 %v6479, %v6495
    %v6498 = vor.u32 %v6496, %v6497
    %v6499 = vsub.s32 4294967266, %v6494
    %v6500 = vadd.s32 %v6499, 127
    %v6501 = vshll.u32 %v6500, 23
    %v6502 = vor.u32 4788187, %v6501
    %v6503 = vand.u32 2147483647, %v6502
    %v6505 = vcvt.s32.f32 %v6498
    %v6506 = vmul.f32 %v6505, %v6503
    %v6507 = vxor.u32 %v6506, 2147483648
    %v6508 = vsel %vm6425, %v6507, %v6506
    %v6509 = vsub.s32 4, %v6485
    %v6510 = vsel %vm6425, %v6509, %v6485
    %v6511 = vsel %vm6424, %v5329, %v6508
    %v6512 = vsel %vm6424, 0, %v6510
    %v6513 = vcosq.f32.pop %v6511
    %v6514 = vsinq.f32.pop %v6511
    %vm6515 = vweird.f32 %v5329
    %v6516 = vadd.s32 %v6512, 3
    %v6517 = vand.u32 %v6516, 3
    %vm6518 = vcmp.lt.s32.totalorder %v6517, 2
    %vm6519 = vcmp.eq.s32.totalorder %v6517, 0
    %v6520 = vxor.u32 %v6514, 2147483648
    %v6521 = vsel %vm6519, %v6513, %v6520
    %vm6522 = vcmp.eq.s32.totalorder %v6517, 2
    %v6523 = vxor.u32 %v6513, 2147483648
    %v6524 = vsel %vm6522, %v6523, %v6514
    %v6525 = vsel %vm6518, %v6521, %v6524
    %v6526 = vsel %vm6515, nan, %v6525
    %v6527 = vand.u32 2147483647, %v5330
    %vm6528 = vcmp.le.f32.partialorder %v6527, 0.7853982
    %vm6529 = vcmp.lt.s32.totalorder %v5330, 0
    %v6530 = vand.u32 %v5330, 2139095040
    %v6531 = vshrl.u32 %v6530, 23
    %v6532 = vsub.s32 %v6531, 127
    %v6533 = vand.u32 2147483647, %v5330
    %v6534 = vand.u32 %v6533, 8388607
    %v6535 = vor.u32 %v6534, 8388608
    %v6536 = vsub.s32 0, %v6535
    %v6537 = vadd.s32 %v6532, 1
    %vm6538 = vcmp.gt.s32.totalorder %v6537, 0
    %v6539 = vsel %vm6538, %v6537, 0
    %v6540 = vshrl.u32 %v6539, 5
    %v6541 = vand.u32 %v6539, 31
    %v6542 = vsub.s32 32, %v6541
    %v6543 = vshrl.u32 683565275, %v6542
    %v6544 = vshll.u32 683565275, %v6541
    %v6545 = vshrl.u32 2475754826, %v6542
    %v6546 = vor.u32 %v6544, %v6545
    %v6547 = vshll.u32 2475754826, %v6541
    %v6548 = vshrl.u32 2131351028, %v6542
    %v6549 = vor.u32 %v6547, %v6548
    %v6550 = vshll.u32 2131351028, %v6541
    %v6551 = vshrl.u32 2102212464, %v6542
    %v6552 = vor.u32 %v6550, %v6551
    %v6553 = vshll.u32 2102212464, %v6541
    %v6554 = vshrl.u32 920167782, %v6542
    %v6555 = vor.u32 %v6553, %v6554
    %v6556 = vshll.u32 920167782, %v6541
    %v6557 = vshrl.u32 1326507024, %v6542
    %v6558 = vor.u32 %v6556, %v6557
    %vm6559 = vcmp.lt.s32.totalorder %v6540, 1
    %vm6560 = vcmp.lt.s32.totalorder %v6540, 2
    %vm6561 = vcmp.lt.s32.totalorder %v6540, 3
    %vm6562 = vcmp.lt.s32.totalorder %v6540, 4
    %v6563 = vsel %vm6559, %v6543, %v6546
    %v6564 = vsel %vm6562, %v6552, 2102212464
    %v6565 = vsel %vm6561, %v6549, %v6564
    %v6566 = vsel %vm6560, %v6563, %v6565
    %v6567 = vsel %vm6559, %v6546, %v6549
    %v6568 = vsel %vm6562, %v6555, 920167782
    %v6569 = vsel %vm6561, %v6552, %v6568
    %v6570 = vsel %vm6560, %v6567, %v6569
    %v6571 = vsel %vm6559, %v6549, %v6552
    %v6572 = vsel %vm6562, %v6558, 1326507024
    %v6573 = vsel %vm6561, %v6555, %v6572
    %v6574 = vsel %vm6560, %v6571, %v6573
    %v6575 = vshll.u32 %v6535, 8
    %v6576 = vmul.u32.u64.compose %v6575, %v6574
    %v6577 = vextract.low.u32 %v6576
    %v6578 = vextract.high.u32 %v6576
    %v6579 = vmul.u32.u64.compose %v6575, %v6570
    %v6580 = vextract.low.u32 %v6579
    %v6581 = vextract.high.u32 %v6579
    %v6582 = vmul.u32 %v6575, %v6566
    %v6583 = vadd.s32 %v6578, %v6580
    %vm6584 = vc.u32 %v6578, %v6580
    %v6585 = vadd.s32 %v6581, 1
    %v6586 = vsel %vm6584, %v6585, %v6581
    %v6587 = vadd.s32 %v6582, %v6586
    %v6588 = vadd.s32 %v6587, 536870912
    %v6589 = vshrl.u32 %v6588, 30
    %v6590 = vshll.u32 %v6589, 30
    %v6591 = vsub.s32 %v6587, %v6590
    %vm6592 = vcmp.lt.s32.totalorder %v6591, 0
    %v6593 = vsub.s32 0, %v6591
    %v6594 = vsel %vm6592, %v6593, %v6591
    %v6595 = vclz %v6594
    %v6596 = vsub.s32 %v6595, 2
    %vm6597 = vcmp.gt.s32.totalorder 0, %v6596
    %v6598 = vsel %vm6597, 0, %v6596
    %v6599 = vsub.s32 32, %v6598
    %v6600 = vshll.u32 %v6591, %v6598
    %v6601 = vshrl.u32 %v6583, %v6599
    %v6602 = vor.u32 %v6600, %v6601
    %v6603 = vsub.s32 4294967266, %v6598
    %v6604 = vadd.s32 %v6603, 127
    %v6605 = vshll.u32 %v6604, 23
    %v6606 = vor.u32 4788187, %v6605
    %v6607 = vand.u32 2147483647, %v6606
    %v6609 = vcvt.s32.f32 %v6602
    %v6610 = vmul.f32 %v6609, %v6607
    %v6611 = vxor.u32 %v6610, 2147483648
    %v6612 = vsel %vm6529, %v6611, %v6610
    %v6613 = vsub.s32 4, %v6589
    %v6614 = vsel %vm6529, %v6613, %v6589
    %v6615 = vsel %vm6528, %v5330, %v6612
    %v6616 = vsel %vm6528, 0, %v6614
    %v6617 = vcosq.f32.pop %v6615
    %v6618 = vsinq.f32.pop %v6615
    %vm6619 = vweird.f32 %v5330
    %v6620 = vadd.s32 %v6616, 3
    %v6621 = vand.u32 %v6620, 3
    %vm6622 = vcmp.lt.s32.totalorder %v6621, 2
    %vm6623 = vcmp.eq.s32.totalorder %v6621, 0
    %v6624 = vxor.u32 %v6618, 2147483648
    %v6625 = vsel %vm6623, %v6617, %v6624
    %vm6626 = vcmp.eq.s32.totalorder %v6621, 2
    %v6627 = vxor.u32 %v6617, 2147483648
    %v6628 = vsel %vm6626, %v6627, %v6618
    %v6629 = vsel %vm6622, %v6625, %v6628
    %v6630 = vsel %vm6619, nan, %v6629
    %v6631 = vand.u32 2147483647, %v5331
    %vm6632 = vcmp.le.f32.partialorder %v6631, 0.7853982
    %vm6633 = vcmp.lt.s32.totalorder %v5331, 0
    %v6634 = vand.u32 %v5331, 2139095040
    %v6635 = vshrl.u32 %v6634, 23
    %v6636 = vsub.s32 %v6635, 127
    %v6637 = vand.u32 2147483647, %v5331
    %v6638 = vand.u32 %v6637, 8388607
    %v6639 = vor.u32 %v6638, 8388608
    %v6640 = vsub.s32 0, %v6639
    %v6641 = vadd.s32 %v6636, 1
    %vm6642 = vcmp.gt.s32.totalorder %v6641, 0
    %v6643 = vsel %vm6642, %v6641, 0
    %v6644 = vshrl.u32 %v6643, 5
    %v6645 = vand.u32 %v6643, 31
    %v6646 = vsub.s32 32, %v6645
    %v6647 = vshrl.u32 683565275, %v6646
    %v6648 = vshll.u32 683565275, %v6645
    %v6649 = vshrl.u32 2475754826, %v6646
    %v6650 = vor.u32 %v6648, %v6649
    %v6651 = vshll.u32 2475754826, %v6645
    %v6652 = vshrl.u32 2131351028, %v6646
    %v6653 = vor.u32 %v6651, %v6652
    %v6654 = vshll.u32 2131351028, %v6645
    %v6655 = vshrl.u32 2102212464, %v6646
    %v6656 = vor.u32 %v6654, %v6655
    %v6657 = vshll.u32 2102212464, %v6645
    %v6658 = vshrl.u32 920167782, %v6646
    %v6659 = vor.u32 %v6657, %v6658
    %v6660 = vshll.u32 920167782, %v6645
    %v6661 = vshrl.u32 1326507024, %v6646
    %v6662 = vor.u32 %v6660, %v6661
    %vm6663 = vcmp.lt.s32.totalorder %v6644, 1
    %vm6664 = vcmp.lt.s32.totalorder %v6644, 2
    %vm6665 = vcmp.lt.s32.totalorder %v6644, 3
    %vm6666 = vcmp.lt.s32.totalorder %v6644, 4
    %v6667 = vsel %vm6663, %v6647, %v6650
    %v6668 = vsel %vm6666, %v6656, 2102212464
    %v6669 = vsel %vm6665, %v6653, %v6668
    %v6670 = vsel %vm6664, %v6667, %v6669
    %v6671 = vsel %vm6663, %v6650, %v6653
    %v6672 = vsel %vm6666, %v6659, 920167782
    %v6673 = vsel %vm6665, %v6656, %v6672
    %v6674 = vsel %vm6664, %v6671, %v6673
    %v6675 = vsel %vm6663, %v6653, %v6656
    %v6676 = vsel %vm6666, %v6662, 1326507024
    %v6677 = vsel %vm6665, %v6659, %v6676
    %v6678 = vsel %vm6664, %v6675, %v6677
    %v6679 = vshll.u32 %v6639, 8
    %v6680 = vmul.u32.u64.compose %v6679, %v6678
    %v6681 = vextract.low.u32 %v6680
    %v6682 = vextract.high.u32 %v6680
    %v6683 = vmul.u32.u64.compose %v6679, %v6674
    %v6684 = vextract.low.u32 %v6683
    %v6685 = vextract.high.u32 %v6683
    %v6686 = vmul.u32 %v6679, %v6670
    %v6687 = vadd.s32 %v6682, %v6684
    %vm6688 = vc.u32 %v6682, %v6684
    %v6689 = vadd.s32 %v6685, 1
    %v6690 = vsel %vm6688, %v6689, %v6685
    %v6691 = vadd.s32 %v6686, %v6690
    %v6692 = vadd.s32 %v6691, 536870912
    %v6693 = vshrl.u32 %v6692, 30
    %v6694 = vshll.u32 %v6693, 30
    %v6695 = vsub.s32 %v6691, %v6694
    %vm6696 = vcmp.lt.s32.totalorder %v6695, 0
    %v6697 = vsub.s32 0, %v6695
    %v6698 = vsel %vm6696, %v6697, %v6695
    %v6699 = vclz %v6698
    %v6700 = vsub.s32 %v6699, 2
    %vm6701 = vcmp.gt.s32.totalorder 0, %v6700
    %v6702 = vsel %vm6701, 0, %v6700
    %v6703 = vsub.s32 32, %v6702
    %v6704 = vshll.u32 %v6695, %v6702
    %v6705 = vshrl.u32 %v6687, %v6703
    %v6706 = vor.u32 %v6704, %v6705
    %v6707 = vsub.s32 4294967266, %v6702
    %v6708 = vadd.s32 %v6707, 127
    %v6709 = vshll.u32 %v6708, 23
    %v6710 = vor.u32 4788187, %v6709
    %v6711 = vand.u32 2147483647, %v6710
    %v6713 = vcvt.s32.f32 %v6706
    %v6714 = vmul.f32 %v6713, %v6711
    %v6715 = vxor.u32 %v6714, 2147483648
    %v6716 = vsel %vm6633, %v6715, %v6714
    %v6717 = vsub.s32 4, %v6693
    %v6718 = vsel %vm6633, %v6717, %v6693
    %v6719 = vsel %vm6632, %v5331, %v6716
    %v6720 = vsel %vm6632, 0, %v6718
    %v6721 = vcosq.f32.pop %v6719
    %v6722 = vsinq.f32.pop %v6719
    %vm6723 = vweird.f32 %v5331
    %v6724 = vadd.s32 %v6720, 3
    %v6725 = vand.u32 %v6724, 3
    %vm6726 = vcmp.lt.s32.totalorder %v6725, 2
    %vm6727 = vcmp.eq.s32.totalorder %v6725, 0
    %v6728 = vxor.u32 %v6722, 2147483648
    %v6729 = vsel %vm6727, %v6721, %v6728
    %vm6730 = vcmp.eq.s32.totalorder %v6725, 2
    %v6731 = vxor.u32 %v6721, 2147483648
    %v6732 = vsel %vm6730, %v6731, %v6722
    %v6733 = vsel %vm6726, %v6729, %v6732
    %v6734 = vsel %vm6723, nan, %v6733
    %v6735 = vand.u32 2147483647, %v5332
    %vm6736 = vcmp.le.f32.partialorder %v6735, 0.7853982
    %vm6737 = vcmp.lt.s32.totalorder %v5332, 0
    %v6738 = vand.u32 %v5332, 2139095040
    %v6739 = vshrl.u32 %v6738, 23
    %v6740 = vsub.s32 %v6739, 127
    %v6741 = vand.u32 2147483647, %v5332
    %v6742 = vand.u32 %v6741, 8388607
    %v6743 = vor.u32 %v6742, 8388608
    %v6744 = vsub.s32 0, %v6743
    %v6745 = vadd.s32 %v6740, 1
    %vm6746 = vcmp.gt.s32.totalorder %v6745, 0
    %v6747 = vsel %vm6746, %v6745, 0
    %v6748 = vshrl.u32 %v6747, 5
    %v6749 = vand.u32 %v6747, 31
    %v6750 = vsub.s32 32, %v6749
    %v6751 = vshrl.u32 683565275, %v6750
    %v6752 = vshll.u32 683565275, %v6749
    %v6753 = vshrl.u32 2475754826, %v6750
    %v6754 = vor.u32 %v6752, %v6753
    %v6755 = vshll.u32 2475754826, %v6749
    %v6756 = vshrl.u32 2131351028, %v6750
    %v6757 = vor.u32 %v6755, %v6756
    %v6758 = vshll.u32 2131351028, %v6749
    %v6759 = vshrl.u32 2102212464, %v6750
    %v6760 = vor.u32 %v6758, %v6759
    %v6761 = vshll.u32 2102212464, %v6749
    %v6762 = vshrl.u32 920167782, %v6750
    %v6763 = vor.u32 %v6761, %v6762
    %v6764 = vshll.u32 920167782, %v6749
    %v6765 = vshrl.u32 1326507024, %v6750
    %v6766 = vor.u32 %v6764, %v6765
    %vm6767 = vcmp.lt.s32.totalorder %v6748, 1
    %vm6768 = vcmp.lt.s32.totalorder %v6748, 2
    %vm6769 = vcmp.lt.s32.totalorder %v6748, 3
    %vm6770 = vcmp.lt.s32.totalorder %v6748, 4
    %v6771 = vsel %vm6767, %v6751, %v6754
    %v6772 = vsel %vm6770, %v6760, 2102212464
    %v6773 = vsel %vm6769, %v6757, %v6772
    %v6774 = vsel %vm6768, %v6771, %v6773
    %v6775 = vsel %vm6767, %v6754, %v6757
    %v6776 = vsel %vm6770, %v6763, 920167782
    %v6777 = vsel %vm6769, %v6760, %v6776
    %v6778 = vsel %vm6768, %v6775, %v6777
    %v6779 = vsel %vm6767, %v6757, %v6760
    %v6780 = vsel %vm6770, %v6766, 1326507024
    %v6781 = vsel %vm6769, %v6763, %v6780
    %v6782 = vsel %vm6768, %v6779, %v6781
    %v6783 = vshll.u32 %v6743, 8
    %v6784 = vmul.u32.u64.compose %v6783, %v6782
    %v6785 = vextract.low.u32 %v6784
    %v6786 = vextract.high.u32 %v6784
    %v6787 = vmul.u32.u64.compose %v6783, %v6778
    %v6788 = vextract.low.u32 %v6787
    %v6789 = vextract.high.u32 %v6787
    %v6790 = vmul.u32 %v6783, %v6774
    %v6791 = vadd.s32 %v6786, %v6788
    %vm6792 = vc.u32 %v6786, %v6788
    %v6793 = vadd.s32 %v6789, 1
    %v6794 = vsel %vm6792, %v6793, %v6789
    %v6795 = vadd.s32 %v6790, %v6794
    %v6796 = vadd.s32 %v6795, 536870912
    %v6797 = vshrl.u32 %v6796, 30
    %v6798 = vshll.u32 %v6797, 30
    %v6799 = vsub.s32 %v6795, %v6798
    %vm6800 = vcmp.lt.s32.totalorder %v6799, 0
    %v6801 = vsub.s32 0, %v6799
    %v6802 = vsel %vm6800, %v6801, %v6799
    %v6803 = vclz %v6802
    %v6804 = vsub.s32 %v6803, 2
    %vm6805 = vcmp.gt.s32.totalorder 0, %v6804
    %v6806 = vsel %vm6805, 0, %v6804
    %v6807 = vsub.s32 32, %v6806
    %v6808 = vshll.u32 %v6799, %v6806
    %v6809 = vshrl.u32 %v6791, %v6807
    %v6810 = vor.u32 %v6808, %v6809
    %v6811 = vsub.s32 4294967266, %v6806
    %v6812 = vadd.s32 %v6811, 127
    %v6813 = vshll.u32 %v6812, 23
    %v6814 = vor.u32 4788187, %v6813
    %v6815 = vand.u32 2147483647, %v6814
    %v6817 = vcvt.s32.f32 %v6810
    %v6818 = vmul.f32 %v6817, %v6815
    %v6819 = vxor.u32 %v6818, 2147483648
    %v6820 = vsel %vm6737, %v6819, %v6818
    %v6821 = vsub.s32 4, %v6797
    %v6822 = vsel %vm6737, %v6821, %v6797
    %v6823 = vsel %vm6736, %v5332, %v6820
    %v6824 = vsel %vm6736, 0, %v6822
    %v6825 = vcosq.f32.pop %v6823
    %v6826 = vsinq.f32.pop %v6823
    %vm6827 = vweird.f32 %v5332
    %v6828 = vadd.s32 %v6824, 3
    %v6829 = vand.u32 %v6828, 3
    %vm6830 = vcmp.lt.s32.totalorder %v6829, 2
    %vm6831 = vcmp.eq.s32.totalorder %v6829, 0
    %v6832 = vxor.u32 %v6826, 2147483648
    %v6833 = vsel %vm6831, %v6825, %v6832
    %vm6834 = vcmp.eq.s32.totalorder %v6829, 2
    %v6835 = vxor.u32 %v6825, 2147483648
    %v6836 = vsel %vm6834, %v6835, %v6826
    %v6837 = vsel %vm6830, %v6833, %v6836
    %v6838 = vsel %vm6827, nan, %v6837
    %v6839 = vand.u32 2147483647, %v5333
    %vm6840 = vcmp.le.f32.partialorder %v6839, 0.7853982
    %vm6841 = vcmp.lt.s32.totalorder %v5333, 0
    %v6842 = vand.u32 %v5333, 2139095040
    %v6843 = vshrl.u32 %v6842, 23
    %v6844 = vsub.s32 %v6843, 127
    %v6845 = vand.u32 2147483647, %v5333
    %v6846 = vand.u32 %v6845, 8388607
    %v6847 = vor.u32 %v6846, 8388608
    %v6848 = vsub.s32 0, %v6847
    %v6849 = vadd.s32 %v6844, 1
    %vm6850 = vcmp.gt.s32.totalorder %v6849, 0
    %v6851 = vsel %vm6850, %v6849, 0
    %v6852 = vshrl.u32 %v6851, 5
    %v6853 = vand.u32 %v6851, 31
    %v6854 = vsub.s32 32, %v6853
    %v6855 = vshrl.u32 683565275, %v6854
    %v6856 = vshll.u32 683565275, %v6853
    %v6857 = vshrl.u32 2475754826, %v6854
    %v6858 = vor.u32 %v6856, %v6857
    %v6859 = vshll.u32 2475754826, %v6853
    %v6860 = vshrl.u32 2131351028, %v6854
    %v6861 = vor.u32 %v6859, %v6860
    %v6862 = vshll.u32 2131351028, %v6853
    %v6863 = vshrl.u32 2102212464, %v6854
    %v6864 = vor.u32 %v6862, %v6863
    %v6865 = vshll.u32 2102212464, %v6853
    %v6866 = vshrl.u32 920167782, %v6854
    %v6867 = vor.u32 %v6865, %v6866
    %v6868 = vshll.u32 920167782, %v6853
    %v6869 = vshrl.u32 1326507024, %v6854
    %v6870 = vor.u32 %v6868, %v6869
    %vm6871 = vcmp.lt.s32.totalorder %v6852, 1
    %vm6872 = vcmp.lt.s32.totalorder %v6852, 2
    %vm6873 = vcmp.lt.s32.totalorder %v6852, 3
    %vm6874 = vcmp.lt.s32.totalorder %v6852, 4
    %v6875 = vsel %vm6871, %v6855, %v6858
    %v6876 = vsel %vm6874, %v6864, 2102212464
    %v6877 = vsel %vm6873, %v6861, %v6876
    %v6878 = vsel %vm6872, %v6875, %v6877
    %v6879 = vsel %vm6871, %v6858, %v6861
    %v6880 = vsel %vm6874, %v6867, 920167782
    %v6881 = vsel %vm6873, %v6864, %v6880
    %v6882 = vsel %vm6872, %v6879, %v6881
    %v6883 = vsel %vm6871, %v6861, %v6864
    %v6884 = vsel %vm6874, %v6870, 1326507024
    %v6885 = vsel %vm6873, %v6867, %v6884
    %v6886 = vsel %vm6872, %v6883, %v6885
    %v6887 = vshll.u32 %v6847, 8
    %v6888 = vmul.u32.u64.compose %v6887, %v6886
    %v6889 = vextract.low.u32 %v6888
    %v6890 = vextract.high.u32 %v6888
    %v6891 = vmul.u32.u64.compose %v6887, %v6882
    %v6892 = vextract.low.u32 %v6891
    %v6893 = vextract.high.u32 %v6891
    %v6894 = vmul.u32 %v6887, %v6878
    %v6895 = vadd.s32 %v6890, %v6892
    %vm6896 = vc.u32 %v6890, %v6892
    %v6897 = vadd.s32 %v6893, 1
    %v6898 = vsel %vm6896, %v6897, %v6893
    %v6899 = vadd.s32 %v6894, %v6898
    %v6900 = vadd.s32 %v6899, 536870912
    %v6901 = vshrl.u32 %v6900, 30
    %v6902 = vshll.u32 %v6901, 30
    %v6903 = vsub.s32 %v6899, %v6902
    %vm6904 = vcmp.lt.s32.totalorder %v6903, 0
    %v6905 = vsub.s32 0, %v6903
    %v6906 = vsel %vm6904, %v6905, %v6903
    %v6907 = vclz %v6906
    %v6908 = vsub.s32 %v6907, 2
    %vm6909 = vcmp.gt.s32.totalorder 0, %v6908
    %v6910 = vsel %vm6909, 0, %v6908
    %v6911 = vsub.s32 32, %v6910
    %v6912 = vshll.u32 %v6903, %v6910
    %v6913 = vshrl.u32 %v6895, %v6911
    %v6914 = vor.u32 %v6912, %v6913
    %v6915 = vsub.s32 4294967266, %v6910
    %v6916 = vadd.s32 %v6915, 127
    %v6917 = vshll.u32 %v6916, 23
    %v6918 = vor.u32 4788187, %v6917
    %v6919 = vand.u32 2147483647, %v6918
    %v6921 = vcvt.s32.f32 %v6914
    %v6922 = vmul.f32 %v6921, %v6919
    %v6923 = vxor.u32 %v6922, 2147483648
    %v6924 = vsel %vm6841, %v6923, %v6922
    %v6925 = vsub.s32 4, %v6901
    %v6926 = vsel %vm6841, %v6925, %v6901
    %v6927 = vsel %vm6840, %v5333, %v6924
    %v6928 = vsel %vm6840, 0, %v6926
    %v6929 = vcosq.f32.pop %v6927
    %v6930 = vsinq.f32.pop %v6927
    %vm6931 = vweird.f32 %v5333
    %v6932 = vadd.s32 %v6928, 3
    %v6933 = vand.u32 %v6932, 3
    %vm6934 = vcmp.lt.s32.totalorder %v6933, 2
    %vm6935 = vcmp.eq.s32.totalorder %v6933, 0
    %v6936 = vxor.u32 %v6930, 2147483648
    %v6937 = vsel %vm6935, %v6929, %v6936
    %vm6938 = vcmp.eq.s32.totalorder %v6933, 2
    %v6939 = vxor.u32 %v6929, 2147483648
    %v6940 = vsel %vm6938, %v6939, %v6930
    %v6941 = vsel %vm6934, %v6937, %v6940
    %v6942 = vsel %vm6931, nan, %v6941
    %v6943 = vand.u32 2147483647, %v5334
    %vm6944 = vcmp.le.f32.partialorder %v6943, 0.7853982
    %vm6945 = vcmp.lt.s32.totalorder %v5334, 0
    %v6946 = vand.u32 %v5334, 2139095040
    %v6947 = vshrl.u32 %v6946, 23
    %v6948 = vsub.s32 %v6947, 127
    %v6949 = vand.u32 2147483647, %v5334
    %v6950 = vand.u32 %v6949, 8388607
    %v6951 = vor.u32 %v6950, 8388608
    %v6952 = vsub.s32 0, %v6951
    %v6953 = vadd.s32 %v6948, 1
    %vm6954 = vcmp.gt.s32.totalorder %v6953, 0
    %v6955 = vsel %vm6954, %v6953, 0
    %v6956 = vshrl.u32 %v6955, 5
    %v6957 = vand.u32 %v6955, 31
    %v6958 = vsub.s32 32, %v6957
    %v6959 = vshrl.u32 683565275, %v6958
    %v6960 = vshll.u32 683565275, %v6957
    %v6961 = vshrl.u32 2475754826, %v6958
    %v6962 = vor.u32 %v6960, %v6961
    %v6963 = vshll.u32 2475754826, %v6957
    %v6964 = vshrl.u32 2131351028, %v6958
    %v6965 = vor.u32 %v6963, %v6964
    %v6966 = vshll.u32 2131351028, %v6957
    %v6967 = vshrl.u32 2102212464, %v6958
    %v6968 = vor.u32 %v6966, %v6967
    %v6969 = vshll.u32 2102212464, %v6957
    %v6970 = vshrl.u32 920167782, %v6958
    %v6971 = vor.u32 %v6969, %v6970
    %v6972 = vshll.u32 920167782, %v6957
    %v6973 = vshrl.u32 1326507024, %v6958
    %v6974 = vor.u32 %v6972, %v6973
    %vm6975 = vcmp.lt.s32.totalorder %v6956, 1
    %vm6976 = vcmp.lt.s32.totalorder %v6956, 2
    %vm6977 = vcmp.lt.s32.totalorder %v6956, 3
    %vm6978 = vcmp.lt.s32.totalorder %v6956, 4
    %v6979 = vsel %vm6975, %v6959, %v6962
    %v6980 = vsel %vm6978, %v6968, 2102212464
    %v6981 = vsel %vm6977, %v6965, %v6980
    %v6982 = vsel %vm6976, %v6979, %v6981
    %v6983 = vsel %vm6975, %v6962, %v6965
    %v6984 = vsel %vm6978, %v6971, 920167782
    %v6985 = vsel %vm6977, %v6968, %v6984
    %v6986 = vsel %vm6976, %v6983, %v6985
    %v6987 = vsel %vm6975, %v6965, %v6968
    %v6988 = vsel %vm6978, %v6974, 1326507024
    %v6989 = vsel %vm6977, %v6971, %v6988
    %v6990 = vsel %vm6976, %v6987, %v6989
    %v6991 = vshll.u32 %v6951, 8
    %v6992 = vmul.u32.u64.compose %v6991, %v6990
    %v6993 = vextract.low.u32 %v6992
    %v6994 = vextract.high.u32 %v6992
    %v6995 = vmul.u32.u64.compose %v6991, %v6986
    %v6996 = vextract.low.u32 %v6995
    %v6997 = vextract.high.u32 %v6995
    %v6998 = vmul.u32 %v6991, %v6982
    %v6999 = vadd.s32 %v6994, %v6996
    %vm7000 = vc.u32 %v6994, %v6996
    %v7001 = vadd.s32 %v6997, 1
    %v7002 = vsel %vm7000, %v7001, %v6997
    %v7003 = vadd.s32 %v6998, %v7002
    %v7004 = vadd.s32 %v7003, 536870912
    %v7005 = vshrl.u32 %v7004, 30
    %v7006 = vshll.u32 %v7005, 30
    %v7007 = vsub.s32 %v7003, %v7006
    %vm7008 = vcmp.lt.s32.totalorder %v7007, 0
    %v7009 = vsub.s32 0, %v7007
    %v7010 = vsel %vm7008, %v7009, %v7007
    %v7011 = vclz %v7010
    %v7012 = vsub.s32 %v7011, 2
    %vm7013 = vcmp.gt.s32.totalorder 0, %v7012
    %v7014 = vsel %vm7013, 0, %v7012
    %v7015 = vsub.s32 32, %v7014
    %v7016 = vshll.u32 %v7007, %v7014
    %v7017 = vshrl.u32 %v6999, %v7015
    %v7018 = vor.u32 %v7016, %v7017
    %v7019 = vsub.s32 4294967266, %v7014
    %v7020 = vadd.s32 %v7019, 127
    %v7021 = vshll.u32 %v7020, 23
    %v7022 = vor.u32 4788187, %v7021
    %v7023 = vand.u32 2147483647, %v7022
    %v7025 = vcvt.s32.f32 %v7018
    %v7026 = vmul.f32 %v7025, %v7023
    %v7027 = vxor.u32 %v7026, 2147483648
    %v7028 = vsel %vm6945, %v7027, %v7026
    %v7029 = vsub.s32 4, %v7005
    %v7030 = vsel %vm6945, %v7029, %v7005
    %v7031 = vsel %vm6944, %v5334, %v7028
    %v7032 = vsel %vm6944, 0, %v7030
    %v7033 = vcosq.f32.pop %v7031
    %v7034 = vsinq.f32.pop %v7031
    %vm7035 = vweird.f32 %v5334
    %v7036 = vadd.s32 %v7032, 3
    %v7037 = vand.u32 %v7036, 3
    %vm7038 = vcmp.lt.s32.totalorder %v7037, 2
    %vm7039 = vcmp.eq.s32.totalorder %v7037, 0
    %v7040 = vxor.u32 %v7034, 2147483648
    %v7041 = vsel %vm7039, %v7033, %v7040
    %vm7042 = vcmp.eq.s32.totalorder %v7037, 2
    %v7043 = vxor.u32 %v7033, 2147483648
    %v7044 = vsel %vm7042, %v7043, %v7034
    %v7045 = vsel %vm7038, %v7041, %v7044
    %v7046 = vsel %vm7035, nan, %v7045
    %v7047 = vand.u32 2147483647, %v5335
    %vm7048 = vcmp.le.f32.partialorder %v7047, 0.7853982
    %vm7049 = vcmp.lt.s32.totalorder %v5335, 0
    %v7050 = vand.u32 %v5335, 2139095040
    %v7051 = vshrl.u32 %v7050, 23
    %v7052 = vsub.s32 %v7051, 127
    %v7053 = vand.u32 2147483647, %v5335
    %v7054 = vand.u32 %v7053, 8388607
    %v7055 = vor.u32 %v7054, 8388608
    %v7056 = vsub.s32 0, %v7055
    %v7057 = vadd.s32 %v7052, 1
    %vm7058 = vcmp.gt.s32.totalorder %v7057, 0
    %v7059 = vsel %vm7058, %v7057, 0
    %v7060 = vshrl.u32 %v7059, 5
    %v7061 = vand.u32 %v7059, 31
    %v7062 = vsub.s32 32, %v7061
    %v7063 = vshrl.u32 683565275, %v7062
    %v7064 = vshll.u32 683565275, %v7061
    %v7065 = vshrl.u32 2475754826, %v7062
    %v7066 = vor.u32 %v7064, %v7065
    %v7067 = vshll.u32 2475754826, %v7061
    %v7068 = vshrl.u32 2131351028, %v7062
    %v7069 = vor.u32 %v7067, %v7068
    %v7070 = vshll.u32 2131351028, %v7061
    %v7071 = vshrl.u32 2102212464, %v7062
    %v7072 = vor.u32 %v7070, %v7071
    %v7073 = vshll.u32 2102212464, %v7061
    %v7074 = vshrl.u32 920167782, %v7062
    %v7075 = vor.u32 %v7073, %v7074
    %v7076 = vshll.u32 920167782, %v7061
    %v7077 = vshrl.u32 1326507024, %v7062
    %v7078 = vor.u32 %v7076, %v7077
    %vm7079 = vcmp.lt.s32.totalorder %v7060, 1
    %vm7080 = vcmp.lt.s32.totalorder %v7060, 2
    %vm7081 = vcmp.lt.s32.totalorder %v7060, 3
    %vm7082 = vcmp.lt.s32.totalorder %v7060, 4
    %v7083 = vsel %vm7079, %v7063, %v7066
    %v7084 = vsel %vm7082, %v7072, 2102212464
    %v7085 = vsel %vm7081, %v7069, %v7084
    %v7086 = vsel %vm7080, %v7083, %v7085
    %v7087 = vsel %vm7079, %v7066, %v7069
    %v7088 = vsel %vm7082, %v7075, 920167782
    %v7089 = vsel %vm7081, %v7072, %v7088
    %v7090 = vsel %vm7080, %v7087, %v7089
    %v7091 = vsel %vm7079, %v7069, %v7072
    %v7092 = vsel %vm7082, %v7078, 1326507024
    %v7093 = vsel %vm7081, %v7075, %v7092
    %v7094 = vsel %vm7080, %v7091, %v7093
    %v7095 = vshll.u32 %v7055, 8
    %v7096 = vmul.u32.u64.compose %v7095, %v7094
    %v7097 = vextract.low.u32 %v7096
    %v7098 = vextract.high.u32 %v7096
    %v7099 = vmul.u32.u64.compose %v7095, %v7090
    %v7100 = vextract.low.u32 %v7099
    %v7101 = vextract.high.u32 %v7099
    %v7102 = vmul.u32 %v7095, %v7086
    %v7103 = vadd.s32 %v7098, %v7100
    %vm7104 = vc.u32 %v7098, %v7100
    %v7105 = vadd.s32 %v7101, 1
    %v7106 = vsel %vm7104, %v7105, %v7101
    %v7107 = vadd.s32 %v7102, %v7106
    %v7108 = vadd.s32 %v7107, 536870912
    %v7109 = vshrl.u32 %v7108, 30
    %v7110 = vshll.u32 %v7109, 30
    %v7111 = vsub.s32 %v7107, %v7110
    %vm7112 = vcmp.lt.s32.totalorder %v7111, 0
    %v7113 = vsub.s32 0, %v7111
    %v7114 = vsel %vm7112, %v7113, %v7111
    %v7115 = vclz %v7114
    %v7116 = vsub.s32 %v7115, 2
    %vm7117 = vcmp.gt.s32.totalorder 0, %v7116
    %v7118 = vsel %vm7117, 0, %v7116
    %v7119 = vsub.s32 32, %v7118
    %v7120 = vshll.u32 %v7111, %v7118
    %v7121 = vshrl.u32 %v7103, %v7119
    %v7122 = vor.u32 %v7120, %v7121
    %v7123 = vsub.s32 4294967266, %v7118
    %v7124 = vadd.s32 %v7123, 127
    %v7125 = vshll.u32 %v7124, 23
    %v7126 = vor.u32 4788187, %v7125
    %v7127 = vand.u32 2147483647, %v7126
    %v7129 = vcvt.s32.f32 %v7122
    %v7130 = vmul.f32 %v7129, %v7127
    %v7131 = vxor.u32 %v7130, 2147483648
    %v7132 = vsel %vm7049, %v7131, %v7130
    %v7133 = vsub.s32 4, %v7109
    %v7134 = vsel %vm7049, %v7133, %v7109
    %v7135 = vsel %vm7048, %v5335, %v7132
    %v7136 = vsel %vm7048, 0, %v7134
    %v7137 = vcosq.f32.pop %v7135
    %v7138 = vsinq.f32.pop %v7135
    %vm7139 = vweird.f32 %v5335
    %v7140 = vadd.s32 %v7136, 3
    %v7141 = vand.u32 %v7140, 3
    %vm7142 = vcmp.lt.s32.totalorder %v7141, 2
    %vm7143 = vcmp.eq.s32.totalorder %v7141, 0
    %v7144 = vxor.u32 %v7138, 2147483648
    %v7145 = vsel %vm7143, %v7137, %v7144
    %vm7146 = vcmp.eq.s32.totalorder %v7141, 2
    %v7147 = vxor.u32 %v7137, 2147483648
    %v7148 = vsel %vm7146, %v7147, %v7138
    %v7149 = vsel %vm7142, %v7145, %v7148
    %v7150 = vsel %vm7139, nan, %v7149
    %v7151 = vand.u32 2147483647, %v5336
    %vm7152 = vcmp.le.f32.partialorder %v7151, 0.7853982
    %vm7153 = vcmp.lt.s32.totalorder %v5336, 0
    %v7154 = vand.u32 %v5336, 2139095040
    %v7155 = vshrl.u32 %v7154, 23
    %v7156 = vsub.s32 %v7155, 127
    %v7157 = vand.u32 2147483647, %v5336
    %v7158 = vand.u32 %v7157, 8388607
    %v7159 = vor.u32 %v7158, 8388608
    %v7160 = vsub.s32 0, %v7159
    %v7161 = vadd.s32 %v7156, 1
    %vm7162 = vcmp.gt.s32.totalorder %v7161, 0
    %v7163 = vsel %vm7162, %v7161, 0
    %v7164 = vshrl.u32 %v7163, 5
    %v7165 = vand.u32 %v7163, 31
    %v7166 = vsub.s32 32, %v7165
    %v7167 = vshrl.u32 683565275, %v7166
    %v7168 = vshll.u32 683565275, %v7165
    %v7169 = vshrl.u32 2475754826, %v7166
    %v7170 = vor.u32 %v7168, %v7169
    %v7171 = vshll.u32 2475754826, %v7165
    %v7172 = vshrl.u32 2131351028, %v7166
    %v7173 = vor.u32 %v7171, %v7172
    %v7174 = vshll.u32 2131351028, %v7165
    %v7175 = vshrl.u32 2102212464, %v7166
    %v7176 = vor.u32 %v7174, %v7175
    %v7177 = vshll.u32 2102212464, %v7165
    %v7178 = vshrl.u32 920167782, %v7166
    %v7179 = vor.u32 %v7177, %v7178
    %v7180 = vshll.u32 920167782, %v7165
    %v7181 = vshrl.u32 1326507024, %v7166
    %v7182 = vor.u32 %v7180, %v7181
    %vm7183 = vcmp.lt.s32.totalorder %v7164, 1
    %vm7184 = vcmp.lt.s32.totalorder %v7164, 2
    %vm7185 = vcmp.lt.s32.totalorder %v7164, 3
    %vm7186 = vcmp.lt.s32.totalorder %v7164, 4
    %v7187 = vsel %vm7183, %v7167, %v7170
    %v7188 = vsel %vm7186, %v7176, 2102212464
    %v7189 = vsel %vm7185, %v7173, %v7188
    %v7190 = vsel %vm7184, %v7187, %v7189
    %v7191 = vsel %vm7183, %v7170, %v7173
    %v7192 = vsel %vm7186, %v7179, 920167782
    %v7193 = vsel %vm7185, %v7176, %v7192
    %v7194 = vsel %vm7184, %v7191, %v7193
    %v7195 = vsel %vm7183, %v7173, %v7176
    %v7196 = vsel %vm7186, %v7182, 1326507024
    %v7197 = vsel %vm7185, %v7179, %v7196
    %v7198 = vsel %vm7184, %v7195, %v7197
    %v7199 = vshll.u32 %v7159, 8
    %v7200 = vmul.u32.u64.compose %v7199, %v7198
    %v7201 = vextract.low.u32 %v7200
    %v7202 = vextract.high.u32 %v7200
    %v7203 = vmul.u32.u64.compose %v7199, %v7194
    %v7204 = vextract.low.u32 %v7203
    %v7205 = vextract.high.u32 %v7203
    %v7206 = vmul.u32 %v7199, %v7190
    %v7207 = vadd.s32 %v7202, %v7204
    %vm7208 = vc.u32 %v7202, %v7204
    %v7209 = vadd.s32 %v7205, 1
    %v7210 = vsel %vm7208, %v7209, %v7205
    %v7211 = vadd.s32 %v7206, %v7210
    %v7212 = vadd.s32 %v7211, 536870912
    %v7213 = vshrl.u32 %v7212, 30
    %v7214 = vshll.u32 %v7213, 30
    %v7215 = vsub.s32 %v7211, %v7214
    %vm7216 = vcmp.lt.s32.totalorder %v7215, 0
    %v7217 = vsub.s32 0, %v7215
    %v7218 = vsel %vm7216, %v7217, %v7215
    %v7219 = vclz %v7218
    %v7220 = vsub.s32 %v7219, 2
    %vm7221 = vcmp.gt.s32.totalorder 0, %v7220
    %v7222 = vsel %vm7221, 0, %v7220
    %v7223 = vsub.s32 32, %v7222
    %v7224 = vshll.u32 %v7215, %v7222
    %v7225 = vshrl.u32 %v7207, %v7223
    %v7226 = vor.u32 %v7224, %v7225
    %v7227 = vsub.s32 4294967266, %v7222
    %v7228 = vadd.s32 %v7227, 127
    %v7229 = vshll.u32 %v7228, 23
    %v7230 = vor.u32 4788187, %v7229
    %v7231 = vand.u32 2147483647, %v7230
    %v7233 = vcvt.s32.f32 %v7226
    %v7234 = vmul.f32 %v7233, %v7231
    %v7235 = vxor.u32 %v7234, 2147483648
    %v7236 = vsel %vm7153, %v7235, %v7234
    %v7237 = vsub.s32 4, %v7213
    %v7238 = vsel %vm7153, %v7237, %v7213
    %v7239 = vsel %vm7152, %v5336, %v7236
    %v7240 = vsel %vm7152, 0, %v7238
    %v7241 = vcosq.f32.pop %v7239
    %v7242 = vsinq.f32.pop %v7239
    %vm7243 = vweird.f32 %v5336
    %v7244 = vadd.s32 %v7240, 3
    %v7245 = vand.u32 %v7244, 3
    %vm7246 = vcmp.lt.s32.totalorder %v7245, 2
    %vm7247 = vcmp.eq.s32.totalorder %v7245, 0
    %v7248 = vxor.u32 %v7242, 2147483648
    %v7249 = vsel %vm7247, %v7241, %v7248
    %vm7250 = vcmp.eq.s32.totalorder %v7245, 2
    %v7251 = vxor.u32 %v7241, 2147483648
    %v7252 = vsel %vm7250, %v7251, %v7242
    %v7253 = vsel %vm7246, %v7249, %v7252
    %v7254 = vsel %vm7243, nan, %v7253
    %v7255 = vand.u32 2147483647, %v5337
    %vm7256 = vcmp.le.f32.partialorder %v7255, 0.7853982
    %vm7257 = vcmp.lt.s32.totalorder %v5337, 0
    %v7258 = vand.u32 %v5337, 2139095040
    %v7259 = vshrl.u32 %v7258, 23
    %v7260 = vsub.s32 %v7259, 127
    %v7261 = vand.u32 2147483647, %v5337
    %v7262 = vand.u32 %v7261, 8388607
    %v7263 = vor.u32 %v7262, 8388608
    %v7264 = vsub.s32 0, %v7263
    %v7265 = vadd.s32 %v7260, 1
    %vm7266 = vcmp.gt.s32.totalorder %v7265, 0
    %v7267 = vsel %vm7266, %v7265, 0
    %v7268 = vshrl.u32 %v7267, 5
    %v7269 = vand.u32 %v7267, 31
    %v7270 = vsub.s32 32, %v7269
    %v7271 = vshrl.u32 683565275, %v7270
    %v7272 = vshll.u32 683565275, %v7269
    %v7273 = vshrl.u32 2475754826, %v7270
    %v7274 = vor.u32 %v7272, %v7273
    %v7275 = vshll.u32 2475754826, %v7269
    %v7276 = vshrl.u32 2131351028, %v7270
    %v7277 = vor.u32 %v7275, %v7276
    %v7278 = vshll.u32 2131351028, %v7269
    %v7279 = vshrl.u32 2102212464, %v7270
    %v7280 = vor.u32 %v7278, %v7279
    %v7281 = vshll.u32 2102212464, %v7269
    %v7282 = vshrl.u32 920167782, %v7270
    %v7283 = vor.u32 %v7281, %v7282
    %v7284 = vshll.u32 920167782, %v7269
    %v7285 = vshrl.u32 1326507024, %v7270
    %v7286 = vor.u32 %v7284, %v7285
    %vm7287 = vcmp.lt.s32.totalorder %v7268, 1
    %vm7288 = vcmp.lt.s32.totalorder %v7268, 2
    %vm7289 = vcmp.lt.s32.totalorder %v7268, 3
    %vm7290 = vcmp.lt.s32.totalorder %v7268, 4
    %v7291 = vsel %vm7287, %v7271, %v7274
    %v7292 = vsel %vm7290, %v7280, 2102212464
    %v7293 = vsel %vm7289, %v7277, %v7292
    %v7294 = vsel %vm7288, %v7291, %v7293
    %v7295 = vsel %vm7287, %v7274, %v7277
    %v7296 = vsel %vm7290, %v7283, 920167782
    %v7297 = vsel %vm7289, %v7280, %v7296
    %v7298 = vsel %vm7288, %v7295, %v7297
    %v7299 = vsel %vm7287, %v7277, %v7280
    %v7300 = vsel %vm7290, %v7286, 1326507024
    %v7301 = vsel %vm7289, %v7283, %v7300
    %v7302 = vsel %vm7288, %v7299, %v7301
    %v7303 = vshll.u32 %v7263, 8
    %v7304 = vmul.u32.u64.compose %v7303, %v7302
    %v7305 = vextract.low.u32 %v7304
    %v7306 = vextract.high.u32 %v7304
    %v7307 = vmul.u32.u64.compose %v7303, %v7298
    %v7308 = vextract.low.u32 %v7307
    %v7309 = vextract.high.u32 %v7307
    %v7310 = vmul.u32 %v7303, %v7294
    %v7311 = vadd.s32 %v7306, %v7308
    %vm7312 = vc.u32 %v7306, %v7308
    %v7313 = vadd.s32 %v7309, 1
    %v7314 = vsel %vm7312, %v7313, %v7309
    %v7315 = vadd.s32 %v7310, %v7314
    %v7316 = vadd.s32 %v7315, 536870912
    %v7317 = vshrl.u32 %v7316, 30
    %v7318 = vshll.u32 %v7317, 30
    %v7319 = vsub.s32 %v7315, %v7318
    %vm7320 = vcmp.lt.s32.totalorder %v7319, 0
    %v7321 = vsub.s32 0, %v7319
    %v7322 = vsel %vm7320, %v7321, %v7319
    %v7323 = vclz %v7322
    %v7324 = vsub.s32 %v7323, 2
    %vm7325 = vcmp.gt.s32.totalorder 0, %v7324
    %v7326 = vsel %vm7325, 0, %v7324
    %v7327 = vsub.s32 32, %v7326
    %v7328 = vshll.u32 %v7319, %v7326
    %v7329 = vshrl.u32 %v7311, %v7327
    %v7330 = vor.u32 %v7328, %v7329
    %v7331 = vsub.s32 4294967266, %v7326
    %v7332 = vadd.s32 %v7331, 127
    %v7333 = vshll.u32 %v7332, 23
    %v7334 = vor.u32 4788187, %v7333
    %v7335 = vand.u32 2147483647, %v7334
    %v7337 = vcvt.s32.f32 %v7330
    %v7338 = vmul.f32 %v7337, %v7335
    %v7339 = vxor.u32 %v7338, 2147483648
    %v7340 = vsel %vm7257, %v7339, %v7338
    %v7341 = vsub.s32 4, %v7317
    %v7342 = vsel %vm7257, %v7341, %v7317
    %v7343 = vsel %vm7256, %v5337, %v7340
    %v7344 = vsel %vm7256, 0, %v7342
    %v7345 = vcosq.f32.pop %v7343
    %v7346 = vsinq.f32.pop %v7343
    %vm7347 = vweird.f32 %v5337
    %v7348 = vadd.s32 %v7344, 3
    %v7349 = vand.u32 %v7348, 3
    %vm7350 = vcmp.lt.s32.totalorder %v7349, 2
    %vm7351 = vcmp.eq.s32.totalorder %v7349, 0
    %v7352 = vxor.u32 %v7346, 2147483648
    %v7353 = vsel %vm7351, %v7345, %v7352
    %vm7354 = vcmp.eq.s32.totalorder %v7349, 2
    %v7355 = vxor.u32 %v7345, 2147483648
    %v7356 = vsel %vm7354, %v7355, %v7346
    %v7357 = vsel %vm7350, %v7353, %v7356
    %v7358 = vsel %vm7347, nan, %v7357
    %v7359 = vand.u32 2147483647, %v5338
    %vm7360 = vcmp.le.f32.partialorder %v7359, 0.7853982
    %vm7361 = vcmp.lt.s32.totalorder %v5338, 0
    %v7362 = vand.u32 %v5338, 2139095040
    %v7363 = vshrl.u32 %v7362, 23
    %v7364 = vsub.s32 %v7363, 127
    %v7365 = vand.u32 2147483647, %v5338
    %v7366 = vand.u32 %v7365, 8388607
    %v7367 = vor.u32 %v7366, 8388608
    %v7368 = vsub.s32 0, %v7367
    %v7369 = vadd.s32 %v7364, 1
    %vm7370 = vcmp.gt.s32.totalorder %v7369, 0
    %v7371 = vsel %vm7370, %v7369, 0
    %v7372 = vshrl.u32 %v7371, 5
    %v7373 = vand.u32 %v7371, 31
    %v7374 = vsub.s32 32, %v7373
    %v7375 = vshrl.u32 683565275, %v7374
    %v7376 = vshll.u32 683565275, %v7373
    %v7377 = vshrl.u32 2475754826, %v7374
    %v7378 = vor.u32 %v7376, %v7377
    %v7379 = vshll.u32 2475754826, %v7373
    %v7380 = vshrl.u32 2131351028, %v7374
    %v7381 = vor.u32 %v7379, %v7380
    %v7382 = vshll.u32 2131351028, %v7373
    %v7383 = vshrl.u32 2102212464, %v7374
    %v7384 = vor.u32 %v7382, %v7383
    %v7385 = vshll.u32 2102212464, %v7373
    %v7386 = vshrl.u32 920167782, %v7374
    %v7387 = vor.u32 %v7385, %v7386
    %v7388 = vshll.u32 920167782, %v7373
    %v7389 = vshrl.u32 1326507024, %v7374
    %v7390 = vor.u32 %v7388, %v7389
    %vm7391 = vcmp.lt.s32.totalorder %v7372, 1
    %vm7392 = vcmp.lt.s32.totalorder %v7372, 2
    %vm7393 = vcmp.lt.s32.totalorder %v7372, 3
    %vm7394 = vcmp.lt.s32.totalorder %v7372, 4
    %v7395 = vsel %vm7391, %v7375, %v7378
    %v7396 = vsel %vm7394, %v7384, 2102212464
    %v7397 = vsel %vm7393, %v7381, %v7396
    %v7398 = vsel %vm7392, %v7395, %v7397
    %v7399 = vsel %vm7391, %v7378, %v7381
    %v7400 = vsel %vm7394, %v7387, 920167782
    %v7401 = vsel %vm7393, %v7384, %v7400
    %v7402 = vsel %vm7392, %v7399, %v7401
    %v7403 = vsel %vm7391, %v7381, %v7384
    %v7404 = vsel %vm7394, %v7390, 1326507024
    %v7405 = vsel %vm7393, %v7387, %v7404
    %v7406 = vsel %vm7392, %v7403, %v7405
    %v7407 = vshll.u32 %v7367, 8
    %v7408 = vmul.u32.u64.compose %v7407, %v7406
    %v7409 = vextract.low.u32 %v7408
    %v7410 = vextract.high.u32 %v7408
    %v7411 = vmul.u32.u64.compose %v7407, %v7402
    %v7412 = vextract.low.u32 %v7411
    %v7413 = vextract.high.u32 %v7411
    %v7414 = vmul.u32 %v7407, %v7398
    %v7415 = vadd.s32 %v7410, %v7412
    %vm7416 = vc.u32 %v7410, %v7412
    %v7417 = vadd.s32 %v7413, 1
    %v7418 = vsel %vm7416, %v7417, %v7413
    %v7419 = vadd.s32 %v7414, %v7418
    %v7420 = vadd.s32 %v7419, 536870912
    %v7421 = vshrl.u32 %v7420, 30
    %v7422 = vshll.u32 %v7421, 30
    %v7423 = vsub.s32 %v7419, %v7422
    %vm7424 = vcmp.lt.s32.totalorder %v7423, 0
    %v7425 = vsub.s32 0, %v7423
    %v7426 = vsel %vm7424, %v7425, %v7423
    %v7427 = vclz %v7426
    %v7428 = vsub.s32 %v7427, 2
    %vm7429 = vcmp.gt.s32.totalorder 0, %v7428
    %v7430 = vsel %vm7429, 0, %v7428
    %v7431 = vsub.s32 32, %v7430
    %v7432 = vshll.u32 %v7423, %v7430
    %v7433 = vshrl.u32 %v7415, %v7431
    %v7434 = vor.u32 %v7432, %v7433
    %v7435 = vsub.s32 4294967266, %v7430
    %v7436 = vadd.s32 %v7435, 127
    %v7437 = vshll.u32 %v7436, 23
    %v7438 = vor.u32 4788187, %v7437
    %v7439 = vand.u32 2147483647, %v7438
    %v7441 = vcvt.s32.f32 %v7434
    %v7442 = vmul.f32 %v7441, %v7439
    %v7443 = vxor.u32 %v7442, 2147483648
    %v7444 = vsel %vm7361, %v7443, %v7442
    %v7445 = vsub.s32 4, %v7421
    %v7446 = vsel %vm7361, %v7445, %v7421
    %v7447 = vsel %vm7360, %v5338, %v7444
    %v7448 = vsel %vm7360, 0, %v7446
    %v7449 = vcosq.f32.pop %v7447
    %v7450 = vsinq.f32.pop %v7447
    %vm7451 = vweird.f32 %v5338
    %v7452 = vadd.s32 %v7448, 3
    %v7453 = vand.u32 %v7452, 3
    %vm7454 = vcmp.lt.s32.totalorder %v7453, 2
    %vm7455 = vcmp.eq.s32.totalorder %v7453, 0
    %v7456 = vxor.u32 %v7450, 2147483648
    %v7457 = vsel %vm7455, %v7449, %v7456
    %vm7458 = vcmp.eq.s32.totalorder %v7453, 2
    %v7459 = vxor.u32 %v7449, 2147483648
    %v7460 = vsel %vm7458, %v7459, %v7450
    %v7461 = vsel %vm7454, %v7457, %v7460
    %v7462 = vsel %vm7451, nan, %v7461
    %v7463 = vand.u32 2147483647, %v5339
    %vm7464 = vcmp.le.f32.partialorder %v7463, 0.7853982
    %vm7465 = vcmp.lt.s32.totalorder %v5339, 0
    %v7466 = vand.u32 %v5339, 2139095040
    %v7467 = vshrl.u32 %v7466, 23
    %v7468 = vsub.s32 %v7467, 127
    %v7469 = vand.u32 2147483647, %v5339
    %v7470 = vand.u32 %v7469, 8388607
    %v7471 = vor.u32 %v7470, 8388608
    %v7472 = vsub.s32 0, %v7471
    %v7473 = vadd.s32 %v7468, 1
    %vm7474 = vcmp.gt.s32.totalorder %v7473, 0
    %v7475 = vsel %vm7474, %v7473, 0
    %v7476 = vshrl.u32 %v7475, 5
    %v7477 = vand.u32 %v7475, 31
    %v7478 = vsub.s32 32, %v7477
    %v7479 = vshrl.u32 683565275, %v7478
    %v7480 = vshll.u32 683565275, %v7477
    %v7481 = vshrl.u32 2475754826, %v7478
    %v7482 = vor.u32 %v7480, %v7481
    %v7483 = vshll.u32 2475754826, %v7477
    %v7484 = vshrl.u32 2131351028, %v7478
    %v7485 = vor.u32 %v7483, %v7484
    %v7486 = vshll.u32 2131351028, %v7477
    %v7487 = vshrl.u32 2102212464, %v7478
    %v7488 = vor.u32 %v7486, %v7487
    %v7489 = vshll.u32 2102212464, %v7477
    %v7490 = vshrl.u32 920167782, %v7478
    %v7491 = vor.u32 %v7489, %v7490
    %v7492 = vshll.u32 920167782, %v7477
    %v7493 = vshrl.u32 1326507024, %v7478
    %v7494 = vor.u32 %v7492, %v7493
    %vm7495 = vcmp.lt.s32.totalorder %v7476, 1
    %vm7496 = vcmp.lt.s32.totalorder %v7476, 2
    %vm7497 = vcmp.lt.s32.totalorder %v7476, 3
    %vm7498 = vcmp.lt.s32.totalorder %v7476, 4
    %v7499 = vsel %vm7495, %v7479, %v7482
    %v7500 = vsel %vm7498, %v7488, 2102212464
    %v7501 = vsel %vm7497, %v7485, %v7500
    %v7502 = vsel %vm7496, %v7499, %v7501
    %v7503 = vsel %vm7495, %v7482, %v7485
    %v7504 = vsel %vm7498, %v7491, 920167782
    %v7505 = vsel %vm7497, %v7488, %v7504
    %v7506 = vsel %vm7496, %v7503, %v7505
    %v7507 = vsel %vm7495, %v7485, %v7488
    %v7508 = vsel %vm7498, %v7494, 1326507024
    %v7509 = vsel %vm7497, %v7491, %v7508
    %v7510 = vsel %vm7496, %v7507, %v7509
    %v7511 = vshll.u32 %v7471, 8
    %v7512 = vmul.u32.u64.compose %v7511, %v7510
    %v7513 = vextract.low.u32 %v7512
    %v7514 = vextract.high.u32 %v7512
    %v7515 = vmul.u32.u64.compose %v7511, %v7506
    %v7516 = vextract.low.u32 %v7515
    %v7517 = vextract.high.u32 %v7515
    %v7518 = vmul.u32 %v7511, %v7502
    %v7519 = vadd.s32 %v7514, %v7516
    %vm7520 = vc.u32 %v7514, %v7516
    %v7521 = vadd.s32 %v7517, 1
    %v7522 = vsel %vm7520, %v7521, %v7517
    %v7523 = vadd.s32 %v7518, %v7522
    %v7524 = vadd.s32 %v7523, 536870912
    %v7525 = vshrl.u32 %v7524, 30
    %v7526 = vshll.u32 %v7525, 30
    %v7527 = vsub.s32 %v7523, %v7526
    %vm7528 = vcmp.lt.s32.totalorder %v7527, 0
    %v7529 = vsub.s32 0, %v7527
    %v7530 = vsel %vm7528, %v7529, %v7527
    %v7531 = vclz %v7530
    %v7532 = vsub.s32 %v7531, 2
    %vm7533 = vcmp.gt.s32.totalorder 0, %v7532
    %v7534 = vsel %vm7533, 0, %v7532
    %v7535 = vsub.s32 32, %v7534
    %v7536 = vshll.u32 %v7527, %v7534
    %v7537 = vshrl.u32 %v7519, %v7535
    %v7538 = vor.u32 %v7536, %v7537
    %v7539 = vsub.s32 4294967266, %v7534
    %v7540 = vadd.s32 %v7539, 127
    %v7541 = vshll.u32 %v7540, 23
    %v7542 = vor.u32 4788187, %v7541
    %v7543 = vand.u32 2147483647, %v7542
    %v7545 = vcvt.s32.f32 %v7538
    %v7546 = vmul.f32 %v7545, %v7543
    %v7547 = vxor.u32 %v7546, 2147483648
    %v7548 = vsel %vm7465, %v7547, %v7546
    %v7549 = vsub.s32 4, %v7525
    %v7550 = vsel %vm7465, %v7549, %v7525
    %v7551 = vsel %vm7464, %v5339, %v7548
    %v7552 = vsel %vm7464, 0, %v7550
    %v7553 = vcosq.f32.pop %v7551
    %v7554 = vsinq.f32.pop %v7551
    %vm7555 = vweird.f32 %v5339
    %v7556 = vadd.s32 %v7552, 3
    %v7557 = vand.u32 %v7556, 3
    %vm7558 = vcmp.lt.s32.totalorder %v7557, 2
    %vm7559 = vcmp.eq.s32.totalorder %v7557, 0
    %v7560 = vxor.u32 %v7554, 2147483648
    %v7561 = vsel %vm7559, %v7553, %v7560
    %vm7562 = vcmp.eq.s32.totalorder %v7557, 2
    %v7563 = vxor.u32 %v7553, 2147483648
    %v7564 = vsel %vm7562, %v7563, %v7554
    %v7565 = vsel %vm7558, %v7561, %v7564
    %v7566 = vsel %vm7555, nan, %v7565
    %v7567 = vand.u32 2147483647, %v5340
    %vm7568 = vcmp.le.f32.partialorder %v7567, 0.7853982
    %vm7569 = vcmp.lt.s32.totalorder %v5340, 0
    %v7570 = vand.u32 %v5340, 2139095040
    %v7571 = vshrl.u32 %v7570, 23
    %v7572 = vsub.s32 %v7571, 127
    %v7573 = vand.u32 2147483647, %v5340
    %v7574 = vand.u32 %v7573, 8388607
    %v7575 = vor.u32 %v7574, 8388608
    %v7576 = vsub.s32 0, %v7575
    %v7577 = vadd.s32 %v7572, 1
    %vm7578 = vcmp.gt.s32.totalorder %v7577, 0
    %v7579 = vsel %vm7578, %v7577, 0
    %v7580 = vshrl.u32 %v7579, 5
    %v7581 = vand.u32 %v7579, 31
    %v7582 = vsub.s32 32, %v7581
    %v7583 = vshrl.u32 683565275, %v7582
    %v7584 = vshll.u32 683565275, %v7581
    %v7585 = vshrl.u32 2475754826, %v7582
    %v7586 = vor.u32 %v7584, %v7585
    %v7587 = vshll.u32 2475754826, %v7581
    %v7588 = vshrl.u32 2131351028, %v7582
    %v7589 = vor.u32 %v7587, %v7588
    %v7590 = vshll.u32 2131351028, %v7581
    %v7591 = vshrl.u32 2102212464, %v7582
    %v7592 = vor.u32 %v7590, %v7591
    %v7593 = vshll.u32 2102212464, %v7581
    %v7594 = vshrl.u32 920167782, %v7582
    %v7595 = vor.u32 %v7593, %v7594
    %v7596 = vshll.u32 920167782, %v7581
    %v7597 = vshrl.u32 1326507024, %v7582
    %v7598 = vor.u32 %v7596, %v7597
    %vm7599 = vcmp.lt.s32.totalorder %v7580, 1
    %vm7600 = vcmp.lt.s32.totalorder %v7580, 2
    %vm7601 = vcmp.lt.s32.totalorder %v7580, 3
    %vm7602 = vcmp.lt.s32.totalorder %v7580, 4
    %v7603 = vsel %vm7599, %v7583, %v7586
    %v7604 = vsel %vm7602, %v7592, 2102212464
    %v7605 = vsel %vm7601, %v7589, %v7604
    %v7606 = vsel %vm7600, %v7603, %v7605
    %v7607 = vsel %vm7599, %v7586, %v7589
    %v7608 = vsel %vm7602, %v7595, 920167782
    %v7609 = vsel %vm7601, %v7592, %v7608
    %v7610 = vsel %vm7600, %v7607, %v7609
    %v7611 = vsel %vm7599, %v7589, %v7592
    %v7612 = vsel %vm7602, %v7598, 1326507024
    %v7613 = vsel %vm7601, %v7595, %v7612
    %v7614 = vsel %vm7600, %v7611, %v7613
    %v7615 = vshll.u32 %v7575, 8
    %v7616 = vmul.u32.u64.compose %v7615, %v7614
    %v7617 = vextract.low.u32 %v7616
    %v7618 = vextract.high.u32 %v7616
    %v7619 = vmul.u32.u64.compose %v7615, %v7610
    %v7620 = vextract.low.u32 %v7619
    %v7621 = vextract.high.u32 %v7619
    %v7622 = vmul.u32 %v7615, %v7606
    %v7623 = vadd.s32 %v7618, %v7620
    %vm7624 = vc.u32 %v7618, %v7620
    %v7625 = vadd.s32 %v7621, 1
    %v7626 = vsel %vm7624, %v7625, %v7621
    %v7627 = vadd.s32 %v7622, %v7626
    %v7628 = vadd.s32 %v7627, 536870912
    %v7629 = vshrl.u32 %v7628, 30
    %v7630 = vshll.u32 %v7629, 30
    %v7631 = vsub.s32 %v7627, %v7630
    %vm7632 = vcmp.lt.s32.totalorder %v7631, 0
    %v7633 = vsub.s32 0, %v7631
    %v7634 = vsel %vm7632, %v7633, %v7631
    %v7635 = vclz %v7634
    %v7636 = vsub.s32 %v7635, 2
    %vm7637 = vcmp.gt.s32.totalorder 0, %v7636
    %v7638 = vsel %vm7637, 0, %v7636
    %v7639 = vsub.s32 32, %v7638
    %v7640 = vshll.u32 %v7631, %v7638
    %v7641 = vshrl.u32 %v7623, %v7639
    %v7642 = vor.u32 %v7640, %v7641
    %v7643 = vsub.s32 4294967266, %v7638
    %v7644 = vadd.s32 %v7643, 127
    %v7645 = vshll.u32 %v7644, 23
    %v7646 = vor.u32 4788187, %v7645
    %v7647 = vand.u32 2147483647, %v7646
    %v7649 = vcvt.s32.f32 %v7642
    %v7650 = vmul.f32 %v7649, %v7647
    %v7651 = vxor.u32 %v7650, 2147483648
    %v7652 = vsel %vm7569, %v7651, %v7650
    %v7653 = vsub.s32 4, %v7629
    %v7654 = vsel %vm7569, %v7653, %v7629
    %v7655 = vsel %vm7568, %v5340, %v7652
    %v7656 = vsel %vm7568, 0, %v7654
    %v7657 = vcosq.f32.pop %v7655
    %v7658 = vsinq.f32.pop %v7655
    %vm7659 = vweird.f32 %v5340
    %v7660 = vadd.s32 %v7656, 3
    %v7661 = vand.u32 %v7660, 3
    %vm7662 = vcmp.lt.s32.totalorder %v7661, 2
    %vm7663 = vcmp.eq.s32.totalorder %v7661, 0
    %v7664 = vxor.u32 %v7658, 2147483648
    %v7665 = vsel %vm7663, %v7657, %v7664
    %vm7666 = vcmp.eq.s32.totalorder %v7661, 2
    %v7667 = vxor.u32 %v7657, 2147483648
    %v7668 = vsel %vm7666, %v7667, %v7658
    %v7669 = vsel %vm7662, %v7665, %v7668
    %v7670 = vsel %vm7659, nan, %v7669
    %v7671 = vand.u32 2147483647, %v5341
    %vm7672 = vcmp.le.f32.partialorder %v7671, 0.7853982
    %vm7673 = vcmp.lt.s32.totalorder %v5341, 0
    %v7674 = vand.u32 %v5341, 2139095040
    %v7675 = vshrl.u32 %v7674, 23
    %v7676 = vsub.s32 %v7675, 127
    %v7677 = vand.u32 2147483647, %v5341
    %v7678 = vand.u32 %v7677, 8388607
    %v7679 = vor.u32 %v7678, 8388608
    %v7680 = vsub.s32 0, %v7679
    %v7681 = vadd.s32 %v7676, 1
    %vm7682 = vcmp.gt.s32.totalorder %v7681, 0
    %v7683 = vsel %vm7682, %v7681, 0
    %v7684 = vshrl.u32 %v7683, 5
    %v7685 = vand.u32 %v7683, 31
    %v7686 = vsub.s32 32, %v7685
    %v7687 = vshrl.u32 683565275, %v7686
    %v7688 = vshll.u32 683565275, %v7685
    %v7689 = vshrl.u32 2475754826, %v7686
    %v7690 = vor.u32 %v7688, %v7689
    %v7691 = vshll.u32 2475754826, %v7685
    %v7692 = vshrl.u32 2131351028, %v7686
    %v7693 = vor.u32 %v7691, %v7692
    %v7694 = vshll.u32 2131351028, %v7685
    %v7695 = vshrl.u32 2102212464, %v7686
    %v7696 = vor.u32 %v7694, %v7695
    %v7697 = vshll.u32 2102212464, %v7685
    %v7698 = vshrl.u32 920167782, %v7686
    %v7699 = vor.u32 %v7697, %v7698
    %v7700 = vshll.u32 920167782, %v7685
    %v7701 = vshrl.u32 1326507024, %v7686
    %v7702 = vor.u32 %v7700, %v7701
    %vm7703 = vcmp.lt.s32.totalorder %v7684, 1
    %vm7704 = vcmp.lt.s32.totalorder %v7684, 2
    %vm7705 = vcmp.lt.s32.totalorder %v7684, 3
    %vm7706 = vcmp.lt.s32.totalorder %v7684, 4
    %v7707 = vsel %vm7703, %v7687, %v7690
    %v7708 = vsel %vm7706, %v7696, 2102212464
    %v7709 = vsel %vm7705, %v7693, %v7708
    %v7710 = vsel %vm7704, %v7707, %v7709
    %v7711 = vsel %vm7703, %v7690, %v7693
    %v7712 = vsel %vm7706, %v7699, 920167782
    %v7713 = vsel %vm7705, %v7696, %v7712
    %v7714 = vsel %vm7704, %v7711, %v7713
    %v7715 = vsel %vm7703, %v7693, %v7696
    %v7716 = vsel %vm7706, %v7702, 1326507024
    %v7717 = vsel %vm7705, %v7699, %v7716
    %v7718 = vsel %vm7704, %v7715, %v7717
    %v7719 = vshll.u32 %v7679, 8
    %v7720 = vmul.u32.u64.compose %v7719, %v7718
    %v7721 = vextract.low.u32 %v7720
    %v7722 = vextract.high.u32 %v7720
    %v7723 = vmul.u32.u64.compose %v7719, %v7714
    %v7724 = vextract.low.u32 %v7723
    %v7725 = vextract.high.u32 %v7723
    %v7726 = vmul.u32 %v7719, %v7710
    %v7727 = vadd.s32 %v7722, %v7724
    %vm7728 = vc.u32 %v7722, %v7724
    %v7729 = vadd.s32 %v7725, 1
    %v7730 = vsel %vm7728, %v7729, %v7725
    %v7731 = vadd.s32 %v7726, %v7730
    %v7732 = vadd.s32 %v7731, 536870912
    %v7733 = vshrl.u32 %v7732, 30
    %v7734 = vshll.u32 %v7733, 30
    %v7735 = vsub.s32 %v7731, %v7734
    %vm7736 = vcmp.lt.s32.totalorder %v7735, 0
    %v7737 = vsub.s32 0, %v7735
    %v7738 = vsel %vm7736, %v7737, %v7735
    %v7739 = vclz %v7738
    %v7740 = vsub.s32 %v7739, 2
    %vm7741 = vcmp.gt.s32.totalorder 0, %v7740
    %v7742 = vsel %vm7741, 0, %v7740
    %v7743 = vsub.s32 32, %v7742
    %v7744 = vshll.u32 %v7735, %v7742
    %v7745 = vshrl.u32 %v7727, %v7743
    %v7746 = vor.u32 %v7744, %v7745
    %v7747 = vsub.s32 4294967266, %v7742
    %v7748 = vadd.s32 %v7747, 127
    %v7749 = vshll.u32 %v7748, 23
    %v7750 = vor.u32 4788187, %v7749
    %v7751 = vand.u32 2147483647, %v7750
    %v7753 = vcvt.s32.f32 %v7746
    %v7754 = vmul.f32 %v7753, %v7751
    %v7755 = vxor.u32 %v7754, 2147483648
    %v7756 = vsel %vm7673, %v7755, %v7754
    %v7757 = vsub.s32 4, %v7733
    %v7758 = vsel %vm7673, %v7757, %v7733
    %v7759 = vsel %vm7672, %v5341, %v7756
    %v7760 = vsel %vm7672, 0, %v7758
    %v7761 = vcosq.f32.pop %v7759
    %v7762 = vsinq.f32.pop %v7759
    %vm7763 = vweird.f32 %v5341
    %v7764 = vadd.s32 %v7760, 3
    %v7765 = vand.u32 %v7764, 3
    %vm7766 = vcmp.lt.s32.totalorder %v7765, 2
    %vm7767 = vcmp.eq.s32.totalorder %v7765, 0
    %v7768 = vxor.u32 %v7762, 2147483648
    %v7769 = vsel %vm7767, %v7761, %v7768
    %vm7770 = vcmp.eq.s32.totalorder %v7765, 2
    %v7771 = vxor.u32 %v7761, 2147483648
    %v7772 = vsel %vm7770, %v7771, %v7762
    %v7773 = vsel %vm7766, %v7769, %v7772
    %v7774 = vsel %vm7763, nan, %v7773
    %v7775 = vand.u32 2147483647, %v5342
    %vm7776 = vcmp.le.f32.partialorder %v7775, 0.7853982
    %vm7777 = vcmp.lt.s32.totalorder %v5342, 0
    %v7778 = vand.u32 %v5342, 2139095040
    %v7779 = vshrl.u32 %v7778, 23
    %v7780 = vsub.s32 %v7779, 127
    %v7781 = vand.u32 2147483647, %v5342
    %v7782 = vand.u32 %v7781, 8388607
    %v7783 = vor.u32 %v7782, 8388608
    %v7784 = vsub.s32 0, %v7783
    %v7785 = vadd.s32 %v7780, 1
    %vm7786 = vcmp.gt.s32.totalorder %v7785, 0
    %v7787 = vsel %vm7786, %v7785, 0
    %v7788 = vshrl.u32 %v7787, 5
    %v7789 = vand.u32 %v7787, 31
    %v7790 = vsub.s32 32, %v7789
    %v7791 = vshrl.u32 683565275, %v7790
    %v7792 = vshll.u32 683565275, %v7789
    %v7793 = vshrl.u32 2475754826, %v7790
    %v7794 = vor.u32 %v7792, %v7793
    %v7795 = vshll.u32 2475754826, %v7789
    %v7796 = vshrl.u32 2131351028, %v7790
    %v7797 = vor.u32 %v7795, %v7796
    %v7798 = vshll.u32 2131351028, %v7789
    %v7799 = vshrl.u32 2102212464, %v7790
    %v7800 = vor.u32 %v7798, %v7799
    %v7801 = vshll.u32 2102212464, %v7789
    %v7802 = vshrl.u32 920167782, %v7790
    %v7803 = vor.u32 %v7801, %v7802
    %v7804 = vshll.u32 920167782, %v7789
    %v7805 = vshrl.u32 1326507024, %v7790
    %v7806 = vor.u32 %v7804, %v7805
    %vm7807 = vcmp.lt.s32.totalorder %v7788, 1
    %vm7808 = vcmp.lt.s32.totalorder %v7788, 2
    %vm7809 = vcmp.lt.s32.totalorder %v7788, 3
    %vm7810 = vcmp.lt.s32.totalorder %v7788, 4
    %v7811 = vsel %vm7807, %v7791, %v7794
    %v7812 = vsel %vm7810, %v7800, 2102212464
    %v7813 = vsel %vm7809, %v7797, %v7812
    %v7814 = vsel %vm7808, %v7811, %v7813
    %v7815 = vsel %vm7807, %v7794, %v7797
    %v7816 = vsel %vm7810, %v7803, 920167782
    %v7817 = vsel %vm7809, %v7800, %v7816
    %v7818 = vsel %vm7808, %v7815, %v7817
    %v7819 = vsel %vm7807, %v7797, %v7800
    %v7820 = vsel %vm7810, %v7806, 1326507024
    %v7821 = vsel %vm7809, %v7803, %v7820
    %v7822 = vsel %vm7808, %v7819, %v7821
    %v7823 = vshll.u32 %v7783, 8
    %v7824 = vmul.u32.u64.compose %v7823, %v7822
    %v7825 = vextract.low.u32 %v7824
    %v7826 = vextract.high.u32 %v7824
    %v7827 = vmul.u32.u64.compose %v7823, %v7818
    %v7828 = vextract.low.u32 %v7827
    %v7829 = vextract.high.u32 %v7827
    %v7830 = vmul.u32 %v7823, %v7814
    %v7831 = vadd.s32 %v7826, %v7828
    %vm7832 = vc.u32 %v7826, %v7828
    %v7833 = vadd.s32 %v7829, 1
    %v7834 = vsel %vm7832, %v7833, %v7829
    %v7835 = vadd.s32 %v7830, %v7834
    %v7836 = vadd.s32 %v7835, 536870912
    %v7837 = vshrl.u32 %v7836, 30
    %v7838 = vshll.u32 %v7837, 30
    %v7839 = vsub.s32 %v7835, %v7838
    %vm7840 = vcmp.lt.s32.totalorder %v7839, 0
    %v7841 = vsub.s32 0, %v7839
    %v7842 = vsel %vm7840, %v7841, %v7839
    %v7843 = vclz %v7842
    %v7844 = vsub.s32 %v7843, 2
    %vm7845 = vcmp.gt.s32.totalorder 0, %v7844
    %v7846 = vsel %vm7845, 0, %v7844
    %v7847 = vsub.s32 32, %v7846
    %v7848 = vshll.u32 %v7839, %v7846
    %v7849 = vshrl.u32 %v7831, %v7847
    %v7850 = vor.u32 %v7848, %v7849
    %v7851 = vsub.s32 4294967266, %v7846
    %v7852 = vadd.s32 %v7851, 127
    %v7853 = vshll.u32 %v7852, 23
    %v7854 = vor.u32 4788187, %v7853
    %v7855 = vand.u32 2147483647, %v7854
    %v7857 = vcvt.s32.f32 %v7850
    %v7858 = vmul.f32 %v7857, %v7855
    %v7859 = vxor.u32 %v7858, 2147483648
    %v7860 = vsel %vm7777, %v7859, %v7858
    %v7861 = vsub.s32 4, %v7837
    %v7862 = vsel %vm7777, %v7861, %v7837
    %v7863 = vsel %vm7776, %v5342, %v7860
    %v7864 = vsel %vm7776, 0, %v7862
    %v7865 = vcosq.f32.pop %v7863
    %v7866 = vsinq.f32.pop %v7863
    %vm7867 = vweird.f32 %v5342
    %v7868 = vadd.s32 %v7864, 3
    %v7869 = vand.u32 %v7868, 3
    %vm7870 = vcmp.lt.s32.totalorder %v7869, 2
    %vm7871 = vcmp.eq.s32.totalorder %v7869, 0
    %v7872 = vxor.u32 %v7866, 2147483648
    %v7873 = vsel %vm7871, %v7865, %v7872
    %vm7874 = vcmp.eq.s32.totalorder %v7869, 2
    %v7875 = vxor.u32 %v7865, 2147483648
    %v7876 = vsel %vm7874, %v7875, %v7866
    %v7877 = vsel %vm7870, %v7873, %v7876
    %v7878 = vsel %vm7867, nan, %v7877
    %v7879 = vand.u32 2147483647, %v5343
    %vm7880 = vcmp.le.f32.partialorder %v7879, 0.7853982
    %vm7881 = vcmp.lt.s32.totalorder %v5343, 0
    %v7882 = vand.u32 %v5343, 2139095040
    %v7883 = vshrl.u32 %v7882, 23
    %v7884 = vsub.s32 %v7883, 127
    %v7885 = vand.u32 2147483647, %v5343
    %v7886 = vand.u32 %v7885, 8388607
    %v7887 = vor.u32 %v7886, 8388608
    %v7888 = vsub.s32 0, %v7887
    %v7889 = vadd.s32 %v7884, 1
    %vm7890 = vcmp.gt.s32.totalorder %v7889, 0
    %v7891 = vsel %vm7890, %v7889, 0
    %v7892 = vshrl.u32 %v7891, 5
    %v7893 = vand.u32 %v7891, 31
    %v7894 = vsub.s32 32, %v7893
    %v7895 = vshrl.u32 683565275, %v7894
    %v7896 = vshll.u32 683565275, %v7893
    %v7897 = vshrl.u32 2475754826, %v7894
    %v7898 = vor.u32 %v7896, %v7897
    %v7899 = vshll.u32 2475754826, %v7893
    %v7900 = vshrl.u32 2131351028, %v7894
    %v7901 = vor.u32 %v7899, %v7900
    %v7902 = vshll.u32 2131351028, %v7893
    %v7903 = vshrl.u32 2102212464, %v7894
    %v7904 = vor.u32 %v7902, %v7903
    %v7905 = vshll.u32 2102212464, %v7893
    %v7906 = vshrl.u32 920167782, %v7894
    %v7907 = vor.u32 %v7905, %v7906
    %v7908 = vshll.u32 920167782, %v7893
    %v7909 = vshrl.u32 1326507024, %v7894
    %v7910 = vor.u32 %v7908, %v7909
    %vm7911 = vcmp.lt.s32.totalorder %v7892, 1
    %vm7912 = vcmp.lt.s32.totalorder %v7892, 2
    %vm7913 = vcmp.lt.s32.totalorder %v7892, 3
    %vm7914 = vcmp.lt.s32.totalorder %v7892, 4
    %v7915 = vsel %vm7911, %v7895, %v7898
    %v7916 = vsel %vm7914, %v7904, 2102212464
    %v7917 = vsel %vm7913, %v7901, %v7916
    %v7918 = vsel %vm7912, %v7915, %v7917
    %v7919 = vsel %vm7911, %v7898, %v7901
    %v7920 = vsel %vm7914, %v7907, 920167782
    %v7921 = vsel %vm7913, %v7904, %v7920
    %v7922 = vsel %vm7912, %v7919, %v7921
    %v7923 = vsel %vm7911, %v7901, %v7904
    %v7924 = vsel %vm7914, %v7910, 1326507024
    %v7925 = vsel %vm7913, %v7907, %v7924
    %v7926 = vsel %vm7912, %v7923, %v7925
    %v7927 = vshll.u32 %v7887, 8
    %v7928 = vmul.u32.u64.compose %v7927, %v7926
    %v7929 = vextract.low.u32 %v7928
    %v7930 = vextract.high.u32 %v7928
    %v7931 = vmul.u32.u64.compose %v7927, %v7922
    %v7932 = vextract.low.u32 %v7931
    %v7933 = vextract.high.u32 %v7931
    %v7934 = vmul.u32 %v7927, %v7918
    %v7935 = vadd.s32 %v7930, %v7932
    %vm7936 = vc.u32 %v7930, %v7932
    %v7937 = vadd.s32 %v7933, 1
    %v7938 = vsel %vm7936, %v7937, %v7933
    %v7939 = vadd.s32 %v7934, %v7938
    %v7940 = vadd.s32 %v7939, 536870912
    %v7941 = vshrl.u32 %v7940, 30
    %v7942 = vshll.u32 %v7941, 30
    %v7943 = vsub.s32 %v7939, %v7942
    %vm7944 = vcmp.lt.s32.totalorder %v7943, 0
    %v7945 = vsub.s32 0, %v7943
    %v7946 = vsel %vm7944, %v7945, %v7943
    %v7947 = vclz %v7946
    %v7948 = vsub.s32 %v7947, 2
    %vm7949 = vcmp.gt.s32.totalorder 0, %v7948
    %v7950 = vsel %vm7949, 0, %v7948
    %v7951 = vsub.s32 32, %v7950
    %v7952 = vshll.u32 %v7943, %v7950
    %v7953 = vshrl.u32 %v7935, %v7951
    %v7954 = vor.u32 %v7952, %v7953
    %v7955 = vsub.s32 4294967266, %v7950
    %v7956 = vadd.s32 %v7955, 127
    %v7957 = vshll.u32 %v7956, 23
    %v7958 = vor.u32 4788187, %v7957
    %v7959 = vand.u32 2147483647, %v7958
    %v7961 = vcvt.s32.f32 %v7954
    %v7962 = vmul.f32 %v7961, %v7959
    %v7963 = vxor.u32 %v7962, 2147483648
    %v7964 = vsel %vm7881, %v7963, %v7962
    %v7965 = vsub.s32 4, %v7941
    %v7966 = vsel %vm7881, %v7965, %v7941
    %v7967 = vsel %vm7880, %v5343, %v7964
    %v7968 = vsel %vm7880, 0, %v7966
    %v7969 = vcosq.f32.pop %v7967
    %v7970 = vsinq.f32.pop %v7967
    %vm7971 = vweird.f32 %v5343
    %v7972 = vadd.s32 %v7968, 3
    %v7973 = vand.u32 %v7972, 3
    %vm7974 = vcmp.lt.s32.totalorder %v7973, 2
    %vm7975 = vcmp.eq.s32.totalorder %v7973, 0
    %v7976 = vxor.u32 %v7970, 2147483648
    %v7977 = vsel %vm7975, %v7969, %v7976
    %vm7978 = vcmp.eq.s32.totalorder %v7973, 2
    %v7979 = vxor.u32 %v7969, 2147483648
    %v7980 = vsel %vm7978, %v7979, %v7970
    %v7981 = vsel %vm7974, %v7977, %v7980
    %v7982 = vsel %vm7971, nan, %v7981
    %v7983 = vand.u32 2147483647, %v5344
    %vm7984 = vcmp.le.f32.partialorder %v7983, 0.7853982
    %vm7985 = vcmp.lt.s32.totalorder %v5344, 0
    %v7986 = vand.u32 %v5344, 2139095040
    %v7987 = vshrl.u32 %v7986, 23
    %v7988 = vsub.s32 %v7987, 127
    %v7989 = vand.u32 2147483647, %v5344
    %v7990 = vand.u32 %v7989, 8388607
    %v7991 = vor.u32 %v7990, 8388608
    %v7992 = vsub.s32 0, %v7991
    %v7993 = vadd.s32 %v7988, 1
    %vm7994 = vcmp.gt.s32.totalorder %v7993, 0
    %v7995 = vsel %vm7994, %v7993, 0
    %v7996 = vshrl.u32 %v7995, 5
    %v7997 = vand.u32 %v7995, 31
    %v7998 = vsub.s32 32, %v7997
    %v7999 = vshrl.u32 683565275, %v7998
    %v8000 = vshll.u32 683565275, %v7997
    %v8001 = vshrl.u32 2475754826, %v7998
    %v8002 = vor.u32 %v8000, %v8001
    %v8003 = vshll.u32 2475754826, %v7997
    %v8004 = vshrl.u32 2131351028, %v7998
    %v8005 = vor.u32 %v8003, %v8004
    %v8006 = vshll.u32 2131351028, %v7997
    %v8007 = vshrl.u32 2102212464, %v7998
    %v8008 = vor.u32 %v8006, %v8007
    %v8009 = vshll.u32 2102212464, %v7997
    %v8010 = vshrl.u32 920167782, %v7998
    %v8011 = vor.u32 %v8009, %v8010
    %v8012 = vshll.u32 920167782, %v7997
    %v8013 = vshrl.u32 1326507024, %v7998
    %v8014 = vor.u32 %v8012, %v8013
    %vm8015 = vcmp.lt.s32.totalorder %v7996, 1
    %vm8016 = vcmp.lt.s32.totalorder %v7996, 2
    %vm8017 = vcmp.lt.s32.totalorder %v7996, 3
    %vm8018 = vcmp.lt.s32.totalorder %v7996, 4
    %v8019 = vsel %vm8015, %v7999, %v8002
    %v8020 = vsel %vm8018, %v8008, 2102212464
    %v8021 = vsel %vm8017, %v8005, %v8020
    %v8022 = vsel %vm8016, %v8019, %v8021
    %v8023 = vsel %vm8015, %v8002, %v8005
    %v8024 = vsel %vm8018, %v8011, 920167782
    %v8025 = vsel %vm8017, %v8008, %v8024
    %v8026 = vsel %vm8016, %v8023, %v8025
    %v8027 = vsel %vm8015, %v8005, %v8008
    %v8028 = vsel %vm8018, %v8014, 1326507024
    %v8029 = vsel %vm8017, %v8011, %v8028
    %v8030 = vsel %vm8016, %v8027, %v8029
    %v8031 = vshll.u32 %v7991, 8
    %v8032 = vmul.u32.u64.compose %v8031, %v8030
    %v8033 = vextract.low.u32 %v8032
    %v8034 = vextract.high.u32 %v8032
    %v8035 = vmul.u32.u64.compose %v8031, %v8026
    %v8036 = vextract.low.u32 %v8035
    %v8037 = vextract.high.u32 %v8035
    %v8038 = vmul.u32 %v8031, %v8022
    %v8039 = vadd.s32 %v8034, %v8036
    %vm8040 = vc.u32 %v8034, %v8036
    %v8041 = vadd.s32 %v8037, 1
    %v8042 = vsel %vm8040, %v8041, %v8037
    %v8043 = vadd.s32 %v8038, %v8042
    %v8044 = vadd.s32 %v8043, 536870912
    %v8045 = vshrl.u32 %v8044, 30
    %v8046 = vshll.u32 %v8045, 30
    %v8047 = vsub.s32 %v8043, %v8046
    %vm8048 = vcmp.lt.s32.totalorder %v8047, 0
    %v8049 = vsub.s32 0, %v8047
    %v8050 = vsel %vm8048, %v8049, %v8047
    %v8051 = vclz %v8050
    %v8052 = vsub.s32 %v8051, 2
    %vm8053 = vcmp.gt.s32.totalorder 0, %v8052
    %v8054 = vsel %vm8053, 0, %v8052
    %v8055 = vsub.s32 32, %v8054
    %v8056 = vshll.u32 %v8047, %v8054
    %v8057 = vshrl.u32 %v8039, %v8055
    %v8058 = vor.u32 %v8056, %v8057
    %v8059 = vsub.s32 4294967266, %v8054
    %v8060 = vadd.s32 %v8059, 127
    %v8061 = vshll.u32 %v8060, 23
    %v8062 = vor.u32 4788187, %v8061
    %v8063 = vand.u32 2147483647, %v8062
    %v8065 = vcvt.s32.f32 %v8058
    %v8066 = vmul.f32 %v8065, %v8063
    %v8067 = vxor.u32 %v8066, 2147483648
    %v8068 = vsel %vm7985, %v8067, %v8066
    %v8069 = vsub.s32 4, %v8045
    %v8070 = vsel %vm7985, %v8069, %v8045
    %v8071 = vsel %vm7984, %v5344, %v8068
    %v8072 = vsel %vm7984, 0, %v8070
    %v8073 = vcosq.f32.pop %v8071
    %v8074 = vsinq.f32.pop %v8071
    %vm8075 = vweird.f32 %v5344
    %v8076 = vadd.s32 %v8072, 3
    %v8077 = vand.u32 %v8076, 3
    %vm8078 = vcmp.lt.s32.totalorder %v8077, 2
    %vm8079 = vcmp.eq.s32.totalorder %v8077, 0
    %v8080 = vxor.u32 %v8074, 2147483648
    %v8081 = vsel %vm8079, %v8073, %v8080
    %vm8082 = vcmp.eq.s32.totalorder %v8077, 2
    %v8083 = vxor.u32 %v8073, 2147483648
    %v8084 = vsel %vm8082, %v8083, %v8074
    %v8085 = vsel %vm8078, %v8081, %v8084
    %v8086 = vsel %vm8075, nan, %v8085
    %v8087 = vand.u32 2147483647, %v5345
    %vm8088 = vcmp.le.f32.partialorder %v8087, 0.7853982
    %vm8089 = vcmp.lt.s32.totalorder %v5345, 0
    %v8090 = vand.u32 %v5345, 2139095040
    %v8091 = vshrl.u32 %v8090, 23
    %v8092 = vsub.s32 %v8091, 127
    %v8093 = vand.u32 2147483647, %v5345
    %v8094 = vand.u32 %v8093, 8388607
    %v8095 = vor.u32 %v8094, 8388608
    %v8096 = vsub.s32 0, %v8095
    %v8097 = vadd.s32 %v8092, 1
    %vm8098 = vcmp.gt.s32.totalorder %v8097, 0
    %v8099 = vsel %vm8098, %v8097, 0
    %v8100 = vshrl.u32 %v8099, 5
    %v8101 = vand.u32 %v8099, 31
    %v8102 = vsub.s32 32, %v8101
    %v8103 = vshrl.u32 683565275, %v8102
    %v8104 = vshll.u32 683565275, %v8101
    %v8105 = vshrl.u32 2475754826, %v8102
    %v8106 = vor.u32 %v8104, %v8105
    %v8107 = vshll.u32 2475754826, %v8101
    %v8108 = vshrl.u32 2131351028, %v8102
    %v8109 = vor.u32 %v8107, %v8108
    %v8110 = vshll.u32 2131351028, %v8101
    %v8111 = vshrl.u32 2102212464, %v8102
    %v8112 = vor.u32 %v8110, %v8111
    %v8113 = vshll.u32 2102212464, %v8101
    %v8114 = vshrl.u32 920167782, %v8102
    %v8115 = vor.u32 %v8113, %v8114
    %v8116 = vshll.u32 920167782, %v8101
    %v8117 = vshrl.u32 1326507024, %v8102
    %v8118 = vor.u32 %v8116, %v8117
    %vm8119 = vcmp.lt.s32.totalorder %v8100, 1
    %vm8120 = vcmp.lt.s32.totalorder %v8100, 2
    %vm8121 = vcmp.lt.s32.totalorder %v8100, 3
    %vm8122 = vcmp.lt.s32.totalorder %v8100, 4
    %v8123 = vsel %vm8119, %v8103, %v8106
    %v8124 = vsel %vm8122, %v8112, 2102212464
    %v8125 = vsel %vm8121, %v8109, %v8124
    %v8126 = vsel %vm8120, %v8123, %v8125
    %v8127 = vsel %vm8119, %v8106, %v8109
    %v8128 = vsel %vm8122, %v8115, 920167782
    %v8129 = vsel %vm8121, %v8112, %v8128
    %v8130 = vsel %vm8120, %v8127, %v8129
    %v8131 = vsel %vm8119, %v8109, %v8112
    %v8132 = vsel %vm8122, %v8118, 1326507024
    %v8133 = vsel %vm8121, %v8115, %v8132
    %v8134 = vsel %vm8120, %v8131, %v8133
    %v8135 = vshll.u32 %v8095, 8
    %v8136 = vmul.u32.u64.compose %v8135, %v8134
    %v8137 = vextract.low.u32 %v8136
    %v8138 = vextract.high.u32 %v8136
    %v8139 = vmul.u32.u64.compose %v8135, %v8130
    %v8140 = vextract.low.u32 %v8139
    %v8141 = vextract.high.u32 %v8139
    %v8142 = vmul.u32 %v8135, %v8126
    %v8143 = vadd.s32 %v8138, %v8140
    %vm8144 = vc.u32 %v8138, %v8140
    %v8145 = vadd.s32 %v8141, 1
    %v8146 = vsel %vm8144, %v8145, %v8141
    %v8147 = vadd.s32 %v8142, %v8146
    %v8148 = vadd.s32 %v8147, 536870912
    %v8149 = vshrl.u32 %v8148, 30
    %v8150 = vshll.u32 %v8149, 30
    %v8151 = vsub.s32 %v8147, %v8150
    %vm8152 = vcmp.lt.s32.totalorder %v8151, 0
    %v8153 = vsub.s32 0, %v8151
    %v8154 = vsel %vm8152, %v8153, %v8151
    %v8155 = vclz %v8154
    %v8156 = vsub.s32 %v8155, 2
    %vm8157 = vcmp.gt.s32.totalorder 0, %v8156
    %v8158 = vsel %vm8157, 0, %v8156
    %v8159 = vsub.s32 32, %v8158
    %v8160 = vshll.u32 %v8151, %v8158
    %v8161 = vshrl.u32 %v8143, %v8159
    %v8162 = vor.u32 %v8160, %v8161
    %v8163 = vsub.s32 4294967266, %v8158
    %v8164 = vadd.s32 %v8163, 127
    %v8165 = vshll.u32 %v8164, 23
    %v8166 = vor.u32 4788187, %v8165
    %v8167 = vand.u32 2147483647, %v8166
    %v8169 = vcvt.s32.f32 %v8162
    %v8170 = vmul.f32 %v8169, %v8167
    %v8171 = vxor.u32 %v8170, 2147483648
    %v8172 = vsel %vm8089, %v8171, %v8170
    %v8173 = vsub.s32 4, %v8149
    %v8174 = vsel %vm8089, %v8173, %v8149
    %v8175 = vsel %vm8088, %v5345, %v8172
    %v8176 = vsel %vm8088, 0, %v8174
    %v8177 = vcosq.f32.pop %v8175
    %v8178 = vsinq.f32.pop %v8175
    %vm8179 = vweird.f32 %v5345
    %v8180 = vadd.s32 %v8176, 3
    %v8181 = vand.u32 %v8180, 3
    %vm8182 = vcmp.lt.s32.totalorder %v8181, 2
    %vm8183 = vcmp.eq.s32.totalorder %v8181, 0
    %v8184 = vxor.u32 %v8178, 2147483648
    %v8185 = vsel %vm8183, %v8177, %v8184
    %vm8186 = vcmp.eq.s32.totalorder %v8181, 2
    %v8187 = vxor.u32 %v8177, 2147483648
    %v8188 = vsel %vm8186, %v8187, %v8178
    %v8189 = vsel %vm8182, %v8185, %v8188
    %v8190 = vsel %vm8179, nan, %v8189
    %v8191 = vand.u32 2147483647, %v5346
    %vm8192 = vcmp.le.f32.partialorder %v8191, 0.7853982
    %vm8193 = vcmp.lt.s32.totalorder %v5346, 0
    %v8194 = vand.u32 %v5346, 2139095040
    %v8195 = vshrl.u32 %v8194, 23
    %v8196 = vsub.s32 %v8195, 127
    %v8197 = vand.u32 2147483647, %v5346
    %v8198 = vand.u32 %v8197, 8388607
    %v8199 = vor.u32 %v8198, 8388608
    %v8200 = vsub.s32 0, %v8199
    %v8201 = vadd.s32 %v8196, 1
    %vm8202 = vcmp.gt.s32.totalorder %v8201, 0
    %v8203 = vsel %vm8202, %v8201, 0
    %v8204 = vshrl.u32 %v8203, 5
    %v8205 = vand.u32 %v8203, 31
    %v8206 = vsub.s32 32, %v8205
    %v8207 = vshrl.u32 683565275, %v8206
    %v8208 = vshll.u32 683565275, %v8205
    %v8209 = vshrl.u32 2475754826, %v8206
    %v8210 = vor.u32 %v8208, %v8209
    %v8211 = vshll.u32 2475754826, %v8205
    %v8212 = vshrl.u32 2131351028, %v8206
    %v8213 = vor.u32 %v8211, %v8212
    %v8214 = vshll.u32 2131351028, %v8205
    %v8215 = vshrl.u32 2102212464, %v8206
    %v8216 = vor.u32 %v8214, %v8215
    %v8217 = vshll.u32 2102212464, %v8205
    %v8218 = vshrl.u32 920167782, %v8206
    %v8219 = vor.u32 %v8217, %v8218
    %v8220 = vshll.u32 920167782, %v8205
    %v8221 = vshrl.u32 1326507024, %v8206
    %v8222 = vor.u32 %v8220, %v8221
    %vm8223 = vcmp.lt.s32.totalorder %v8204, 1
    %vm8224 = vcmp.lt.s32.totalorder %v8204, 2
    %vm8225 = vcmp.lt.s32.totalorder %v8204, 3
    %vm8226 = vcmp.lt.s32.totalorder %v8204, 4
    %v8227 = vsel %vm8223, %v8207, %v8210
    %v8228 = vsel %vm8226, %v8216, 2102212464
    %v8229 = vsel %vm8225, %v8213, %v8228
    %v8230 = vsel %vm8224, %v8227, %v8229
    %v8231 = vsel %vm8223, %v8210, %v8213
    %v8232 = vsel %vm8226, %v8219, 920167782
    %v8233 = vsel %vm8225, %v8216, %v8232
    %v8234 = vsel %vm8224, %v8231, %v8233
    %v8235 = vsel %vm8223, %v8213, %v8216
    %v8236 = vsel %vm8226, %v8222, 1326507024
    %v8237 = vsel %vm8225, %v8219, %v8236
    %v8238 = vsel %vm8224, %v8235, %v8237
    %v8239 = vshll.u32 %v8199, 8
    %v8240 = vmul.u32.u64.compose %v8239, %v8238
    %v8241 = vextract.low.u32 %v8240
    %v8242 = vextract.high.u32 %v8240
    %v8243 = vmul.u32.u64.compose %v8239, %v8234
    %v8244 = vextract.low.u32 %v8243
    %v8245 = vextract.high.u32 %v8243
    %v8246 = vmul.u32 %v8239, %v8230
    %v8247 = vadd.s32 %v8242, %v8244
    %vm8248 = vc.u32 %v8242, %v8244
    %v8249 = vadd.s32 %v8245, 1
    %v8250 = vsel %vm8248, %v8249, %v8245
    %v8251 = vadd.s32 %v8246, %v8250
    %v8252 = vadd.s32 %v8251, 536870912
    %v8253 = vshrl.u32 %v8252, 30
    %v8254 = vshll.u32 %v8253, 30
    %v8255 = vsub.s32 %v8251, %v8254
    %vm8256 = vcmp.lt.s32.totalorder %v8255, 0
    %v8257 = vsub.s32 0, %v8255
    %v8258 = vsel %vm8256, %v8257, %v8255
    %v8259 = vclz %v8258
    %v8260 = vsub.s32 %v8259, 2
    %vm8261 = vcmp.gt.s32.totalorder 0, %v8260
    %v8262 = vsel %vm8261, 0, %v8260
    %v8263 = vsub.s32 32, %v8262
    %v8264 = vshll.u32 %v8255, %v8262
    %v8265 = vshrl.u32 %v8247, %v8263
    %v8266 = vor.u32 %v8264, %v8265
    %v8267 = vsub.s32 4294967266, %v8262
    %v8268 = vadd.s32 %v8267, 127
    %v8269 = vshll.u32 %v8268, 23
    %v8270 = vor.u32 4788187, %v8269
    %v8271 = vand.u32 2147483647, %v8270
    %v8273 = vcvt.s32.f32 %v8266
    %v8274 = vmul.f32 %v8273, %v8271
    %v8275 = vxor.u32 %v8274, 2147483648
    %v8276 = vsel %vm8193, %v8275, %v8274
    %v8277 = vsub.s32 4, %v8253
    %v8278 = vsel %vm8193, %v8277, %v8253
    %v8279 = vsel %vm8192, %v5346, %v8276
    %v8280 = vsel %vm8192, 0, %v8278
    %v8281 = vcosq.f32.pop %v8279
    %v8282 = vsinq.f32.pop %v8279
    %vm8283 = vweird.f32 %v5346
    %v8284 = vadd.s32 %v8280, 3
    %v8285 = vand.u32 %v8284, 3
    %vm8286 = vcmp.lt.s32.totalorder %v8285, 2
    %vm8287 = vcmp.eq.s32.totalorder %v8285, 0
    %v8288 = vxor.u32 %v8282, 2147483648
    %v8289 = vsel %vm8287, %v8281, %v8288
    %vm8290 = vcmp.eq.s32.totalorder %v8285, 2
    %v8291 = vxor.u32 %v8281, 2147483648
    %v8292 = vsel %vm8290, %v8291, %v8282
    %v8293 = vsel %vm8286, %v8289, %v8292
    %v8294 = vsel %vm8283, nan, %v8293
    %v8295 = vand.u32 2147483647, %v5347
    %vm8296 = vcmp.le.f32.partialorder %v8295, 0.7853982
    %vm8297 = vcmp.lt.s32.totalorder %v5347, 0
    %v8298 = vand.u32 %v5347, 2139095040
    %v8299 = vshrl.u32 %v8298, 23
    %v8300 = vsub.s32 %v8299, 127
    %v8301 = vand.u32 2147483647, %v5347
    %v8302 = vand.u32 %v8301, 8388607
    %v8303 = vor.u32 %v8302, 8388608
    %v8304 = vsub.s32 0, %v8303
    %v8305 = vadd.s32 %v8300, 1
    %vm8306 = vcmp.gt.s32.totalorder %v8305, 0
    %v8307 = vsel %vm8306, %v8305, 0
    %v8308 = vshrl.u32 %v8307, 5
    %v8309 = vand.u32 %v8307, 31
    %v8310 = vsub.s32 32, %v8309
    %v8311 = vshrl.u32 683565275, %v8310
    %v8312 = vshll.u32 683565275, %v8309
    %v8313 = vshrl.u32 2475754826, %v8310
    %v8314 = vor.u32 %v8312, %v8313
    %v8315 = vshll.u32 2475754826, %v8309
    %v8316 = vshrl.u32 2131351028, %v8310
    %v8317 = vor.u32 %v8315, %v8316
    %v8318 = vshll.u32 2131351028, %v8309
    %v8319 = vshrl.u32 2102212464, %v8310
    %v8320 = vor.u32 %v8318, %v8319
    %v8321 = vshll.u32 2102212464, %v8309
    %v8322 = vshrl.u32 920167782, %v8310
    %v8323 = vor.u32 %v8321, %v8322
    %v8324 = vshll.u32 920167782, %v8309
    %v8325 = vshrl.u32 1326507024, %v8310
    %v8326 = vor.u32 %v8324, %v8325
    %vm8327 = vcmp.lt.s32.totalorder %v8308, 1
    %vm8328 = vcmp.lt.s32.totalorder %v8308, 2
    %vm8329 = vcmp.lt.s32.totalorder %v8308, 3
    %vm8330 = vcmp.lt.s32.totalorder %v8308, 4
    %v8331 = vsel %vm8327, %v8311, %v8314
    %v8332 = vsel %vm8330, %v8320, 2102212464
    %v8333 = vsel %vm8329, %v8317, %v8332
    %v8334 = vsel %vm8328, %v8331, %v8333
    %v8335 = vsel %vm8327, %v8314, %v8317
    %v8336 = vsel %vm8330, %v8323, 920167782
    %v8337 = vsel %vm8329, %v8320, %v8336
    %v8338 = vsel %vm8328, %v8335, %v8337
    %v8339 = vsel %vm8327, %v8317, %v8320
    %v8340 = vsel %vm8330, %v8326, 1326507024
    %v8341 = vsel %vm8329, %v8323, %v8340
    %v8342 = vsel %vm8328, %v8339, %v8341
    %v8343 = vshll.u32 %v8303, 8
    %v8344 = vmul.u32.u64.compose %v8343, %v8342
    %v8345 = vextract.low.u32 %v8344
    %v8346 = vextract.high.u32 %v8344
    %v8347 = vmul.u32.u64.compose %v8343, %v8338
    %v8348 = vextract.low.u32 %v8347
    %v8349 = vextract.high.u32 %v8347
    %v8350 = vmul.u32 %v8343, %v8334
    %v8351 = vadd.s32 %v8346, %v8348
    %vm8352 = vc.u32 %v8346, %v8348
    %v8353 = vadd.s32 %v8349, 1
    %v8354 = vsel %vm8352, %v8353, %v8349
    %v8355 = vadd.s32 %v8350, %v8354
    %v8356 = vadd.s32 %v8355, 536870912
    %v8357 = vshrl.u32 %v8356, 30
    %v8358 = vshll.u32 %v8357, 30
    %v8359 = vsub.s32 %v8355, %v8358
    %vm8360 = vcmp.lt.s32.totalorder %v8359, 0
    %v8361 = vsub.s32 0, %v8359
    %v8362 = vsel %vm8360, %v8361, %v8359
    %v8363 = vclz %v8362
    %v8364 = vsub.s32 %v8363, 2
    %vm8365 = vcmp.gt.s32.totalorder 0, %v8364
    %v8366 = vsel %vm8365, 0, %v8364
    %v8367 = vsub.s32 32, %v8366
    %v8368 = vshll.u32 %v8359, %v8366
    %v8369 = vshrl.u32 %v8351, %v8367
    %v8370 = vor.u32 %v8368, %v8369
    %v8371 = vsub.s32 4294967266, %v8366
    %v8372 = vadd.s32 %v8371, 127
    %v8373 = vshll.u32 %v8372, 23
    %v8374 = vor.u32 4788187, %v8373
    %v8375 = vand.u32 2147483647, %v8374
    %v8377 = vcvt.s32.f32 %v8370
    %v8378 = vmul.f32 %v8377, %v8375
    %v8379 = vxor.u32 %v8378, 2147483648
    %v8380 = vsel %vm8297, %v8379, %v8378
    %v8381 = vsub.s32 4, %v8357
    %v8382 = vsel %vm8297, %v8381, %v8357
    %v8383 = vsel %vm8296, %v5347, %v8380
    %v8384 = vsel %vm8296, 0, %v8382
    %v8385 = vcosq.f32.pop %v8383
    %v8386 = vsinq.f32.pop %v8383
    %vm8387 = vweird.f32 %v5347
    %v8388 = vadd.s32 %v8384, 3
    %v8389 = vand.u32 %v8388, 3
    %vm8390 = vcmp.lt.s32.totalorder %v8389, 2
    %vm8391 = vcmp.eq.s32.totalorder %v8389, 0
    %v8392 = vxor.u32 %v8386, 2147483648
    %v8393 = vsel %vm8391, %v8385, %v8392
    %vm8394 = vcmp.eq.s32.totalorder %v8389, 2
    %v8395 = vxor.u32 %v8385, 2147483648
    %v8396 = vsel %vm8394, %v8395, %v8386
    %v8397 = vsel %vm8390, %v8393, %v8396
    %v8398 = vsel %vm8387, nan, %v8397
    %v8399 = vand.u32 2147483647, %v5348
    %vm8400 = vcmp.le.f32.partialorder %v8399, 0.7853982
    %vm8401 = vcmp.lt.s32.totalorder %v5348, 0
    %v8402 = vand.u32 %v5348, 2139095040
    %v8403 = vshrl.u32 %v8402, 23
    %v8404 = vsub.s32 %v8403, 127
    %v8405 = vand.u32 2147483647, %v5348
    %v8406 = vand.u32 %v8405, 8388607
    %v8407 = vor.u32 %v8406, 8388608
    %v8408 = vsub.s32 0, %v8407
    %v8409 = vadd.s32 %v8404, 1
    %vm8410 = vcmp.gt.s32.totalorder %v8409, 0
    %v8411 = vsel %vm8410, %v8409, 0
    %v8412 = vshrl.u32 %v8411, 5
    %v8413 = vand.u32 %v8411, 31
    %v8414 = vsub.s32 32, %v8413
    %v8415 = vshrl.u32 683565275, %v8414
    %v8416 = vshll.u32 683565275, %v8413
    %v8417 = vshrl.u32 2475754826, %v8414
    %v8418 = vor.u32 %v8416, %v8417
    %v8419 = vshll.u32 2475754826, %v8413
    %v8420 = vshrl.u32 2131351028, %v8414
    %v8421 = vor.u32 %v8419, %v8420
    %v8422 = vshll.u32 2131351028, %v8413
    %v8423 = vshrl.u32 2102212464, %v8414
    %v8424 = vor.u32 %v8422, %v8423
    %v8425 = vshll.u32 2102212464, %v8413
    %v8426 = vshrl.u32 920167782, %v8414
    %v8427 = vor.u32 %v8425, %v8426
    %v8428 = vshll.u32 920167782, %v8413
    %v8429 = vshrl.u32 1326507024, %v8414
    %v8430 = vor.u32 %v8428, %v8429
    %vm8431 = vcmp.lt.s32.totalorder %v8412, 1
    %vm8432 = vcmp.lt.s32.totalorder %v8412, 2
    %vm8433 = vcmp.lt.s32.totalorder %v8412, 3
    %vm8434 = vcmp.lt.s32.totalorder %v8412, 4
    %v8435 = vsel %vm8431, %v8415, %v8418
    %v8436 = vsel %vm8434, %v8424, 2102212464
    %v8437 = vsel %vm8433, %v8421, %v8436
    %v8438 = vsel %vm8432, %v8435, %v8437
    %v8439 = vsel %vm8431, %v8418, %v8421
    %v8440 = vsel %vm8434, %v8427, 920167782
    %v8441 = vsel %vm8433, %v8424, %v8440
    %v8442 = vsel %vm8432, %v8439, %v8441
    %v8443 = vsel %vm8431, %v8421, %v8424
    %v8444 = vsel %vm8434, %v8430, 1326507024
    %v8445 = vsel %vm8433, %v8427, %v8444
    %v8446 = vsel %vm8432, %v8443, %v8445
    %v8447 = vshll.u32 %v8407, 8
    %v8448 = vmul.u32.u64.compose %v8447, %v8446
    %v8449 = vextract.low.u32 %v8448
    %v8450 = vextract.high.u32 %v8448
    %v8451 = vmul.u32.u64.compose %v8447, %v8442
    %v8452 = vextract.low.u32 %v8451
    %v8453 = vextract.high.u32 %v8451
    %v8454 = vmul.u32 %v8447, %v8438
    %v8455 = vadd.s32 %v8450, %v8452
    %vm8456 = vc.u32 %v8450, %v8452
    %v8457 = vadd.s32 %v8453, 1
    %v8458 = vsel %vm8456, %v8457, %v8453
    %v8459 = vadd.s32 %v8454, %v8458
    %v8460 = vadd.s32 %v8459, 536870912
    %v8461 = vshrl.u32 %v8460, 30
    %v8462 = vshll.u32 %v8461, 30
    %v8463 = vsub.s32 %v8459, %v8462
    %vm8464 = vcmp.lt.s32.totalorder %v8463, 0
    %v8465 = vsub.s32 0, %v8463
    %v8466 = vsel %vm8464, %v8465, %v8463
    %v8467 = vclz %v8466
    %v8468 = vsub.s32 %v8467, 2
    %vm8469 = vcmp.gt.s32.totalorder 0, %v8468
    %v8470 = vsel %vm8469, 0, %v8468
    %v8471 = vsub.s32 32, %v8470
    %v8472 = vshll.u32 %v8463, %v8470
    %v8473 = vshrl.u32 %v8455, %v8471
    %v8474 = vor.u32 %v8472, %v8473
    %v8475 = vsub.s32 4294967266, %v8470
    %v8476 = vadd.s32 %v8475, 127
    %v8477 = vshll.u32 %v8476, 23
    %v8478 = vor.u32 4788187, %v8477
    %v8479 = vand.u32 2147483647, %v8478
    %v8481 = vcvt.s32.f32 %v8474
    %v8482 = vmul.f32 %v8481, %v8479
    %v8483 = vxor.u32 %v8482, 2147483648
    %v8484 = vsel %vm8401, %v8483, %v8482
    %v8485 = vsub.s32 4, %v8461
    %v8486 = vsel %vm8401, %v8485, %v8461
    %v8487 = vsel %vm8400, %v5348, %v8484
    %v8488 = vsel %vm8400, 0, %v8486
    %v8489 = vcosq.f32.pop %v8487
    %v8490 = vsinq.f32.pop %v8487
    %vm8491 = vweird.f32 %v5348
    %v8492 = vadd.s32 %v8488, 3
    %v8493 = vand.u32 %v8492, 3
    %vm8494 = vcmp.lt.s32.totalorder %v8493, 2
    %vm8495 = vcmp.eq.s32.totalorder %v8493, 0
    %v8496 = vxor.u32 %v8490, 2147483648
    %v8497 = vsel %vm8495, %v8489, %v8496
    %vm8498 = vcmp.eq.s32.totalorder %v8493, 2
    %v8499 = vxor.u32 %v8489, 2147483648
    %v8500 = vsel %vm8498, %v8499, %v8490
    %v8501 = vsel %vm8494, %v8497, %v8500
    %v8502 = vsel %vm8491, nan, %v8501
    %v8503 = vand.u32 2147483647, %v5349
    %vm8504 = vcmp.le.f32.partialorder %v8503, 0.7853982
    %vm8505 = vcmp.lt.s32.totalorder %v5349, 0
    %v8506 = vand.u32 %v5349, 2139095040
    %v8507 = vshrl.u32 %v8506, 23
    %v8508 = vsub.s32 %v8507, 127
    %v8509 = vand.u32 2147483647, %v5349
    %v8510 = vand.u32 %v8509, 8388607
    %v8511 = vor.u32 %v8510, 8388608
    %v8512 = vsub.s32 0, %v8511
    %v8513 = vadd.s32 %v8508, 1
    %vm8514 = vcmp.gt.s32.totalorder %v8513, 0
    %v8515 = vsel %vm8514, %v8513, 0
    %v8516 = vshrl.u32 %v8515, 5
    %v8517 = vand.u32 %v8515, 31
    %v8518 = vsub.s32 32, %v8517
    %v8519 = vshrl.u32 683565275, %v8518
    %v8520 = vshll.u32 683565275, %v8517
    %v8521 = vshrl.u32 2475754826, %v8518
    %v8522 = vor.u32 %v8520, %v8521
    %v8523 = vshll.u32 2475754826, %v8517
    %v8524 = vshrl.u32 2131351028, %v8518
    %v8525 = vor.u32 %v8523, %v8524
    %v8526 = vshll.u32 2131351028, %v8517
    %v8527 = vshrl.u32 2102212464, %v8518
    %v8528 = vor.u32 %v8526, %v8527
    %v8529 = vshll.u32 2102212464, %v8517
    %v8530 = vshrl.u32 920167782, %v8518
    %v8531 = vor.u32 %v8529, %v8530
    %v8532 = vshll.u32 920167782, %v8517
    %v8533 = vshrl.u32 1326507024, %v8518
    %v8534 = vor.u32 %v8532, %v8533
    %vm8535 = vcmp.lt.s32.totalorder %v8516, 1
    %vm8536 = vcmp.lt.s32.totalorder %v8516, 2
    %vm8537 = vcmp.lt.s32.totalorder %v8516, 3
    %vm8538 = vcmp.lt.s32.totalorder %v8516, 4
    %v8539 = vsel %vm8535, %v8519, %v8522
    %v8540 = vsel %vm8538, %v8528, 2102212464
    %v8541 = vsel %vm8537, %v8525, %v8540
    %v8542 = vsel %vm8536, %v8539, %v8541
    %v8543 = vsel %vm8535, %v8522, %v8525
    %v8544 = vsel %vm8538, %v8531, 920167782
    %v8545 = vsel %vm8537, %v8528, %v8544
    %v8546 = vsel %vm8536, %v8543, %v8545
    %v8547 = vsel %vm8535, %v8525, %v8528
    %v8548 = vsel %vm8538, %v8534, 1326507024
    %v8549 = vsel %vm8537, %v8531, %v8548
    %v8550 = vsel %vm8536, %v8547, %v8549
    %v8551 = vshll.u32 %v8511, 8
    %v8552 = vmul.u32.u64.compose %v8551, %v8550
    %v8553 = vextract.low.u32 %v8552
    %v8554 = vextract.high.u32 %v8552
    %v8555 = vmul.u32.u64.compose %v8551, %v8546
    %v8556 = vextract.low.u32 %v8555
    %v8557 = vextract.high.u32 %v8555
    %v8558 = vmul.u32 %v8551, %v8542
    %v8559 = vadd.s32 %v8554, %v8556
    %vm8560 = vc.u32 %v8554, %v8556
    %v8561 = vadd.s32 %v8557, 1
    %v8562 = vsel %vm8560, %v8561, %v8557
    %v8563 = vadd.s32 %v8558, %v8562
    %v8564 = vadd.s32 %v8563, 536870912
    %v8565 = vshrl.u32 %v8564, 30
    %v8566 = vshll.u32 %v8565, 30
    %v8567 = vsub.s32 %v8563, %v8566
    %vm8568 = vcmp.lt.s32.totalorder %v8567, 0
    %v8569 = vsub.s32 0, %v8567
    %v8570 = vsel %vm8568, %v8569, %v8567
    %v8571 = vclz %v8570
    %v8572 = vsub.s32 %v8571, 2
    %vm8573 = vcmp.gt.s32.totalorder 0, %v8572
    %v8574 = vsel %vm8573, 0, %v8572
    %v8575 = vsub.s32 32, %v8574
    %v8576 = vshll.u32 %v8567, %v8574
    %v8577 = vshrl.u32 %v8559, %v8575
    %v8578 = vor.u32 %v8576, %v8577
    %v8579 = vsub.s32 4294967266, %v8574
    %v8580 = vadd.s32 %v8579, 127
    %v8581 = vshll.u32 %v8580, 23
    %v8582 = vor.u32 4788187, %v8581
    %v8583 = vand.u32 2147483647, %v8582
    %v8585 = vcvt.s32.f32 %v8578
    %v8586 = vmul.f32 %v8585, %v8583
    %v8587 = vxor.u32 %v8586, 2147483648
    %v8588 = vsel %vm8505, %v8587, %v8586
    %v8589 = vsub.s32 4, %v8565
    %v8590 = vsel %vm8505, %v8589, %v8565
    %v8591 = vsel %vm8504, %v5349, %v8588
    %v8592 = vsel %vm8504, 0, %v8590
    %v8593 = vcosq.f32.pop %v8591
    %v8594 = vsinq.f32.pop %v8591
    %vm8595 = vweird.f32 %v5349
    %v8596 = vadd.s32 %v8592, 3
    %v8597 = vand.u32 %v8596, 3
    %vm8598 = vcmp.lt.s32.totalorder %v8597, 2
    %vm8599 = vcmp.eq.s32.totalorder %v8597, 0
    %v8600 = vxor.u32 %v8594, 2147483648
    %v8601 = vsel %vm8599, %v8593, %v8600
    %vm8602 = vcmp.eq.s32.totalorder %v8597, 2
    %v8603 = vxor.u32 %v8593, 2147483648
    %v8604 = vsel %vm8602, %v8603, %v8594
    %v8605 = vsel %vm8598, %v8601, %v8604
    %v8606 = vsel %vm8595, nan, %v8605
    %v8607 = vand.u32 2147483647, %v5350
    %vm8608 = vcmp.le.f32.partialorder %v8607, 0.7853982
    %vm8609 = vcmp.lt.s32.totalorder %v5350, 0
    %v8610 = vand.u32 %v5350, 2139095040
    %v8611 = vshrl.u32 %v8610, 23
    %v8612 = vsub.s32 %v8611, 127
    %v8613 = vand.u32 2147483647, %v5350
    %v8614 = vand.u32 %v8613, 8388607
    %v8615 = vor.u32 %v8614, 8388608
    %v8616 = vsub.s32 0, %v8615
    %v8617 = vadd.s32 %v8612, 1
    %vm8618 = vcmp.gt.s32.totalorder %v8617, 0
    %v8619 = vsel %vm8618, %v8617, 0
    %v8620 = vshrl.u32 %v8619, 5
    %v8621 = vand.u32 %v8619, 31
    %v8622 = vsub.s32 32, %v8621
    %v8623 = vshrl.u32 683565275, %v8622
    %v8624 = vshll.u32 683565275, %v8621
    %v8625 = vshrl.u32 2475754826, %v8622
    %v8626 = vor.u32 %v8624, %v8625
    %v8627 = vshll.u32 2475754826, %v8621
    %v8628 = vshrl.u32 2131351028, %v8622
    %v8629 = vor.u32 %v8627, %v8628
    %v8630 = vshll.u32 2131351028, %v8621
    %v8631 = vshrl.u32 2102212464, %v8622
    %v8632 = vor.u32 %v8630, %v8631
    %v8633 = vshll.u32 2102212464, %v8621
    %v8634 = vshrl.u32 920167782, %v8622
    %v8635 = vor.u32 %v8633, %v8634
    %v8636 = vshll.u32 920167782, %v8621
    %v8637 = vshrl.u32 1326507024, %v8622
    %v8638 = vor.u32 %v8636, %v8637
    %vm8639 = vcmp.lt.s32.totalorder %v8620, 1
    %vm8640 = vcmp.lt.s32.totalorder %v8620, 2
    %vm8641 = vcmp.lt.s32.totalorder %v8620, 3
    %vm8642 = vcmp.lt.s32.totalorder %v8620, 4
    %v8643 = vsel %vm8639, %v8623, %v8626
    %v8644 = vsel %vm8642, %v8632, 2102212464
    %v8645 = vsel %vm8641, %v8629, %v8644
    %v8646 = vsel %vm8640, %v8643, %v8645
    %v8647 = vsel %vm8639, %v8626, %v8629
    %v8648 = vsel %vm8642, %v8635, 920167782
    %v8649 = vsel %vm8641, %v8632, %v8648
    %v8650 = vsel %vm8640, %v8647, %v8649
    %v8651 = vsel %vm8639, %v8629, %v8632
    %v8652 = vsel %vm8642, %v8638, 1326507024
    %v8653 = vsel %vm8641, %v8635, %v8652
    %v8654 = vsel %vm8640, %v8651, %v8653
    %v8655 = vshll.u32 %v8615, 8
    %v8656 = vmul.u32.u64.compose %v8655, %v8654
    %v8657 = vextract.low.u32 %v8656
    %v8658 = vextract.high.u32 %v8656
    %v8659 = vmul.u32.u64.compose %v8655, %v8650
    %v8660 = vextract.low.u32 %v8659
    %v8661 = vextract.high.u32 %v8659
    %v8662 = vmul.u32 %v8655, %v8646
    %v8663 = vadd.s32 %v8658, %v8660
    %vm8664 = vc.u32 %v8658, %v8660
    %v8665 = vadd.s32 %v8661, 1
    %v8666 = vsel %vm8664, %v8665, %v8661
    %v8667 = vadd.s32 %v8662, %v8666
    %v8668 = vadd.s32 %v8667, 536870912
    %v8669 = vshrl.u32 %v8668, 30
    %v8670 = vshll.u32 %v8669, 30
    %v8671 = vsub.s32 %v8667, %v8670
    %vm8672 = vcmp.lt.s32.totalorder %v8671, 0
    %v8673 = vsub.s32 0, %v8671
    %v8674 = vsel %vm8672, %v8673, %v8671
    %v8675 = vclz %v8674
    %v8676 = vsub.s32 %v8675, 2
    %vm8677 = vcmp.gt.s32.totalorder 0, %v8676
    %v8678 = vsel %vm8677, 0, %v8676
    %v8679 = vsub.s32 32, %v8678
    %v8680 = vshll.u32 %v8671, %v8678
    %v8681 = vshrl.u32 %v8663, %v8679
    %v8682 = vor.u32 %v8680, %v8681
    %v8683 = vsub.s32 4294967266, %v8678
    %v8684 = vadd.s32 %v8683, 127
    %v8685 = vshll.u32 %v8684, 23
    %v8686 = vor.u32 4788187, %v8685
    %v8687 = vand.u32 2147483647, %v8686
    %v8689 = vcvt.s32.f32 %v8682
    %v8690 = vmul.f32 %v8689, %v8687
    %v8691 = vxor.u32 %v8690, 2147483648
    %v8692 = vsel %vm8609, %v8691, %v8690
    %v8693 = vsub.s32 4, %v8669
    %v8694 = vsel %vm8609, %v8693, %v8669
    %v8695 = vsel %vm8608, %v5350, %v8692
    %v8696 = vsel %vm8608, 0, %v8694
    %v8697 = vcosq.f32.pop %v8695
    %v8698 = vsinq.f32.pop %v8695
    %vm8699 = vweird.f32 %v5350
    %v8700 = vadd.s32 %v8696, 3
    %v8701 = vand.u32 %v8700, 3
    %vm8702 = vcmp.lt.s32.totalorder %v8701, 2
    %vm8703 = vcmp.eq.s32.totalorder %v8701, 0
    %v8704 = vxor.u32 %v8698, 2147483648
    %v8705 = vsel %vm8703, %v8697, %v8704
    %vm8706 = vcmp.eq.s32.totalorder %v8701, 2
    %v8707 = vxor.u32 %v8697, 2147483648
    %v8708 = vsel %vm8706, %v8707, %v8698
    %v8709 = vsel %vm8702, %v8705, %v8708
    %v8710 = vsel %vm8699, nan, %v8709
    %v8711 = vand.u32 2147483647, %v5351
    %vm8712 = vcmp.le.f32.partialorder %v8711, 0.7853982
    %vm8713 = vcmp.lt.s32.totalorder %v5351, 0
    %v8714 = vand.u32 %v5351, 2139095040
    %v8715 = vshrl.u32 %v8714, 23
    %v8716 = vsub.s32 %v8715, 127
    %v8717 = vand.u32 2147483647, %v5351
    %v8718 = vand.u32 %v8717, 8388607
    %v8719 = vor.u32 %v8718, 8388608
    %v8720 = vsub.s32 0, %v8719
    %v8721 = vadd.s32 %v8716, 1
    %vm8722 = vcmp.gt.s32.totalorder %v8721, 0
    %v8723 = vsel %vm8722, %v8721, 0
    %v8724 = vshrl.u32 %v8723, 5
    %v8725 = vand.u32 %v8723, 31
    %v8726 = vsub.s32 32, %v8725
    %v8727 = vshrl.u32 683565275, %v8726
    %v8728 = vshll.u32 683565275, %v8725
    %v8729 = vshrl.u32 2475754826, %v8726
    %v8730 = vor.u32 %v8728, %v8729
    %v8731 = vshll.u32 2475754826, %v8725
    %v8732 = vshrl.u32 2131351028, %v8726
    %v8733 = vor.u32 %v8731, %v8732
    %v8734 = vshll.u32 2131351028, %v8725
    %v8735 = vshrl.u32 2102212464, %v8726
    %v8736 = vor.u32 %v8734, %v8735
    %v8737 = vshll.u32 2102212464, %v8725
    %v8738 = vshrl.u32 920167782, %v8726
    %v8739 = vor.u32 %v8737, %v8738
    %v8740 = vshll.u32 920167782, %v8725
    %v8741 = vshrl.u32 1326507024, %v8726
    %v8742 = vor.u32 %v8740, %v8741
    %vm8743 = vcmp.lt.s32.totalorder %v8724, 1
    %vm8744 = vcmp.lt.s32.totalorder %v8724, 2
    %vm8745 = vcmp.lt.s32.totalorder %v8724, 3
    %vm8746 = vcmp.lt.s32.totalorder %v8724, 4
    %v8747 = vsel %vm8743, %v8727, %v8730
    %v8748 = vsel %vm8746, %v8736, 2102212464
    %v8749 = vsel %vm8745, %v8733, %v8748
    %v8750 = vsel %vm8744, %v8747, %v8749
    %v8751 = vsel %vm8743, %v8730, %v8733
    %v8752 = vsel %vm8746, %v8739, 920167782
    %v8753 = vsel %vm8745, %v8736, %v8752
    %v8754 = vsel %vm8744, %v8751, %v8753
    %v8755 = vsel %vm8743, %v8733, %v8736
    %v8756 = vsel %vm8746, %v8742, 1326507024
    %v8757 = vsel %vm8745, %v8739, %v8756
    %v8758 = vsel %vm8744, %v8755, %v8757
    %v8759 = vshll.u32 %v8719, 8
    %v8760 = vmul.u32.u64.compose %v8759, %v8758
    %v8761 = vextract.low.u32 %v8760
    %v8762 = vextract.high.u32 %v8760
    %v8763 = vmul.u32.u64.compose %v8759, %v8754
    %v8764 = vextract.low.u32 %v8763
    %v8765 = vextract.high.u32 %v8763
    %v8766 = vmul.u32 %v8759, %v8750
    %v8767 = vadd.s32 %v8762, %v8764
    %vm8768 = vc.u32 %v8762, %v8764
    %v8769 = vadd.s32 %v8765, 1
    %v8770 = vsel %vm8768, %v8769, %v8765
    %v8771 = vadd.s32 %v8766, %v8770
    %v8772 = vadd.s32 %v8771, 536870912
    %v8773 = vshrl.u32 %v8772, 30
    %v8774 = vshll.u32 %v8773, 30
    %v8775 = vsub.s32 %v8771, %v8774
    %vm8776 = vcmp.lt.s32.totalorder %v8775, 0
    %v8777 = vsub.s32 0, %v8775
    %v8778 = vsel %vm8776, %v8777, %v8775
    %v8779 = vclz %v8778
    %v8780 = vsub.s32 %v8779, 2
    %vm8781 = vcmp.gt.s32.totalorder 0, %v8780
    %v8782 = vsel %vm8781, 0, %v8780
    %v8783 = vsub.s32 32, %v8782
    %v8784 = vshll.u32 %v8775, %v8782
    %v8785 = vshrl.u32 %v8767, %v8783
    %v8786 = vor.u32 %v8784, %v8785
    %v8787 = vsub.s32 4294967266, %v8782
    %v8788 = vadd.s32 %v8787, 127
    %v8789 = vshll.u32 %v8788, 23
    %v8790 = vor.u32 4788187, %v8789
    %v8791 = vand.u32 2147483647, %v8790
    %v8793 = vcvt.s32.f32 %v8786
    %v8794 = vmul.f32 %v8793, %v8791
    %v8795 = vxor.u32 %v8794, 2147483648
    %v8796 = vsel %vm8713, %v8795, %v8794
    %v8797 = vsub.s32 4, %v8773
    %v8798 = vsel %vm8713, %v8797, %v8773
    %v8799 = vsel %vm8712, %v5351, %v8796
    %v8800 = vsel %vm8712, 0, %v8798
    %v8801 = vcosq.f32.pop %v8799
    %v8802 = vsinq.f32.pop %v8799
    %vm8803 = vweird.f32 %v5351
    %v8804 = vadd.s32 %v8800, 3
    %v8805 = vand.u32 %v8804, 3
    %vm8806 = vcmp.lt.s32.totalorder %v8805, 2
    %vm8807 = vcmp.eq.s32.totalorder %v8805, 0
    %v8808 = vxor.u32 %v8802, 2147483648
    %v8809 = vsel %vm8807, %v8801, %v8808
    %vm8810 = vcmp.eq.s32.totalorder %v8805, 2
    %v8811 = vxor.u32 %v8801, 2147483648
    %v8812 = vsel %vm8810, %v8811, %v8802
    %v8813 = vsel %vm8806, %v8809, %v8812
    %v8814 = vsel %vm8803, nan, %v8813
    %v8815 = vand.u32 2147483647, %v5352
    %vm8816 = vcmp.le.f32.partialorder %v8815, 0.7853982
    %vm8817 = vcmp.lt.s32.totalorder %v5352, 0
    %v8818 = vand.u32 %v5352, 2139095040
    %v8819 = vshrl.u32 %v8818, 23
    %v8820 = vsub.s32 %v8819, 127
    %v8821 = vand.u32 2147483647, %v5352
    %v8822 = vand.u32 %v8821, 8388607
    %v8823 = vor.u32 %v8822, 8388608
    %v8824 = vsub.s32 0, %v8823
    %v8825 = vadd.s32 %v8820, 1
    %vm8826 = vcmp.gt.s32.totalorder %v8825, 0
    %v8827 = vsel %vm8826, %v8825, 0
    %v8828 = vshrl.u32 %v8827, 5
    %v8829 = vand.u32 %v8827, 31
    %v8830 = vsub.s32 32, %v8829
    %v8831 = vshrl.u32 683565275, %v8830
    %v8832 = vshll.u32 683565275, %v8829
    %v8833 = vshrl.u32 2475754826, %v8830
    %v8834 = vor.u32 %v8832, %v8833
    %v8835 = vshll.u32 2475754826, %v8829
    %v8836 = vshrl.u32 2131351028, %v8830
    %v8837 = vor.u32 %v8835, %v8836
    %v8838 = vshll.u32 2131351028, %v8829
    %v8839 = vshrl.u32 2102212464, %v8830
    %v8840 = vor.u32 %v8838, %v8839
    %v8841 = vshll.u32 2102212464, %v8829
    %v8842 = vshrl.u32 920167782, %v8830
    %v8843 = vor.u32 %v8841, %v8842
    %v8844 = vshll.u32 920167782, %v8829
    %v8845 = vshrl.u32 1326507024, %v8830
    %v8846 = vor.u32 %v8844, %v8845
    %vm8847 = vcmp.lt.s32.totalorder %v8828, 1
    %vm8848 = vcmp.lt.s32.totalorder %v8828, 2
    %vm8849 = vcmp.lt.s32.totalorder %v8828, 3
    %vm8850 = vcmp.lt.s32.totalorder %v8828, 4
    %v8851 = vsel %vm8847, %v8831, %v8834
    %v8852 = vsel %vm8850, %v8840, 2102212464
    %v8853 = vsel %vm8849, %v8837, %v8852
    %v8854 = vsel %vm8848, %v8851, %v8853
    %v8855 = vsel %vm8847, %v8834, %v8837
    %v8856 = vsel %vm8850, %v8843, 920167782
    %v8857 = vsel %vm8849, %v8840, %v8856
    %v8858 = vsel %vm8848, %v8855, %v8857
    %v8859 = vsel %vm8847, %v8837, %v8840
    %v8860 = vsel %vm8850, %v8846, 1326507024
    %v8861 = vsel %vm8849, %v8843, %v8860
    %v8862 = vsel %vm8848, %v8859, %v8861
    %v8863 = vshll.u32 %v8823, 8
    %v8864 = vmul.u32.u64.compose %v8863, %v8862
    %v8865 = vextract.low.u32 %v8864
    %v8866 = vextract.high.u32 %v8864
    %v8867 = vmul.u32.u64.compose %v8863, %v8858
    %v8868 = vextract.low.u32 %v8867
    %v8869 = vextract.high.u32 %v8867
    %v8870 = vmul.u32 %v8863, %v8854
    %v8871 = vadd.s32 %v8866, %v8868
    %vm8872 = vc.u32 %v8866, %v8868
    %v8873 = vadd.s32 %v8869, 1
    %v8874 = vsel %vm8872, %v8873, %v8869
    %v8875 = vadd.s32 %v8870, %v8874
    %v8876 = vadd.s32 %v8875, 536870912
    %v8877 = vshrl.u32 %v8876, 30
    %v8878 = vshll.u32 %v8877, 30
    %v8879 = vsub.s32 %v8875, %v8878
    %vm8880 = vcmp.lt.s32.totalorder %v8879, 0
    %v8881 = vsub.s32 0, %v8879
    %v8882 = vsel %vm8880, %v8881, %v8879
    %v8883 = vclz %v8882
    %v8884 = vsub.s32 %v8883, 2
    %vm8885 = vcmp.gt.s32.totalorder 0, %v8884
    %v8886 = vsel %vm8885, 0, %v8884
    %v8887 = vsub.s32 32, %v8886
    %v8888 = vshll.u32 %v8879, %v8886
    %v8889 = vshrl.u32 %v8871, %v8887
    %v8890 = vor.u32 %v8888, %v8889
    %v8891 = vsub.s32 4294967266, %v8886
    %v8892 = vadd.s32 %v8891, 127
    %v8893 = vshll.u32 %v8892, 23
    %v8894 = vor.u32 4788187, %v8893
    %v8895 = vand.u32 2147483647, %v8894
    %v8897 = vcvt.s32.f32 %v8890
    %v8898 = vmul.f32 %v8897, %v8895
    %v8899 = vxor.u32 %v8898, 2147483648
    %v8900 = vsel %vm8817, %v8899, %v8898
    %v8901 = vsub.s32 4, %v8877
    %v8902 = vsel %vm8817, %v8901, %v8877
    %v8903 = vsel %vm8816, %v5352, %v8900
    %v8904 = vsel %vm8816, 0, %v8902
    %v8905 = vcosq.f32.pop %v8903
    %v8906 = vsinq.f32.pop %v8903
    %vm8907 = vweird.f32 %v5352
    %v8908 = vadd.s32 %v8904, 3
    %v8909 = vand.u32 %v8908, 3
    %vm8910 = vcmp.lt.s32.totalorder %v8909, 2
    %vm8911 = vcmp.eq.s32.totalorder %v8909, 0
    %v8912 = vxor.u32 %v8906, 2147483648
    %v8913 = vsel %vm8911, %v8905, %v8912
    %vm8914 = vcmp.eq.s32.totalorder %v8909, 2
    %v8915 = vxor.u32 %v8905, 2147483648
    %v8916 = vsel %vm8914, %v8915, %v8906
    %v8917 = vsel %vm8910, %v8913, %v8916
    %v8918 = vsel %vm8907, nan, %v8917
    %v8919 = vand.u32 2147483647, %v5353
    %vm8920 = vcmp.le.f32.partialorder %v8919, 0.7853982
    %vm8921 = vcmp.lt.s32.totalorder %v5353, 0
    %v8922 = vand.u32 %v5353, 2139095040
    %v8923 = vshrl.u32 %v8922, 23
    %v8924 = vsub.s32 %v8923, 127
    %v8925 = vand.u32 2147483647, %v5353
    %v8926 = vand.u32 %v8925, 8388607
    %v8927 = vor.u32 %v8926, 8388608
    %v8928 = vsub.s32 0, %v8927
    %v8929 = vadd.s32 %v8924, 1
    %vm8930 = vcmp.gt.s32.totalorder %v8929, 0
    %v8931 = vsel %vm8930, %v8929, 0
    %v8932 = vshrl.u32 %v8931, 5
    %v8933 = vand.u32 %v8931, 31
    %v8934 = vsub.s32 32, %v8933
    %v8935 = vshrl.u32 683565275, %v8934
    %v8936 = vshll.u32 683565275, %v8933
    %v8937 = vshrl.u32 2475754826, %v8934
    %v8938 = vor.u32 %v8936, %v8937
    %v8939 = vshll.u32 2475754826, %v8933
    %v8940 = vshrl.u32 2131351028, %v8934
    %v8941 = vor.u32 %v8939, %v8940
    %v8942 = vshll.u32 2131351028, %v8933
    %v8943 = vshrl.u32 2102212464, %v8934
    %v8944 = vor.u32 %v8942, %v8943
    %v8945 = vshll.u32 2102212464, %v8933
    %v8946 = vshrl.u32 920167782, %v8934
    %v8947 = vor.u32 %v8945, %v8946
    %v8948 = vshll.u32 920167782, %v8933
    %v8949 = vshrl.u32 1326507024, %v8934
    %v8950 = vor.u32 %v8948, %v8949
    %vm8951 = vcmp.lt.s32.totalorder %v8932, 1
    %vm8952 = vcmp.lt.s32.totalorder %v8932, 2
    %vm8953 = vcmp.lt.s32.totalorder %v8932, 3
    %vm8954 = vcmp.lt.s32.totalorder %v8932, 4
    %v8955 = vsel %vm8951, %v8935, %v8938
    %v8956 = vsel %vm8954, %v8944, 2102212464
    %v8957 = vsel %vm8953, %v8941, %v8956
    %v8958 = vsel %vm8952, %v8955, %v8957
    %v8959 = vsel %vm8951, %v8938, %v8941
    %v8960 = vsel %vm8954, %v8947, 920167782
    %v8961 = vsel %vm8953, %v8944, %v8960
    %v8962 = vsel %vm8952, %v8959, %v8961
    %v8963 = vsel %vm8951, %v8941, %v8944
    %v8964 = vsel %vm8954, %v8950, 1326507024
    %v8965 = vsel %vm8953, %v8947, %v8964
    %v8966 = vsel %vm8952, %v8963, %v8965
    %v8967 = vshll.u32 %v8927, 8
    %v8968 = vmul.u32.u64.compose %v8967, %v8966
    %v8969 = vextract.low.u32 %v8968
    %v8970 = vextract.high.u32 %v8968
    %v8971 = vmul.u32.u64.compose %v8967, %v8962
    %v8972 = vextract.low.u32 %v8971
    %v8973 = vextract.high.u32 %v8971
    %v8974 = vmul.u32 %v8967, %v8958
    %v8975 = vadd.s32 %v8970, %v8972
    %vm8976 = vc.u32 %v8970, %v8972
    %v8977 = vadd.s32 %v8973, 1
    %v8978 = vsel %vm8976, %v8977, %v8973
    %v8979 = vadd.s32 %v8974, %v8978
    %v8980 = vadd.s32 %v8979, 536870912
    %v8981 = vshrl.u32 %v8980, 30
    %v8982 = vshll.u32 %v8981, 30
    %v8983 = vsub.s32 %v8979, %v8982
    %vm8984 = vcmp.lt.s32.totalorder %v8983, 0
    %v8985 = vsub.s32 0, %v8983
    %v8986 = vsel %vm8984, %v8985, %v8983
    %v8987 = vclz %v8986
    %v8988 = vsub.s32 %v8987, 2
    %vm8989 = vcmp.gt.s32.totalorder 0, %v8988
    %v8990 = vsel %vm8989, 0, %v8988
    %v8991 = vsub.s32 32, %v8990
    %v8992 = vshll.u32 %v8983, %v8990
    %v8993 = vshrl.u32 %v8975, %v8991
    %v8994 = vor.u32 %v8992, %v8993
    %v8995 = vsub.s32 4294967266, %v8990
    %v8996 = vadd.s32 %v8995, 127
    %v8997 = vshll.u32 %v8996, 23
    %v8998 = vor.u32 4788187, %v8997
    %v8999 = vand.u32 2147483647, %v8998
    %v9001 = vcvt.s32.f32 %v8994
    %v9002 = vmul.f32 %v9001, %v8999
    %v9003 = vxor.u32 %v9002, 2147483648
    %v9004 = vsel %vm8921, %v9003, %v9002
    %v9005 = vsub.s32 4, %v8981
    %v9006 = vsel %vm8921, %v9005, %v8981
    %v9007 = vsel %vm8920, %v5353, %v9004
    %v9008 = vsel %vm8920, 0, %v9006
    %v9009 = vcosq.f32.pop %v9007
    %v9010 = vsinq.f32.pop %v9007
    %vm9011 = vweird.f32 %v5353
    %v9012 = vadd.s32 %v9008, 3
    %v9013 = vand.u32 %v9012, 3
    %vm9014 = vcmp.lt.s32.totalorder %v9013, 2
    %vm9015 = vcmp.eq.s32.totalorder %v9013, 0
    %v9016 = vxor.u32 %v9010, 2147483648
    %v9017 = vsel %vm9015, %v9009, %v9016
    %vm9018 = vcmp.eq.s32.totalorder %v9013, 2
    %v9019 = vxor.u32 %v9009, 2147483648
    %v9020 = vsel %vm9018, %v9019, %v9010
    %v9021 = vsel %vm9014, %v9017, %v9020
    %v9022 = vsel %vm9011, nan, %v9021
    %v9023 = vand.u32 2147483647, %v5354
    %vm9024 = vcmp.le.f32.partialorder %v9023, 0.7853982
    %vm9025 = vcmp.lt.s32.totalorder %v5354, 0
    %v9026 = vand.u32 %v5354, 2139095040
    %v9027 = vshrl.u32 %v9026, 23
    %v9028 = vsub.s32 %v9027, 127
    %v9029 = vand.u32 2147483647, %v5354
    %v9030 = vand.u32 %v9029, 8388607
    %v9031 = vor.u32 %v9030, 8388608
    %v9032 = vsub.s32 0, %v9031
    %v9033 = vadd.s32 %v9028, 1
    %vm9034 = vcmp.gt.s32.totalorder %v9033, 0
    %v9035 = vsel %vm9034, %v9033, 0
    %v9036 = vshrl.u32 %v9035, 5
    %v9037 = vand.u32 %v9035, 31
    %v9038 = vsub.s32 32, %v9037
    %v9039 = vshrl.u32 683565275, %v9038
    %v9040 = vshll.u32 683565275, %v9037
    %v9041 = vshrl.u32 2475754826, %v9038
    %v9042 = vor.u32 %v9040, %v9041
    %v9043 = vshll.u32 2475754826, %v9037
    %v9044 = vshrl.u32 2131351028, %v9038
    %v9045 = vor.u32 %v9043, %v9044
    %v9046 = vshll.u32 2131351028, %v9037
    %v9047 = vshrl.u32 2102212464, %v9038
    %v9048 = vor.u32 %v9046, %v9047
    %v9049 = vshll.u32 2102212464, %v9037
    %v9050 = vshrl.u32 920167782, %v9038
    %v9051 = vor.u32 %v9049, %v9050
    %v9052 = vshll.u32 920167782, %v9037
    %v9053 = vshrl.u32 1326507024, %v9038
    %v9054 = vor.u32 %v9052, %v9053
    %vm9055 = vcmp.lt.s32.totalorder %v9036, 1
    %vm9056 = vcmp.lt.s32.totalorder %v9036, 2
    %vm9057 = vcmp.lt.s32.totalorder %v9036, 3
    %vm9058 = vcmp.lt.s32.totalorder %v9036, 4
    %v9059 = vsel %vm9055, %v9039, %v9042
    %v9060 = vsel %vm9058, %v9048, 2102212464
    %v9061 = vsel %vm9057, %v9045, %v9060
    %v9062 = vsel %vm9056, %v9059, %v9061
    %v9063 = vsel %vm9055, %v9042, %v9045
    %v9064 = vsel %vm9058, %v9051, 920167782
    %v9065 = vsel %vm9057, %v9048, %v9064
    %v9066 = vsel %vm9056, %v9063, %v9065
    %v9067 = vsel %vm9055, %v9045, %v9048
    %v9068 = vsel %vm9058, %v9054, 1326507024
    %v9069 = vsel %vm9057, %v9051, %v9068
    %v9070 = vsel %vm9056, %v9067, %v9069
    %v9071 = vshll.u32 %v9031, 8
    %v9072 = vmul.u32.u64.compose %v9071, %v9070
    %v9073 = vextract.low.u32 %v9072
    %v9074 = vextract.high.u32 %v9072
    %v9075 = vmul.u32.u64.compose %v9071, %v9066
    %v9076 = vextract.low.u32 %v9075
    %v9077 = vextract.high.u32 %v9075
    %v9078 = vmul.u32 %v9071, %v9062
    %v9079 = vadd.s32 %v9074, %v9076
    %vm9080 = vc.u32 %v9074, %v9076
    %v9081 = vadd.s32 %v9077, 1
    %v9082 = vsel %vm9080, %v9081, %v9077
    %v9083 = vadd.s32 %v9078, %v9082
    %v9084 = vadd.s32 %v9083, 536870912
    %v9085 = vshrl.u32 %v9084, 30
    %v9086 = vshll.u32 %v9085, 30
    %v9087 = vsub.s32 %v9083, %v9086
    %vm9088 = vcmp.lt.s32.totalorder %v9087, 0
    %v9089 = vsub.s32 0, %v9087
    %v9090 = vsel %vm9088, %v9089, %v9087
    %v9091 = vclz %v9090
    %v9092 = vsub.s32 %v9091, 2
    %vm9093 = vcmp.gt.s32.totalorder 0, %v9092
    %v9094 = vsel %vm9093, 0, %v9092
    %v9095 = vsub.s32 32, %v9094
    %v9096 = vshll.u32 %v9087, %v9094
    %v9097 = vshrl.u32 %v9079, %v9095
    %v9098 = vor.u32 %v9096, %v9097
    %v9099 = vsub.s32 4294967266, %v9094
    %v9100 = vadd.s32 %v9099, 127
    %v9101 = vshll.u32 %v9100, 23
    %v9102 = vor.u32 4788187, %v9101
    %v9103 = vand.u32 2147483647, %v9102
    %v9105 = vcvt.s32.f32 %v9098
    %v9106 = vmul.f32 %v9105, %v9103
    %v9107 = vxor.u32 %v9106, 2147483648
    %v9108 = vsel %vm9025, %v9107, %v9106
    %v9109 = vsub.s32 4, %v9085
    %v9110 = vsel %vm9025, %v9109, %v9085
    %v9111 = vsel %vm9024, %v5354, %v9108
    %v9112 = vsel %vm9024, 0, %v9110
    %v9113 = vcosq.f32.pop %v9111
    %v9114 = vsinq.f32.pop %v9111
    %vm9115 = vweird.f32 %v5354
    %v9116 = vadd.s32 %v9112, 3
    %v9117 = vand.u32 %v9116, 3
    %vm9118 = vcmp.lt.s32.totalorder %v9117, 2
    %vm9119 = vcmp.eq.s32.totalorder %v9117, 0
    %v9120 = vxor.u32 %v9114, 2147483648
    %v9121 = vsel %vm9119, %v9113, %v9120
    %vm9122 = vcmp.eq.s32.totalorder %v9117, 2
    %v9123 = vxor.u32 %v9113, 2147483648
    %v9124 = vsel %vm9122, %v9123, %v9114
    %v9125 = vsel %vm9118, %v9121, %v9124
    %v9126 = vsel %vm9115, nan, %v9125
    %v9127 = vand.u32 2147483647, %v5355
    %vm9128 = vcmp.le.f32.partialorder %v9127, 0.7853982
    %vm9129 = vcmp.lt.s32.totalorder %v5355, 0
    %v9130 = vand.u32 %v5355, 2139095040
    %v9131 = vshrl.u32 %v9130, 23
    %v9132 = vsub.s32 %v9131, 127
    %v9133 = vand.u32 2147483647, %v5355
    %v9134 = vand.u32 %v9133, 8388607
    %v9135 = vor.u32 %v9134, 8388608
    %v9136 = vsub.s32 0, %v9135
    %v9137 = vadd.s32 %v9132, 1
    %vm9138 = vcmp.gt.s32.totalorder %v9137, 0
    %v9139 = vsel %vm9138, %v9137, 0
    %v9140 = vshrl.u32 %v9139, 5
    %v9141 = vand.u32 %v9139, 31
    %v9142 = vsub.s32 32, %v9141
    %v9143 = vshrl.u32 683565275, %v9142
    %v9144 = vshll.u32 683565275, %v9141
    %v9145 = vshrl.u32 2475754826, %v9142
    %v9146 = vor.u32 %v9144, %v9145
    %v9147 = vshll.u32 2475754826, %v9141
    %v9148 = vshrl.u32 2131351028, %v9142
    %v9149 = vor.u32 %v9147, %v9148
    %v9150 = vshll.u32 2131351028, %v9141
    %v9151 = vshrl.u32 2102212464, %v9142
    %v9152 = vor.u32 %v9150, %v9151
    %v9153 = vshll.u32 2102212464, %v9141
    %v9154 = vshrl.u32 920167782, %v9142
    %v9155 = vor.u32 %v9153, %v9154
    %v9156 = vshll.u32 920167782, %v9141
    %v9157 = vshrl.u32 1326507024, %v9142
    %v9158 = vor.u32 %v9156, %v9157
    %vm9159 = vcmp.lt.s32.totalorder %v9140, 1
    %vm9160 = vcmp.lt.s32.totalorder %v9140, 2
    %vm9161 = vcmp.lt.s32.totalorder %v9140, 3
    %vm9162 = vcmp.lt.s32.totalorder %v9140, 4
    %v9163 = vsel %vm9159, %v9143, %v9146
    %v9164 = vsel %vm9162, %v9152, 2102212464
    %v9165 = vsel %vm9161, %v9149, %v9164
    %v9166 = vsel %vm9160, %v9163, %v9165
    %v9167 = vsel %vm9159, %v9146, %v9149
    %v9168 = vsel %vm9162, %v9155, 920167782
    %v9169 = vsel %vm9161, %v9152, %v9168
    %v9170 = vsel %vm9160, %v9167, %v9169
    %v9171 = vsel %vm9159, %v9149, %v9152
    %v9172 = vsel %vm9162, %v9158, 1326507024
    %v9173 = vsel %vm9161, %v9155, %v9172
    %v9174 = vsel %vm9160, %v9171, %v9173
    %v9175 = vshll.u32 %v9135, 8
    %v9176 = vmul.u32.u64.compose %v9175, %v9174
    %v9177 = vextract.low.u32 %v9176
    %v9178 = vextract.high.u32 %v9176
    %v9179 = vmul.u32.u64.compose %v9175, %v9170
    %v9180 = vextract.low.u32 %v9179
    %v9181 = vextract.high.u32 %v9179
    %v9182 = vmul.u32 %v9175, %v9166
    %v9183 = vadd.s32 %v9178, %v9180
    %vm9184 = vc.u32 %v9178, %v9180
    %v9185 = vadd.s32 %v9181, 1
    %v9186 = vsel %vm9184, %v9185, %v9181
    %v9187 = vadd.s32 %v9182, %v9186
    %v9188 = vadd.s32 %v9187, 536870912
    %v9189 = vshrl.u32 %v9188, 30
    %v9190 = vshll.u32 %v9189, 30
    %v9191 = vsub.s32 %v9187, %v9190
    %vm9192 = vcmp.lt.s32.totalorder %v9191, 0
    %v9193 = vsub.s32 0, %v9191
    %v9194 = vsel %vm9192, %v9193, %v9191
    %v9195 = vclz %v9194
    %v9196 = vsub.s32 %v9195, 2
    %vm9197 = vcmp.gt.s32.totalorder 0, %v9196
    %v9198 = vsel %vm9197, 0, %v9196
    %v9199 = vsub.s32 32, %v9198
    %v9200 = vshll.u32 %v9191, %v9198
    %v9201 = vshrl.u32 %v9183, %v9199
    %v9202 = vor.u32 %v9200, %v9201
    %v9203 = vsub.s32 4294967266, %v9198
    %v9204 = vadd.s32 %v9203, 127
    %v9205 = vshll.u32 %v9204, 23
    %v9206 = vor.u32 4788187, %v9205
    %v9207 = vand.u32 2147483647, %v9206
    %v9209 = vcvt.s32.f32 %v9202
    %v9210 = vmul.f32 %v9209, %v9207
    %v9211 = vxor.u32 %v9210, 2147483648
    %v9212 = vsel %vm9129, %v9211, %v9210
    %v9213 = vsub.s32 4, %v9189
    %v9214 = vsel %vm9129, %v9213, %v9189
    %v9215 = vsel %vm9128, %v5355, %v9212
    %v9216 = vsel %vm9128, 0, %v9214
    %v9217 = vcosq.f32.pop %v9215
    %v9218 = vsinq.f32.pop %v9215
    %vm9219 = vweird.f32 %v5355
    %v9220 = vadd.s32 %v9216, 3
    %v9221 = vand.u32 %v9220, 3
    %vm9222 = vcmp.lt.s32.totalorder %v9221, 2
    %vm9223 = vcmp.eq.s32.totalorder %v9221, 0
    %v9224 = vxor.u32 %v9218, 2147483648
    %v9225 = vsel %vm9223, %v9217, %v9224
    %vm9226 = vcmp.eq.s32.totalorder %v9221, 2
    %v9227 = vxor.u32 %v9217, 2147483648
    %v9228 = vsel %vm9226, %v9227, %v9218
    %v9229 = vsel %vm9222, %v9225, %v9228
    %v9230 = vsel %vm9219, nan, %v9229
    %v9231 = vand.u32 2147483647, %v5356
    %vm9232 = vcmp.le.f32.partialorder %v9231, 0.7853982
    %vm9233 = vcmp.lt.s32.totalorder %v5356, 0
    %v9234 = vand.u32 %v5356, 2139095040
    %v9235 = vshrl.u32 %v9234, 23
    %v9236 = vsub.s32 %v9235, 127
    %v9237 = vand.u32 2147483647, %v5356
    %v9238 = vand.u32 %v9237, 8388607
    %v9239 = vor.u32 %v9238, 8388608
    %v9240 = vsub.s32 0, %v9239
    %v9241 = vadd.s32 %v9236, 1
    %vm9242 = vcmp.gt.s32.totalorder %v9241, 0
    %v9243 = vsel %vm9242, %v9241, 0
    %v9244 = vshrl.u32 %v9243, 5
    %v9245 = vand.u32 %v9243, 31
    %v9246 = vsub.s32 32, %v9245
    %v9247 = vshrl.u32 683565275, %v9246
    %v9248 = vshll.u32 683565275, %v9245
    %v9249 = vshrl.u32 2475754826, %v9246
    %v9250 = vor.u32 %v9248, %v9249
    %v9251 = vshll.u32 2475754826, %v9245
    %v9252 = vshrl.u32 2131351028, %v9246
    %v9253 = vor.u32 %v9251, %v9252
    %v9254 = vshll.u32 2131351028, %v9245
    %v9255 = vshrl.u32 2102212464, %v9246
    %v9256 = vor.u32 %v9254, %v9255
    %v9257 = vshll.u32 2102212464, %v9245
    %v9258 = vshrl.u32 920167782, %v9246
    %v9259 = vor.u32 %v9257, %v9258
    %v9260 = vshll.u32 920167782, %v9245
    %v9261 = vshrl.u32 1326507024, %v9246
    %v9262 = vor.u32 %v9260, %v9261
    %vm9263 = vcmp.lt.s32.totalorder %v9244, 1
    %vm9264 = vcmp.lt.s32.totalorder %v9244, 2
    %vm9265 = vcmp.lt.s32.totalorder %v9244, 3
    %vm9266 = vcmp.lt.s32.totalorder %v9244, 4
    %v9267 = vsel %vm9263, %v9247, %v9250
    %v9268 = vsel %vm9266, %v9256, 2102212464
    %v9269 = vsel %vm9265, %v9253, %v9268
    %v9270 = vsel %vm9264, %v9267, %v9269
    %v9271 = vsel %vm9263, %v9250, %v9253
    %v9272 = vsel %vm9266, %v9259, 920167782
    %v9273 = vsel %vm9265, %v9256, %v9272
    %v9274 = vsel %vm9264, %v9271, %v9273
    %v9275 = vsel %vm9263, %v9253, %v9256
    %v9276 = vsel %vm9266, %v9262, 1326507024
    %v9277 = vsel %vm9265, %v9259, %v9276
    %v9278 = vsel %vm9264, %v9275, %v9277
    %v9279 = vshll.u32 %v9239, 8
    %v9280 = vmul.u32.u64.compose %v9279, %v9278
    %v9281 = vextract.low.u32 %v9280
    %v9282 = vextract.high.u32 %v9280
    %v9283 = vmul.u32.u64.compose %v9279, %v9274
    %v9284 = vextract.low.u32 %v9283
    %v9285 = vextract.high.u32 %v9283
    %v9286 = vmul.u32 %v9279, %v9270
    %v9287 = vadd.s32 %v9282, %v9284
    %vm9288 = vc.u32 %v9282, %v9284
    %v9289 = vadd.s32 %v9285, 1
    %v9290 = vsel %vm9288, %v9289, %v9285
    %v9291 = vadd.s32 %v9286, %v9290
    %v9292 = vadd.s32 %v9291, 536870912
    %v9293 = vshrl.u32 %v9292, 30
    %v9294 = vshll.u32 %v9293, 30
    %v9295 = vsub.s32 %v9291, %v9294
    %vm9296 = vcmp.lt.s32.totalorder %v9295, 0
    %v9297 = vsub.s32 0, %v9295
    %v9298 = vsel %vm9296, %v9297, %v9295
    %v9299 = vclz %v9298
    %v9300 = vsub.s32 %v9299, 2
    %vm9301 = vcmp.gt.s32.totalorder 0, %v9300
    %v9302 = vsel %vm9301, 0, %v9300
    %v9303 = vsub.s32 32, %v9302
    %v9304 = vshll.u32 %v9295, %v9302
    %v9305 = vshrl.u32 %v9287, %v9303
    %v9306 = vor.u32 %v9304, %v9305
    %v9307 = vsub.s32 4294967266, %v9302
    %v9308 = vadd.s32 %v9307, 127
    %v9309 = vshll.u32 %v9308, 23
    %v9310 = vor.u32 4788187, %v9309
    %v9311 = vand.u32 2147483647, %v9310
    %v9313 = vcvt.s32.f32 %v9306
    %v9314 = vmul.f32 %v9313, %v9311
    %v9315 = vxor.u32 %v9314, 2147483648
    %v9316 = vsel %vm9233, %v9315, %v9314
    %v9317 = vsub.s32 4, %v9293
    %v9318 = vsel %vm9233, %v9317, %v9293
    %v9319 = vsel %vm9232, %v5356, %v9316
    %v9320 = vsel %vm9232, 0, %v9318
    %v9321 = vcosq.f32.pop %v9319
    %v9322 = vsinq.f32.pop %v9319
    %vm9323 = vweird.f32 %v5356
    %v9324 = vadd.s32 %v9320, 3
    %v9325 = vand.u32 %v9324, 3
    %vm9326 = vcmp.lt.s32.totalorder %v9325, 2
    %vm9327 = vcmp.eq.s32.totalorder %v9325, 0
    %v9328 = vxor.u32 %v9322, 2147483648
    %v9329 = vsel %vm9327, %v9321, %v9328
    %vm9330 = vcmp.eq.s32.totalorder %v9325, 2
    %v9331 = vxor.u32 %v9321, 2147483648
    %v9332 = vsel %vm9330, %v9331, %v9322
    %v9333 = vsel %vm9326, %v9329, %v9332
    %v9334 = vsel %vm9323, nan, %v9333
    %v9335 = vand.u32 2147483647, %v5357
    %vm9336 = vcmp.le.f32.partialorder %v9335, 0.7853982
    %vm9337 = vcmp.lt.s32.totalorder %v5357, 0
    %v9338 = vand.u32 %v5357, 2139095040
    %v9339 = vshrl.u32 %v9338, 23
    %v9340 = vsub.s32 %v9339, 127
    %v9341 = vand.u32 2147483647, %v5357
    %v9342 = vand.u32 %v9341, 8388607
    %v9343 = vor.u32 %v9342, 8388608
    %v9344 = vsub.s32 0, %v9343
    %v9345 = vadd.s32 %v9340, 1
    %vm9346 = vcmp.gt.s32.totalorder %v9345, 0
    %v9347 = vsel %vm9346, %v9345, 0
    %v9348 = vshrl.u32 %v9347, 5
    %v9349 = vand.u32 %v9347, 31
    %v9350 = vsub.s32 32, %v9349
    %v9351 = vshrl.u32 683565275, %v9350
    %v9352 = vshll.u32 683565275, %v9349
    %v9353 = vshrl.u32 2475754826, %v9350
    %v9354 = vor.u32 %v9352, %v9353
    %v9355 = vshll.u32 2475754826, %v9349
    %v9356 = vshrl.u32 2131351028, %v9350
    %v9357 = vor.u32 %v9355, %v9356
    %v9358 = vshll.u32 2131351028, %v9349
    %v9359 = vshrl.u32 2102212464, %v9350
    %v9360 = vor.u32 %v9358, %v9359
    %v9361 = vshll.u32 2102212464, %v9349
    %v9362 = vshrl.u32 920167782, %v9350
    %v9363 = vor.u32 %v9361, %v9362
    %v9364 = vshll.u32 920167782, %v9349
    %v9365 = vshrl.u32 1326507024, %v9350
    %v9366 = vor.u32 %v9364, %v9365
    %vm9367 = vcmp.lt.s32.totalorder %v9348, 1
    %vm9368 = vcmp.lt.s32.totalorder %v9348, 2
    %vm9369 = vcmp.lt.s32.totalorder %v9348, 3
    %vm9370 = vcmp.lt.s32.totalorder %v9348, 4
    %v9371 = vsel %vm9367, %v9351, %v9354
    %v9372 = vsel %vm9370, %v9360, 2102212464
    %v9373 = vsel %vm9369, %v9357, %v9372
    %v9374 = vsel %vm9368, %v9371, %v9373
    %v9375 = vsel %vm9367, %v9354, %v9357
    %v9376 = vsel %vm9370, %v9363, 920167782
    %v9377 = vsel %vm9369, %v9360, %v9376
    %v9378 = vsel %vm9368, %v9375, %v9377
    %v9379 = vsel %vm9367, %v9357, %v9360
    %v9380 = vsel %vm9370, %v9366, 1326507024
    %v9381 = vsel %vm9369, %v9363, %v9380
    %v9382 = vsel %vm9368, %v9379, %v9381
    %v9383 = vshll.u32 %v9343, 8
    %v9384 = vmul.u32.u64.compose %v9383, %v9382
    %v9385 = vextract.low.u32 %v9384
    %v9386 = vextract.high.u32 %v9384
    %v9387 = vmul.u32.u64.compose %v9383, %v9378
    %v9388 = vextract.low.u32 %v9387
    %v9389 = vextract.high.u32 %v9387
    %v9390 = vmul.u32 %v9383, %v9374
    %v9391 = vadd.s32 %v9386, %v9388
    %vm9392 = vc.u32 %v9386, %v9388
    %v9393 = vadd.s32 %v9389, 1
    %v9394 = vsel %vm9392, %v9393, %v9389
    %v9395 = vadd.s32 %v9390, %v9394
    %v9396 = vadd.s32 %v9395, 536870912
    %v9397 = vshrl.u32 %v9396, 30
    %v9398 = vshll.u32 %v9397, 30
    %v9399 = vsub.s32 %v9395, %v9398
    %vm9400 = vcmp.lt.s32.totalorder %v9399, 0
    %v9401 = vsub.s32 0, %v9399
    %v9402 = vsel %vm9400, %v9401, %v9399
    %v9403 = vclz %v9402
    %v9404 = vsub.s32 %v9403, 2
    %vm9405 = vcmp.gt.s32.totalorder 0, %v9404
    %v9406 = vsel %vm9405, 0, %v9404
    %v9407 = vsub.s32 32, %v9406
    %v9408 = vshll.u32 %v9399, %v9406
    %v9409 = vshrl.u32 %v9391, %v9407
    %v9410 = vor.u32 %v9408, %v9409
    %v9411 = vsub.s32 4294967266, %v9406
    %v9412 = vadd.s32 %v9411, 127
    %v9413 = vshll.u32 %v9412, 23
    %v9414 = vor.u32 4788187, %v9413
    %v9415 = vand.u32 2147483647, %v9414
    %v9417 = vcvt.s32.f32 %v9410
    %v9418 = vmul.f32 %v9417, %v9415
    %v9419 = vxor.u32 %v9418, 2147483648
    %v9420 = vsel %vm9337, %v9419, %v9418
    %v9421 = vsub.s32 4, %v9397
    %v9422 = vsel %vm9337, %v9421, %v9397
    %v9423 = vsel %vm9336, %v5357, %v9420
    %v9424 = vsel %vm9336, 0, %v9422
    %v9425 = vcosq.f32.pop %v9423
    %v9426 = vsinq.f32.pop %v9423
    %vm9427 = vweird.f32 %v5357
    %v9428 = vadd.s32 %v9424, 3
    %v9429 = vand.u32 %v9428, 3
    %vm9430 = vcmp.lt.s32.totalorder %v9429, 2
    %vm9431 = vcmp.eq.s32.totalorder %v9429, 0
    %v9432 = vxor.u32 %v9426, 2147483648
    %v9433 = vsel %vm9431, %v9425, %v9432
    %vm9434 = vcmp.eq.s32.totalorder %v9429, 2
    %v9435 = vxor.u32 %v9425, 2147483648
    %v9436 = vsel %vm9434, %v9435, %v9426
    %v9437 = vsel %vm9430, %v9433, %v9436
    %v9438 = vsel %vm9427, nan, %v9437
    %v9439 = vand.u32 2147483647, %v5358
    %vm9440 = vcmp.le.f32.partialorder %v9439, 0.7853982
    %vm9441 = vcmp.lt.s32.totalorder %v5358, 0
    %v9442 = vand.u32 %v5358, 2139095040
    %v9443 = vshrl.u32 %v9442, 23
    %v9444 = vsub.s32 %v9443, 127
    %v9445 = vand.u32 2147483647, %v5358
    %v9446 = vand.u32 %v9445, 8388607
    %v9447 = vor.u32 %v9446, 8388608
    %v9448 = vsub.s32 0, %v9447
    %v9449 = vadd.s32 %v9444, 1
    %vm9450 = vcmp.gt.s32.totalorder %v9449, 0
    %v9451 = vsel %vm9450, %v9449, 0
    %v9452 = vshrl.u32 %v9451, 5
    %v9453 = vand.u32 %v9451, 31
    %v9454 = vsub.s32 32, %v9453
    %v9455 = vshrl.u32 683565275, %v9454
    %v9456 = vshll.u32 683565275, %v9453
    %v9457 = vshrl.u32 2475754826, %v9454
    %v9458 = vor.u32 %v9456, %v9457
    %v9459 = vshll.u32 2475754826, %v9453
    %v9460 = vshrl.u32 2131351028, %v9454
    %v9461 = vor.u32 %v9459, %v9460
    %v9462 = vshll.u32 2131351028, %v9453
    %v9463 = vshrl.u32 2102212464, %v9454
    %v9464 = vor.u32 %v9462, %v9463
    %v9465 = vshll.u32 2102212464, %v9453
    %v9466 = vshrl.u32 920167782, %v9454
    %v9467 = vor.u32 %v9465, %v9466
    %v9468 = vshll.u32 920167782, %v9453
    %v9469 = vshrl.u32 1326507024, %v9454
    %v9470 = vor.u32 %v9468, %v9469
    %vm9471 = vcmp.lt.s32.totalorder %v9452, 1
    %vm9472 = vcmp.lt.s32.totalorder %v9452, 2
    %vm9473 = vcmp.lt.s32.totalorder %v9452, 3
    %vm9474 = vcmp.lt.s32.totalorder %v9452, 4
    %v9475 = vsel %vm9471, %v9455, %v9458
    %v9476 = vsel %vm9474, %v9464, 2102212464
    %v9477 = vsel %vm9473, %v9461, %v9476
    %v9478 = vsel %vm9472, %v9475, %v9477
    %v9479 = vsel %vm9471, %v9458, %v9461
    %v9480 = vsel %vm9474, %v9467, 920167782
    %v9481 = vsel %vm9473, %v9464, %v9480
    %v9482 = vsel %vm9472, %v9479, %v9481
    %v9483 = vsel %vm9471, %v9461, %v9464
    %v9484 = vsel %vm9474, %v9470, 1326507024
    %v9485 = vsel %vm9473, %v9467, %v9484
    %v9486 = vsel %vm9472, %v9483, %v9485
    %v9487 = vshll.u32 %v9447, 8
    %v9488 = vmul.u32.u64.compose %v9487, %v9486
    %v9489 = vextract.low.u32 %v9488
    %v9490 = vextract.high.u32 %v9488
    %v9491 = vmul.u32.u64.compose %v9487, %v9482
    %v9492 = vextract.low.u32 %v9491
    %v9493 = vextract.high.u32 %v9491
    %v9494 = vmul.u32 %v9487, %v9478
    %v9495 = vadd.s32 %v9490, %v9492
    %vm9496 = vc.u32 %v9490, %v9492
    %v9497 = vadd.s32 %v9493, 1
    %v9498 = vsel %vm9496, %v9497, %v9493
    %v9499 = vadd.s32 %v9494, %v9498
    %v9500 = vadd.s32 %v9499, 536870912
    %v9501 = vshrl.u32 %v9500, 30
    %v9502 = vshll.u32 %v9501, 30
    %v9503 = vsub.s32 %v9499, %v9502
    %vm9504 = vcmp.lt.s32.totalorder %v9503, 0
    %v9505 = vsub.s32 0, %v9503
    %v9506 = vsel %vm9504, %v9505, %v9503
    %v9507 = vclz %v9506
    %v9508 = vsub.s32 %v9507, 2
    %vm9509 = vcmp.gt.s32.totalorder 0, %v9508
    %v9510 = vsel %vm9509, 0, %v9508
    %v9511 = vsub.s32 32, %v9510
    %v9512 = vshll.u32 %v9503, %v9510
    %v9513 = vshrl.u32 %v9495, %v9511
    %v9514 = vor.u32 %v9512, %v9513
    %v9515 = vsub.s32 4294967266, %v9510
    %v9516 = vadd.s32 %v9515, 127
    %v9517 = vshll.u32 %v9516, 23
    %v9518 = vor.u32 4788187, %v9517
    %v9519 = vand.u32 2147483647, %v9518
    %v9521 = vcvt.s32.f32 %v9514
    %v9522 = vmul.f32 %v9521, %v9519
    %v9523 = vxor.u32 %v9522, 2147483648
    %v9524 = vsel %vm9441, %v9523, %v9522
    %v9525 = vsub.s32 4, %v9501
    %v9526 = vsel %vm9441, %v9525, %v9501
    %v9527 = vsel %vm9440, %v5358, %v9524
    %v9528 = vsel %vm9440, 0, %v9526
    %v9529 = vcosq.f32.pop %v9527
    %v9530 = vsinq.f32.pop %v9527
    %vm9531 = vweird.f32 %v5358
    %v9532 = vadd.s32 %v9528, 3
    %v9533 = vand.u32 %v9532, 3
    %vm9534 = vcmp.lt.s32.totalorder %v9533, 2
    %vm9535 = vcmp.eq.s32.totalorder %v9533, 0
    %v9536 = vxor.u32 %v9530, 2147483648
    %v9537 = vsel %vm9535, %v9529, %v9536
    %vm9538 = vcmp.eq.s32.totalorder %v9533, 2
    %v9539 = vxor.u32 %v9529, 2147483648
    %v9540 = vsel %vm9538, %v9539, %v9530
    %v9541 = vsel %vm9534, %v9537, %v9540
    %v9542 = vsel %vm9531, nan, %v9541
    %v9543 = vand.u32 2147483647, %v5359
    %vm9544 = vcmp.le.f32.partialorder %v9543, 0.7853982
    %vm9545 = vcmp.lt.s32.totalorder %v5359, 0
    %v9546 = vand.u32 %v5359, 2139095040
    %v9547 = vshrl.u32 %v9546, 23
    %v9548 = vsub.s32 %v9547, 127
    %v9549 = vand.u32 2147483647, %v5359
    %v9550 = vand.u32 %v9549, 8388607
    %v9551 = vor.u32 %v9550, 8388608
    %v9552 = vsub.s32 0, %v9551
    %v9553 = vadd.s32 %v9548, 1
    %vm9554 = vcmp.gt.s32.totalorder %v9553, 0
    %v9555 = vsel %vm9554, %v9553, 0
    %v9556 = vshrl.u32 %v9555, 5
    %v9557 = vand.u32 %v9555, 31
    %v9558 = vsub.s32 32, %v9557
    %v9559 = vshrl.u32 683565275, %v9558
    %v9560 = vshll.u32 683565275, %v9557
    %v9561 = vshrl.u32 2475754826, %v9558
    %v9562 = vor.u32 %v9560, %v9561
    %v9563 = vshll.u32 2475754826, %v9557
    %v9564 = vshrl.u32 2131351028, %v9558
    %v9565 = vor.u32 %v9563, %v9564
    %v9566 = vshll.u32 2131351028, %v9557
    %v9567 = vshrl.u32 2102212464, %v9558
    %v9568 = vor.u32 %v9566, %v9567
    %v9569 = vshll.u32 2102212464, %v9557
    %v9570 = vshrl.u32 920167782, %v9558
    %v9571 = vor.u32 %v9569, %v9570
    %v9572 = vshll.u32 920167782, %v9557
    %v9573 = vshrl.u32 1326507024, %v9558
    %v9574 = vor.u32 %v9572, %v9573
    %vm9575 = vcmp.lt.s32.totalorder %v9556, 1
    %vm9576 = vcmp.lt.s32.totalorder %v9556, 2
    %vm9577 = vcmp.lt.s32.totalorder %v9556, 3
    %vm9578 = vcmp.lt.s32.totalorder %v9556, 4
    %v9579 = vsel %vm9575, %v9559, %v9562
    %v9580 = vsel %vm9578, %v9568, 2102212464
    %v9581 = vsel %vm9577, %v9565, %v9580
    %v9582 = vsel %vm9576, %v9579, %v9581
    %v9583 = vsel %vm9575, %v9562, %v9565
    %v9584 = vsel %vm9578, %v9571, 920167782
    %v9585 = vsel %vm9577, %v9568, %v9584
    %v9586 = vsel %vm9576, %v9583, %v9585
    %v9587 = vsel %vm9575, %v9565, %v9568
    %v9588 = vsel %vm9578, %v9574, 1326507024
    %v9589 = vsel %vm9577, %v9571, %v9588
    %v9590 = vsel %vm9576, %v9587, %v9589
    %v9591 = vshll.u32 %v9551, 8
    %v9592 = vmul.u32.u64.compose %v9591, %v9590
    %v9593 = vextract.low.u32 %v9592
    %v9594 = vextract.high.u32 %v9592
    %v9595 = vmul.u32.u64.compose %v9591, %v9586
    %v9596 = vextract.low.u32 %v9595
    %v9597 = vextract.high.u32 %v9595
    %v9598 = vmul.u32 %v9591, %v9582
    %v9599 = vadd.s32 %v9594, %v9596
    %vm9600 = vc.u32 %v9594, %v9596
    %v9601 = vadd.s32 %v9597, 1
    %v9602 = vsel %vm9600, %v9601, %v9597
    %v9603 = vadd.s32 %v9598, %v9602
    %v9604 = vadd.s32 %v9603, 536870912
    %v9605 = vshrl.u32 %v9604, 30
    %v9606 = vshll.u32 %v9605, 30
    %v9607 = vsub.s32 %v9603, %v9606
    %vm9608 = vcmp.lt.s32.totalorder %v9607, 0
    %v9609 = vsub.s32 0, %v9607
    %v9610 = vsel %vm9608, %v9609, %v9607
    %v9611 = vclz %v9610
    %v9612 = vsub.s32 %v9611, 2
    %vm9613 = vcmp.gt.s32.totalorder 0, %v9612
    %v9614 = vsel %vm9613, 0, %v9612
    %v9615 = vsub.s32 32, %v9614
    %v9616 = vshll.u32 %v9607, %v9614
    %v9617 = vshrl.u32 %v9599, %v9615
    %v9618 = vor.u32 %v9616, %v9617
    %v9619 = vsub.s32 4294967266, %v9614
    %v9620 = vadd.s32 %v9619, 127
    %v9621 = vshll.u32 %v9620, 23
    %v9622 = vor.u32 4788187, %v9621
    %v9623 = vand.u32 2147483647, %v9622
    %v9625 = vcvt.s32.f32 %v9618
    %v9626 = vmul.f32 %v9625, %v9623
    %v9627 = vxor.u32 %v9626, 2147483648
    %v9628 = vsel %vm9545, %v9627, %v9626
    %v9629 = vsub.s32 4, %v9605
    %v9630 = vsel %vm9545, %v9629, %v9605
    %v9631 = vsel %vm9544, %v5359, %v9628
    %v9632 = vsel %vm9544, 0, %v9630
    %v9633 = vcosq.f32.pop %v9631
    %v9634 = vsinq.f32.pop %v9631
    %vm9635 = vweird.f32 %v5359
    %v9636 = vadd.s32 %v9632, 3
    %v9637 = vand.u32 %v9636, 3
    %vm9638 = vcmp.lt.s32.totalorder %v9637, 2
    %vm9639 = vcmp.eq.s32.totalorder %v9637, 0
    %v9640 = vxor.u32 %v9634, 2147483648
    %v9641 = vsel %vm9639, %v9633, %v9640
    %vm9642 = vcmp.eq.s32.totalorder %v9637, 2
    %v9643 = vxor.u32 %v9633, 2147483648
    %v9644 = vsel %vm9642, %v9643, %v9634
    %v9645 = vsel %vm9638, %v9641, %v9644
    %v9646 = vsel %vm9635, nan, %v9645
    %v9647 = vand.u32 2147483647, %v5360
    %vm9648 = vcmp.le.f32.partialorder %v9647, 0.7853982
    %vm9649 = vcmp.lt.s32.totalorder %v5360, 0
    %v9650 = vand.u32 %v5360, 2139095040
    %v9651 = vshrl.u32 %v9650, 23
    %v9652 = vsub.s32 %v9651, 127
    %v9653 = vand.u32 2147483647, %v5360
    %v9654 = vand.u32 %v9653, 8388607
    %v9655 = vor.u32 %v9654, 8388608
    %v9656 = vsub.s32 0, %v9655
    %v9657 = vadd.s32 %v9652, 1
    %vm9658 = vcmp.gt.s32.totalorder %v9657, 0
    %v9659 = vsel %vm9658, %v9657, 0
    %v9660 = vshrl.u32 %v9659, 5
    %v9661 = vand.u32 %v9659, 31
    %v9662 = vsub.s32 32, %v9661
    %v9663 = vshrl.u32 683565275, %v9662
    %v9664 = vshll.u32 683565275, %v9661
    %v9665 = vshrl.u32 2475754826, %v9662
    %v9666 = vor.u32 %v9664, %v9665
    %v9667 = vshll.u32 2475754826, %v9661
    %v9668 = vshrl.u32 2131351028, %v9662
    %v9669 = vor.u32 %v9667, %v9668
    %v9670 = vshll.u32 2131351028, %v9661
    %v9671 = vshrl.u32 2102212464, %v9662
    %v9672 = vor.u32 %v9670, %v9671
    %v9673 = vshll.u32 2102212464, %v9661
    %v9674 = vshrl.u32 920167782, %v9662
    %v9675 = vor.u32 %v9673, %v9674
    %v9676 = vshll.u32 920167782, %v9661
    %v9677 = vshrl.u32 1326507024, %v9662
    %v9678 = vor.u32 %v9676, %v9677
    %vm9679 = vcmp.lt.s32.totalorder %v9660, 1
    %vm9680 = vcmp.lt.s32.totalorder %v9660, 2
    %vm9681 = vcmp.lt.s32.totalorder %v9660, 3
    %vm9682 = vcmp.lt.s32.totalorder %v9660, 4
    %v9683 = vsel %vm9679, %v9663, %v9666
    %v9684 = vsel %vm9682, %v9672, 2102212464
    %v9685 = vsel %vm9681, %v9669, %v9684
    %v9686 = vsel %vm9680, %v9683, %v9685
    %v9687 = vsel %vm9679, %v9666, %v9669
    %v9688 = vsel %vm9682, %v9675, 920167782
    %v9689 = vsel %vm9681, %v9672, %v9688
    %v9690 = vsel %vm9680, %v9687, %v9689
    %v9691 = vsel %vm9679, %v9669, %v9672
    %v9692 = vsel %vm9682, %v9678, 1326507024
    %v9693 = vsel %vm9681, %v9675, %v9692
    %v9694 = vsel %vm9680, %v9691, %v9693
    %v9695 = vshll.u32 %v9655, 8
    %v9696 = vmul.u32.u64.compose %v9695, %v9694
    %v9697 = vextract.low.u32 %v9696
    %v9698 = vextract.high.u32 %v9696
    %v9699 = vmul.u32.u64.compose %v9695, %v9690
    %v9700 = vextract.low.u32 %v9699
    %v9701 = vextract.high.u32 %v9699
    %v9702 = vmul.u32 %v9695, %v9686
    %v9703 = vadd.s32 %v9698, %v9700
    %vm9704 = vc.u32 %v9698, %v9700
    %v9705 = vadd.s32 %v9701, 1
    %v9706 = vsel %vm9704, %v9705, %v9701
    %v9707 = vadd.s32 %v9702, %v9706
    %v9708 = vadd.s32 %v9707, 536870912
    %v9709 = vshrl.u32 %v9708, 30
    %v9710 = vshll.u32 %v9709, 30
    %v9711 = vsub.s32 %v9707, %v9710
    %vm9712 = vcmp.lt.s32.totalorder %v9711, 0
    %v9713 = vsub.s32 0, %v9711
    %v9714 = vsel %vm9712, %v9713, %v9711
    %v9715 = vclz %v9714
    %v9716 = vsub.s32 %v9715, 2
    %vm9717 = vcmp.gt.s32.totalorder 0, %v9716
    %v9718 = vsel %vm9717, 0, %v9716
    %v9719 = vsub.s32 32, %v9718
    %v9720 = vshll.u32 %v9711, %v9718
    %v9721 = vshrl.u32 %v9703, %v9719
    %v9722 = vor.u32 %v9720, %v9721
    %v9723 = vsub.s32 4294967266, %v9718
    %v9724 = vadd.s32 %v9723, 127
    %v9725 = vshll.u32 %v9724, 23
    %v9726 = vor.u32 4788187, %v9725
    %v9727 = vand.u32 2147483647, %v9726
    %v9729 = vcvt.s32.f32 %v9722
    %v9730 = vmul.f32 %v9729, %v9727
    %v9731 = vxor.u32 %v9730, 2147483648
    %v9732 = vsel %vm9649, %v9731, %v9730
    %v9733 = vsub.s32 4, %v9709
    %v9734 = vsel %vm9649, %v9733, %v9709
    %v9735 = vsel %vm9648, %v5360, %v9732
    %v9736 = vsel %vm9648, 0, %v9734
    %v9737 = vcosq.f32.pop %v9735
    %v9738 = vsinq.f32.pop %v9735
    %vm9739 = vweird.f32 %v5360
    %v9740 = vadd.s32 %v9736, 3
    %v9741 = vand.u32 %v9740, 3
    %vm9742 = vcmp.lt.s32.totalorder %v9741, 2
    %vm9743 = vcmp.eq.s32.totalorder %v9741, 0
    %v9744 = vxor.u32 %v9738, 2147483648
    %v9745 = vsel %vm9743, %v9737, %v9744
    %vm9746 = vcmp.eq.s32.totalorder %v9741, 2
    %v9747 = vxor.u32 %v9737, 2147483648
    %v9748 = vsel %vm9746, %v9747, %v9738
    %v9749 = vsel %vm9742, %v9745, %v9748
    %v9750 = vsel %vm9739, nan, %v9749
    %v9751 = vand.u32 2147483647, %v5361
    %vm9752 = vcmp.le.f32.partialorder %v9751, 0.7853982
    %vm9753 = vcmp.lt.s32.totalorder %v5361, 0
    %v9754 = vand.u32 %v5361, 2139095040
    %v9755 = vshrl.u32 %v9754, 23
    %v9756 = vsub.s32 %v9755, 127
    %v9757 = vand.u32 2147483647, %v5361
    %v9758 = vand.u32 %v9757, 8388607
    %v9759 = vor.u32 %v9758, 8388608
    %v9760 = vsub.s32 0, %v9759
    %v9761 = vadd.s32 %v9756, 1
    %vm9762 = vcmp.gt.s32.totalorder %v9761, 0
    %v9763 = vsel %vm9762, %v9761, 0
    %v9764 = vshrl.u32 %v9763, 5
    %v9765 = vand.u32 %v9763, 31
    %v9766 = vsub.s32 32, %v9765
    %v9767 = vshrl.u32 683565275, %v9766
    %v9768 = vshll.u32 683565275, %v9765
    %v9769 = vshrl.u32 2475754826, %v9766
    %v9770 = vor.u32 %v9768, %v9769
    %v9771 = vshll.u32 2475754826, %v9765
    %v9772 = vshrl.u32 2131351028, %v9766
    %v9773 = vor.u32 %v9771, %v9772
    %v9774 = vshll.u32 2131351028, %v9765
    %v9775 = vshrl.u32 2102212464, %v9766
    %v9776 = vor.u32 %v9774, %v9775
    %v9777 = vshll.u32 2102212464, %v9765
    %v9778 = vshrl.u32 920167782, %v9766
    %v9779 = vor.u32 %v9777, %v9778
    %v9780 = vshll.u32 920167782, %v9765
    %v9781 = vshrl.u32 1326507024, %v9766
    %v9782 = vor.u32 %v9780, %v9781
    %vm9783 = vcmp.lt.s32.totalorder %v9764, 1
    %vm9784 = vcmp.lt.s32.totalorder %v9764, 2
    %vm9785 = vcmp.lt.s32.totalorder %v9764, 3
    %vm9786 = vcmp.lt.s32.totalorder %v9764, 4
    %v9787 = vsel %vm9783, %v9767, %v9770
    %v9788 = vsel %vm9786, %v9776, 2102212464
    %v9789 = vsel %vm9785, %v9773, %v9788
    %v9790 = vsel %vm9784, %v9787, %v9789
    %v9791 = vsel %vm9783, %v9770, %v9773
    %v9792 = vsel %vm9786, %v9779, 920167782
    %v9793 = vsel %vm9785, %v9776, %v9792
    %v9794 = vsel %vm9784, %v9791, %v9793
    %v9795 = vsel %vm9783, %v9773, %v9776
    %v9796 = vsel %vm9786, %v9782, 1326507024
    %v9797 = vsel %vm9785, %v9779, %v9796
    %v9798 = vsel %vm9784, %v9795, %v9797
    %v9799 = vshll.u32 %v9759, 8
    %v9800 = vmul.u32.u64.compose %v9799, %v9798
    %v9801 = vextract.low.u32 %v9800
    %v9802 = vextract.high.u32 %v9800
    %v9803 = vmul.u32.u64.compose %v9799, %v9794
    %v9804 = vextract.low.u32 %v9803
    %v9805 = vextract.high.u32 %v9803
    %v9806 = vmul.u32 %v9799, %v9790
    %v9807 = vadd.s32 %v9802, %v9804
    %vm9808 = vc.u32 %v9802, %v9804
    %v9809 = vadd.s32 %v9805, 1
    %v9810 = vsel %vm9808, %v9809, %v9805
    %v9811 = vadd.s32 %v9806, %v9810
    %v9812 = vadd.s32 %v9811, 536870912
    %v9813 = vshrl.u32 %v9812, 30
    %v9814 = vshll.u32 %v9813, 30
    %v9815 = vsub.s32 %v9811, %v9814
    %vm9816 = vcmp.lt.s32.totalorder %v9815, 0
    %v9817 = vsub.s32 0, %v9815
    %v9818 = vsel %vm9816, %v9817, %v9815
    %v9819 = vclz %v9818
    %v9820 = vsub.s32 %v9819, 2
    %vm9821 = vcmp.gt.s32.totalorder 0, %v9820
    %v9822 = vsel %vm9821, 0, %v9820
    %v9823 = vsub.s32 32, %v9822
    %v9824 = vshll.u32 %v9815, %v9822
    %v9825 = vshrl.u32 %v9807, %v9823
    %v9826 = vor.u32 %v9824, %v9825
    %v9827 = vsub.s32 4294967266, %v9822
    %v9828 = vadd.s32 %v9827, 127
    %v9829 = vshll.u32 %v9828, 23
    %v9830 = vor.u32 4788187, %v9829
    %v9831 = vand.u32 2147483647, %v9830
    %v9833 = vcvt.s32.f32 %v9826
    %v9834 = vmul.f32 %v9833, %v9831
    %v9835 = vxor.u32 %v9834, 2147483648
    %v9836 = vsel %vm9753, %v9835, %v9834
    %v9837 = vsub.s32 4, %v9813
    %v9838 = vsel %vm9753, %v9837, %v9813
    %v9839 = vsel %vm9752, %v5361, %v9836
    %v9840 = vsel %vm9752, 0, %v9838
    %v9841 = vcosq.f32.pop %v9839
    %v9842 = vsinq.f32.pop %v9839
    %vm9843 = vweird.f32 %v5361
    %v9844 = vadd.s32 %v9840, 3
    %v9845 = vand.u32 %v9844, 3
    %vm9846 = vcmp.lt.s32.totalorder %v9845, 2
    %vm9847 = vcmp.eq.s32.totalorder %v9845, 0
    %v9848 = vxor.u32 %v9842, 2147483648
    %v9849 = vsel %vm9847, %v9841, %v9848
    %vm9850 = vcmp.eq.s32.totalorder %v9845, 2
    %v9851 = vxor.u32 %v9841, 2147483648
    %v9852 = vsel %vm9850, %v9851, %v9842
    %v9853 = vsel %vm9846, %v9849, %v9852
    %v9854 = vsel %vm9843, nan, %v9853
    %v9855 = vand.u32 2147483647, %v5362
    %vm9856 = vcmp.le.f32.partialorder %v9855, 0.7853982
    %vm9857 = vcmp.lt.s32.totalorder %v5362, 0
    %v9858 = vand.u32 %v5362, 2139095040
    %v9859 = vshrl.u32 %v9858, 23
    %v9860 = vsub.s32 %v9859, 127
    %v9861 = vand.u32 2147483647, %v5362
    %v9862 = vand.u32 %v9861, 8388607
    %v9863 = vor.u32 %v9862, 8388608
    %v9864 = vsub.s32 0, %v9863
    %v9865 = vadd.s32 %v9860, 1
    %vm9866 = vcmp.gt.s32.totalorder %v9865, 0
    %v9867 = vsel %vm9866, %v9865, 0
    %v9868 = vshrl.u32 %v9867, 5
    %v9869 = vand.u32 %v9867, 31
    %v9870 = vsub.s32 32, %v9869
    %v9871 = vshrl.u32 683565275, %v9870
    %v9872 = vshll.u32 683565275, %v9869
    %v9873 = vshrl.u32 2475754826, %v9870
    %v9874 = vor.u32 %v9872, %v9873
    %v9875 = vshll.u32 2475754826, %v9869
    %v9876 = vshrl.u32 2131351028, %v9870
    %v9877 = vor.u32 %v9875, %v9876
    %v9878 = vshll.u32 2131351028, %v9869
    %v9879 = vshrl.u32 2102212464, %v9870
    %v9880 = vor.u32 %v9878, %v9879
    %v9881 = vshll.u32 2102212464, %v9869
    %v9882 = vshrl.u32 920167782, %v9870
    %v9883 = vor.u32 %v9881, %v9882
    %v9884 = vshll.u32 920167782, %v9869
    %v9885 = vshrl.u32 1326507024, %v9870
    %v9886 = vor.u32 %v9884, %v9885
    %vm9887 = vcmp.lt.s32.totalorder %v9868, 1
    %vm9888 = vcmp.lt.s32.totalorder %v9868, 2
    %vm9889 = vcmp.lt.s32.totalorder %v9868, 3
    %vm9890 = vcmp.lt.s32.totalorder %v9868, 4
    %v9891 = vsel %vm9887, %v9871, %v9874
    %v9892 = vsel %vm9890, %v9880, 2102212464
    %v9893 = vsel %vm9889, %v9877, %v9892
    %v9894 = vsel %vm9888, %v9891, %v9893
    %v9895 = vsel %vm9887, %v9874, %v9877
    %v9896 = vsel %vm9890, %v9883, 920167782
    %v9897 = vsel %vm9889, %v9880, %v9896
    %v9898 = vsel %vm9888, %v9895, %v9897
    %v9899 = vsel %vm9887, %v9877, %v9880
    %v9900 = vsel %vm9890, %v9886, 1326507024
    %v9901 = vsel %vm9889, %v9883, %v9900
    %v9902 = vsel %vm9888, %v9899, %v9901
    %v9903 = vshll.u32 %v9863, 8
    %v9904 = vmul.u32.u64.compose %v9903, %v9902
    %v9905 = vextract.low.u32 %v9904
    %v9906 = vextract.high.u32 %v9904
    %v9907 = vmul.u32.u64.compose %v9903, %v9898
    %v9908 = vextract.low.u32 %v9907
    %v9909 = vextract.high.u32 %v9907
    %v9910 = vmul.u32 %v9903, %v9894
    %v9911 = vadd.s32 %v9906, %v9908
    %vm9912 = vc.u32 %v9906, %v9908
    %v9913 = vadd.s32 %v9909, 1
    %v9914 = vsel %vm9912, %v9913, %v9909
    %v9915 = vadd.s32 %v9910, %v9914
    %v9916 = vadd.s32 %v9915, 536870912
    %v9917 = vshrl.u32 %v9916, 30
    %v9918 = vshll.u32 %v9917, 30
    %v9919 = vsub.s32 %v9915, %v9918
    %vm9920 = vcmp.lt.s32.totalorder %v9919, 0
    %v9921 = vsub.s32 0, %v9919
    %v9922 = vsel %vm9920, %v9921, %v9919
    %v9923 = vclz %v9922
    %v9924 = vsub.s32 %v9923, 2
    %vm9925 = vcmp.gt.s32.totalorder 0, %v9924
    %v9926 = vsel %vm9925, 0, %v9924
    %v9927 = vsub.s32 32, %v9926
    %v9928 = vshll.u32 %v9919, %v9926
    %v9929 = vshrl.u32 %v9911, %v9927
    %v9930 = vor.u32 %v9928, %v9929
    %v9931 = vsub.s32 4294967266, %v9926
    %v9932 = vadd.s32 %v9931, 127
    %v9933 = vshll.u32 %v9932, 23
    %v9934 = vor.u32 4788187, %v9933
    %v9935 = vand.u32 2147483647, %v9934
    %v9937 = vcvt.s32.f32 %v9930
    %v9938 = vmul.f32 %v9937, %v9935
    %v9939 = vxor.u32 %v9938, 2147483648
    %v9940 = vsel %vm9857, %v9939, %v9938
    %v9941 = vsub.s32 4, %v9917
    %v9942 = vsel %vm9857, %v9941, %v9917
    %v9943 = vsel %vm9856, %v5362, %v9940
    %v9944 = vsel %vm9856, 0, %v9942
    %v9945 = vcosq.f32.pop %v9943
    %v9946 = vsinq.f32.pop %v9943
    %vm9947 = vweird.f32 %v5362
    %v9948 = vadd.s32 %v9944, 3
    %v9949 = vand.u32 %v9948, 3
    %vm9950 = vcmp.lt.s32.totalorder %v9949, 2
    %vm9951 = vcmp.eq.s32.totalorder %v9949, 0
    %v9952 = vxor.u32 %v9946, 2147483648
    %v9953 = vsel %vm9951, %v9945, %v9952
    %vm9954 = vcmp.eq.s32.totalorder %v9949, 2
    %v9955 = vxor.u32 %v9945, 2147483648
    %v9956 = vsel %vm9954, %v9955, %v9946
    %v9957 = vsel %vm9950, %v9953, %v9956
    %v9958 = vsel %vm9947, nan, %v9957
    %v9959 = vand.u32 2147483647, %v5363
    %vm9960 = vcmp.le.f32.partialorder %v9959, 0.7853982
    %vm9961 = vcmp.lt.s32.totalorder %v5363, 0
    %v9962 = vand.u32 %v5363, 2139095040
    %v9963 = vshrl.u32 %v9962, 23
    %v9964 = vsub.s32 %v9963, 127
    %v9965 = vand.u32 2147483647, %v5363
    %v9966 = vand.u32 %v9965, 8388607
    %v9967 = vor.u32 %v9966, 8388608
    %v9968 = vsub.s32 0, %v9967
    %v9969 = vadd.s32 %v9964, 1
    %vm9970 = vcmp.gt.s32.totalorder %v9969, 0
    %v9971 = vsel %vm9970, %v9969, 0
    %v9972 = vshrl.u32 %v9971, 5
    %v9973 = vand.u32 %v9971, 31
    %v9974 = vsub.s32 32, %v9973
    %v9975 = vshrl.u32 683565275, %v9974
    %v9976 = vshll.u32 683565275, %v9973
    %v9977 = vshrl.u32 2475754826, %v9974
    %v9978 = vor.u32 %v9976, %v9977
    %v9979 = vshll.u32 2475754826, %v9973
    %v9980 = vshrl.u32 2131351028, %v9974
    %v9981 = vor.u32 %v9979, %v9980
    %v9982 = vshll.u32 2131351028, %v9973
    %v9983 = vshrl.u32 2102212464, %v9974
    %v9984 = vor.u32 %v9982, %v9983
    %v9985 = vshll.u32 2102212464, %v9973
    %v9986 = vshrl.u32 920167782, %v9974
    %v9987 = vor.u32 %v9985, %v9986
    %v9988 = vshll.u32 920167782, %v9973
    %v9989 = vshrl.u32 1326507024, %v9974
    %v9990 = vor.u32 %v9988, %v9989
    %vm9991 = vcmp.lt.s32.totalorder %v9972, 1
    %vm9992 = vcmp.lt.s32.totalorder %v9972, 2
    %vm9993 = vcmp.lt.s32.totalorder %v9972, 3
    %vm9994 = vcmp.lt.s32.totalorder %v9972, 4
    %v9995 = vsel %vm9991, %v9975, %v9978
    %v9996 = vsel %vm9994, %v9984, 2102212464
    %v9997 = vsel %vm9993, %v9981, %v9996
    %v9998 = vsel %vm9992, %v9995, %v9997
    %v9999 = vsel %vm9991, %v9978, %v9981
    %v10000 = vsel %vm9994, %v9987, 920167782
    %v10001 = vsel %vm9993, %v9984, %v10000
    %v10002 = vsel %vm9992, %v9999, %v10001
    %v10003 = vsel %vm9991, %v9981, %v9984
    %v10004 = vsel %vm9994, %v9990, 1326507024
    %v10005 = vsel %vm9993, %v9987, %v10004
    %v10006 = vsel %vm9992, %v10003, %v10005
    %v10007 = vshll.u32 %v9967, 8
    %v10008 = vmul.u32.u64.compose %v10007, %v10006
    %v10009 = vextract.low.u32 %v10008
    %v10010 = vextract.high.u32 %v10008
    %v10011 = vmul.u32.u64.compose %v10007, %v10002
    %v10012 = vextract.low.u32 %v10011
    %v10013 = vextract.high.u32 %v10011
    %v10014 = vmul.u32 %v10007, %v9998
    %v10015 = vadd.s32 %v10010, %v10012
    %vm10016 = vc.u32 %v10010, %v10012
    %v10017 = vadd.s32 %v10013, 1
    %v10018 = vsel %vm10016, %v10017, %v10013
    %v10019 = vadd.s32 %v10014, %v10018
    %v10020 = vadd.s32 %v10019, 536870912
    %v10021 = vshrl.u32 %v10020, 30
    %v10022 = vshll.u32 %v10021, 30
    %v10023 = vsub.s32 %v10019, %v10022
    %vm10024 = vcmp.lt.s32.totalorder %v10023, 0
    %v10025 = vsub.s32 0, %v10023
    %v10026 = vsel %vm10024, %v10025, %v10023
    %v10027 = vclz %v10026
    %v10028 = vsub.s32 %v10027, 2
    %vm10029 = vcmp.gt.s32.totalorder 0, %v10028
    %v10030 = vsel %vm10029, 0, %v10028
    %v10031 = vsub.s32 32, %v10030
    %v10032 = vshll.u32 %v10023, %v10030
    %v10033 = vshrl.u32 %v10015, %v10031
    %v10034 = vor.u32 %v10032, %v10033
    %v10035 = vsub.s32 4294967266, %v10030
    %v10036 = vadd.s32 %v10035, 127
    %v10037 = vshll.u32 %v10036, 23
    %v10038 = vor.u32 4788187, %v10037
    %v10039 = vand.u32 2147483647, %v10038
    %v10041 = vcvt.s32.f32 %v10034
    %v10042 = vmul.f32 %v10041, %v10039
    %v10043 = vxor.u32 %v10042, 2147483648
    %v10044 = vsel %vm9961, %v10043, %v10042
    %v10045 = vsub.s32 4, %v10021
    %v10046 = vsel %vm9961, %v10045, %v10021
    %v10047 = vsel %vm9960, %v5363, %v10044
    %v10048 = vsel %vm9960, 0, %v10046
    %v10049 = vcosq.f32.pop %v10047
    %v10050 = vsinq.f32.pop %v10047
    %vm10051 = vweird.f32 %v5363
    %v10052 = vadd.s32 %v10048, 3
    %v10053 = vand.u32 %v10052, 3
    %vm10054 = vcmp.lt.s32.totalorder %v10053, 2
    %vm10055 = vcmp.eq.s32.totalorder %v10053, 0
    %v10056 = vxor.u32 %v10050, 2147483648
    %v10057 = vsel %vm10055, %v10049, %v10056
    %vm10058 = vcmp.eq.s32.totalorder %v10053, 2
    %v10059 = vxor.u32 %v10049, 2147483648
    %v10060 = vsel %vm10058, %v10059, %v10050
    %v10061 = vsel %vm10054, %v10057, %v10060
    %v10062 = vsel %vm10051, nan, %v10061
    %v10063 = vand.u32 2147483647, %v5364
    %vm10064 = vcmp.le.f32.partialorder %v10063, 0.7853982
    %vm10065 = vcmp.lt.s32.totalorder %v5364, 0
    %v10066 = vand.u32 %v5364, 2139095040
    %v10067 = vshrl.u32 %v10066, 23
    %v10068 = vsub.s32 %v10067, 127
    %v10069 = vand.u32 2147483647, %v5364
    %v10070 = vand.u32 %v10069, 8388607
    %v10071 = vor.u32 %v10070, 8388608
    %v10072 = vsub.s32 0, %v10071
    %v10073 = vadd.s32 %v10068, 1
    %vm10074 = vcmp.gt.s32.totalorder %v10073, 0
    %v10075 = vsel %vm10074, %v10073, 0
    %v10076 = vshrl.u32 %v10075, 5
    %v10077 = vand.u32 %v10075, 31
    %v10078 = vsub.s32 32, %v10077
    %v10079 = vshrl.u32 683565275, %v10078
    %v10080 = vshll.u32 683565275, %v10077
    %v10081 = vshrl.u32 2475754826, %v10078
    %v10082 = vor.u32 %v10080, %v10081
    %v10083 = vshll.u32 2475754826, %v10077
    %v10084 = vshrl.u32 2131351028, %v10078
    %v10085 = vor.u32 %v10083, %v10084
    %v10086 = vshll.u32 2131351028, %v10077
    %v10087 = vshrl.u32 2102212464, %v10078
    %v10088 = vor.u32 %v10086, %v10087
    %v10089 = vshll.u32 2102212464, %v10077
    %v10090 = vshrl.u32 920167782, %v10078
    %v10091 = vor.u32 %v10089, %v10090
    %v10092 = vshll.u32 920167782, %v10077
    %v10093 = vshrl.u32 1326507024, %v10078
    %v10094 = vor.u32 %v10092, %v10093
    %vm10095 = vcmp.lt.s32.totalorder %v10076, 1
    %vm10096 = vcmp.lt.s32.totalorder %v10076, 2
    %vm10097 = vcmp.lt.s32.totalorder %v10076, 3
    %vm10098 = vcmp.lt.s32.totalorder %v10076, 4
    %v10099 = vsel %vm10095, %v10079, %v10082
    %v10100 = vsel %vm10098, %v10088, 2102212464
    %v10101 = vsel %vm10097, %v10085, %v10100
    %v10102 = vsel %vm10096, %v10099, %v10101
    %v10103 = vsel %vm10095, %v10082, %v10085
    %v10104 = vsel %vm10098, %v10091, 920167782
    %v10105 = vsel %vm10097, %v10088, %v10104
    %v10106 = vsel %vm10096, %v10103, %v10105
    %v10107 = vsel %vm10095, %v10085, %v10088
    %v10108 = vsel %vm10098, %v10094, 1326507024
    %v10109 = vsel %vm10097, %v10091, %v10108
    %v10110 = vsel %vm10096, %v10107, %v10109
    %v10111 = vshll.u32 %v10071, 8
    %v10112 = vmul.u32.u64.compose %v10111, %v10110
    %v10113 = vextract.low.u32 %v10112
    %v10114 = vextract.high.u32 %v10112
    %v10115 = vmul.u32.u64.compose %v10111, %v10106
    %v10116 = vextract.low.u32 %v10115
    %v10117 = vextract.high.u32 %v10115
    %v10118 = vmul.u32 %v10111, %v10102
    %v10119 = vadd.s32 %v10114, %v10116
    %vm10120 = vc.u32 %v10114, %v10116
    %v10121 = vadd.s32 %v10117, 1
    %v10122 = vsel %vm10120, %v10121, %v10117
    %v10123 = vadd.s32 %v10118, %v10122
    %v10124 = vadd.s32 %v10123, 536870912
    %v10125 = vshrl.u32 %v10124, 30
    %v10126 = vshll.u32 %v10125, 30
    %v10127 = vsub.s32 %v10123, %v10126
    %vm10128 = vcmp.lt.s32.totalorder %v10127, 0
    %v10129 = vsub.s32 0, %v10127
    %v10130 = vsel %vm10128, %v10129, %v10127
    %v10131 = vclz %v10130
    %v10132 = vsub.s32 %v10131, 2
    %vm10133 = vcmp.gt.s32.totalorder 0, %v10132
    %v10134 = vsel %vm10133, 0, %v10132
    %v10135 = vsub.s32 32, %v10134
    %v10136 = vshll.u32 %v10127, %v10134
    %v10137 = vshrl.u32 %v10119, %v10135
    %v10138 = vor.u32 %v10136, %v10137
    %v10139 = vsub.s32 4294967266, %v10134
    %v10140 = vadd.s32 %v10139, 127
    %v10141 = vshll.u32 %v10140, 23
    %v10142 = vor.u32 4788187, %v10141
    %v10143 = vand.u32 2147483647, %v10142
    %v10145 = vcvt.s32.f32 %v10138
    %v10146 = vmul.f32 %v10145, %v10143
    %v10147 = vxor.u32 %v10146, 2147483648
    %v10148 = vsel %vm10065, %v10147, %v10146
    %v10149 = vsub.s32 4, %v10125
    %v10150 = vsel %vm10065, %v10149, %v10125
    %v10151 = vsel %vm10064, %v5364, %v10148
    %v10152 = vsel %vm10064, 0, %v10150
    %v10153 = vcosq.f32.pop %v10151
    %v10154 = vsinq.f32.pop %v10151
    %vm10155 = vweird.f32 %v5364
    %v10156 = vadd.s32 %v10152, 3
    %v10157 = vand.u32 %v10156, 3
    %vm10158 = vcmp.lt.s32.totalorder %v10157, 2
    %vm10159 = vcmp.eq.s32.totalorder %v10157, 0
    %v10160 = vxor.u32 %v10154, 2147483648
    %v10161 = vsel %vm10159, %v10153, %v10160
    %vm10162 = vcmp.eq.s32.totalorder %v10157, 2
    %v10163 = vxor.u32 %v10153, 2147483648
    %v10164 = vsel %vm10162, %v10163, %v10154
    %v10165 = vsel %vm10158, %v10161, %v10164
    %v10166 = vsel %vm10155, nan, %v10165
    %v10167 = vand.u32 2147483647, %v5365
    %vm10168 = vcmp.le.f32.partialorder %v10167, 0.7853982
    %vm10169 = vcmp.lt.s32.totalorder %v5365, 0
    %v10170 = vand.u32 %v5365, 2139095040
    %v10171 = vshrl.u32 %v10170, 23
    %v10172 = vsub.s32 %v10171, 127
    %v10173 = vand.u32 2147483647, %v5365
    %v10174 = vand.u32 %v10173, 8388607
    %v10175 = vor.u32 %v10174, 8388608
    %v10176 = vsub.s32 0, %v10175
    %v10177 = vadd.s32 %v10172, 1
    %vm10178 = vcmp.gt.s32.totalorder %v10177, 0
    %v10179 = vsel %vm10178, %v10177, 0
    %v10180 = vshrl.u32 %v10179, 5
    %v10181 = vand.u32 %v10179, 31
    %v10182 = vsub.s32 32, %v10181
    %v10183 = vshrl.u32 683565275, %v10182
    %v10184 = vshll.u32 683565275, %v10181
    %v10185 = vshrl.u32 2475754826, %v10182
    %v10186 = vor.u32 %v10184, %v10185
    %v10187 = vshll.u32 2475754826, %v10181
    %v10188 = vshrl.u32 2131351028, %v10182
    %v10189 = vor.u32 %v10187, %v10188
    %v10190 = vshll.u32 2131351028, %v10181
    %v10191 = vshrl.u32 2102212464, %v10182
    %v10192 = vor.u32 %v10190, %v10191
    %v10193 = vshll.u32 2102212464, %v10181
    %v10194 = vshrl.u32 920167782, %v10182
    %v10195 = vor.u32 %v10193, %v10194
    %v10196 = vshll.u32 920167782, %v10181
    %v10197 = vshrl.u32 1326507024, %v10182
    %v10198 = vor.u32 %v10196, %v10197
    %vm10199 = vcmp.lt.s32.totalorder %v10180, 1
    %vm10200 = vcmp.lt.s32.totalorder %v10180, 2
    %vm10201 = vcmp.lt.s32.totalorder %v10180, 3
    %vm10202 = vcmp.lt.s32.totalorder %v10180, 4
    %v10203 = vsel %vm10199, %v10183, %v10186
    %v10204 = vsel %vm10202, %v10192, 2102212464
    %v10205 = vsel %vm10201, %v10189, %v10204
    %v10206 = vsel %vm10200, %v10203, %v10205
    %v10207 = vsel %vm10199, %v10186, %v10189
    %v10208 = vsel %vm10202, %v10195, 920167782
    %v10209 = vsel %vm10201, %v10192, %v10208
    %v10210 = vsel %vm10200, %v10207, %v10209
    %v10211 = vsel %vm10199, %v10189, %v10192
    %v10212 = vsel %vm10202, %v10198, 1326507024
    %v10213 = vsel %vm10201, %v10195, %v10212
    %v10214 = vsel %vm10200, %v10211, %v10213
    %v10215 = vshll.u32 %v10175, 8
    %v10216 = vmul.u32.u64.compose %v10215, %v10214
    %v10217 = vextract.low.u32 %v10216
    %v10218 = vextract.high.u32 %v10216
    %v10219 = vmul.u32.u64.compose %v10215, %v10210
    %v10220 = vextract.low.u32 %v10219
    %v10221 = vextract.high.u32 %v10219
    %v10222 = vmul.u32 %v10215, %v10206
    %v10223 = vadd.s32 %v10218, %v10220
    %vm10224 = vc.u32 %v10218, %v10220
    %v10225 = vadd.s32 %v10221, 1
    %v10226 = vsel %vm10224, %v10225, %v10221
    %v10227 = vadd.s32 %v10222, %v10226
    %v10228 = vadd.s32 %v10227, 536870912
    %v10229 = vshrl.u32 %v10228, 30
    %v10230 = vshll.u32 %v10229, 30
    %v10231 = vsub.s32 %v10227, %v10230
    %vm10232 = vcmp.lt.s32.totalorder %v10231, 0
    %v10233 = vsub.s32 0, %v10231
    %v10234 = vsel %vm10232, %v10233, %v10231
    %v10235 = vclz %v10234
    %v10236 = vsub.s32 %v10235, 2
    %vm10237 = vcmp.gt.s32.totalorder 0, %v10236
    %v10238 = vsel %vm10237, 0, %v10236
    %v10239 = vsub.s32 32, %v10238
    %v10240 = vshll.u32 %v10231, %v10238
    %v10241 = vshrl.u32 %v10223, %v10239
    %v10242 = vor.u32 %v10240, %v10241
    %v10243 = vsub.s32 4294967266, %v10238
    %v10244 = vadd.s32 %v10243, 127
    %v10245 = vshll.u32 %v10244, 23
    %v10246 = vor.u32 4788187, %v10245
    %v10247 = vand.u32 2147483647, %v10246
    %v10249 = vcvt.s32.f32 %v10242
    %v10250 = vmul.f32 %v10249, %v10247
    %v10251 = vxor.u32 %v10250, 2147483648
    %v10252 = vsel %vm10169, %v10251, %v10250
    %v10253 = vsub.s32 4, %v10229
    %v10254 = vsel %vm10169, %v10253, %v10229
    %v10255 = vsel %vm10168, %v5365, %v10252
    %v10256 = vsel %vm10168, 0, %v10254
    %v10257 = vcosq.f32.pop %v10255
    %v10258 = vsinq.f32.pop %v10255
    %vm10259 = vweird.f32 %v5365
    %v10260 = vadd.s32 %v10256, 3
    %v10261 = vand.u32 %v10260, 3
    %vm10262 = vcmp.lt.s32.totalorder %v10261, 2
    %vm10263 = vcmp.eq.s32.totalorder %v10261, 0
    %v10264 = vxor.u32 %v10258, 2147483648
    %v10265 = vsel %vm10263, %v10257, %v10264
    %vm10266 = vcmp.eq.s32.totalorder %v10261, 2
    %v10267 = vxor.u32 %v10257, 2147483648
    %v10268 = vsel %vm10266, %v10267, %v10258
    %v10269 = vsel %vm10262, %v10265, %v10268
    %v10270 = vsel %vm10259, nan, %v10269
    %v10271 = vand.u32 2147483647, %v5366
    %vm10272 = vcmp.le.f32.partialorder %v10271, 0.7853982
    %vm10273 = vcmp.lt.s32.totalorder %v5366, 0
    %v10274 = vand.u32 %v5366, 2139095040
    %v10275 = vshrl.u32 %v10274, 23
    %v10276 = vsub.s32 %v10275, 127
    %v10277 = vand.u32 2147483647, %v5366
    %v10278 = vand.u32 %v10277, 8388607
    %v10279 = vor.u32 %v10278, 8388608
    %v10280 = vsub.s32 0, %v10279
    %v10281 = vadd.s32 %v10276, 1
    %vm10282 = vcmp.gt.s32.totalorder %v10281, 0
    %v10283 = vsel %vm10282, %v10281, 0
    %v10284 = vshrl.u32 %v10283, 5
    %v10285 = vand.u32 %v10283, 31
    %v10286 = vsub.s32 32, %v10285
    %v10287 = vshrl.u32 683565275, %v10286
    %v10288 = vshll.u32 683565275, %v10285
    %v10289 = vshrl.u32 2475754826, %v10286
    %v10290 = vor.u32 %v10288, %v10289
    %v10291 = vshll.u32 2475754826, %v10285
    %v10292 = vshrl.u32 2131351028, %v10286
    %v10293 = vor.u32 %v10291, %v10292
    %v10294 = vshll.u32 2131351028, %v10285
    %v10295 = vshrl.u32 2102212464, %v10286
    %v10296 = vor.u32 %v10294, %v10295
    %v10297 = vshll.u32 2102212464, %v10285
    %v10298 = vshrl.u32 920167782, %v10286
    %v10299 = vor.u32 %v10297, %v10298
    %v10300 = vshll.u32 920167782, %v10285
    %v10301 = vshrl.u32 1326507024, %v10286
    %v10302 = vor.u32 %v10300, %v10301
    %vm10303 = vcmp.lt.s32.totalorder %v10284, 1
    %vm10304 = vcmp.lt.s32.totalorder %v10284, 2
    %vm10305 = vcmp.lt.s32.totalorder %v10284, 3
    %vm10306 = vcmp.lt.s32.totalorder %v10284, 4
    %v10307 = vsel %vm10303, %v10287, %v10290
    %v10308 = vsel %vm10306, %v10296, 2102212464
    %v10309 = vsel %vm10305, %v10293, %v10308
    %v10310 = vsel %vm10304, %v10307, %v10309
    %v10311 = vsel %vm10303, %v10290, %v10293
    %v10312 = vsel %vm10306, %v10299, 920167782
    %v10313 = vsel %vm10305, %v10296, %v10312
    %v10314 = vsel %vm10304, %v10311, %v10313
    %v10315 = vsel %vm10303, %v10293, %v10296
    %v10316 = vsel %vm10306, %v10302, 1326507024
    %v10317 = vsel %vm10305, %v10299, %v10316
    %v10318 = vsel %vm10304, %v10315, %v10317
    %v10319 = vshll.u32 %v10279, 8
    %v10320 = vmul.u32.u64.compose %v10319, %v10318
    %v10321 = vextract.low.u32 %v10320
    %v10322 = vextract.high.u32 %v10320
    %v10323 = vmul.u32.u64.compose %v10319, %v10314
    %v10324 = vextract.low.u32 %v10323
    %v10325 = vextract.high.u32 %v10323
    %v10326 = vmul.u32 %v10319, %v10310
    %v10327 = vadd.s32 %v10322, %v10324
    %vm10328 = vc.u32 %v10322, %v10324
    %v10329 = vadd.s32 %v10325, 1
    %v10330 = vsel %vm10328, %v10329, %v10325
    %v10331 = vadd.s32 %v10326, %v10330
    %v10332 = vadd.s32 %v10331, 536870912
    %v10333 = vshrl.u32 %v10332, 30
    %v10334 = vshll.u32 %v10333, 30
    %v10335 = vsub.s32 %v10331, %v10334
    %vm10336 = vcmp.lt.s32.totalorder %v10335, 0
    %v10337 = vsub.s32 0, %v10335
    %v10338 = vsel %vm10336, %v10337, %v10335
    %v10339 = vclz %v10338
    %v10340 = vsub.s32 %v10339, 2
    %vm10341 = vcmp.gt.s32.totalorder 0, %v10340
    %v10342 = vsel %vm10341, 0, %v10340
    %v10343 = vsub.s32 32, %v10342
    %v10344 = vshll.u32 %v10335, %v10342
    %v10345 = vshrl.u32 %v10327, %v10343
    %v10346 = vor.u32 %v10344, %v10345
    %v10347 = vsub.s32 4294967266, %v10342
    %v10348 = vadd.s32 %v10347, 127
    %v10349 = vshll.u32 %v10348, 23
    %v10350 = vor.u32 4788187, %v10349
    %v10351 = vand.u32 2147483647, %v10350
    %v10353 = vcvt.s32.f32 %v10346
    %v10354 = vmul.f32 %v10353, %v10351
    %v10355 = vxor.u32 %v10354, 2147483648
    %v10356 = vsel %vm10273, %v10355, %v10354
    %v10357 = vsub.s32 4, %v10333
    %v10358 = vsel %vm10273, %v10357, %v10333
    %v10359 = vsel %vm10272, %v5366, %v10356
    %v10360 = vsel %vm10272, 0, %v10358
    %v10361 = vcosq.f32.pop %v10359
    %v10362 = vsinq.f32.pop %v10359
    %vm10363 = vweird.f32 %v5366
    %v10364 = vadd.s32 %v10360, 3
    %v10365 = vand.u32 %v10364, 3
    %vm10366 = vcmp.lt.s32.totalorder %v10365, 2
    %vm10367 = vcmp.eq.s32.totalorder %v10365, 0
    %v10368 = vxor.u32 %v10362, 2147483648
    %v10369 = vsel %vm10367, %v10361, %v10368
    %vm10370 = vcmp.eq.s32.totalorder %v10365, 2
    %v10371 = vxor.u32 %v10361, 2147483648
    %v10372 = vsel %vm10370, %v10371, %v10362
    %v10373 = vsel %vm10366, %v10369, %v10372
    %v10374 = vsel %vm10363, nan, %v10373
    %v10375 = vand.u32 2147483647, %v5367
    %vm10376 = vcmp.le.f32.partialorder %v10375, 0.7853982
    %vm10377 = vcmp.lt.s32.totalorder %v5367, 0
    %v10378 = vand.u32 %v5367, 2139095040
    %v10379 = vshrl.u32 %v10378, 23
    %v10380 = vsub.s32 %v10379, 127
    %v10381 = vand.u32 2147483647, %v5367
    %v10382 = vand.u32 %v10381, 8388607
    %v10383 = vor.u32 %v10382, 8388608
    %v10384 = vsub.s32 0, %v10383
    %v10385 = vadd.s32 %v10380, 1
    %vm10386 = vcmp.gt.s32.totalorder %v10385, 0
    %v10387 = vsel %vm10386, %v10385, 0
    %v10388 = vshrl.u32 %v10387, 5
    %v10389 = vand.u32 %v10387, 31
    %v10390 = vsub.s32 32, %v10389
    %v10391 = vshrl.u32 683565275, %v10390
    %v10392 = vshll.u32 683565275, %v10389
    %v10393 = vshrl.u32 2475754826, %v10390
    %v10394 = vor.u32 %v10392, %v10393
    %v10395 = vshll.u32 2475754826, %v10389
    %v10396 = vshrl.u32 2131351028, %v10390
    %v10397 = vor.u32 %v10395, %v10396
    %v10398 = vshll.u32 2131351028, %v10389
    %v10399 = vshrl.u32 2102212464, %v10390
    %v10400 = vor.u32 %v10398, %v10399
    %v10401 = vshll.u32 2102212464, %v10389
    %v10402 = vshrl.u32 920167782, %v10390
    %v10403 = vor.u32 %v10401, %v10402
    %v10404 = vshll.u32 920167782, %v10389
    %v10405 = vshrl.u32 1326507024, %v10390
    %v10406 = vor.u32 %v10404, %v10405
    %vm10407 = vcmp.lt.s32.totalorder %v10388, 1
    %vm10408 = vcmp.lt.s32.totalorder %v10388, 2
    %vm10409 = vcmp.lt.s32.totalorder %v10388, 3
    %vm10410 = vcmp.lt.s32.totalorder %v10388, 4
    %v10411 = vsel %vm10407, %v10391, %v10394
    %v10412 = vsel %vm10410, %v10400, 2102212464
    %v10413 = vsel %vm10409, %v10397, %v10412
    %v10414 = vsel %vm10408, %v10411, %v10413
    %v10415 = vsel %vm10407, %v10394, %v10397
    %v10416 = vsel %vm10410, %v10403, 920167782
    %v10417 = vsel %vm10409, %v10400, %v10416
    %v10418 = vsel %vm10408, %v10415, %v10417
    %v10419 = vsel %vm10407, %v10397, %v10400
    %v10420 = vsel %vm10410, %v10406, 1326507024
    %v10421 = vsel %vm10409, %v10403, %v10420
    %v10422 = vsel %vm10408, %v10419, %v10421
    %v10423 = vshll.u32 %v10383, 8
    %v10424 = vmul.u32.u64.compose %v10423, %v10422
    %v10425 = vextract.low.u32 %v10424
    %v10426 = vextract.high.u32 %v10424
    %v10427 = vmul.u32.u64.compose %v10423, %v10418
    %v10428 = vextract.low.u32 %v10427
    %v10429 = vextract.high.u32 %v10427
    %v10430 = vmul.u32 %v10423, %v10414
    %v10431 = vadd.s32 %v10426, %v10428
    %vm10432 = vc.u32 %v10426, %v10428
    %v10433 = vadd.s32 %v10429, 1
    %v10434 = vsel %vm10432, %v10433, %v10429
    %v10435 = vadd.s32 %v10430, %v10434
    %v10436 = vadd.s32 %v10435, 536870912
    %v10437 = vshrl.u32 %v10436, 30
    %v10438 = vshll.u32 %v10437, 30
    %v10439 = vsub.s32 %v10435, %v10438
    %vm10440 = vcmp.lt.s32.totalorder %v10439, 0
    %v10441 = vsub.s32 0, %v10439
    %v10442 = vsel %vm10440, %v10441, %v10439
    %v10443 = vclz %v10442
    %v10444 = vsub.s32 %v10443, 2
    %vm10445 = vcmp.gt.s32.totalorder 0, %v10444
    %v10446 = vsel %vm10445, 0, %v10444
    %v10447 = vsub.s32 32, %v10446
    %v10448 = vshll.u32 %v10439, %v10446
    %v10449 = vshrl.u32 %v10431, %v10447
    %v10450 = vor.u32 %v10448, %v10449
    %v10451 = vsub.s32 4294967266, %v10446
    %v10452 = vadd.s32 %v10451, 127
    %v10453 = vshll.u32 %v10452, 23
    %v10454 = vor.u32 4788187, %v10453
    %v10455 = vand.u32 2147483647, %v10454
    %v10457 = vcvt.s32.f32 %v10450
    %v10458 = vmul.f32 %v10457, %v10455
    %v10459 = vxor.u32 %v10458, 2147483648
    %v10460 = vsel %vm10377, %v10459, %v10458
    %v10461 = vsub.s32 4, %v10437
    %v10462 = vsel %vm10377, %v10461, %v10437
    %v10463 = vsel %vm10376, %v5367, %v10460
    %v10464 = vsel %vm10376, 0, %v10462
    %v10465 = vcosq.f32.pop %v10463
    %v10466 = vsinq.f32.pop %v10463
    %vm10467 = vweird.f32 %v5367
    %v10468 = vadd.s32 %v10464, 3
    %v10469 = vand.u32 %v10468, 3
    %vm10470 = vcmp.lt.s32.totalorder %v10469, 2
    %vm10471 = vcmp.eq.s32.totalorder %v10469, 0
    %v10472 = vxor.u32 %v10466, 2147483648
    %v10473 = vsel %vm10471, %v10465, %v10472
    %vm10474 = vcmp.eq.s32.totalorder %v10469, 2
    %v10475 = vxor.u32 %v10465, 2147483648
    %v10476 = vsel %vm10474, %v10475, %v10466
    %v10477 = vsel %vm10470, %v10473, %v10476
    %v10478 = vsel %vm10467, nan, %v10477
    %v10479 = vand.u32 2147483647, %v5368
    %vm10480 = vcmp.le.f32.partialorder %v10479, 0.7853982
    %vm10481 = vcmp.lt.s32.totalorder %v5368, 0
    %v10482 = vand.u32 %v5368, 2139095040
    %v10483 = vshrl.u32 %v10482, 23
    %v10484 = vsub.s32 %v10483, 127
    %v10485 = vand.u32 2147483647, %v5368
    %v10486 = vand.u32 %v10485, 8388607
    %v10487 = vor.u32 %v10486, 8388608
    %v10488 = vsub.s32 0, %v10487
    %v10489 = vadd.s32 %v10484, 1
    %vm10490 = vcmp.gt.s32.totalorder %v10489, 0
    %v10491 = vsel %vm10490, %v10489, 0
    %v10492 = vshrl.u32 %v10491, 5
    %v10493 = vand.u32 %v10491, 31
    %v10494 = vsub.s32 32, %v10493
    %v10495 = vshrl.u32 683565275, %v10494
    %v10496 = vshll.u32 683565275, %v10493
    %v10497 = vshrl.u32 2475754826, %v10494
    %v10498 = vor.u32 %v10496, %v10497
    %v10499 = vshll.u32 2475754826, %v10493
    %v10500 = vshrl.u32 2131351028, %v10494
    %v10501 = vor.u32 %v10499, %v10500
    %v10502 = vshll.u32 2131351028, %v10493
    %v10503 = vshrl.u32 2102212464, %v10494
    %v10504 = vor.u32 %v10502, %v10503
    %v10505 = vshll.u32 2102212464, %v10493
    %v10506 = vshrl.u32 920167782, %v10494
    %v10507 = vor.u32 %v10505, %v10506
    %v10508 = vshll.u32 920167782, %v10493
    %v10509 = vshrl.u32 1326507024, %v10494
    %v10510 = vor.u32 %v10508, %v10509
    %vm10511 = vcmp.lt.s32.totalorder %v10492, 1
    %vm10512 = vcmp.lt.s32.totalorder %v10492, 2
    %vm10513 = vcmp.lt.s32.totalorder %v10492, 3
    %vm10514 = vcmp.lt.s32.totalorder %v10492, 4
    %v10515 = vsel %vm10511, %v10495, %v10498
    %v10516 = vsel %vm10514, %v10504, 2102212464
    %v10517 = vsel %vm10513, %v10501, %v10516
    %v10518 = vsel %vm10512, %v10515, %v10517
    %v10519 = vsel %vm10511, %v10498, %v10501
    %v10520 = vsel %vm10514, %v10507, 920167782
    %v10521 = vsel %vm10513, %v10504, %v10520
    %v10522 = vsel %vm10512, %v10519, %v10521
    %v10523 = vsel %vm10511, %v10501, %v10504
    %v10524 = vsel %vm10514, %v10510, 1326507024
    %v10525 = vsel %vm10513, %v10507, %v10524
    %v10526 = vsel %vm10512, %v10523, %v10525
    %v10527 = vshll.u32 %v10487, 8
    %v10528 = vmul.u32.u64.compose %v10527, %v10526
    %v10529 = vextract.low.u32 %v10528
    %v10530 = vextract.high.u32 %v10528
    %v10531 = vmul.u32.u64.compose %v10527, %v10522
    %v10532 = vextract.low.u32 %v10531
    %v10533 = vextract.high.u32 %v10531
    %v10534 = vmul.u32 %v10527, %v10518
    %v10535 = vadd.s32 %v10530, %v10532
    %vm10536 = vc.u32 %v10530, %v10532
    %v10537 = vadd.s32 %v10533, 1
    %v10538 = vsel %vm10536, %v10537, %v10533
    %v10539 = vadd.s32 %v10534, %v10538
    %v10540 = vadd.s32 %v10539, 536870912
    %v10541 = vshrl.u32 %v10540, 30
    %v10542 = vshll.u32 %v10541, 30
    %v10543 = vsub.s32 %v10539, %v10542
    %vm10544 = vcmp.lt.s32.totalorder %v10543, 0
    %v10545 = vsub.s32 0, %v10543
    %v10546 = vsel %vm10544, %v10545, %v10543
    %v10547 = vclz %v10546
    %v10548 = vsub.s32 %v10547, 2
    %vm10549 = vcmp.gt.s32.totalorder 0, %v10548
    %v10550 = vsel %vm10549, 0, %v10548
    %v10551 = vsub.s32 32, %v10550
    %v10552 = vshll.u32 %v10543, %v10550
    %v10553 = vshrl.u32 %v10535, %v10551
    %v10554 = vor.u32 %v10552, %v10553
    %v10555 = vsub.s32 4294967266, %v10550
    %v10556 = vadd.s32 %v10555, 127
    %v10557 = vshll.u32 %v10556, 23
    %v10558 = vor.u32 4788187, %v10557
    %v10559 = vand.u32 2147483647, %v10558
    %v10561 = vcvt.s32.f32 %v10554
    %v10562 = vmul.f32 %v10561, %v10559
    %v10563 = vxor.u32 %v10562, 2147483648
    %v10564 = vsel %vm10481, %v10563, %v10562
    %v10565 = vsub.s32 4, %v10541
    %v10566 = vsel %vm10481, %v10565, %v10541
    %v10567 = vsel %vm10480, %v5368, %v10564
    %v10568 = vsel %vm10480, 0, %v10566
    %v10569 = vcosq.f32.pop %v10567
    %v10570 = vsinq.f32.pop %v10567
    %vm10571 = vweird.f32 %v5368
    %v10572 = vadd.s32 %v10568, 3
    %v10573 = vand.u32 %v10572, 3
    %vm10574 = vcmp.lt.s32.totalorder %v10573, 2
    %vm10575 = vcmp.eq.s32.totalorder %v10573, 0
    %v10576 = vxor.u32 %v10570, 2147483648
    %v10577 = vsel %vm10575, %v10569, %v10576
    %vm10578 = vcmp.eq.s32.totalorder %v10573, 2
    %v10579 = vxor.u32 %v10569, 2147483648
    %v10580 = vsel %vm10578, %v10579, %v10570
    %v10581 = vsel %vm10574, %v10577, %v10580
    %v10582 = vsel %vm10571, nan, %v10581
    %v10583 = vand.u32 2147483647, %v5369
    %vm10584 = vcmp.le.f32.partialorder %v10583, 0.7853982
    %vm10585 = vcmp.lt.s32.totalorder %v5369, 0
    %v10586 = vand.u32 %v5369, 2139095040
    %v10587 = vshrl.u32 %v10586, 23
    %v10588 = vsub.s32 %v10587, 127
    %v10589 = vand.u32 2147483647, %v5369
    %v10590 = vand.u32 %v10589, 8388607
    %v10591 = vor.u32 %v10590, 8388608
    %v10592 = vsub.s32 0, %v10591
    %v10593 = vadd.s32 %v10588, 1
    %vm10594 = vcmp.gt.s32.totalorder %v10593, 0
    %v10595 = vsel %vm10594, %v10593, 0
    %v10596 = vshrl.u32 %v10595, 5
    %v10597 = vand.u32 %v10595, 31
    %v10598 = vsub.s32 32, %v10597
    %v10599 = vshrl.u32 683565275, %v10598
    %v10600 = vshll.u32 683565275, %v10597
    %v10601 = vshrl.u32 2475754826, %v10598
    %v10602 = vor.u32 %v10600, %v10601
    %v10603 = vshll.u32 2475754826, %v10597
    %v10604 = vshrl.u32 2131351028, %v10598
    %v10605 = vor.u32 %v10603, %v10604
    %v10606 = vshll.u32 2131351028, %v10597
    %v10607 = vshrl.u32 2102212464, %v10598
    %v10608 = vor.u32 %v10606, %v10607
    %v10609 = vshll.u32 2102212464, %v10597
    %v10610 = vshrl.u32 920167782, %v10598
    %v10611 = vor.u32 %v10609, %v10610
    %v10612 = vshll.u32 920167782, %v10597
    %v10613 = vshrl.u32 1326507024, %v10598
    %v10614 = vor.u32 %v10612, %v10613
    %vm10615 = vcmp.lt.s32.totalorder %v10596, 1
    %vm10616 = vcmp.lt.s32.totalorder %v10596, 2
    %vm10617 = vcmp.lt.s32.totalorder %v10596, 3
    %vm10618 = vcmp.lt.s32.totalorder %v10596, 4
    %v10619 = vsel %vm10615, %v10599, %v10602
    %v10620 = vsel %vm10618, %v10608, 2102212464
    %v10621 = vsel %vm10617, %v10605, %v10620
    %v10622 = vsel %vm10616, %v10619, %v10621
    %v10623 = vsel %vm10615, %v10602, %v10605
    %v10624 = vsel %vm10618, %v10611, 920167782
    %v10625 = vsel %vm10617, %v10608, %v10624
    %v10626 = vsel %vm10616, %v10623, %v10625
    %v10627 = vsel %vm10615, %v10605, %v10608
    %v10628 = vsel %vm10618, %v10614, 1326507024
    %v10629 = vsel %vm10617, %v10611, %v10628
    %v10630 = vsel %vm10616, %v10627, %v10629
    %v10631 = vshll.u32 %v10591, 8
    %v10632 = vmul.u32.u64.compose %v10631, %v10630
    %v10633 = vextract.low.u32 %v10632
    %v10634 = vextract.high.u32 %v10632
    %v10635 = vmul.u32.u64.compose %v10631, %v10626
    %v10636 = vextract.low.u32 %v10635
    %v10637 = vextract.high.u32 %v10635
    %v10638 = vmul.u32 %v10631, %v10622
    %v10639 = vadd.s32 %v10634, %v10636
    %vm10640 = vc.u32 %v10634, %v10636
    %v10641 = vadd.s32 %v10637, 1
    %v10642 = vsel %vm10640, %v10641, %v10637
    %v10643 = vadd.s32 %v10638, %v10642
    %v10644 = vadd.s32 %v10643, 536870912
    %v10645 = vshrl.u32 %v10644, 30
    %v10646 = vshll.u32 %v10645, 30
    %v10647 = vsub.s32 %v10643, %v10646
    %vm10648 = vcmp.lt.s32.totalorder %v10647, 0
    %v10649 = vsub.s32 0, %v10647
    %v10650 = vsel %vm10648, %v10649, %v10647
    %v10651 = vclz %v10650
    %v10652 = vsub.s32 %v10651, 2
    %vm10653 = vcmp.gt.s32.totalorder 0, %v10652
    %v10654 = vsel %vm10653, 0, %v10652
    %v10655 = vsub.s32 32, %v10654
    %v10656 = vshll.u32 %v10647, %v10654
    %v10657 = vshrl.u32 %v10639, %v10655
    %v10658 = vor.u32 %v10656, %v10657
    %v10659 = vsub.s32 4294967266, %v10654
    %v10660 = vadd.s32 %v10659, 127
    %v10661 = vshll.u32 %v10660, 23
    %v10662 = vor.u32 4788187, %v10661
    %v10663 = vand.u32 2147483647, %v10662
    %v10665 = vcvt.s32.f32 %v10658
    %v10666 = vmul.f32 %v10665, %v10663
    %v10667 = vxor.u32 %v10666, 2147483648
    %v10668 = vsel %vm10585, %v10667, %v10666
    %v10669 = vsub.s32 4, %v10645
    %v10670 = vsel %vm10585, %v10669, %v10645
    %v10671 = vsel %vm10584, %v5369, %v10668
    %v10672 = vsel %vm10584, 0, %v10670
    %v10673 = vcosq.f32.pop %v10671
    %v10674 = vsinq.f32.pop %v10671
    %vm10675 = vweird.f32 %v5369
    %v10676 = vadd.s32 %v10672, 3
    %v10677 = vand.u32 %v10676, 3
    %vm10678 = vcmp.lt.s32.totalorder %v10677, 2
    %vm10679 = vcmp.eq.s32.totalorder %v10677, 0
    %v10680 = vxor.u32 %v10674, 2147483648
    %v10681 = vsel %vm10679, %v10673, %v10680
    %vm10682 = vcmp.eq.s32.totalorder %v10677, 2
    %v10683 = vxor.u32 %v10673, 2147483648
    %v10684 = vsel %vm10682, %v10683, %v10674
    %v10685 = vsel %vm10678, %v10681, %v10684
    %v10686 = vsel %vm10675, nan, %v10685
    %v10687 = vand.u32 2147483647, %v5370
    %vm10688 = vcmp.le.f32.partialorder %v10687, 0.7853982
    %vm10689 = vcmp.lt.s32.totalorder %v5370, 0
    %v10690 = vand.u32 %v5370, 2139095040
    %v10691 = vshrl.u32 %v10690, 23
    %v10692 = vsub.s32 %v10691, 127
    %v10693 = vand.u32 2147483647, %v5370
    %v10694 = vand.u32 %v10693, 8388607
    %v10695 = vor.u32 %v10694, 8388608
    %v10696 = vsub.s32 0, %v10695
    %v10697 = vadd.s32 %v10692, 1
    %vm10698 = vcmp.gt.s32.totalorder %v10697, 0
    %v10699 = vsel %vm10698, %v10697, 0
    %v10700 = vshrl.u32 %v10699, 5
    %v10701 = vand.u32 %v10699, 31
    %v10702 = vsub.s32 32, %v10701
    %v10703 = vshrl.u32 683565275, %v10702
    %v10704 = vshll.u32 683565275, %v10701
    %v10705 = vshrl.u32 2475754826, %v10702
    %v10706 = vor.u32 %v10704, %v10705
    %v10707 = vshll.u32 2475754826, %v10701
    %v10708 = vshrl.u32 2131351028, %v10702
    %v10709 = vor.u32 %v10707, %v10708
    %v10710 = vshll.u32 2131351028, %v10701
    %v10711 = vshrl.u32 2102212464, %v10702
    %v10712 = vor.u32 %v10710, %v10711
    %v10713 = vshll.u32 2102212464, %v10701
    %v10714 = vshrl.u32 920167782, %v10702
    %v10715 = vor.u32 %v10713, %v10714
    %v10716 = vshll.u32 920167782, %v10701
    %v10717 = vshrl.u32 1326507024, %v10702
    %v10718 = vor.u32 %v10716, %v10717
    %vm10719 = vcmp.lt.s32.totalorder %v10700, 1
    %vm10720 = vcmp.lt.s32.totalorder %v10700, 2
    %vm10721 = vcmp.lt.s32.totalorder %v10700, 3
    %vm10722 = vcmp.lt.s32.totalorder %v10700, 4
    %v10723 = vsel %vm10719, %v10703, %v10706
    %v10724 = vsel %vm10722, %v10712, 2102212464
    %v10725 = vsel %vm10721, %v10709, %v10724
    %v10726 = vsel %vm10720, %v10723, %v10725
    %v10727 = vsel %vm10719, %v10706, %v10709
    %v10728 = vsel %vm10722, %v10715, 920167782
    %v10729 = vsel %vm10721, %v10712, %v10728
    %v10730 = vsel %vm10720, %v10727, %v10729
    %v10731 = vsel %vm10719, %v10709, %v10712
    %v10732 = vsel %vm10722, %v10718, 1326507024
    %v10733 = vsel %vm10721, %v10715, %v10732
    %v10734 = vsel %vm10720, %v10731, %v10733
    %v10735 = vshll.u32 %v10695, 8
    %v10736 = vmul.u32.u64.compose %v10735, %v10734
    %v10737 = vextract.low.u32 %v10736
    %v10738 = vextract.high.u32 %v10736
    %v10739 = vmul.u32.u64.compose %v10735, %v10730
    %v10740 = vextract.low.u32 %v10739
    %v10741 = vextract.high.u32 %v10739
    %v10742 = vmul.u32 %v10735, %v10726
    %v10743 = vadd.s32 %v10738, %v10740
    %vm10744 = vc.u32 %v10738, %v10740
    %v10745 = vadd.s32 %v10741, 1
    %v10746 = vsel %vm10744, %v10745, %v10741
    %v10747 = vadd.s32 %v10742, %v10746
    %v10748 = vadd.s32 %v10747, 536870912
    %v10749 = vshrl.u32 %v10748, 30
    %v10750 = vshll.u32 %v10749, 30
    %v10751 = vsub.s32 %v10747, %v10750
    %vm10752 = vcmp.lt.s32.totalorder %v10751, 0
    %v10753 = vsub.s32 0, %v10751
    %v10754 = vsel %vm10752, %v10753, %v10751
    %v10755 = vclz %v10754
    %v10756 = vsub.s32 %v10755, 2
    %vm10757 = vcmp.gt.s32.totalorder 0, %v10756
    %v10758 = vsel %vm10757, 0, %v10756
    %v10759 = vsub.s32 32, %v10758
    %v10760 = vshll.u32 %v10751, %v10758
    %v10761 = vshrl.u32 %v10743, %v10759
    %v10762 = vor.u32 %v10760, %v10761
    %v10763 = vsub.s32 4294967266, %v10758
    %v10764 = vadd.s32 %v10763, 127
    %v10765 = vshll.u32 %v10764, 23
    %v10766 = vor.u32 4788187, %v10765
    %v10767 = vand.u32 2147483647, %v10766
    %v10769 = vcvt.s32.f32 %v10762
    %v10770 = vmul.f32 %v10769, %v10767
    %v10771 = vxor.u32 %v10770, 2147483648
    %v10772 = vsel %vm10689, %v10771, %v10770
    %v10773 = vsub.s32 4, %v10749
    %v10774 = vsel %vm10689, %v10773, %v10749
    %v10775 = vsel %vm10688, %v5370, %v10772
    %v10776 = vsel %vm10688, 0, %v10774
    %v10777 = vcosq.f32.pop %v10775
    %v10778 = vsinq.f32.pop %v10775
    %vm10779 = vweird.f32 %v5370
    %v10780 = vadd.s32 %v10776, 3
    %v10781 = vand.u32 %v10780, 3
    %vm10782 = vcmp.lt.s32.totalorder %v10781, 2
    %vm10783 = vcmp.eq.s32.totalorder %v10781, 0
    %v10784 = vxor.u32 %v10778, 2147483648
    %v10785 = vsel %vm10783, %v10777, %v10784
    %vm10786 = vcmp.eq.s32.totalorder %v10781, 2
    %v10787 = vxor.u32 %v10777, 2147483648
    %v10788 = vsel %vm10786, %v10787, %v10778
    %v10789 = vsel %vm10782, %v10785, %v10788
    %v10790 = vsel %vm10779, nan, %v10789
    %v10791 = vand.u32 2147483647, %v5371
    %vm10792 = vcmp.le.f32.partialorder %v10791, 0.7853982
    %vm10793 = vcmp.lt.s32.totalorder %v5371, 0
    %v10794 = vand.u32 %v5371, 2139095040
    %v10795 = vshrl.u32 %v10794, 23
    %v10796 = vsub.s32 %v10795, 127
    %v10797 = vand.u32 2147483647, %v5371
    %v10798 = vand.u32 %v10797, 8388607
    %v10799 = vor.u32 %v10798, 8388608
    %v10800 = vsub.s32 0, %v10799
    %v10801 = vadd.s32 %v10796, 1
    %vm10802 = vcmp.gt.s32.totalorder %v10801, 0
    %v10803 = vsel %vm10802, %v10801, 0
    %v10804 = vshrl.u32 %v10803, 5
    %v10805 = vand.u32 %v10803, 31
    %v10806 = vsub.s32 32, %v10805
    %v10807 = vshrl.u32 683565275, %v10806
    %v10808 = vshll.u32 683565275, %v10805
    %v10809 = vshrl.u32 2475754826, %v10806
    %v10810 = vor.u32 %v10808, %v10809
    %v10811 = vshll.u32 2475754826, %v10805
    %v10812 = vshrl.u32 2131351028, %v10806
    %v10813 = vor.u32 %v10811, %v10812
    %v10814 = vshll.u32 2131351028, %v10805
    %v10815 = vshrl.u32 2102212464, %v10806
    %v10816 = vor.u32 %v10814, %v10815
    %v10817 = vshll.u32 2102212464, %v10805
    %v10818 = vshrl.u32 920167782, %v10806
    %v10819 = vor.u32 %v10817, %v10818
    %v10820 = vshll.u32 920167782, %v10805
    %v10821 = vshrl.u32 1326507024, %v10806
    %v10822 = vor.u32 %v10820, %v10821
    %vm10823 = vcmp.lt.s32.totalorder %v10804, 1
    %vm10824 = vcmp.lt.s32.totalorder %v10804, 2
    %vm10825 = vcmp.lt.s32.totalorder %v10804, 3
    %vm10826 = vcmp.lt.s32.totalorder %v10804, 4
    %v10827 = vsel %vm10823, %v10807, %v10810
    %v10828 = vsel %vm10826, %v10816, 2102212464
    %v10829 = vsel %vm10825, %v10813, %v10828
    %v10830 = vsel %vm10824, %v10827, %v10829
    %v10831 = vsel %vm10823, %v10810, %v10813
    %v10832 = vsel %vm10826, %v10819, 920167782
    %v10833 = vsel %vm10825, %v10816, %v10832
    %v10834 = vsel %vm10824, %v10831, %v10833
    %v10835 = vsel %vm10823, %v10813, %v10816
    %v10836 = vsel %vm10826, %v10822, 1326507024
    %v10837 = vsel %vm10825, %v10819, %v10836
    %v10838 = vsel %vm10824, %v10835, %v10837
    %v10839 = vshll.u32 %v10799, 8
    %v10840 = vmul.u32.u64.compose %v10839, %v10838
    %v10841 = vextract.low.u32 %v10840
    %v10842 = vextract.high.u32 %v10840
    %v10843 = vmul.u32.u64.compose %v10839, %v10834
    %v10844 = vextract.low.u32 %v10843
    %v10845 = vextract.high.u32 %v10843
    %v10846 = vmul.u32 %v10839, %v10830
    %v10847 = vadd.s32 %v10842, %v10844
    %vm10848 = vc.u32 %v10842, %v10844
    %v10849 = vadd.s32 %v10845, 1
    %v10850 = vsel %vm10848, %v10849, %v10845
    %v10851 = vadd.s32 %v10846, %v10850
    %v10852 = vadd.s32 %v10851, 536870912
    %v10853 = vshrl.u32 %v10852, 30
    %v10854 = vshll.u32 %v10853, 30
    %v10855 = vsub.s32 %v10851, %v10854
    %vm10856 = vcmp.lt.s32.totalorder %v10855, 0
    %v10857 = vsub.s32 0, %v10855
    %v10858 = vsel %vm10856, %v10857, %v10855
    %v10859 = vclz %v10858
    %v10860 = vsub.s32 %v10859, 2
    %vm10861 = vcmp.gt.s32.totalorder 0, %v10860
    %v10862 = vsel %vm10861, 0, %v10860
    %v10863 = vsub.s32 32, %v10862
    %v10864 = vshll.u32 %v10855, %v10862
    %v10865 = vshrl.u32 %v10847, %v10863
    %v10866 = vor.u32 %v10864, %v10865
    %v10867 = vsub.s32 4294967266, %v10862
    %v10868 = vadd.s32 %v10867, 127
    %v10869 = vshll.u32 %v10868, 23
    %v10870 = vor.u32 4788187, %v10869
    %v10871 = vand.u32 2147483647, %v10870
    %v10873 = vcvt.s32.f32 %v10866
    %v10874 = vmul.f32 %v10873, %v10871
    %v10875 = vxor.u32 %v10874, 2147483648
    %v10876 = vsel %vm10793, %v10875, %v10874
    %v10877 = vsub.s32 4, %v10853
    %v10878 = vsel %vm10793, %v10877, %v10853
    %v10879 = vsel %vm10792, %v5371, %v10876
    %v10880 = vsel %vm10792, 0, %v10878
    %v10881 = vcosq.f32.pop %v10879
    %v10882 = vsinq.f32.pop %v10879
    %vm10883 = vweird.f32 %v5371
    %v10884 = vadd.s32 %v10880, 3
    %v10885 = vand.u32 %v10884, 3
    %vm10886 = vcmp.lt.s32.totalorder %v10885, 2
    %vm10887 = vcmp.eq.s32.totalorder %v10885, 0
    %v10888 = vxor.u32 %v10882, 2147483648
    %v10889 = vsel %vm10887, %v10881, %v10888
    %vm10890 = vcmp.eq.s32.totalorder %v10885, 2
    %v10891 = vxor.u32 %v10881, 2147483648
    %v10892 = vsel %vm10890, %v10891, %v10882
    %v10893 = vsel %vm10886, %v10889, %v10892
    %v10894 = vsel %vm10883, nan, %v10893
    %v10895 = vand.u32 2147483647, %v5372
    %vm10896 = vcmp.le.f32.partialorder %v10895, 0.7853982
    %vm10897 = vcmp.lt.s32.totalorder %v5372, 0
    %v10898 = vand.u32 %v5372, 2139095040
    %v10899 = vshrl.u32 %v10898, 23
    %v10900 = vsub.s32 %v10899, 127
    %v10901 = vand.u32 2147483647, %v5372
    %v10902 = vand.u32 %v10901, 8388607
    %v10903 = vor.u32 %v10902, 8388608
    %v10904 = vsub.s32 0, %v10903
    %v10905 = vadd.s32 %v10900, 1
    %vm10906 = vcmp.gt.s32.totalorder %v10905, 0
    %v10907 = vsel %vm10906, %v10905, 0
    %v10908 = vshrl.u32 %v10907, 5
    %v10909 = vand.u32 %v10907, 31
    %v10910 = vsub.s32 32, %v10909
    %v10911 = vshrl.u32 683565275, %v10910
    %v10912 = vshll.u32 683565275, %v10909
    %v10913 = vshrl.u32 2475754826, %v10910
    %v10914 = vor.u32 %v10912, %v10913
    %v10915 = vshll.u32 2475754826, %v10909
    %v10916 = vshrl.u32 2131351028, %v10910
    %v10917 = vor.u32 %v10915, %v10916
    %v10918 = vshll.u32 2131351028, %v10909
    %v10919 = vshrl.u32 2102212464, %v10910
    %v10920 = vor.u32 %v10918, %v10919
    %v10921 = vshll.u32 2102212464, %v10909
    %v10922 = vshrl.u32 920167782, %v10910
    %v10923 = vor.u32 %v10921, %v10922
    %v10924 = vshll.u32 920167782, %v10909
    %v10925 = vshrl.u32 1326507024, %v10910
    %v10926 = vor.u32 %v10924, %v10925
    %vm10927 = vcmp.lt.s32.totalorder %v10908, 1
    %vm10928 = vcmp.lt.s32.totalorder %v10908, 2
    %vm10929 = vcmp.lt.s32.totalorder %v10908, 3
    %vm10930 = vcmp.lt.s32.totalorder %v10908, 4
    %v10931 = vsel %vm10927, %v10911, %v10914
    %v10932 = vsel %vm10930, %v10920, 2102212464
    %v10933 = vsel %vm10929, %v10917, %v10932
    %v10934 = vsel %vm10928, %v10931, %v10933
    %v10935 = vsel %vm10927, %v10914, %v10917
    %v10936 = vsel %vm10930, %v10923, 920167782
    %v10937 = vsel %vm10929, %v10920, %v10936
    %v10938 = vsel %vm10928, %v10935, %v10937
    %v10939 = vsel %vm10927, %v10917, %v10920
    %v10940 = vsel %vm10930, %v10926, 1326507024
    %v10941 = vsel %vm10929, %v10923, %v10940
    %v10942 = vsel %vm10928, %v10939, %v10941
    %v10943 = vshll.u32 %v10903, 8
    %v10944 = vmul.u32.u64.compose %v10943, %v10942
    %v10945 = vextract.low.u32 %v10944
    %v10946 = vextract.high.u32 %v10944
    %v10947 = vmul.u32.u64.compose %v10943, %v10938
    %v10948 = vextract.low.u32 %v10947
    %v10949 = vextract.high.u32 %v10947
    %v10950 = vmul.u32 %v10943, %v10934
    %v10951 = vadd.s32 %v10946, %v10948
    %vm10952 = vc.u32 %v10946, %v10948
    %v10953 = vadd.s32 %v10949, 1
    %v10954 = vsel %vm10952, %v10953, %v10949
    %v10955 = vadd.s32 %v10950, %v10954
    %v10956 = vadd.s32 %v10955, 536870912
    %v10957 = vshrl.u32 %v10956, 30
    %v10958 = vshll.u32 %v10957, 30
    %v10959 = vsub.s32 %v10955, %v10958
    %vm10960 = vcmp.lt.s32.totalorder %v10959, 0
    %v10961 = vsub.s32 0, %v10959
    %v10962 = vsel %vm10960, %v10961, %v10959
    %v10963 = vclz %v10962
    %v10964 = vsub.s32 %v10963, 2
    %vm10965 = vcmp.gt.s32.totalorder 0, %v10964
    %v10966 = vsel %vm10965, 0, %v10964
    %v10967 = vsub.s32 32, %v10966
    %v10968 = vshll.u32 %v10959, %v10966
    %v10969 = vshrl.u32 %v10951, %v10967
    %v10970 = vor.u32 %v10968, %v10969
    %v10971 = vsub.s32 4294967266, %v10966
    %v10972 = vadd.s32 %v10971, 127
    %v10973 = vshll.u32 %v10972, 23
    %v10974 = vor.u32 4788187, %v10973
    %v10975 = vand.u32 2147483647, %v10974
    %v10977 = vcvt.s32.f32 %v10970
    %v10978 = vmul.f32 %v10977, %v10975
    %v10979 = vxor.u32 %v10978, 2147483648
    %v10980 = vsel %vm10897, %v10979, %v10978
    %v10981 = vsub.s32 4, %v10957
    %v10982 = vsel %vm10897, %v10981, %v10957
    %v10983 = vsel %vm10896, %v5372, %v10980
    %v10984 = vsel %vm10896, 0, %v10982
    %v10985 = vcosq.f32.pop %v10983
    %v10986 = vsinq.f32.pop %v10983
    %vm10987 = vweird.f32 %v5372
    %v10988 = vadd.s32 %v10984, 3
    %v10989 = vand.u32 %v10988, 3
    %vm10990 = vcmp.lt.s32.totalorder %v10989, 2
    %vm10991 = vcmp.eq.s32.totalorder %v10989, 0
    %v10992 = vxor.u32 %v10986, 2147483648
    %v10993 = vsel %vm10991, %v10985, %v10992
    %vm10994 = vcmp.eq.s32.totalorder %v10989, 2
    %v10995 = vxor.u32 %v10985, 2147483648
    %v10996 = vsel %vm10994, %v10995, %v10986
    %v10997 = vsel %vm10990, %v10993, %v10996
    %v10998 = vsel %vm10987, nan, %v10997
    %v10999 = vand.u32 2147483647, %v5373
    %vm11000 = vcmp.le.f32.partialorder %v10999, 0.7853982
    %vm11001 = vcmp.lt.s32.totalorder %v5373, 0
    %v11002 = vand.u32 %v5373, 2139095040
    %v11003 = vshrl.u32 %v11002, 23
    %v11004 = vsub.s32 %v11003, 127
    %v11005 = vand.u32 2147483647, %v5373
    %v11006 = vand.u32 %v11005, 8388607
    %v11007 = vor.u32 %v11006, 8388608
    %v11008 = vsub.s32 0, %v11007
    %v11009 = vadd.s32 %v11004, 1
    %vm11010 = vcmp.gt.s32.totalorder %v11009, 0
    %v11011 = vsel %vm11010, %v11009, 0
    %v11012 = vshrl.u32 %v11011, 5
    %v11013 = vand.u32 %v11011, 31
    %v11014 = vsub.s32 32, %v11013
    %v11015 = vshrl.u32 683565275, %v11014
    %v11016 = vshll.u32 683565275, %v11013
    %v11017 = vshrl.u32 2475754826, %v11014
    %v11018 = vor.u32 %v11016, %v11017
    %v11019 = vshll.u32 2475754826, %v11013
    %v11020 = vshrl.u32 2131351028, %v11014
    %v11021 = vor.u32 %v11019, %v11020
    %v11022 = vshll.u32 2131351028, %v11013
    %v11023 = vshrl.u32 2102212464, %v11014
    %v11024 = vor.u32 %v11022, %v11023
    %v11025 = vshll.u32 2102212464, %v11013
    %v11026 = vshrl.u32 920167782, %v11014
    %v11027 = vor.u32 %v11025, %v11026
    %v11028 = vshll.u32 920167782, %v11013
    %v11029 = vshrl.u32 1326507024, %v11014
    %v11030 = vor.u32 %v11028, %v11029
    %vm11031 = vcmp.lt.s32.totalorder %v11012, 1
    %vm11032 = vcmp.lt.s32.totalorder %v11012, 2
    %vm11033 = vcmp.lt.s32.totalorder %v11012, 3
    %vm11034 = vcmp.lt.s32.totalorder %v11012, 4
    %v11035 = vsel %vm11031, %v11015, %v11018
    %v11036 = vsel %vm11034, %v11024, 2102212464
    %v11037 = vsel %vm11033, %v11021, %v11036
    %v11038 = vsel %vm11032, %v11035, %v11037
    %v11039 = vsel %vm11031, %v11018, %v11021
    %v11040 = vsel %vm11034, %v11027, 920167782
    %v11041 = vsel %vm11033, %v11024, %v11040
    %v11042 = vsel %vm11032, %v11039, %v11041
    %v11043 = vsel %vm11031, %v11021, %v11024
    %v11044 = vsel %vm11034, %v11030, 1326507024
    %v11045 = vsel %vm11033, %v11027, %v11044
    %v11046 = vsel %vm11032, %v11043, %v11045
    %v11047 = vshll.u32 %v11007, 8
    %v11048 = vmul.u32.u64.compose %v11047, %v11046
    %v11049 = vextract.low.u32 %v11048
    %v11050 = vextract.high.u32 %v11048
    %v11051 = vmul.u32.u64.compose %v11047, %v11042
    %v11052 = vextract.low.u32 %v11051
    %v11053 = vextract.high.u32 %v11051
    %v11054 = vmul.u32 %v11047, %v11038
    %v11055 = vadd.s32 %v11050, %v11052
    %vm11056 = vc.u32 %v11050, %v11052
    %v11057 = vadd.s32 %v11053, 1
    %v11058 = vsel %vm11056, %v11057, %v11053
    %v11059 = vadd.s32 %v11054, %v11058
    %v11060 = vadd.s32 %v11059, 536870912
    %v11061 = vshrl.u32 %v11060, 30
    %v11062 = vshll.u32 %v11061, 30
    %v11063 = vsub.s32 %v11059, %v11062
    %vm11064 = vcmp.lt.s32.totalorder %v11063, 0
    %v11065 = vsub.s32 0, %v11063
    %v11066 = vsel %vm11064, %v11065, %v11063
    %v11067 = vclz %v11066
    %v11068 = vsub.s32 %v11067, 2
    %vm11069 = vcmp.gt.s32.totalorder 0, %v11068
    %v11070 = vsel %vm11069, 0, %v11068
    %v11071 = vsub.s32 32, %v11070
    %v11072 = vshll.u32 %v11063, %v11070
    %v11073 = vshrl.u32 %v11055, %v11071
    %v11074 = vor.u32 %v11072, %v11073
    %v11075 = vsub.s32 4294967266, %v11070
    %v11076 = vadd.s32 %v11075, 127
    %v11077 = vshll.u32 %v11076, 23
    %v11078 = vor.u32 4788187, %v11077
    %v11079 = vand.u32 2147483647, %v11078
    %v11081 = vcvt.s32.f32 %v11074
    %v11082 = vmul.f32 %v11081, %v11079
    %v11083 = vxor.u32 %v11082, 2147483648
    %v11084 = vsel %vm11001, %v11083, %v11082
    %v11085 = vsub.s32 4, %v11061
    %v11086 = vsel %vm11001, %v11085, %v11061
    %v11087 = vsel %vm11000, %v5373, %v11084
    %v11088 = vsel %vm11000, 0, %v11086
    %v11089 = vcosq.f32.pop %v11087
    %v11090 = vsinq.f32.pop %v11087
    %vm11091 = vweird.f32 %v5373
    %v11092 = vadd.s32 %v11088, 3
    %v11093 = vand.u32 %v11092, 3
    %vm11094 = vcmp.lt.s32.totalorder %v11093, 2
    %vm11095 = vcmp.eq.s32.totalorder %v11093, 0
    %v11096 = vxor.u32 %v11090, 2147483648
    %v11097 = vsel %vm11095, %v11089, %v11096
    %vm11098 = vcmp.eq.s32.totalorder %v11093, 2
    %v11099 = vxor.u32 %v11089, 2147483648
    %v11100 = vsel %vm11098, %v11099, %v11090
    %v11101 = vsel %vm11094, %v11097, %v11100
    %v11102 = vsel %vm11091, nan, %v11101
    %v11103 = vand.u32 2147483647, %v5374
    %vm11104 = vcmp.le.f32.partialorder %v11103, 0.7853982
    %vm11105 = vcmp.lt.s32.totalorder %v5374, 0
    %v11106 = vand.u32 %v5374, 2139095040
    %v11107 = vshrl.u32 %v11106, 23
    %v11108 = vsub.s32 %v11107, 127
    %v11109 = vand.u32 2147483647, %v5374
    %v11110 = vand.u32 %v11109, 8388607
    %v11111 = vor.u32 %v11110, 8388608
    %v11112 = vsub.s32 0, %v11111
    %v11113 = vadd.s32 %v11108, 1
    %vm11114 = vcmp.gt.s32.totalorder %v11113, 0
    %v11115 = vsel %vm11114, %v11113, 0
    %v11116 = vshrl.u32 %v11115, 5
    %v11117 = vand.u32 %v11115, 31
    %v11118 = vsub.s32 32, %v11117
    %v11119 = vshrl.u32 683565275, %v11118
    %v11120 = vshll.u32 683565275, %v11117
    %v11121 = vshrl.u32 2475754826, %v11118
    %v11122 = vor.u32 %v11120, %v11121
    %v11123 = vshll.u32 2475754826, %v11117
    %v11124 = vshrl.u32 2131351028, %v11118
    %v11125 = vor.u32 %v11123, %v11124
    %v11126 = vshll.u32 2131351028, %v11117
    %v11127 = vshrl.u32 2102212464, %v11118
    %v11128 = vor.u32 %v11126, %v11127
    %v11129 = vshll.u32 2102212464, %v11117
    %v11130 = vshrl.u32 920167782, %v11118
    %v11131 = vor.u32 %v11129, %v11130
    %v11132 = vshll.u32 920167782, %v11117
    %v11133 = vshrl.u32 1326507024, %v11118
    %v11134 = vor.u32 %v11132, %v11133
    %vm11135 = vcmp.lt.s32.totalorder %v11116, 1
    %vm11136 = vcmp.lt.s32.totalorder %v11116, 2
    %vm11137 = vcmp.lt.s32.totalorder %v11116, 3
    %vm11138 = vcmp.lt.s32.totalorder %v11116, 4
    %v11139 = vsel %vm11135, %v11119, %v11122
    %v11140 = vsel %vm11138, %v11128, 2102212464
    %v11141 = vsel %vm11137, %v11125, %v11140
    %v11142 = vsel %vm11136, %v11139, %v11141
    %v11143 = vsel %vm11135, %v11122, %v11125
    %v11144 = vsel %vm11138, %v11131, 920167782
    %v11145 = vsel %vm11137, %v11128, %v11144
    %v11146 = vsel %vm11136, %v11143, %v11145
    %v11147 = vsel %vm11135, %v11125, %v11128
    %v11148 = vsel %vm11138, %v11134, 1326507024
    %v11149 = vsel %vm11137, %v11131, %v11148
    %v11150 = vsel %vm11136, %v11147, %v11149
    %v11151 = vshll.u32 %v11111, 8
    %v11152 = vmul.u32.u64.compose %v11151, %v11150
    %v11153 = vextract.low.u32 %v11152
    %v11154 = vextract.high.u32 %v11152
    %v11155 = vmul.u32.u64.compose %v11151, %v11146
    %v11156 = vextract.low.u32 %v11155
    %v11157 = vextract.high.u32 %v11155
    %v11158 = vmul.u32 %v11151, %v11142
    %v11159 = vadd.s32 %v11154, %v11156
    %vm11160 = vc.u32 %v11154, %v11156
    %v11161 = vadd.s32 %v11157, 1
    %v11162 = vsel %vm11160, %v11161, %v11157
    %v11163 = vadd.s32 %v11158, %v11162
    %v11164 = vadd.s32 %v11163, 536870912
    %v11165 = vshrl.u32 %v11164, 30
    %v11166 = vshll.u32 %v11165, 30
    %v11167 = vsub.s32 %v11163, %v11166
    %vm11168 = vcmp.lt.s32.totalorder %v11167, 0
    %v11169 = vsub.s32 0, %v11167
    %v11170 = vsel %vm11168, %v11169, %v11167
    %v11171 = vclz %v11170
    %v11172 = vsub.s32 %v11171, 2
    %vm11173 = vcmp.gt.s32.totalorder 0, %v11172
    %v11174 = vsel %vm11173, 0, %v11172
    %v11175 = vsub.s32 32, %v11174
    %v11176 = vshll.u32 %v11167, %v11174
    %v11177 = vshrl.u32 %v11159, %v11175
    %v11178 = vor.u32 %v11176, %v11177
    %v11179 = vsub.s32 4294967266, %v11174
    %v11180 = vadd.s32 %v11179, 127
    %v11181 = vshll.u32 %v11180, 23
    %v11182 = vor.u32 4788187, %v11181
    %v11183 = vand.u32 2147483647, %v11182
    %v11185 = vcvt.s32.f32 %v11178
    %v11186 = vmul.f32 %v11185, %v11183
    %v11187 = vxor.u32 %v11186, 2147483648
    %v11188 = vsel %vm11105, %v11187, %v11186
    %v11189 = vsub.s32 4, %v11165
    %v11190 = vsel %vm11105, %v11189, %v11165
    %v11191 = vsel %vm11104, %v5374, %v11188
    %v11192 = vsel %vm11104, 0, %v11190
    %v11193 = vcosq.f32.pop %v11191
    %v11194 = vsinq.f32.pop %v11191
    %vm11195 = vweird.f32 %v5374
    %v11196 = vadd.s32 %v11192, 3
    %v11197 = vand.u32 %v11196, 3
    %vm11198 = vcmp.lt.s32.totalorder %v11197, 2
    %vm11199 = vcmp.eq.s32.totalorder %v11197, 0
    %v11200 = vxor.u32 %v11194, 2147483648
    %v11201 = vsel %vm11199, %v11193, %v11200
    %vm11202 = vcmp.eq.s32.totalorder %v11197, 2
    %v11203 = vxor.u32 %v11193, 2147483648
    %v11204 = vsel %vm11202, %v11203, %v11194
    %v11205 = vsel %vm11198, %v11201, %v11204
    %v11206 = vsel %vm11195, nan, %v11205
    %v11207 = vand.u32 2147483647, %v5375
    %vm11208 = vcmp.le.f32.partialorder %v11207, 0.7853982
    %vm11209 = vcmp.lt.s32.totalorder %v5375, 0
    %v11210 = vand.u32 %v5375, 2139095040
    %v11211 = vshrl.u32 %v11210, 23
    %v11212 = vsub.s32 %v11211, 127
    %v11213 = vand.u32 2147483647, %v5375
    %v11214 = vand.u32 %v11213, 8388607
    %v11215 = vor.u32 %v11214, 8388608
    %v11216 = vsub.s32 0, %v11215
    %v11217 = vadd.s32 %v11212, 1
    %vm11218 = vcmp.gt.s32.totalorder %v11217, 0
    %v11219 = vsel %vm11218, %v11217, 0
    %v11220 = vshrl.u32 %v11219, 5
    %v11221 = vand.u32 %v11219, 31
    %v11222 = vsub.s32 32, %v11221
    %v11223 = vshrl.u32 683565275, %v11222
    %v11224 = vshll.u32 683565275, %v11221
    %v11225 = vshrl.u32 2475754826, %v11222
    %v11226 = vor.u32 %v11224, %v11225
    %v11227 = vshll.u32 2475754826, %v11221
    %v11228 = vshrl.u32 2131351028, %v11222
    %v11229 = vor.u32 %v11227, %v11228
    %v11230 = vshll.u32 2131351028, %v11221
    %v11231 = vshrl.u32 2102212464, %v11222
    %v11232 = vor.u32 %v11230, %v11231
    %v11233 = vshll.u32 2102212464, %v11221
    %v11234 = vshrl.u32 920167782, %v11222
    %v11235 = vor.u32 %v11233, %v11234
    %v11236 = vshll.u32 920167782, %v11221
    %v11237 = vshrl.u32 1326507024, %v11222
    %v11238 = vor.u32 %v11236, %v11237
    %vm11239 = vcmp.lt.s32.totalorder %v11220, 1
    %vm11240 = vcmp.lt.s32.totalorder %v11220, 2
    %vm11241 = vcmp.lt.s32.totalorder %v11220, 3
    %vm11242 = vcmp.lt.s32.totalorder %v11220, 4
    %v11243 = vsel %vm11239, %v11223, %v11226
    %v11244 = vsel %vm11242, %v11232, 2102212464
    %v11245 = vsel %vm11241, %v11229, %v11244
    %v11246 = vsel %vm11240, %v11243, %v11245
    %v11247 = vsel %vm11239, %v11226, %v11229
    %v11248 = vsel %vm11242, %v11235, 920167782
    %v11249 = vsel %vm11241, %v11232, %v11248
    %v11250 = vsel %vm11240, %v11247, %v11249
    %v11251 = vsel %vm11239, %v11229, %v11232
    %v11252 = vsel %vm11242, %v11238, 1326507024
    %v11253 = vsel %vm11241, %v11235, %v11252
    %v11254 = vsel %vm11240, %v11251, %v11253
    %v11255 = vshll.u32 %v11215, 8
    %v11256 = vmul.u32.u64.compose %v11255, %v11254
    %v11257 = vextract.low.u32 %v11256
    %v11258 = vextract.high.u32 %v11256
    %v11259 = vmul.u32.u64.compose %v11255, %v11250
    %v11260 = vextract.low.u32 %v11259
    %v11261 = vextract.high.u32 %v11259
    %v11262 = vmul.u32 %v11255, %v11246
    %v11263 = vadd.s32 %v11258, %v11260
    %vm11264 = vc.u32 %v11258, %v11260
    %v11265 = vadd.s32 %v11261, 1
    %v11266 = vsel %vm11264, %v11265, %v11261
    %v11267 = vadd.s32 %v11262, %v11266
    %v11268 = vadd.s32 %v11267, 536870912
    %v11269 = vshrl.u32 %v11268, 30
    %v11270 = vshll.u32 %v11269, 30
    %v11271 = vsub.s32 %v11267, %v11270
    %vm11272 = vcmp.lt.s32.totalorder %v11271, 0
    %v11273 = vsub.s32 0, %v11271
    %v11274 = vsel %vm11272, %v11273, %v11271
    %v11275 = vclz %v11274
    %v11276 = vsub.s32 %v11275, 2
    %vm11277 = vcmp.gt.s32.totalorder 0, %v11276
    %v11278 = vsel %vm11277, 0, %v11276
    %v11279 = vsub.s32 32, %v11278
    %v11280 = vshll.u32 %v11271, %v11278
    %v11281 = vshrl.u32 %v11263, %v11279
    %v11282 = vor.u32 %v11280, %v11281
    %v11283 = vsub.s32 4294967266, %v11278
    %v11284 = vadd.s32 %v11283, 127
    %v11285 = vshll.u32 %v11284, 23
    %v11286 = vor.u32 4788187, %v11285
    %v11287 = vand.u32 2147483647, %v11286
    %v11289 = vcvt.s32.f32 %v11282
    %v11290 = vmul.f32 %v11289, %v11287
    %v11291 = vxor.u32 %v11290, 2147483648
    %v11292 = vsel %vm11209, %v11291, %v11290
    %v11293 = vsub.s32 4, %v11269
    %v11294 = vsel %vm11209, %v11293, %v11269
    %v11295 = vsel %vm11208, %v5375, %v11292
    %v11296 = vsel %vm11208, 0, %v11294
    %v11297 = vcosq.f32.pop %v11295
    %v11298 = vsinq.f32.pop %v11295
    %vm11299 = vweird.f32 %v5375
    %v11300 = vadd.s32 %v11296, 3
    %v11301 = vand.u32 %v11300, 3
    %vm11302 = vcmp.lt.s32.totalorder %v11301, 2
    %vm11303 = vcmp.eq.s32.totalorder %v11301, 0
    %v11304 = vxor.u32 %v11298, 2147483648
    %v11305 = vsel %vm11303, %v11297, %v11304
    %vm11306 = vcmp.eq.s32.totalorder %v11301, 2
    %v11307 = vxor.u32 %v11297, 2147483648
    %v11308 = vsel %vm11306, %v11307, %v11298
    %v11309 = vsel %vm11302, %v11305, %v11308
    %v11310 = vsel %vm11299, nan, %v11309
    %v11311 = vand.u32 2147483647, %v5376
    %vm11312 = vcmp.le.f32.partialorder %v11311, 0.7853982
    %vm11313 = vcmp.lt.s32.totalorder %v5376, 0
    %v11314 = vand.u32 %v5376, 2139095040
    %v11315 = vshrl.u32 %v11314, 23
    %v11316 = vsub.s32 %v11315, 127
    %v11317 = vand.u32 2147483647, %v5376
    %v11318 = vand.u32 %v11317, 8388607
    %v11319 = vor.u32 %v11318, 8388608
    %v11320 = vsub.s32 0, %v11319
    %v11321 = vadd.s32 %v11316, 1
    %vm11322 = vcmp.gt.s32.totalorder %v11321, 0
    %v11323 = vsel %vm11322, %v11321, 0
    %v11324 = vshrl.u32 %v11323, 5
    %v11325 = vand.u32 %v11323, 31
    %v11326 = vsub.s32 32, %v11325
    %v11327 = vshrl.u32 683565275, %v11326
    %v11328 = vshll.u32 683565275, %v11325
    %v11329 = vshrl.u32 2475754826, %v11326
    %v11330 = vor.u32 %v11328, %v11329
    %v11331 = vshll.u32 2475754826, %v11325
    %v11332 = vshrl.u32 2131351028, %v11326
    %v11333 = vor.u32 %v11331, %v11332
    %v11334 = vshll.u32 2131351028, %v11325
    %v11335 = vshrl.u32 2102212464, %v11326
    %v11336 = vor.u32 %v11334, %v11335
    %v11337 = vshll.u32 2102212464, %v11325
    %v11338 = vshrl.u32 920167782, %v11326
    %v11339 = vor.u32 %v11337, %v11338
    %v11340 = vshll.u32 920167782, %v11325
    %v11341 = vshrl.u32 1326507024, %v11326
    %v11342 = vor.u32 %v11340, %v11341
    %vm11343 = vcmp.lt.s32.totalorder %v11324, 1
    %vm11344 = vcmp.lt.s32.totalorder %v11324, 2
    %vm11345 = vcmp.lt.s32.totalorder %v11324, 3
    %vm11346 = vcmp.lt.s32.totalorder %v11324, 4
    %v11347 = vsel %vm11343, %v11327, %v11330
    %v11348 = vsel %vm11346, %v11336, 2102212464
    %v11349 = vsel %vm11345, %v11333, %v11348
    %v11350 = vsel %vm11344, %v11347, %v11349
    %v11351 = vsel %vm11343, %v11330, %v11333
    %v11352 = vsel %vm11346, %v11339, 920167782
    %v11353 = vsel %vm11345, %v11336, %v11352
    %v11354 = vsel %vm11344, %v11351, %v11353
    %v11355 = vsel %vm11343, %v11333, %v11336
    %v11356 = vsel %vm11346, %v11342, 1326507024
    %v11357 = vsel %vm11345, %v11339, %v11356
    %v11358 = vsel %vm11344, %v11355, %v11357
    %v11359 = vshll.u32 %v11319, 8
    %v11360 = vmul.u32.u64.compose %v11359, %v11358
    %v11361 = vextract.low.u32 %v11360
    %v11362 = vextract.high.u32 %v11360
    %v11363 = vmul.u32.u64.compose %v11359, %v11354
    %v11364 = vextract.low.u32 %v11363
    %v11365 = vextract.high.u32 %v11363
    %v11366 = vmul.u32 %v11359, %v11350
    %v11367 = vadd.s32 %v11362, %v11364
    %vm11368 = vc.u32 %v11362, %v11364
    %v11369 = vadd.s32 %v11365, 1
    %v11370 = vsel %vm11368, %v11369, %v11365
    %v11371 = vadd.s32 %v11366, %v11370
    %v11372 = vadd.s32 %v11371, 536870912
    %v11373 = vshrl.u32 %v11372, 30
    %v11374 = vshll.u32 %v11373, 30
    %v11375 = vsub.s32 %v11371, %v11374
    %vm11376 = vcmp.lt.s32.totalorder %v11375, 0
    %v11377 = vsub.s32 0, %v11375
    %v11378 = vsel %vm11376, %v11377, %v11375
    %v11379 = vclz %v11378
    %v11380 = vsub.s32 %v11379, 2
    %vm11381 = vcmp.gt.s32.totalorder 0, %v11380
    %v11382 = vsel %vm11381, 0, %v11380
    %v11383 = vsub.s32 32, %v11382
    %v11384 = vshll.u32 %v11375, %v11382
    %v11385 = vshrl.u32 %v11367, %v11383
    %v11386 = vor.u32 %v11384, %v11385
    %v11387 = vsub.s32 4294967266, %v11382
    %v11388 = vadd.s32 %v11387, 127
    %v11389 = vshll.u32 %v11388, 23
    %v11390 = vor.u32 4788187, %v11389
    %v11391 = vand.u32 2147483647, %v11390
    %v11393 = vcvt.s32.f32 %v11386
    %v11394 = vmul.f32 %v11393, %v11391
    %v11395 = vxor.u32 %v11394, 2147483648
    %v11396 = vsel %vm11313, %v11395, %v11394
    %v11397 = vsub.s32 4, %v11373
    %v11398 = vsel %vm11313, %v11397, %v11373
    %v11399 = vsel %vm11312, %v5376, %v11396
    %v11400 = vsel %vm11312, 0, %v11398
    %v11401 = vcosq.f32.pop %v11399
    %v11402 = vsinq.f32.pop %v11399
    %vm11403 = vweird.f32 %v5376
    %v11404 = vadd.s32 %v11400, 3
    %v11405 = vand.u32 %v11404, 3
    %vm11406 = vcmp.lt.s32.totalorder %v11405, 2
    %vm11407 = vcmp.eq.s32.totalorder %v11405, 0
    %v11408 = vxor.u32 %v11402, 2147483648
    %v11409 = vsel %vm11407, %v11401, %v11408
    %vm11410 = vcmp.eq.s32.totalorder %v11405, 2
    %v11411 = vxor.u32 %v11401, 2147483648
    %v11412 = vsel %vm11410, %v11411, %v11402
    %v11413 = vsel %vm11406, %v11409, %v11412
    %v11414 = vsel %vm11403, nan, %v11413
    %v11415 = vand.u32 2147483647, %v5377
    %vm11416 = vcmp.le.f32.partialorder %v11415, 0.7853982
    %vm11417 = vcmp.lt.s32.totalorder %v5377, 0
    %v11418 = vand.u32 %v5377, 2139095040
    %v11419 = vshrl.u32 %v11418, 23
    %v11420 = vsub.s32 %v11419, 127
    %v11421 = vand.u32 2147483647, %v5377
    %v11422 = vand.u32 %v11421, 8388607
    %v11423 = vor.u32 %v11422, 8388608
    %v11424 = vsub.s32 0, %v11423
    %v11425 = vadd.s32 %v11420, 1
    %vm11426 = vcmp.gt.s32.totalorder %v11425, 0
    %v11427 = vsel %vm11426, %v11425, 0
    %v11428 = vshrl.u32 %v11427, 5
    %v11429 = vand.u32 %v11427, 31
    %v11430 = vsub.s32 32, %v11429
    %v11431 = vshrl.u32 683565275, %v11430
    %v11432 = vshll.u32 683565275, %v11429
    %v11433 = vshrl.u32 2475754826, %v11430
    %v11434 = vor.u32 %v11432, %v11433
    %v11435 = vshll.u32 2475754826, %v11429
    %v11436 = vshrl.u32 2131351028, %v11430
    %v11437 = vor.u32 %v11435, %v11436
    %v11438 = vshll.u32 2131351028, %v11429
    %v11439 = vshrl.u32 2102212464, %v11430
    %v11440 = vor.u32 %v11438, %v11439
    %v11441 = vshll.u32 2102212464, %v11429
    %v11442 = vshrl.u32 920167782, %v11430
    %v11443 = vor.u32 %v11441, %v11442
    %v11444 = vshll.u32 920167782, %v11429
    %v11445 = vshrl.u32 1326507024, %v11430
    %v11446 = vor.u32 %v11444, %v11445
    %vm11447 = vcmp.lt.s32.totalorder %v11428, 1
    %vm11448 = vcmp.lt.s32.totalorder %v11428, 2
    %vm11449 = vcmp.lt.s32.totalorder %v11428, 3
    %vm11450 = vcmp.lt.s32.totalorder %v11428, 4
    %v11451 = vsel %vm11447, %v11431, %v11434
    %v11452 = vsel %vm11450, %v11440, 2102212464
    %v11453 = vsel %vm11449, %v11437, %v11452
    %v11454 = vsel %vm11448, %v11451, %v11453
    %v11455 = vsel %vm11447, %v11434, %v11437
    %v11456 = vsel %vm11450, %v11443, 920167782
    %v11457 = vsel %vm11449, %v11440, %v11456
    %v11458 = vsel %vm11448, %v11455, %v11457
    %v11459 = vsel %vm11447, %v11437, %v11440
    %v11460 = vsel %vm11450, %v11446, 1326507024
    %v11461 = vsel %vm11449, %v11443, %v11460
    %v11462 = vsel %vm11448, %v11459, %v11461
    %v11463 = vshll.u32 %v11423, 8
    %v11464 = vmul.u32.u64.compose %v11463, %v11462
    %v11465 = vextract.low.u32 %v11464
    %v11466 = vextract.high.u32 %v11464
    %v11467 = vmul.u32.u64.compose %v11463, %v11458
    %v11468 = vextract.low.u32 %v11467
    %v11469 = vextract.high.u32 %v11467
    %v11470 = vmul.u32 %v11463, %v11454
    %v11471 = vadd.s32 %v11466, %v11468
    %vm11472 = vc.u32 %v11466, %v11468
    %v11473 = vadd.s32 %v11469, 1
    %v11474 = vsel %vm11472, %v11473, %v11469
    %v11475 = vadd.s32 %v11470, %v11474
    %v11476 = vadd.s32 %v11475, 536870912
    %v11477 = vshrl.u32 %v11476, 30
    %v11478 = vshll.u32 %v11477, 30
    %v11479 = vsub.s32 %v11475, %v11478
    %vm11480 = vcmp.lt.s32.totalorder %v11479, 0
    %v11481 = vsub.s32 0, %v11479
    %v11482 = vsel %vm11480, %v11481, %v11479
    %v11483 = vclz %v11482
    %v11484 = vsub.s32 %v11483, 2
    %vm11485 = vcmp.gt.s32.totalorder 0, %v11484
    %v11486 = vsel %vm11485, 0, %v11484
    %v11487 = vsub.s32 32, %v11486
    %v11488 = vshll.u32 %v11479, %v11486
    %v11489 = vshrl.u32 %v11471, %v11487
    %v11490 = vor.u32 %v11488, %v11489
    %v11491 = vsub.s32 4294967266, %v11486
    %v11492 = vadd.s32 %v11491, 127
    %v11493 = vshll.u32 %v11492, 23
    %v11494 = vor.u32 4788187, %v11493
    %v11495 = vand.u32 2147483647, %v11494
    %v11497 = vcvt.s32.f32 %v11490
    %v11498 = vmul.f32 %v11497, %v11495
    %v11499 = vxor.u32 %v11498, 2147483648
    %v11500 = vsel %vm11417, %v11499, %v11498
    %v11501 = vsub.s32 4, %v11477
    %v11502 = vsel %vm11417, %v11501, %v11477
    %v11503 = vsel %vm11416, %v5377, %v11500
    %v11504 = vsel %vm11416, 0, %v11502
    %v11505 = vcosq.f32.pop %v11503
    %v11506 = vsinq.f32.pop %v11503
    %vm11507 = vweird.f32 %v5377
    %v11508 = vadd.s32 %v11504, 3
    %v11509 = vand.u32 %v11508, 3
    %vm11510 = vcmp.lt.s32.totalorder %v11509, 2
    %vm11511 = vcmp.eq.s32.totalorder %v11509, 0
    %v11512 = vxor.u32 %v11506, 2147483648
    %v11513 = vsel %vm11511, %v11505, %v11512
    %vm11514 = vcmp.eq.s32.totalorder %v11509, 2
    %v11515 = vxor.u32 %v11505, 2147483648
    %v11516 = vsel %vm11514, %v11515, %v11506
    %v11517 = vsel %vm11510, %v11513, %v11516
    %v11518 = vsel %vm11507, nan, %v11517
    %v11519 = vand.u32 2147483647, %v5378
    %vm11520 = vcmp.le.f32.partialorder %v11519, 0.7853982
    %vm11521 = vcmp.lt.s32.totalorder %v5378, 0
    %v11522 = vand.u32 %v5378, 2139095040
    %v11523 = vshrl.u32 %v11522, 23
    %v11524 = vsub.s32 %v11523, 127
    %v11525 = vand.u32 2147483647, %v5378
    %v11526 = vand.u32 %v11525, 8388607
    %v11527 = vor.u32 %v11526, 8388608
    %v11528 = vsub.s32 0, %v11527
    %v11529 = vadd.s32 %v11524, 1
    %vm11530 = vcmp.gt.s32.totalorder %v11529, 0
    %v11531 = vsel %vm11530, %v11529, 0
    %v11532 = vshrl.u32 %v11531, 5
    %v11533 = vand.u32 %v11531, 31
    %v11534 = vsub.s32 32, %v11533
    %v11535 = vshrl.u32 683565275, %v11534
    %v11536 = vshll.u32 683565275, %v11533
    %v11537 = vshrl.u32 2475754826, %v11534
    %v11538 = vor.u32 %v11536, %v11537
    %v11539 = vshll.u32 2475754826, %v11533
    %v11540 = vshrl.u32 2131351028, %v11534
    %v11541 = vor.u32 %v11539, %v11540
    %v11542 = vshll.u32 2131351028, %v11533
    %v11543 = vshrl.u32 2102212464, %v11534
    %v11544 = vor.u32 %v11542, %v11543
    %v11545 = vshll.u32 2102212464, %v11533
    %v11546 = vshrl.u32 920167782, %v11534
    %v11547 = vor.u32 %v11545, %v11546
    %v11548 = vshll.u32 920167782, %v11533
    %v11549 = vshrl.u32 1326507024, %v11534
    %v11550 = vor.u32 %v11548, %v11549
    %vm11551 = vcmp.lt.s32.totalorder %v11532, 1
    %vm11552 = vcmp.lt.s32.totalorder %v11532, 2
    %vm11553 = vcmp.lt.s32.totalorder %v11532, 3
    %vm11554 = vcmp.lt.s32.totalorder %v11532, 4
    %v11555 = vsel %vm11551, %v11535, %v11538
    %v11556 = vsel %vm11554, %v11544, 2102212464
    %v11557 = vsel %vm11553, %v11541, %v11556
    %v11558 = vsel %vm11552, %v11555, %v11557
    %v11559 = vsel %vm11551, %v11538, %v11541
    %v11560 = vsel %vm11554, %v11547, 920167782
    %v11561 = vsel %vm11553, %v11544, %v11560
    %v11562 = vsel %vm11552, %v11559, %v11561
    %v11563 = vsel %vm11551, %v11541, %v11544
    %v11564 = vsel %vm11554, %v11550, 1326507024
    %v11565 = vsel %vm11553, %v11547, %v11564
    %v11566 = vsel %vm11552, %v11563, %v11565
    %v11567 = vshll.u32 %v11527, 8
    %v11568 = vmul.u32.u64.compose %v11567, %v11566
    %v11569 = vextract.low.u32 %v11568
    %v11570 = vextract.high.u32 %v11568
    %v11571 = vmul.u32.u64.compose %v11567, %v11562
    %v11572 = vextract.low.u32 %v11571
    %v11573 = vextract.high.u32 %v11571
    %v11574 = vmul.u32 %v11567, %v11558
    %v11575 = vadd.s32 %v11570, %v11572
    %vm11576 = vc.u32 %v11570, %v11572
    %v11577 = vadd.s32 %v11573, 1
    %v11578 = vsel %vm11576, %v11577, %v11573
    %v11579 = vadd.s32 %v11574, %v11578
    %v11580 = vadd.s32 %v11579, 536870912
    %v11581 = vshrl.u32 %v11580, 30
    %v11582 = vshll.u32 %v11581, 30
    %v11583 = vsub.s32 %v11579, %v11582
    %vm11584 = vcmp.lt.s32.totalorder %v11583, 0
    %v11585 = vsub.s32 0, %v11583
    %v11586 = vsel %vm11584, %v11585, %v11583
    %v11587 = vclz %v11586
    %v11588 = vsub.s32 %v11587, 2
    %vm11589 = vcmp.gt.s32.totalorder 0, %v11588
    %v11590 = vsel %vm11589, 0, %v11588
    %v11591 = vsub.s32 32, %v11590
    %v11592 = vshll.u32 %v11583, %v11590
    %v11593 = vshrl.u32 %v11575, %v11591
    %v11594 = vor.u32 %v11592, %v11593
    %v11595 = vsub.s32 4294967266, %v11590
    %v11596 = vadd.s32 %v11595, 127
    %v11597 = vshll.u32 %v11596, 23
    %v11598 = vor.u32 4788187, %v11597
    %v11599 = vand.u32 2147483647, %v11598
    %v11601 = vcvt.s32.f32 %v11594
    %v11602 = vmul.f32 %v11601, %v11599
    %v11603 = vxor.u32 %v11602, 2147483648
    %v11604 = vsel %vm11521, %v11603, %v11602
    %v11605 = vsub.s32 4, %v11581
    %v11606 = vsel %vm11521, %v11605, %v11581
    %v11607 = vsel %vm11520, %v5378, %v11604
    %v11608 = vsel %vm11520, 0, %v11606
    %v11609 = vcosq.f32.pop %v11607
    %v11610 = vsinq.f32.pop %v11607
    %vm11611 = vweird.f32 %v5378
    %v11612 = vadd.s32 %v11608, 3
    %v11613 = vand.u32 %v11612, 3
    %vm11614 = vcmp.lt.s32.totalorder %v11613, 2
    %vm11615 = vcmp.eq.s32.totalorder %v11613, 0
    %v11616 = vxor.u32 %v11610, 2147483648
    %v11617 = vsel %vm11615, %v11609, %v11616
    %vm11618 = vcmp.eq.s32.totalorder %v11613, 2
    %v11619 = vxor.u32 %v11609, 2147483648
    %v11620 = vsel %vm11618, %v11619, %v11610
    %v11621 = vsel %vm11614, %v11617, %v11620
    %v11622 = vsel %vm11611, nan, %v11621
    %v11623 = vand.u32 2147483647, %v5379
    %vm11624 = vcmp.le.f32.partialorder %v11623, 0.7853982
    %vm11625 = vcmp.lt.s32.totalorder %v5379, 0
    %v11626 = vand.u32 %v5379, 2139095040
    %v11627 = vshrl.u32 %v11626, 23
    %v11628 = vsub.s32 %v11627, 127
    %v11629 = vand.u32 2147483647, %v5379
    %v11630 = vand.u32 %v11629, 8388607
    %v11631 = vor.u32 %v11630, 8388608
    %v11632 = vsub.s32 0, %v11631
    %v11633 = vadd.s32 %v11628, 1
    %vm11634 = vcmp.gt.s32.totalorder %v11633, 0
    %v11635 = vsel %vm11634, %v11633, 0
    %v11636 = vshrl.u32 %v11635, 5
    %v11637 = vand.u32 %v11635, 31
    %v11638 = vsub.s32 32, %v11637
    %v11639 = vshrl.u32 683565275, %v11638
    %v11640 = vshll.u32 683565275, %v11637
    %v11641 = vshrl.u32 2475754826, %v11638
    %v11642 = vor.u32 %v11640, %v11641
    %v11643 = vshll.u32 2475754826, %v11637
    %v11644 = vshrl.u32 2131351028, %v11638
    %v11645 = vor.u32 %v11643, %v11644
    %v11646 = vshll.u32 2131351028, %v11637
    %v11647 = vshrl.u32 2102212464, %v11638
    %v11648 = vor.u32 %v11646, %v11647
    %v11649 = vshll.u32 2102212464, %v11637
    %v11650 = vshrl.u32 920167782, %v11638
    %v11651 = vor.u32 %v11649, %v11650
    %v11652 = vshll.u32 920167782, %v11637
    %v11653 = vshrl.u32 1326507024, %v11638
    %v11654 = vor.u32 %v11652, %v11653
    %vm11655 = vcmp.lt.s32.totalorder %v11636, 1
    %vm11656 = vcmp.lt.s32.totalorder %v11636, 2
    %vm11657 = vcmp.lt.s32.totalorder %v11636, 3
    %vm11658 = vcmp.lt.s32.totalorder %v11636, 4
    %v11659 = vsel %vm11655, %v11639, %v11642
    %v11660 = vsel %vm11658, %v11648, 2102212464
    %v11661 = vsel %vm11657, %v11645, %v11660
    %v11662 = vsel %vm11656, %v11659, %v11661
    %v11663 = vsel %vm11655, %v11642, %v11645
    %v11664 = vsel %vm11658, %v11651, 920167782
    %v11665 = vsel %vm11657, %v11648, %v11664
    %v11666 = vsel %vm11656, %v11663, %v11665
    %v11667 = vsel %vm11655, %v11645, %v11648
    %v11668 = vsel %vm11658, %v11654, 1326507024
    %v11669 = vsel %vm11657, %v11651, %v11668
    %v11670 = vsel %vm11656, %v11667, %v11669
    %v11671 = vshll.u32 %v11631, 8
    %v11672 = vmul.u32.u64.compose %v11671, %v11670
    %v11673 = vextract.low.u32 %v11672
    %v11674 = vextract.high.u32 %v11672
    %v11675 = vmul.u32.u64.compose %v11671, %v11666
    %v11676 = vextract.low.u32 %v11675
    %v11677 = vextract.high.u32 %v11675
    %v11678 = vmul.u32 %v11671, %v11662
    %v11679 = vadd.s32 %v11674, %v11676
    %vm11680 = vc.u32 %v11674, %v11676
    %v11681 = vadd.s32 %v11677, 1
    %v11682 = vsel %vm11680, %v11681, %v11677
    %v11683 = vadd.s32 %v11678, %v11682
    %v11684 = vadd.s32 %v11683, 536870912
    %v11685 = vshrl.u32 %v11684, 30
    %v11686 = vshll.u32 %v11685, 30
    %v11687 = vsub.s32 %v11683, %v11686
    %vm11688 = vcmp.lt.s32.totalorder %v11687, 0
    %v11689 = vsub.s32 0, %v11687
    %v11690 = vsel %vm11688, %v11689, %v11687
    %v11691 = vclz %v11690
    %v11692 = vsub.s32 %v11691, 2
    %vm11693 = vcmp.gt.s32.totalorder 0, %v11692
    %v11694 = vsel %vm11693, 0, %v11692
    %v11695 = vsub.s32 32, %v11694
    %v11696 = vshll.u32 %v11687, %v11694
    %v11697 = vshrl.u32 %v11679, %v11695
    %v11698 = vor.u32 %v11696, %v11697
    %v11699 = vsub.s32 4294967266, %v11694
    %v11700 = vadd.s32 %v11699, 127
    %v11701 = vshll.u32 %v11700, 23
    %v11702 = vor.u32 4788187, %v11701
    %v11703 = vand.u32 2147483647, %v11702
    %v11705 = vcvt.s32.f32 %v11698
    %v11706 = vmul.f32 %v11705, %v11703
    %v11707 = vxor.u32 %v11706, 2147483648
    %v11708 = vsel %vm11625, %v11707, %v11706
    %v11709 = vsub.s32 4, %v11685
    %v11710 = vsel %vm11625, %v11709, %v11685
    %v11711 = vsel %vm11624, %v5379, %v11708
    %v11712 = vsel %vm11624, 0, %v11710
    %v11713 = vcosq.f32.pop %v11711
    %v11714 = vsinq.f32.pop %v11711
    %vm11715 = vweird.f32 %v5379
    %v11716 = vadd.s32 %v11712, 3
    %v11717 = vand.u32 %v11716, 3
    %vm11718 = vcmp.lt.s32.totalorder %v11717, 2
    %vm11719 = vcmp.eq.s32.totalorder %v11717, 0
    %v11720 = vxor.u32 %v11714, 2147483648
    %v11721 = vsel %vm11719, %v11713, %v11720
    %vm11722 = vcmp.eq.s32.totalorder %v11717, 2
    %v11723 = vxor.u32 %v11713, 2147483648
    %v11724 = vsel %vm11722, %v11723, %v11714
    %v11725 = vsel %vm11718, %v11721, %v11724
    %v11726 = vsel %vm11715, nan, %v11725
    %v11727 = vand.u32 2147483647, %v5380
    %vm11728 = vcmp.le.f32.partialorder %v11727, 0.7853982
    %vm11729 = vcmp.lt.s32.totalorder %v5380, 0
    %v11730 = vand.u32 %v5380, 2139095040
    %v11731 = vshrl.u32 %v11730, 23
    %v11732 = vsub.s32 %v11731, 127
    %v11733 = vand.u32 2147483647, %v5380
    %v11734 = vand.u32 %v11733, 8388607
    %v11735 = vor.u32 %v11734, 8388608
    %v11736 = vsub.s32 0, %v11735
    %v11737 = vadd.s32 %v11732, 1
    %vm11738 = vcmp.gt.s32.totalorder %v11737, 0
    %v11739 = vsel %vm11738, %v11737, 0
    %v11740 = vshrl.u32 %v11739, 5
    %v11741 = vand.u32 %v11739, 31
    %v11742 = vsub.s32 32, %v11741
    %v11743 = vshrl.u32 683565275, %v11742
    %v11744 = vshll.u32 683565275, %v11741
    %v11745 = vshrl.u32 2475754826, %v11742
    %v11746 = vor.u32 %v11744, %v11745
    %v11747 = vshll.u32 2475754826, %v11741
    %v11748 = vshrl.u32 2131351028, %v11742
    %v11749 = vor.u32 %v11747, %v11748
    %v11750 = vshll.u32 2131351028, %v11741
    %v11751 = vshrl.u32 2102212464, %v11742
    %v11752 = vor.u32 %v11750, %v11751
    %v11753 = vshll.u32 2102212464, %v11741
    %v11754 = vshrl.u32 920167782, %v11742
    %v11755 = vor.u32 %v11753, %v11754
    %v11756 = vshll.u32 920167782, %v11741
    %v11757 = vshrl.u32 1326507024, %v11742
    %v11758 = vor.u32 %v11756, %v11757
    %vm11759 = vcmp.lt.s32.totalorder %v11740, 1
    %vm11760 = vcmp.lt.s32.totalorder %v11740, 2
    %vm11761 = vcmp.lt.s32.totalorder %v11740, 3
    %vm11762 = vcmp.lt.s32.totalorder %v11740, 4
    %v11763 = vsel %vm11759, %v11743, %v11746
    %v11764 = vsel %vm11762, %v11752, 2102212464
    %v11765 = vsel %vm11761, %v11749, %v11764
    %v11766 = vsel %vm11760, %v11763, %v11765
    %v11767 = vsel %vm11759, %v11746, %v11749
    %v11768 = vsel %vm11762, %v11755, 920167782
    %v11769 = vsel %vm11761, %v11752, %v11768
    %v11770 = vsel %vm11760, %v11767, %v11769
    %v11771 = vsel %vm11759, %v11749, %v11752
    %v11772 = vsel %vm11762, %v11758, 1326507024
    %v11773 = vsel %vm11761, %v11755, %v11772
    %v11774 = vsel %vm11760, %v11771, %v11773
    %v11775 = vshll.u32 %v11735, 8
    %v11776 = vmul.u32.u64.compose %v11775, %v11774
    %v11777 = vextract.low.u32 %v11776
    %v11778 = vextract.high.u32 %v11776
    %v11779 = vmul.u32.u64.compose %v11775, %v11770
    %v11780 = vextract.low.u32 %v11779
    %v11781 = vextract.high.u32 %v11779
    %v11782 = vmul.u32 %v11775, %v11766
    %v11783 = vadd.s32 %v11778, %v11780
    %vm11784 = vc.u32 %v11778, %v11780
    %v11785 = vadd.s32 %v11781, 1
    %v11786 = vsel %vm11784, %v11785, %v11781
    %v11787 = vadd.s32 %v11782, %v11786
    %v11788 = vadd.s32 %v11787, 536870912
    %v11789 = vshrl.u32 %v11788, 30
    %v11790 = vshll.u32 %v11789, 30
    %v11791 = vsub.s32 %v11787, %v11790
    %vm11792 = vcmp.lt.s32.totalorder %v11791, 0
    %v11793 = vsub.s32 0, %v11791
    %v11794 = vsel %vm11792, %v11793, %v11791
    %v11795 = vclz %v11794
    %v11796 = vsub.s32 %v11795, 2
    %vm11797 = vcmp.gt.s32.totalorder 0, %v11796
    %v11798 = vsel %vm11797, 0, %v11796
    %v11799 = vsub.s32 32, %v11798
    %v11800 = vshll.u32 %v11791, %v11798
    %v11801 = vshrl.u32 %v11783, %v11799
    %v11802 = vor.u32 %v11800, %v11801
    %v11803 = vsub.s32 4294967266, %v11798
    %v11804 = vadd.s32 %v11803, 127
    %v11805 = vshll.u32 %v11804, 23
    %v11806 = vor.u32 4788187, %v11805
    %v11807 = vand.u32 2147483647, %v11806
    %v11809 = vcvt.s32.f32 %v11802
    %v11810 = vmul.f32 %v11809, %v11807
    %v11811 = vxor.u32 %v11810, 2147483648
    %v11812 = vsel %vm11729, %v11811, %v11810
    %v11813 = vsub.s32 4, %v11789
    %v11814 = vsel %vm11729, %v11813, %v11789
    %v11815 = vsel %vm11728, %v5380, %v11812
    %v11816 = vsel %vm11728, 0, %v11814
    %v11817 = vcosq.f32.pop %v11815
    %v11818 = vsinq.f32.pop %v11815
    %vm11819 = vweird.f32 %v5380
    %v11820 = vadd.s32 %v11816, 3
    %v11821 = vand.u32 %v11820, 3
    %vm11822 = vcmp.lt.s32.totalorder %v11821, 2
    %vm11823 = vcmp.eq.s32.totalorder %v11821, 0
    %v11824 = vxor.u32 %v11818, 2147483648
    %v11825 = vsel %vm11823, %v11817, %v11824
    %vm11826 = vcmp.eq.s32.totalorder %v11821, 2
    %v11827 = vxor.u32 %v11817, 2147483648
    %v11828 = vsel %vm11826, %v11827, %v11818
    %v11829 = vsel %vm11822, %v11825, %v11828
    %v11830 = vsel %vm11819, nan, %v11829
    %v11831 = vand.u32 2147483647, %v5381
    %vm11832 = vcmp.le.f32.partialorder %v11831, 0.7853982
    %vm11833 = vcmp.lt.s32.totalorder %v5381, 0
    %v11834 = vand.u32 %v5381, 2139095040
    %v11835 = vshrl.u32 %v11834, 23
    %v11836 = vsub.s32 %v11835, 127
    %v11837 = vand.u32 2147483647, %v5381
    %v11838 = vand.u32 %v11837, 8388607
    %v11839 = vor.u32 %v11838, 8388608
    %v11840 = vsub.s32 0, %v11839
    %v11841 = vadd.s32 %v11836, 1
    %vm11842 = vcmp.gt.s32.totalorder %v11841, 0
    %v11843 = vsel %vm11842, %v11841, 0
    %v11844 = vshrl.u32 %v11843, 5
    %v11845 = vand.u32 %v11843, 31
    %v11846 = vsub.s32 32, %v11845
    %v11847 = vshrl.u32 683565275, %v11846
    %v11848 = vshll.u32 683565275, %v11845
    %v11849 = vshrl.u32 2475754826, %v11846
    %v11850 = vor.u32 %v11848, %v11849
    %v11851 = vshll.u32 2475754826, %v11845
    %v11852 = vshrl.u32 2131351028, %v11846
    %v11853 = vor.u32 %v11851, %v11852
    %v11854 = vshll.u32 2131351028, %v11845
    %v11855 = vshrl.u32 2102212464, %v11846
    %v11856 = vor.u32 %v11854, %v11855
    %v11857 = vshll.u32 2102212464, %v11845
    %v11858 = vshrl.u32 920167782, %v11846
    %v11859 = vor.u32 %v11857, %v11858
    %v11860 = vshll.u32 920167782, %v11845
    %v11861 = vshrl.u32 1326507024, %v11846
    %v11862 = vor.u32 %v11860, %v11861
    %vm11863 = vcmp.lt.s32.totalorder %v11844, 1
    %vm11864 = vcmp.lt.s32.totalorder %v11844, 2
    %vm11865 = vcmp.lt.s32.totalorder %v11844, 3
    %vm11866 = vcmp.lt.s32.totalorder %v11844, 4
    %v11867 = vsel %vm11863, %v11847, %v11850
    %v11868 = vsel %vm11866, %v11856, 2102212464
    %v11869 = vsel %vm11865, %v11853, %v11868
    %v11870 = vsel %vm11864, %v11867, %v11869
    %v11871 = vsel %vm11863, %v11850, %v11853
    %v11872 = vsel %vm11866, %v11859, 920167782
    %v11873 = vsel %vm11865, %v11856, %v11872
    %v11874 = vsel %vm11864, %v11871, %v11873
    %v11875 = vsel %vm11863, %v11853, %v11856
    %v11876 = vsel %vm11866, %v11862, 1326507024
    %v11877 = vsel %vm11865, %v11859, %v11876
    %v11878 = vsel %vm11864, %v11875, %v11877
    %v11879 = vshll.u32 %v11839, 8
    %v11880 = vmul.u32.u64.compose %v11879, %v11878
    %v11881 = vextract.low.u32 %v11880
    %v11882 = vextract.high.u32 %v11880
    %v11883 = vmul.u32.u64.compose %v11879, %v11874
    %v11884 = vextract.low.u32 %v11883
    %v11885 = vextract.high.u32 %v11883
    %v11886 = vmul.u32 %v11879, %v11870
    %v11887 = vadd.s32 %v11882, %v11884
    %vm11888 = vc.u32 %v11882, %v11884
    %v11889 = vadd.s32 %v11885, 1
    %v11890 = vsel %vm11888, %v11889, %v11885
    %v11891 = vadd.s32 %v11886, %v11890
    %v11892 = vadd.s32 %v11891, 536870912
    %v11893 = vshrl.u32 %v11892, 30
    %v11894 = vshll.u32 %v11893, 30
    %v11895 = vsub.s32 %v11891, %v11894
    %vm11896 = vcmp.lt.s32.totalorder %v11895, 0
    %v11897 = vsub.s32 0, %v11895
    %v11898 = vsel %vm11896, %v11897, %v11895
    %v11899 = vclz %v11898
    %v11900 = vsub.s32 %v11899, 2
    %vm11901 = vcmp.gt.s32.totalorder 0, %v11900
    %v11902 = vsel %vm11901, 0, %v11900
    %v11903 = vsub.s32 32, %v11902
    %v11904 = vshll.u32 %v11895, %v11902
    %v11905 = vshrl.u32 %v11887, %v11903
    %v11906 = vor.u32 %v11904, %v11905
    %v11907 = vsub.s32 4294967266, %v11902
    %v11908 = vadd.s32 %v11907, 127
    %v11909 = vshll.u32 %v11908, 23
    %v11910 = vor.u32 4788187, %v11909
    %v11911 = vand.u32 2147483647, %v11910
    %v11913 = vcvt.s32.f32 %v11906
    %v11914 = vmul.f32 %v11913, %v11911
    %v11915 = vxor.u32 %v11914, 2147483648
    %v11916 = vsel %vm11833, %v11915, %v11914
    %v11917 = vsub.s32 4, %v11893
    %v11918 = vsel %vm11833, %v11917, %v11893
    %v11919 = vsel %vm11832, %v5381, %v11916
    %v11920 = vsel %vm11832, 0, %v11918
    %v11921 = vcosq.f32.pop %v11919
    %v11922 = vsinq.f32.pop %v11919
    %vm11923 = vweird.f32 %v5381
    %v11924 = vadd.s32 %v11920, 3
    %v11925 = vand.u32 %v11924, 3
    %vm11926 = vcmp.lt.s32.totalorder %v11925, 2
    %vm11927 = vcmp.eq.s32.totalorder %v11925, 0
    %v11928 = vxor.u32 %v11922, 2147483648
    %v11929 = vsel %vm11927, %v11921, %v11928
    %vm11930 = vcmp.eq.s32.totalorder %v11925, 2
    %v11931 = vxor.u32 %v11921, 2147483648
    %v11932 = vsel %vm11930, %v11931, %v11922
    %v11933 = vsel %vm11926, %v11929, %v11932
    %v11934 = vsel %vm11923, nan, %v11933
    %v11935 = vand.u32 2147483647, %v5382
    %vm11936 = vcmp.le.f32.partialorder %v11935, 0.7853982
    %vm11937 = vcmp.lt.s32.totalorder %v5382, 0
    %v11938 = vand.u32 %v5382, 2139095040
    %v11939 = vshrl.u32 %v11938, 23
    %v11940 = vsub.s32 %v11939, 127
    %v11941 = vand.u32 2147483647, %v5382
    %v11942 = vand.u32 %v11941, 8388607
    %v11943 = vor.u32 %v11942, 8388608
    %v11944 = vsub.s32 0, %v11943
    %v11945 = vadd.s32 %v11940, 1
    %vm11946 = vcmp.gt.s32.totalorder %v11945, 0
    %v11947 = vsel %vm11946, %v11945, 0
    %v11948 = vshrl.u32 %v11947, 5
    %v11949 = vand.u32 %v11947, 31
    %v11950 = vsub.s32 32, %v11949
    %v11951 = vshrl.u32 683565275, %v11950
    %v11952 = vshll.u32 683565275, %v11949
    %v11953 = vshrl.u32 2475754826, %v11950
    %v11954 = vor.u32 %v11952, %v11953
    %v11955 = vshll.u32 2475754826, %v11949
    %v11956 = vshrl.u32 2131351028, %v11950
    %v11957 = vor.u32 %v11955, %v11956
    %v11958 = vshll.u32 2131351028, %v11949
    %v11959 = vshrl.u32 2102212464, %v11950
    %v11960 = vor.u32 %v11958, %v11959
    %v11961 = vshll.u32 2102212464, %v11949
    %v11962 = vshrl.u32 920167782, %v11950
    %v11963 = vor.u32 %v11961, %v11962
    %v11964 = vshll.u32 920167782, %v11949
    %v11965 = vshrl.u32 1326507024, %v11950
    %v11966 = vor.u32 %v11964, %v11965
    %vm11967 = vcmp.lt.s32.totalorder %v11948, 1
    %vm11968 = vcmp.lt.s32.totalorder %v11948, 2
    %vm11969 = vcmp.lt.s32.totalorder %v11948, 3
    %vm11970 = vcmp.lt.s32.totalorder %v11948, 4
    %v11971 = vsel %vm11967, %v11951, %v11954
    %v11972 = vsel %vm11970, %v11960, 2102212464
    %v11973 = vsel %vm11969, %v11957, %v11972
    %v11974 = vsel %vm11968, %v11971, %v11973
    %v11975 = vsel %vm11967, %v11954, %v11957
    %v11976 = vsel %vm11970, %v11963, 920167782
    %v11977 = vsel %vm11969, %v11960, %v11976
    %v11978 = vsel %vm11968, %v11975, %v11977
    %v11979 = vsel %vm11967, %v11957, %v11960
    %v11980 = vsel %vm11970, %v11966, 1326507024
    %v11981 = vsel %vm11969, %v11963, %v11980
    %v11982 = vsel %vm11968, %v11979, %v11981
    %v11983 = vshll.u32 %v11943, 8
    %v11984 = vmul.u32.u64.compose %v11983, %v11982
    %v11985 = vextract.low.u32 %v11984
    %v11986 = vextract.high.u32 %v11984
    %v11987 = vmul.u32.u64.compose %v11983, %v11978
    %v11988 = vextract.low.u32 %v11987
    %v11989 = vextract.high.u32 %v11987
    %v11990 = vmul.u32 %v11983, %v11974
    %v11991 = vadd.s32 %v11986, %v11988
    %vm11992 = vc.u32 %v11986, %v11988
    %v11993 = vadd.s32 %v11989, 1
    %v11994 = vsel %vm11992, %v11993, %v11989
    %v11995 = vadd.s32 %v11990, %v11994
    %v11996 = vadd.s32 %v11995, 536870912
    %v11997 = vshrl.u32 %v11996, 30
    %v11998 = vshll.u32 %v11997, 30
    %v11999 = vsub.s32 %v11995, %v11998
    %vm12000 = vcmp.lt.s32.totalorder %v11999, 0
    %v12001 = vsub.s32 0, %v11999
    %v12002 = vsel %vm12000, %v12001, %v11999
    %v12003 = vclz %v12002
    %v12004 = vsub.s32 %v12003, 2
    %vm12005 = vcmp.gt.s32.totalorder 0, %v12004
    %v12006 = vsel %vm12005, 0, %v12004
    %v12007 = vsub.s32 32, %v12006
    %v12008 = vshll.u32 %v11999, %v12006
    %v12009 = vshrl.u32 %v11991, %v12007
    %v12010 = vor.u32 %v12008, %v12009
    %v12011 = vsub.s32 4294967266, %v12006
    %v12012 = vadd.s32 %v12011, 127
    %v12013 = vshll.u32 %v12012, 23
    %v12014 = vor.u32 4788187, %v12013
    %v12015 = vand.u32 2147483647, %v12014
    %v12017 = vcvt.s32.f32 %v12010
    %v12018 = vmul.f32 %v12017, %v12015
    %v12019 = vxor.u32 %v12018, 2147483648
    %v12020 = vsel %vm11937, %v12019, %v12018
    %v12021 = vsub.s32 4, %v11997
    %v12022 = vsel %vm11937, %v12021, %v11997
    %v12023 = vsel %vm11936, %v5382, %v12020
    %v12024 = vsel %vm11936, 0, %v12022
    %v12025 = vcosq.f32.pop %v12023
    %v12026 = vsinq.f32.pop %v12023
    %vm12027 = vweird.f32 %v5382
    %v12028 = vadd.s32 %v12024, 3
    %v12029 = vand.u32 %v12028, 3
    %vm12030 = vcmp.lt.s32.totalorder %v12029, 2
    %vm12031 = vcmp.eq.s32.totalorder %v12029, 0
    %v12032 = vxor.u32 %v12026, 2147483648
    %v12033 = vsel %vm12031, %v12025, %v12032
    %vm12034 = vcmp.eq.s32.totalorder %v12029, 2
    %v12035 = vxor.u32 %v12025, 2147483648
    %v12036 = vsel %vm12034, %v12035, %v12026
    %v12037 = vsel %vm12030, %v12033, %v12036
    %v12038 = vsel %vm12027, nan, %v12037
    %v12041 = vlaneseq
    %v12042 = vshrl.u32 %v12041, 7
    %v12043 = vsub.s32 0, %v12042
    %v12044 = vrot.slane %v5233, %v12043
    %v12045 = vlaneseq
    %v12046 = vshrl.u32 %v12045, 7
    %v12047 = vsub.s32 1, %v12046
    %v12048 = vrot.slane %v5233, %v12047
    %v12049 = vlaneseq
    %v12050 = vshrl.u32 %v12049, 7
    %v12051 = vsub.s32 2, %v12050
    %v12052 = vrot.slane %v5233, %v12051
    %v12053 = vlaneseq
    %v12054 = vshrl.u32 %v12053, 7
    %v12055 = vsub.s32 3, %v12054
    %v12056 = vrot.slane %v5233, %v12055
    %v12057 = vlaneseq
    %v12058 = vshrl.u32 %v12057, 7
    %v12059 = vsub.s32 4, %v12058
    %v12060 = vrot.slane %v5233, %v12059
    %v12061 = vlaneseq
    %v12062 = vshrl.u32 %v12061, 7
    %v12063 = vsub.s32 5, %v12062
    %v12064 = vrot.slane %v5233, %v12063
    %v12065 = vlaneseq
    %v12066 = vshrl.u32 %v12065, 7
    %v12067 = vsub.s32 6, %v12066
    %v12068 = vrot.slane %v5233, %v12067
    %v12069 = vlaneseq
    %v12070 = vshrl.u32 %v12069, 7
    %v12071 = vsub.s32 7, %v12070
    %v12072 = vrot.slane %v5233, %v12071
    %v12073 = vlaneseq
    %v12074 = vshrl.u32 %v12073, 7
    %v12075 = vsub.s32 0, %v12074
    %v12076 = vrot.slane %v5234, %v12075
    %v12077 = vlaneseq
    %v12078 = vshrl.u32 %v12077, 7
    %v12079 = vsub.s32 1, %v12078
    %v12080 = vrot.slane %v5234, %v12079
    %v12081 = vlaneseq
    %v12082 = vshrl.u32 %v12081, 7
    %v12083 = vsub.s32 2, %v12082
    %v12084 = vrot.slane %v5234, %v12083
    %v12085 = vlaneseq
    %v12086 = vshrl.u32 %v12085, 7
    %v12087 = vsub.s32 3, %v12086
    %v12088 = vrot.slane %v5234, %v12087
    %v12089 = vlaneseq
    %v12090 = vshrl.u32 %v12089, 7
    %v12091 = vsub.s32 4, %v12090
    %v12092 = vrot.slane %v5234, %v12091
    %v12093 = vlaneseq
    %v12094 = vshrl.u32 %v12093, 7
    %v12095 = vsub.s32 5, %v12094
    %v12096 = vrot.slane %v5234, %v12095
    %v12097 = vlaneseq
    %v12098 = vshrl.u32 %v12097, 7
    %v12099 = vsub.s32 6, %v12098
    %v12100 = vrot.slane %v5234, %v12099
    %v12101 = vlaneseq
    %v12102 = vshrl.u32 %v12101, 7
    %v12103 = vsub.s32 7, %v12102
    %v12104 = vrot.slane %v5234, %v12103
    %v12121 = vmul.f32 %v12044, %v5486
    %v12122 = vmul.f32 %v12048, %v5590
    %v12123 = vmul.f32 %v12052, %v5694
    %v12124 = vmul.f32 %v12056, %v5798
    %v12125 = vmul.f32 %v12060, %v5902
    %v12126 = vmul.f32 %v12064, %v6006
    %v12127 = vmul.f32 %v12068, %v6110
    %v12128 = vmul.f32 %v12072, %v6214
    %v12129 = vmul.f32 %v12076, %v6318
    %v12130 = vmul.f32 %v12080, %v6422
    %v12131 = vmul.f32 %v12084, %v6526
    %v12132 = vmul.f32 %v12088, %v6630
    %v12133 = vmul.f32 %v12092, %v6734
    %v12134 = vmul.f32 %v12096, %v6838
    %v12135 = vmul.f32 %v12100, %v6942
    %v12136 = vmul.f32 %v12104, %v7046
    %v12137 = vmul.f32 %v12044, %v7150
    %v12138 = vmul.f32 %v12048, %v7254
    %v12139 = vmul.f32 %v12052, %v7358
    %v12140 = vmul.f32 %v12056, %v7462
    %v12141 = vmul.f32 %v12060, %v7566
    %v12142 = vmul.f32 %v12064, %v7670
    %v12143 = vmul.f32 %v12068, %v7774
    %v12144 = vmul.f32 %v12072, %v7878
    %v12145 = vmul.f32 %v12076, %v7982
    %v12146 = vmul.f32 %v12080, %v8086
    %v12147 = vmul.f32 %v12084, %v8190
    %v12148 = vmul.f32 %v12088, %v8294
    %v12149 = vmul.f32 %v12092, %v8398
    %v12150 = vmul.f32 %v12096, %v8502
    %v12151 = vmul.f32 %v12100, %v8606
    %v12152 = vmul.f32 %v12104, %v8710
    %v12153 = vmul.f32 %v12044, %v8814
    %v12154 = vmul.f32 %v12048, %v8918
    %v12155 = vmul.f32 %v12052, %v9022
    %v12156 = vmul.f32 %v12056, %v9126
    %v12157 = vmul.f32 %v12060, %v9230
    %v12158 = vmul.f32 %v12064, %v9334
    %v12159 = vmul.f32 %v12068, %v9438
    %v12160 = vmul.f32 %v12072, %v9542
    %v12161 = vmul.f32 %v12076, %v9646
    %v12162 = vmul.f32 %v12080, %v9750
    %v12163 = vmul.f32 %v12084, %v9854
    %v12164 = vmul.f32 %v12088, %v9958
    %v12165 = vmul.f32 %v12092, %v10062
    %v12166 = vmul.f32 %v12096, %v10166
    %v12167 = vmul.f32 %v12100, %v10270
    %v12168 = vmul.f32 %v12104, %v10374
    %v12169 = vmul.f32 %v12044, %v10478
    %v12170 = vmul.f32 %v12048, %v10582
    %v12171 = vmul.f32 %v12052, %v10686
    %v12172 = vmul.f32 %v12056, %v10790
    %v12173 = vmul.f32 %v12060, %v10894
    %v12174 = vmul.f32 %v12064, %v10998
    %v12175 = vmul.f32 %v12068, %v11102
    %v12176 = vmul.f32 %v12072, %v11206
    %v12177 = vmul.f32 %v12076, %v11310
    %v12178 = vmul.f32 %v12080, %v11414
    %v12179 = vmul.f32 %v12084, %v11518
    %v12180 = vmul.f32 %v12088, %v11622
    %v12181 = vmul.f32 %v12092, %v11726
    %v12182 = vmul.f32 %v12096, %v11830
    %v12183 = vmul.f32 %v12100, %v11934
    %v12184 = vmul.f32 %v12104, %v12038
    %12185 = vst [vmem:[#allocation13] sm:$0xff] %v12121
    %12186 = vst [vmem:[#allocation13 + $0x8] sm:$0xff] %v12122
    %12187 = vst [vmem:[#allocation13 + $0x10] sm:$0xff] %v12123
    %12188 = vst [vmem:[#allocation13 + $0x18] sm:$0xff] %v12124
    %12189 = vst [vmem:[#allocation13 + $0x20] sm:$0xff] %v12125
    %12190 = vst [vmem:[#allocation13 + $0x28] sm:$0xff] %v12126
    %12191 = vst [vmem:[#allocation13 + $0x30] sm:$0xff] %v12127
    %12192 = vst [vmem:[#allocation13 + $0x38] sm:$0xff] %v12128
    %12193 = vst [vmem:[#allocation13 + $0x40] sm:$0xff] %v12129
    %12194 = vst [vmem:[#allocation13 + $0x48] sm:$0xff] %v12130
    %12195 = vst [vmem:[#allocation13 + $0x50] sm:$0xff] %v12131
    %12196 = vst [vmem:[#allocation13 + $0x58] sm:$0xff] %v12132
    %12197 = vst [vmem:[#allocation13 + $0x60] sm:$0xff] %v12133
    %12198 = vst [vmem:[#allocation13 + $0x68] sm:$0xff] %v12134
    %12199 = vst [vmem:[#allocation13 + $0x70] sm:$0xff] %v12135
    %12200 = vst [vmem:[#allocation13 + $0x78] sm:$0xff] %v12136
    %12201 = vst [vmem:[#allocation13 + $0x80] sm:$0xff] %v12137
    %12202 = vst [vmem:[#allocation13 + $0x88] sm:$0xff] %v12138
    %12203 = vst [vmem:[#allocation13 + $0x90] sm:$0xff] %v12139
    %12204 = vst [vmem:[#allocation13 + $0x98] sm:$0xff] %v12140
    %12205 = vst [vmem:[#allocation13 + $0xa0] sm:$0xff] %v12141
    %12206 = vst [vmem:[#allocation13 + $0xa8] sm:$0xff] %v12142
    %12207 = vst [vmem:[#allocation13 + $0xb0] sm:$0xff] %v12143
    %12208 = vst [vmem:[#allocation13 + $0xb8] sm:$0xff] %v12144
    %12209 = vst [vmem:[#allocation13 + $0xc0] sm:$0xff] %v12145
    %12210 = vst [vmem:[#allocation13 + $0xc8] sm:$0xff] %v12146
    %12211 = vst [vmem:[#allocation13 + $0xd0] sm:$0xff] %v12147
    %12212 = vst [vmem:[#allocation13 + $0xd8] sm:$0xff] %v12148
    %12213 = vst [vmem:[#allocation13 + $0xe0] sm:$0xff] %v12149
    %12214 = vst [vmem:[#allocation13 + $0xe8] sm:$0xff] %v12150
    %12215 = vst [vmem:[#allocation13 + $0xf0] sm:$0xff] %v12151
    %12216 = vst [vmem:[#allocation13 + $0xf8] sm:$0xff] %v12152
    %12217 = vst [vmem:[#allocation13 + $0x100] sm:$0xff] %v12153
    %12218 = vst [vmem:[#allocation13 + $0x108] sm:$0xff] %v12154
    %12219 = vst [vmem:[#allocation13 + $0x110] sm:$0xff] %v12155
    %12220 = vst [vmem:[#allocation13 + $0x118] sm:$0xff] %v12156
    %12221 = vst [vmem:[#allocation13 + $0x120] sm:$0xff] %v12157
    %12222 = vst [vmem:[#allocation13 + $0x128] sm:$0xff] %v12158
    %12223 = vst [vmem:[#allocation13 + $0x130] sm:$0xff] %v12159
    %12224 = vst [vmem:[#allocation13 + $0x138] sm:$0xff] %v12160
    %12225 = vst [vmem:[#allocation13 + $0x140] sm:$0xff] %v12161
    %12226 = vst [vmem:[#allocation13 + $0x148] sm:$0xff] %v12162
    %12227 = vst [vmem:[#allocation13 + $0x150] sm:$0xff] %v12163
    %12228 = vst [vmem:[#allocation13 + $0x158] sm:$0xff] %v12164
    %12229 = vst [vmem:[#allocation13 + $0x160] sm:$0xff] %v12165
    %12230 = vst [vmem:[#allocation13 + $0x168] sm:$0xff] %v12166
    %12231 = vst [vmem:[#allocation13 + $0x170] sm:$0xff] %v12167
    %12232 = vst [vmem:[#allocation13 + $0x178] sm:$0xff] %v12168
    %12233 = vst [vmem:[#allocation13 + $0x180] sm:$0xff] %v12169
    %12234 = vst [vmem:[#allocation13 + $0x188] sm:$0xff] %v12170
    %12235 = vst [vmem:[#allocation13 + $0x190] sm:$0xff] %v12171
    %12236 = vst [vmem:[#allocation13 + $0x198] sm:$0xff] %v12172
    %12237 = vst [vmem:[#allocation13 + $0x1a0] sm:$0xff] %v12173
    %12238 = vst [vmem:[#allocation13 + $0x1a8] sm:$0xff] %v12174
    %12239 = vst [vmem:[#allocation13 + $0x1b0] sm:$0xff] %v12175
    %12240 = vst [vmem:[#allocation13 + $0x1b8] sm:$0xff] %v12176
    %12241 = vst [vmem:[#allocation13 + $0x1c0] sm:$0xff] %v12177
    %12242 = vst [vmem:[#allocation13 + $0x1c8] sm:$0xff] %v12178
    %12243 = vst [vmem:[#allocation13 + $0x1d0] sm:$0xff] %v12179
    %12244 = vst [vmem:[#allocation13 + $0x1d8] sm:$0xff] %v12180
    %12245 = vst [vmem:[#allocation13 + $0x1e0] sm:$0xff] %v12181
    %12246 = vst [vmem:[#allocation13 + $0x1e8] sm:$0xff] %v12182
    %12247 = vst [vmem:[#allocation13 + $0x1f0] sm:$0xff] %v12183
    %12248 = vst [vmem:[#allocation13 + $0x1f8] sm:$0xff] %v12184
    // Predicated region
    $region50: #{tpu_custom_call.1} parent=1 // pred_check
      _
    $region51: #{tpu_custom_call.1} parent=1 // pred_check_branch
      %12250 = sbr.rel (0) target = $region53
    $region52: #{tpu_custom_call.1} parent=1 // pred_region
      %s12252 = ssub.s32 8192, 8192
      %12253 = vsyncadd [#allocation4], %s12252
      %s12254 = sshll.u32 [#allocation13], 4
      %s12255 = int_to_ptr.vmem [resolvable:$true] %s12254
      %12260 = dma.vmem_to_hbm [thread:$0]  %s12255, 8192, %s6, [#allocation4], 2048, 2048, 128
    $region53: #{tpu_custom_call.1} parent=1 // pred_fallthru
      _
    // Predicated region
    $region54: #{tpu_custom_call.1} parent=1 // pred_check
      _
    $region55: #{tpu_custom_call.1} parent=1 // pred_check_branch
      %12262 = sbr.rel (0) target = $region57
    $region56: #{tpu_custom_call.1} parent=1 // pred_region
      %12263 = dma.done [#allocation4], 8192
    $region57: #{tpu_custom_call.1} parent=1 // pred_fallthru
      _
    %12264 = vsyncpa [#allocation3], 1
    %12265 = vsyncpa [#allocation6], 1
    %12266 = vsyncpa [#allocation9], 1
    %12267 = vsyncpa [#allocation12], 1
    %12268 = vsyncpa [#allocation4], 1

</llo_original>
